<compile_context>
chip_gen: v6e
topology: v6e:2x2x1
jax: 0.10.0
libtpu: 0.0.40
codegen_flags: <defaults>
</compile_context>

<pallas_src>
import functools

import jax
import jax.numpy as jnp
from jax.experimental import pallas as pl
from jax.experimental.pallas import tpu as pltpu

EPS = 1e-5
LANE = 128


def _round_up(x, mult):
    return (x + mult - 1) // mult * mult


def _bn_rows(y, gamma, beta):
    """Training-mode BN over the row axis (rows == N*H*W), one-pass stats.

    var = E[y^2] - E[y]^2; the max() guard only protects real lanes against
    tiny negative cancellation error.  Padded lanes are exactly zero.
    """
    mean = jnp.mean(y, axis=0, keepdims=True)
    var = jnp.maximum(jnp.mean(y * y, axis=0, keepdims=True) - mean * mean, 0.0)
    return (y - mean) * jax.lax.rsqrt(var + EPS) * gamma + beta


# ---------------------------------------------------------------------------
# Fused kernel: conv1(1x1)+bn1+relu -> conv2(3x3)+bn2+relu -> conv3(1x1)+bn3
#               -> residual add -> relu, all resident in VMEM.
# ---------------------------------------------------------------------------
def bottleneck_kernel(x_ref, w1_ref, w2_ref, w3_ref,
                      g1_ref, b1_ref, g2_ref, b2_ref, g3_ref, b3_ref,
                      o_ref, pad_ref, patches_ref, *, n, h, w):
    m = n * h * w
    cw = w1_ref.shape[1]            # lane-padded bottleneck width (mult of 128)

    # ---- stage 1: 1x1 conv (bf16 in / f32 acc on MXU) + BN + ReLU ----------
    y1 = jnp.dot(x_ref[...], w1_ref[...], preferred_element_type=jnp.float32)
    a1 = jnp.maximum(_bn_rows(y1, g1_ref[...], b1_ref[...]), 0.0)

    # ---- stage 2: 3x3 conv as ONE im2col matmul ----------------------------
    # bf16 halo buffer in VMEM: zero only the 1-pixel border (interior is
    # fully overwritten right after); cast a1 to bf16 once, not once per tap.
    zero_row = jnp.zeros((n, 1, w + 2, cw), jnp.bfloat16)
    zero_col = jnp.zeros((n, h + 2, 1, cw), jnp.bfloat16)
    pad_ref[:, 0:1, :, :] = zero_row
    pad_ref[:, h + 1:h + 2, :, :] = zero_row
    pad_ref[:, :, 0:1, :] = zero_col
    pad_ref[:, :, w + 1:w + 2, :] = zero_col
    pad_ref[:, 1:h + 1, 1:w + 1, :] = (
        a1.reshape(n, h, w, cw).astype(jnp.bfloat16))

    # im2col patches written tap-by-tap into a pre-allocated bf16 scratch
    # (no jnp.concatenate); column offsets are lane-aligned multiples of 128.
    # Tap order (dy major, then dx, then cin) matches the wrapper's w2 reshape.
    for dy in range(3):
        for dx in range(3):
            t = dy * 3 + dx
            patches_ref[:, t * cw:(t + 1) * cw] = (
                pad_ref[:, dy:dy + h, dx:dx + w, :].reshape(m, cw))
    y2 = jnp.dot(patches_ref[...], w2_ref[...],
                 preferred_element_type=jnp.float32)
    a2 = jnp.maximum(_bn_rows(y2, g2_ref[...], b2_ref[...]), 0.0)

    # ---- stage 3: 1x1 conv + BN + residual add + ReLU ----------------------
    y3 = jnp.dot(a2.astype(jnp.bfloat16), w3_ref[...],
                 preferred_element_type=jnp.float32)
    y3 = _bn_rows(y3, g3_ref[...], b3_ref[...])
    identity = x_ref[...].astype(jnp.float32)   # same lane padding as output
    o_ref[...] = jnp.maximum(y3 + identity, 0.0).astype(o_ref.dtype)


# ---------------------------------------------------------------------------
# Wrapper (public API stays NCHW to match the PyTorch module)
# ---------------------------------------------------------------------------
def bottleneck_forward(x_nchw, params, stride=1):
    # TODO(synk): stride>1 / groups>1 / explicit downsample branch not
    # implemented (they take their trivial default values in this module).
    assert stride == 1
    n, cin, h, w = x_nchw.shape
    width = params["w1"].shape[1]
    c3 = params["w3"].shape[1]
    assert cin == c3, "downsample=None requires in_channel == out_channel*expansion"

    cin_p = _round_up(cin, LANE)
    wid_p = _round_up(width, LANE)
    c3_p = _round_up(c3, LANE)
    assert cin_p == c3_p
    m = n * h * w

    # NHWC, bf16 FIRST (halves transpose/pad traffic), lane-pad channels.
    x = jnp.transpose(x_nchw.astype(jnp.bfloat16), (0, 2, 3, 1)).reshape(m, cin)
    x = jnp.pad(x, ((0, 0), (0, cin_p - cin)))

    # Weights: bf16, zero-pad channel dims; 3x3 weight reshaped once to the
    # im2col layout (9*Cin, Cout) matching the in-kernel (dy, dx) tap order.
    w1 = jnp.pad(params["w1"].astype(jnp.bfloat16),
                 ((0, cin_p - cin), (0, wid_p - width)))
    w2 = jnp.pad(params["w2"].astype(jnp.bfloat16),
                 ((0, 0), (0, 0), (0, wid_p - width), (0, wid_p - width)))
    w2 = w2.reshape(9 * wid_p, wid_p)
    w3 = jnp.pad(params["w3"].astype(jnp.bfloat16),
                 ((0, wid_p - width), (0, c3_p - c3)))

    def pad_vec(v, cp):   # ZERO padding (keeps padded lanes exactly 0)
        return jnp.pad(v.astype(jnp.float32), ((0, 0), (0, cp - v.shape[1])))

    g1, b1 = pad_vec(params["g1"], wid_p), pad_vec(params["b1"], wid_p)
    g2, b2 = pad_vec(params["g2"], wid_p), pad_vec(params["b2"], wid_p)
    g3, b3 = pad_vec(params["g3"], c3_p), pad_vec(params["b3"], c3_p)

    flops = 2 * m * (cin_p * wid_p + 9 * wid_p * wid_p + wid_p * c3_p)
    bytes_accessed = sum(int(a.size) * a.dtype.itemsize
                         for a in (x, w1, w2, w3, g1, b1, g2, b2, g3, b3))
    bytes_accessed += m * c3_p * 2                            # bf16 output

    kernel = functools.partial(bottleneck_kernel, n=n, h=h, w=w)
    out = pl.pallas_call(
        kernel,
        out_shape=jax.ShapeDtypeStruct((m, c3_p), jnp.bfloat16),
        in_specs=[pl.BlockSpec(memory_space=pltpu.MemorySpace.VMEM)] * 10,
        out_specs=pl.BlockSpec(memory_space=pltpu.MemorySpace.VMEM),
        scratch_shapes=[
            pltpu.VMEM((n, h + 2, w + 2, wid_p), jnp.bfloat16),   # halo
            pltpu.VMEM((m, 9 * wid_p), jnp.bfloat16),             # im2col
        ],
        compiler_params=pltpu.CompilerParams(
            vmem_limit_bytes=32 * 1024 * 1024),
        cost_estimate=pl.CostEstimate(
            flops=flops, transcendentals=2 * wid_p + c3_p,
            bytes_accessed=bytes_accessed),
    )(x, w1, w2, w3, g1, b1, g2, b2, g3, b3)

    out = out[:, :c3].reshape(n, h, w, c3)
    return jnp.transpose(out, (0, 3, 1, 2)).astype(x_nchw.dtype)


# ---------------------------------------------------------------------------
# Pure-JAX f32 reference (NCHW, lax.conv) used only for the correctness check
# ---------------------------------------------------------------------------
def bottleneck_reference(x, p):
    def conv(x, w_oihw, pad):
        return jax.lax.conv_general_dilated(
            x, w_oihw, window_strides=(1, 1),
            padding=[(pad, pad), (pad, pad)],
            dimension_numbers=("NCHW", "OIHW", "NCHW"))

    def bn(y, g, b):
        mean = jnp.mean(y, axis=(0, 2, 3), keepdims=True)
        var = jnp.mean((y - mean) ** 2, axis=(0, 2, 3), keepdims=True)
        y = (y - mean) * jax.lax.rsqrt(var + EPS)
        return y * g.reshape(1, -1, 1, 1) + b.reshape(1, -1, 1, 1)

    w1 = jnp.transpose(p["w1"], (1, 0))[:, :, None, None]     # OIHW
    w2 = jnp.transpose(p["w2"], (3, 2, 0, 1))                  # OIHW
    w3 = jnp.transpose(p["w3"], (1, 0))[:, :, None, None]      # OIHW
    out = jnp.maximum(bn(conv(x, w1, 0), p["g1"], p["b1"]), 0.0)
    out = jnp.maximum(bn(conv(out, w2, 1), p["g2"], p["b2"]), 0.0)
    out = bn(conv(out, w3, 0), p["g3"], p["b3"])
    return jnp.maximum(out + x, 0.0)


# ---------------------------------------------------------------------------
if __name__ == "__main__":
    key = jax.random.PRNGKey(0)
    expansion = 4
    out_channel = 4
    in_channel = out_channel * expansion   # 16 (identity path needs no downsample)
    width = out_channel                    # groups=1, width_per_group=64
    c3 = out_channel * expansion
    N, H, W = 2, 16, 16

    ks = jax.random.split(key, 4)
    x = jax.random.normal(ks[0], (N, in_channel, H, W), jnp.float32)

    params = {
        # conv1: torch (width, in_channel, 1, 1)    -> stored as (in_channel, width)
        "w1": 0.1 * jax.random.normal(ks[1], (in_channel, width), jnp.float32),
        "g1": jnp.ones((1, width), jnp.float32),
        "b1": jnp.zeros((1, width), jnp.float32),
        # conv2: torch (width, width, 3, 3)         -> stored as (3, 3, width, width)
        "w2": 0.1 * jax.random.normal(ks[2], (3, 3, width, width), jnp.float32),
        "g2": jnp.ones((1, width), jnp.float32),
        "b2": jnp.zeros((1, width), jnp.float32),
        # conv3: torch (out_channel*4, width, 1, 1) -> stored as (width, out_channel*4)
        "w3": 0.1 * jax.random.normal(ks[3], (width, c3), jnp.float32),
        "g3": jnp.ones((1, c3), jnp.float32),
        "b3": jnp.zeros((1, c3), jnp.float32),
    }

    out = jax.jit(bottleneck_forward)(x, params)
    out = jax.block_until_ready(out)

    ref = bottleneck_reference(x, params)
    assert out.shape == (N, c3, H, W)
    # Loose-ish tolerance: kernel matmuls use bf16 operands (f32 accum), the
    # residual and the kernel output are bf16; the reference is pure f32.
    assert bool(jnp.allclose(out, ref, atol=7e-2, rtol=5e-2)), "mismatch vs reference"
    print("KERNEL_OK")
</pallas_src>

<mosaic_0001>
module attributes {stable_mosaic.version = 11 : i64} {
  func.func @bottleneck_kernel(%arg0: memref<512x128xbf16, #tpu.memory_space<vmem>>, %arg1: memref<128x128xbf16, #tpu.memory_space<vmem>>, %arg2: memref<1152x128xbf16, #tpu.memory_space<vmem>>, %arg3: memref<128x128xbf16, #tpu.memory_space<vmem>>, %arg4: memref<1x128xf32, #tpu.memory_space<vmem>>, %arg5: memref<1x128xf32, #tpu.memory_space<vmem>>, %arg6: memref<1x128xf32, #tpu.memory_space<vmem>>, %arg7: memref<1x128xf32, #tpu.memory_space<vmem>>, %arg8: memref<1x128xf32, #tpu.memory_space<vmem>>, %arg9: memref<1x128xf32, #tpu.memory_space<vmem>>, %arg10: memref<512x128xbf16, #tpu.memory_space<vmem>>, %arg11: memref<2x18x18x128xbf16, #tpu.memory_space<vmem>>, %arg12: memref<512x1152xbf16, #tpu.memory_space<vmem>>) attributes {dimension_semantics = [], scalar_prefetch = 0 : i64, scratch_operands = 2 : i64, tpu.core_type = #tpu.core_type<tc>} {
    %c0 = arith.constant 0 : index
    %c0_0 = arith.constant 0 : index
    %0 = vector.load %arg0[%c0, %c0_0] : memref<512x128xbf16, #tpu.memory_space<vmem>>, vector<512x128xbf16>
    %c0_1 = arith.constant 0 : index
    %c0_2 = arith.constant 0 : index
    %1 = vector.load %arg1[%c0_1, %c0_2] : memref<128x128xbf16, #tpu.memory_space<vmem>>, vector<128x128xbf16>
    %cst = arith.constant dense<0.000000e+00> : vector<512x128xf32>
    %2 = tpu.matmul %0, %1, %cst {dimension_numbers = #tpu.dot_dimension_numbers<[1], [0], [0], [1], [0, 0, 1, 1], [], []>} : vector<512x128xbf16>, vector<128x128xbf16>, vector<512x128xf32> -> vector<512x128xf32>
    %c0_3 = arith.constant 0 : index
    %c0_4 = arith.constant 0 : index
    %3 = vector.load %arg4[%c0_3, %c0_4] : memref<1x128xf32, #tpu.memory_space<vmem>>, vector<1x128xf32>
    %c0_5 = arith.constant 0 : index
    %c0_6 = arith.constant 0 : index
    %4 = vector.load %arg5[%c0_5, %c0_6] : memref<1x128xf32, #tpu.memory_space<vmem>>, vector<1x128xf32>
    %cst_7 = arith.constant dense<0.000000e+00> : vector<128xf32>
    %5 = vector.multi_reduction <add>, %2, %cst_7 [0] : vector<512x128xf32> to vector<128xf32>
    %6 = vector.shape_cast %5 : vector<128xf32> to vector<1x128xf32>
    %cst_8 = arith.constant 5.120000e+02 : f32
    %7 = vector.broadcast %cst_8 : f32 to vector<1x128xf32>
    %8 = arith.divf %6, %7 : vector<1x128xf32>
    %9 = arith.mulf %2, %2 : vector<512x128xf32>
    %cst_9 = arith.constant dense<0.000000e+00> : vector<128xf32>
    %10 = vector.multi_reduction <add>, %9, %cst_9 [0] : vector<512x128xf32> to vector<128xf32>
    %11 = vector.shape_cast %10 : vector<128xf32> to vector<1x128xf32>
    %cst_10 = arith.constant 5.120000e+02 : f32
    %12 = vector.broadcast %cst_10 : f32 to vector<1x128xf32>
    %13 = arith.divf %11, %12 : vector<1x128xf32>
    %14 = arith.mulf %8, %8 : vector<1x128xf32>
    %15 = arith.subf %13, %14 : vector<1x128xf32>
    %cst_11 = arith.constant 0.000000e+00 : f32
    %16 = vector.broadcast %cst_11 : f32 to vector<1x128xf32>
    %17 = arith.maximumf %15, %16 : vector<1x128xf32>
    %18 = vector.broadcast %8 : vector<1x128xf32> to vector<512x128xf32>
    %19 = arith.subf %2, %18 : vector<512x128xf32>
    %cst_12 = arith.constant 9.99999974E-6 : f32
    %20 = vector.broadcast %cst_12 : f32 to vector<1x128xf32>
    %21 = arith.addf %17, %20 : vector<1x128xf32>
    %22 = math.rsqrt %21 : vector<1x128xf32>
    %23 = vector.broadcast %22 : vector<1x128xf32> to vector<512x128xf32>
    %24 = arith.mulf %19, %23 : vector<512x128xf32>
    %25 = vector.broadcast %3 : vector<1x128xf32> to vector<512x128xf32>
    %26 = arith.mulf %24, %25 : vector<512x128xf32>
    %27 = vector.broadcast %4 : vector<1x128xf32> to vector<512x128xf32>
    %28 = arith.addf %26, %27 : vector<512x128xf32>
    %cst_13 = arith.constant 0.000000e+00 : f32
    %29 = vector.broadcast %cst_13 : f32 to vector<512x128xf32>
    %30 = arith.maximumf %28, %29 : vector<512x128xf32>
    %cst_14 = arith.constant 0.000000e+00 : bf16
    %31 = vector.broadcast %cst_14 : bf16 to vector<2x1x18x128xbf16>
    %cst_15 = arith.constant 0.000000e+00 : bf16
    %32 = vector.broadcast %cst_15 : bf16 to vector<2x18x1x128xbf16>
    %c0_16 = arith.constant 0 : index
    %c0_17 = arith.constant 0 : index
    %c0_18 = arith.constant 0 : index
    %c0_19 = arith.constant 0 : index
    %33 = vector.load %arg11[%c0_16, %c0_17, %c0_18, %c0_19] : memref<2x18x18x128xbf16, #tpu.memory_space<vmem>>, vector<2x1x18x128xbf16>
    tpu.vector_store %arg11[%c0_16, %c0_17, %c0_18, %c0_19], %31 {strides = array<i32>} : memref<2x18x18x128xbf16, #tpu.memory_space<vmem>>, vector<2x1x18x128xbf16>,
    %c0_20 = arith.constant 0 : index
    %c17 = arith.constant 17 : index
    %c0_21 = arith.constant 0 : index
    %c0_22 = arith.constant 0 : index
    %34 = vector.load %arg11[%c0_20, %c17, %c0_21, %c0_22] : memref<2x18x18x128xbf16, #tpu.memory_space<vmem>>, vector<2x1x18x128xbf16>
    tpu.vector_store %arg11[%c0_20, %c17, %c0_21, %c0_22], %31 {strides = array<i32>} : memref<2x18x18x128xbf16, #tpu.memory_space<vmem>>, vector<2x1x18x128xbf16>,
    %c0_23 = arith.constant 0 : index
    %c0_24 = arith.constant 0 : index
    %c0_25 = arith.constant 0 : index
    %c0_26 = arith.constant 0 : index
    %35 = vector.load %arg11[%c0_23, %c0_24, %c0_25, %c0_26] : memref<2x18x18x128xbf16, #tpu.memory_space<vmem>>, vector<2x18x1x128xbf16>
    tpu.vector_store %arg11[%c0_23, %c0_24, %c0_25, %c0_26], %32 {strides = array<i32>} : memref<2x18x18x128xbf16, #tpu.memory_space<vmem>>, vector<2x18x1x128xbf16>,
    %c0_27 = arith.constant 0 : index
    %c0_28 = arith.constant 0 : index
    %c17_29 = arith.constant 17 : index
    %c0_30 = arith.constant 0 : index
    %36 = vector.load %arg11[%c0_27, %c0_28, %c17_29, %c0_30] : memref<2x18x18x128xbf16, #tpu.memory_space<vmem>>, vector<2x18x1x128xbf16>
    tpu.vector_store %arg11[%c0_27, %c0_28, %c17_29, %c0_30], %32 {strides = array<i32>} : memref<2x18x18x128xbf16, #tpu.memory_space<vmem>>, vector<2x18x1x128xbf16>,
    %37 = vector.shape_cast %30 : vector<512x128xf32> to vector<2x16x16x128xf32>
    %38 = arith.truncf %37 : vector<2x16x16x128xf32> to vector<2x16x16x128xbf16>
    %c0_31 = arith.constant 0 : index
    %c1 = arith.constant 1 : index
    %c1_32 = arith.constant 1 : index
    %c0_33 = arith.constant 0 : index
    %39 = vector.load %arg11[%c0_31, %c1, %c1_32, %c0_33] : memref<2x18x18x128xbf16, #tpu.memory_space<vmem>>, vector<2x16x16x128xbf16>
    tpu.vector_store %arg11[%c0_31, %c1, %c1_32, %c0_33], %38 {strides = array<i32>} : memref<2x18x18x128xbf16, #tpu.memory_space<vmem>>, vector<2x16x16x128xbf16>,
    %c0_34 = arith.constant 0 : index
    %c0_35 = arith.constant 0 : index
    %c0_36 = arith.constant 0 : index
    %c0_37 = arith.constant 0 : index
    %40 = vector.load %arg11[%c0_34, %c0_35, %c0_36, %c0_37] : memref<2x18x18x128xbf16, #tpu.memory_space<vmem>>, vector<2x16x16x128xbf16>
    %41 = vector.shape_cast %40 : vector<2x16x16x128xbf16> to vector<512x128xbf16>
    %c0_38 = arith.constant 0 : index
    %c0_39 = arith.constant 0 : index
    %42 = vector.load %arg12[%c0_38, %c0_39] : memref<512x1152xbf16, #tpu.memory_space<vmem>>, vector<512x128xbf16>
    tpu.vector_store %arg12[%c0_38, %c0_39], %41 {strides = array<i32>} : memref<512x1152xbf16, #tpu.memory_space<vmem>>, vector<512x128xbf16>,
    %c0_40 = arith.constant 0 : index
    %c0_41 = arith.constant 0 : index
    %c1_42 = arith.constant 1 : index
    %c0_43 = arith.constant 0 : index
    %43 = vector.load %arg11[%c0_40, %c0_41, %c1_42, %c0_43] : memref<2x18x18x128xbf16, #tpu.memory_space<vmem>>, vector<2x16x16x128xbf16>
    %44 = vector.shape_cast %43 : vector<2x16x16x128xbf16> to vector<512x128xbf16>
    %c0_44 = arith.constant 0 : index
    %c128 = arith.constant 128 : index
    %45 = vector.load %arg12[%c0_44, %c128] : memref<512x1152xbf16, #tpu.memory_space<vmem>>, vector<512x128xbf16>
    tpu.vector_store %arg12[%c0_44, %c128], %44 {strides = array<i32>} : memref<512x1152xbf16, #tpu.memory_space<vmem>>, vector<512x128xbf16>,
    %c0_45 = arith.constant 0 : index
    %c0_46 = arith.constant 0 : index
    %c2 = arith.constant 2 : index
    %c0_47 = arith.constant 0 : index
    %46 = vector.load %arg11[%c0_45, %c0_46, %c2, %c0_47] : memref<2x18x18x128xbf16, #tpu.memory_space<vmem>>, vector<2x16x16x128xbf16>
    %47 = vector.shape_cast %46 : vector<2x16x16x128xbf16> to vector<512x128xbf16>
    %c0_48 = arith.constant 0 : index
    %c256 = arith.constant 256 : index
    %48 = vector.load %arg12[%c0_48, %c256] : memref<512x1152xbf16, #tpu.memory_space<vmem>>, vector<512x128xbf16>
    tpu.vector_store %arg12[%c0_48, %c256], %47 {strides = array<i32>} : memref<512x1152xbf16, #tpu.memory_space<vmem>>, vector<512x128xbf16>,
    %c0_49 = arith.constant 0 : index
    %c1_50 = arith.constant 1 : index
    %c0_51 = arith.constant 0 : index
    %c0_52 = arith.constant 0 : index
    %49 = vector.load %arg11[%c0_49, %c1_50, %c0_51, %c0_52] : memref<2x18x18x128xbf16, #tpu.memory_space<vmem>>, vector<2x16x16x128xbf16>
    %50 = vector.shape_cast %49 : vector<2x16x16x128xbf16> to vector<512x128xbf16>
    %c0_53 = arith.constant 0 : index
    %c384 = arith.constant 384 : index
    %51 = vector.load %arg12[%c0_53, %c384] : memref<512x1152xbf16, #tpu.memory_space<vmem>>, vector<512x128xbf16>
    tpu.vector_store %arg12[%c0_53, %c384], %50 {strides = array<i32>} : memref<512x1152xbf16, #tpu.memory_space<vmem>>, vector<512x128xbf16>,
    %c0_54 = arith.constant 0 : index
    %c1_55 = arith.constant 1 : index
    %c1_56 = arith.constant 1 : index
    %c0_57 = arith.constant 0 : index
    %52 = vector.load %arg11[%c0_54, %c1_55, %c1_56, %c0_57] : memref<2x18x18x128xbf16, #tpu.memory_space<vmem>>, vector<2x16x16x128xbf16>
    %53 = vector.shape_cast %52 : vector<2x16x16x128xbf16> to vector<512x128xbf16>
    %c0_58 = arith.constant 0 : index
    %c512 = arith.constant 512 : index
    %54 = vector.load %arg12[%c0_58, %c512] : memref<512x1152xbf16, #tpu.memory_space<vmem>>, vector<512x128xbf16>
    tpu.vector_store %arg12[%c0_58, %c512], %53 {strides = array<i32>} : memref<512x1152xbf16, #tpu.memory_space<vmem>>, vector<512x128xbf16>,
    %c0_59 = arith.constant 0 : index
    %c1_60 = arith.constant 1 : index
    %c2_61 = arith.constant 2 : index
    %c0_62 = arith.constant 0 : index
    %55 = vector.load %arg11[%c0_59, %c1_60, %c2_61, %c0_62] : memref<2x18x18x128xbf16, #tpu.memory_space<vmem>>, vector<2x16x16x128xbf16>
    %56 = vector.shape_cast %55 : vector<2x16x16x128xbf16> to vector<512x128xbf16>
    %c0_63 = arith.constant 0 : index
    %c640 = arith.constant 640 : index
    %57 = vector.load %arg12[%c0_63, %c640] : memref<512x1152xbf16, #tpu.memory_space<vmem>>, vector<512x128xbf16>
    tpu.vector_store %arg12[%c0_63, %c640], %56 {strides = array<i32>} : memref<512x1152xbf16, #tpu.memory_space<vmem>>, vector<512x128xbf16>,
    %c0_64 = arith.constant 0 : index
    %c2_65 = arith.constant 2 : index
    %c0_66 = arith.constant 0 : index
    %c0_67 = arith.constant 0 : index
    %58 = vector.load %arg11[%c0_64, %c2_65, %c0_66, %c0_67] : memref<2x18x18x128xbf16, #tpu.memory_space<vmem>>, vector<2x16x16x128xbf16>
    %59 = vector.shape_cast %58 : vector<2x16x16x128xbf16> to vector<512x128xbf16>
    %c0_68 = arith.constant 0 : index
    %c768 = arith.constant 768 : index
    %60 = vector.load %arg12[%c0_68, %c768] : memref<512x1152xbf16, #tpu.memory_space<vmem>>, vector<512x128xbf16>
    tpu.vector_store %arg12[%c0_68, %c768], %59 {strides = array<i32>} : memref<512x1152xbf16, #tpu.memory_space<vmem>>, vector<512x128xbf16>,
    %c0_69 = arith.constant 0 : index
    %c2_70 = arith.constant 2 : index
    %c1_71 = arith.constant 1 : index
    %c0_72 = arith.constant 0 : index
    %61 = vector.load %arg11[%c0_69, %c2_70, %c1_71, %c0_72] : memref<2x18x18x128xbf16, #tpu.memory_space<vmem>>, vector<2x16x16x128xbf16>
    %62 = vector.shape_cast %61 : vector<2x16x16x128xbf16> to vector<512x128xbf16>
    %c0_73 = arith.constant 0 : index
    %c896 = arith.constant 896 : index
    %63 = vector.load %arg12[%c0_73, %c896] : memref<512x1152xbf16, #tpu.memory_space<vmem>>, vector<512x128xbf16>
    tpu.vector_store %arg12[%c0_73, %c896], %62 {strides = array<i32>} : memref<512x1152xbf16, #tpu.memory_space<vmem>>, vector<512x128xbf16>,
    %c0_74 = arith.constant 0 : index
    %c2_75 = arith.constant 2 : index
    %c2_76 = arith.constant 2 : index
    %c0_77 = arith.constant 0 : index
    %64 = vector.load %arg11[%c0_74, %c2_75, %c2_76, %c0_77] : memref<2x18x18x128xbf16, #tpu.memory_space<vmem>>, vector<2x16x16x128xbf16>
    %65 = vector.shape_cast %64 : vector<2x16x16x128xbf16> to vector<512x128xbf16>
    %c0_78 = arith.constant 0 : index
    %c1024 = arith.constant 1024 : index
    %66 = vector.load %arg12[%c0_78, %c1024] : memref<512x1152xbf16, #tpu.memory_space<vmem>>, vector<512x128xbf16>
    tpu.vector_store %arg12[%c0_78, %c1024], %65 {strides = array<i32>} : memref<512x1152xbf16, #tpu.memory_space<vmem>>, vector<512x128xbf16>,
    %c0_79 = arith.constant 0 : index
    %c0_80 = arith.constant 0 : index
    %67 = vector.load %arg12[%c0_79, %c0_80] : memref<512x1152xbf16, #tpu.memory_space<vmem>>, vector<512x1152xbf16>
    %c0_81 = arith.constant 0 : index
    %c0_82 = arith.constant 0 : index
    %68 = vector.load %arg2[%c0_81, %c0_82] : memref<1152x128xbf16, #tpu.memory_space<vmem>>, vector<1152x128xbf16>
    %cst_83 = arith.constant dense<0.000000e+00> : vector<512x128xf32>
    %69 = tpu.matmul %67, %68, %cst_83 {dimension_numbers = #tpu.dot_dimension_numbers<[1], [0], [0], [1], [0, 0, 1, 1], [], []>} : vector<512x1152xbf16>, vector<1152x128xbf16>, vector<512x128xf32> -> vector<512x128xf32>
    %c0_84 = arith.constant 0 : index
    %c0_85 = arith.constant 0 : index
    %70 = vector.load %arg6[%c0_84, %c0_85] : memref<1x128xf32, #tpu.memory_space<vmem>>, vector<1x128xf32>
    %c0_86 = arith.constant 0 : index
    %c0_87 = arith.constant 0 : index
    %71 = vector.load %arg7[%c0_86, %c0_87] : memref<1x128xf32, #tpu.memory_space<vmem>>, vector<1x128xf32>
    %cst_88 = arith.constant dense<0.000000e+00> : vector<128xf32>
    %72 = vector.multi_reduction <add>, %69, %cst_88 [0] : vector<512x128xf32> to vector<128xf32>
    %73 = vector.shape_cast %72 : vector<128xf32> to vector<1x128xf32>
    %cst_89 = arith.constant 5.120000e+02 : f32
    %74 = vector.broadcast %cst_89 : f32 to vector<1x128xf32>
    %75 = arith.divf %73, %74 : vector<1x128xf32>
    %76 = arith.mulf %69, %69 : vector<512x128xf32>
    %cst_90 = arith.constant dense<0.000000e+00> : vector<128xf32>
    %77 = vector.multi_reduction <add>, %76, %cst_90 [0] : vector<512x128xf32> to vector<128xf32>
    %78 = vector.shape_cast %77 : vector<128xf32> to vector<1x128xf32>
    %cst_91 = arith.constant 5.120000e+02 : f32
    %79 = vector.broadcast %cst_91 : f32 to vector<1x128xf32>
    %80 = arith.divf %78, %79 : vector<1x128xf32>
    %81 = arith.mulf %75, %75 : vector<1x128xf32>
    %82 = arith.subf %80, %81 : vector<1x128xf32>
    %cst_92 = arith.constant 0.000000e+00 : f32
    %83 = vector.broadcast %cst_92 : f32 to vector<1x128xf32>
    %84 = arith.maximumf %82, %83 : vector<1x128xf32>
    %85 = vector.broadcast %75 : vector<1x128xf32> to vector<512x128xf32>
    %86 = arith.subf %69, %85 : vector<512x128xf32>
    %cst_93 = arith.constant 9.99999974E-6 : f32
    %87 = vector.broadcast %cst_93 : f32 to vector<1x128xf32>
    %88 = arith.addf %84, %87 : vector<1x128xf32>
    %89 = math.rsqrt %88 : vector<1x128xf32>
    %90 = vector.broadcast %89 : vector<1x128xf32> to vector<512x128xf32>
    %91 = arith.mulf %86, %90 : vector<512x128xf32>
    %92 = vector.broadcast %70 : vector<1x128xf32> to vector<512x128xf32>
    %93 = arith.mulf %91, %92 : vector<512x128xf32>
    %94 = vector.broadcast %71 : vector<1x128xf32> to vector<512x128xf32>
    %95 = arith.addf %93, %94 : vector<512x128xf32>
    %cst_94 = arith.constant 0.000000e+00 : f32
    %96 = vector.broadcast %cst_94 : f32 to vector<512x128xf32>
    %97 = arith.maximumf %95, %96 : vector<512x128xf32>
    %98 = arith.truncf %97 : vector<512x128xf32> to vector<512x128xbf16>
    %c0_95 = arith.constant 0 : index
    %c0_96 = arith.constant 0 : index
    %99 = vector.load %arg3[%c0_95, %c0_96] : memref<128x128xbf16, #tpu.memory_space<vmem>>, vector<128x128xbf16>
    %cst_97 = arith.constant dense<0.000000e+00> : vector<512x128xf32>
    %100 = tpu.matmul %98, %99, %cst_97 {dimension_numbers = #tpu.dot_dimension_numbers<[1], [0], [0], [1], [0, 0, 1, 1], [], []>} : vector<512x128xbf16>, vector<128x128xbf16>, vector<512x128xf32> -> vector<512x128xf32>
    %c0_98 = arith.constant 0 : index
    %c0_99 = arith.constant 0 : index
    %101 = vector.load %arg8[%c0_98, %c0_99] : memref<1x128xf32, #tpu.memory_space<vmem>>, vector<1x128xf32>
    %c0_100 = arith.constant 0 : index
    %c0_101 = arith.constant 0 : index
    %102 = vector.load %arg9[%c0_100, %c0_101] : memref<1x128xf32, #tpu.memory_space<vmem>>, vector<1x128xf32>
    %cst_102 = arith.constant dense<0.000000e+00> : vector<128xf32>
    %103 = vector.multi_reduction <add>, %100, %cst_102 [0] : vector<512x128xf32> to vector<128xf32>
    %104 = vector.shape_cast %103 : vector<128xf32> to vector<1x128xf32>
    %cst_103 = arith.constant 5.120000e+02 : f32
    %105 = vector.broadcast %cst_103 : f32 to vector<1x128xf32>
    %106 = arith.divf %104, %105 : vector<1x128xf32>
    %107 = arith.mulf %100, %100 : vector<512x128xf32>
    %cst_104 = arith.constant dense<0.000000e+00> : vector<128xf32>
    %108 = vector.multi_reduction <add>, %107, %cst_104 [0] : vector<512x128xf32> to vector<128xf32>
    %109 = vector.shape_cast %108 : vector<128xf32> to vector<1x128xf32>
    %cst_105 = arith.constant 5.120000e+02 : f32
    %110 = vector.broadcast %cst_105 : f32 to vector<1x128xf32>
    %111 = arith.divf %109, %110 : vector<1x128xf32>
    %112 = arith.mulf %106, %106 : vector<1x128xf32>
    %113 = arith.subf %111, %112 : vector<1x128xf32>
    %cst_106 = arith.constant 0.000000e+00 : f32
    %114 = vector.broadcast %cst_106 : f32 to vector<1x128xf32>
    %115 = arith.maximumf %113, %114 : vector<1x128xf32>
    %116 = vector.broadcast %106 : vector<1x128xf32> to vector<512x128xf32>
    %117 = arith.subf %100, %116 : vector<512x128xf32>
    %cst_107 = arith.constant 9.99999974E-6 : f32
    %118 = vector.broadcast %cst_107 : f32 to vector<1x128xf32>
    %119 = arith.addf %115, %118 : vector<1x128xf32>
    %120 = math.rsqrt %119 : vector<1x128xf32>
    %121 = vector.broadcast %120 : vector<1x128xf32> to vector<512x128xf32>
    %122 = arith.mulf %117, %121 : vector<512x128xf32>
    %123 = vector.broadcast %101 : vector<1x128xf32> to vector<512x128xf32>
    %124 = arith.mulf %122, %123 : vector<512x128xf32>
    %125 = vector.broadcast %102 : vector<1x128xf32> to vector<512x128xf32>
    %126 = arith.addf %124, %125 : vector<512x128xf32>
    %c0_108 = arith.constant 0 : index
    %c0_109 = arith.constant 0 : index
    %127 = vector.load %arg0[%c0_108, %c0_109] : memref<512x128xbf16, #tpu.memory_space<vmem>>, vector<512x128xbf16>
    %128 = arith.extf %127 : vector<512x128xbf16> to vector<512x128xf32>
    %129 = arith.addf %126, %128 : vector<512x128xf32>
    %cst_110 = arith.constant 0.000000e+00 : f32
    %130 = vector.broadcast %cst_110 : f32 to vector<512x128xf32>
    %131 = arith.maximumf %129, %130 : vector<512x128xf32>
    %132 = arith.truncf %131 : vector<512x128xf32> to vector<512x128xbf16>
    %c0_111 = arith.constant 0 : index
    %c0_112 = arith.constant 0 : index
    %133 = vector.load %arg10[%c0_111, %c0_112] : memref<512x128xbf16, #tpu.memory_space<vmem>>, vector<512x128xbf16>
    tpu.vector_store %arg10[%c0_111, %c0_112], %132 {strides = array<i32>} : memref<512x128xbf16, #tpu.memory_space<vmem>>, vector<512x128xbf16>,
    return
  }
}

</mosaic_0001>

<llo_original>
// kernel: bottleneck_forward.1
$region0: #{bottleneck_forward.1}
  #allocation0 [shape = 'u32[]', space=smem, size = 0x4, offset = 0x4, fixed_abs, tag = 'smem constant byte address 0x4 - core index']
  #allocation1 [shape = 'u32[144,128]{1,0:T(1,128)}', space=vmem, size = 0x12000, scoped, tag = 'internal scratch']
  #allocation2 [shape = 'bf16[2,18,18,128]{3,2,1,0:T(8,128)(2,1)}', space=vmem, size = 0x36000, scoped, tag = 'scratch operand']
  #allocation3 [shape = 'bf16[512,1152]{1,0:T(8,128)(2,1)}', space=vmem, size = 0x120000, scoped, tag = 'scratch operand']
  %s0 = inlined_call_operand.vmem [shape: bf16[512,128], index: 0, kind: input, shape index: {}]
  %s1 = inlined_call_operand.vmem [shape: bf16[128,128], index: 1, kind: input, shape index: {}]
  %s2 = inlined_call_operand.vmem [shape: bf16[1152,128], index: 2, kind: input, shape index: {}]
  %s3 = inlined_call_operand.vmem [shape: bf16[128,128], index: 3, kind: input, shape index: {}]
  %s4 = inlined_call_operand.vmem [shape: f32[1,128], index: 4, kind: input, shape index: {}]
  %s5 = inlined_call_operand.vmem [shape: f32[1,128], index: 5, kind: input, shape index: {}]
  %s6 = inlined_call_operand.vmem [shape: f32[1,128], index: 6, kind: input, shape index: {}]
  %s7 = inlined_call_operand.vmem [shape: f32[1,128], index: 7, kind: input, shape index: {}]
  %s8 = inlined_call_operand.vmem [shape: f32[1,128], index: 8, kind: input, shape index: {}]
  %s9 = inlined_call_operand.vmem [shape: f32[1,128], index: 9, kind: input, shape index: {}]
  %s10 = inlined_call_operand.vmem [shape: bf16[512,128], index: 10, kind: output, shape index: {}]
  %s11 = sld [smem:[#allocation0]]
  $region50: #{bottleneck_forward.1} parent=0
    _
  %s13 = ssub.s32 1, %s11
  %s14 = scalar_select 0, %s13, %s11
  // Predicated region
  $region2: #{bottleneck_forward.1} parent=0 // pred_check
    _
  $region3: #{bottleneck_forward.1} parent=0 // pred_check_branch
    %16 = sbr.rel (0) target = $region5
  $region4: #{bottleneck_forward.1} parent=0 // pred_region
    _
  $region5: #{bottleneck_forward.1} parent=0 // pred_fallthru
    _
  // Predicated region
  $region6: #{bottleneck_forward.1} parent=0 // pred_check
    _
  $region7: #{bottleneck_forward.1} parent=0 // pred_check_branch
    %18 = sbr.rel (0) target = $region9
  $region8: #{bottleneck_forward.1} parent=0 // pred_region
    _
  $region9: #{bottleneck_forward.1} parent=0 // pred_fallthru
    _
  // Predicated region
  $region10: #{bottleneck_forward.1} parent=0 // pred_check
    _
  $region11: #{bottleneck_forward.1} parent=0 // pred_check_branch
    %20 = sbr.rel (0) target = $region13
  $region12: #{bottleneck_forward.1} parent=0 // pred_region
    _
  $region13: #{bottleneck_forward.1} parent=0 // pred_fallthru
    _
  // Predicated region
  $region14: #{bottleneck_forward.1} parent=0 // pred_check
    _
  $region15: #{bottleneck_forward.1} parent=0 // pred_check_branch
    %22 = sbr.rel (0) target = $region17
  $region16: #{bottleneck_forward.1} parent=0 // pred_region
    _
  $region17: #{bottleneck_forward.1} parent=0 // pred_fallthru
    _
  // Predicated region
  $region18: #{bottleneck_forward.1} parent=0 // pred_check
    _
  $region19: #{bottleneck_forward.1} parent=0 // pred_check_branch
    %24 = sbr.rel (0) target = $region21
  $region20: #{bottleneck_forward.1} parent=0 // pred_region
    _
  $region21: #{bottleneck_forward.1} parent=0 // pred_fallthru
    _
  // Predicated region
  $region22: #{bottleneck_forward.1} parent=0 // pred_check
    _
  $region23: #{bottleneck_forward.1} parent=0 // pred_check_branch
    %26 = sbr.rel (0) target = $region25
  $region24: #{bottleneck_forward.1} parent=0 // pred_region
    _
  $region25: #{bottleneck_forward.1} parent=0 // pred_fallthru
    _
  // Predicated region
  $region26: #{bottleneck_forward.1} parent=0 // pred_check
    _
  $region27: #{bottleneck_forward.1} parent=0 // pred_check_branch
    %28 = sbr.rel (0) target = $region29
  $region28: #{bottleneck_forward.1} parent=0 // pred_region
    _
  $region29: #{bottleneck_forward.1} parent=0 // pred_fallthru
    _
  // Predicated region
  $region30: #{bottleneck_forward.1} parent=0 // pred_check
    _
  $region31: #{bottleneck_forward.1} parent=0 // pred_check_branch
    %30 = sbr.rel (0) target = $region33
  $region32: #{bottleneck_forward.1} parent=0 // pred_region
    _
  $region33: #{bottleneck_forward.1} parent=0 // pred_fallthru
    _
  // Predicated region
  $region34: #{bottleneck_forward.1} parent=0 // pred_check
    _
  $region35: #{bottleneck_forward.1} parent=0 // pred_check_branch
    %32 = sbr.rel (0) target = $region37
  $region36: #{bottleneck_forward.1} parent=0 // pred_region
    _
  $region37: #{bottleneck_forward.1} parent=0 // pred_fallthru
    _
  // Predicated region
  $region38: #{bottleneck_forward.1} parent=0 // pred_check
    _
  $region39: #{bottleneck_forward.1} parent=0 // pred_check_branch
    %34 = sbr.rel (0) target = $region41
  $region40: #{bottleneck_forward.1} parent=0 // pred_region
    _
  $region41: #{bottleneck_forward.1} parent=0 // pred_fallthru
    _
  %v36 = vld [vmem:[%s0] sm:$0xf]
  %v37 = vld [vmem:[%s0 + $0x4] sm:$0xf]
  %v38 = vld [vmem:[%s0 + $0x8] sm:$0xf]
  %v39 = vld [vmem:[%s0 + $0xc] sm:$0xf]
  %v40 = vld [vmem:[%s0 + $0x10] sm:$0xf]
  %v41 = vld [vmem:[%s0 + $0x14] sm:$0xf]
  %v42 = vld [vmem:[%s0 + $0x18] sm:$0xf]
  %v43 = vld [vmem:[%s0 + $0x1c] sm:$0xf]
  %v44 = vld [vmem:[%s0 + $0x20] sm:$0xf]
  %v45 = vld [vmem:[%s0 + $0x24] sm:$0xf]
  %v46 = vld [vmem:[%s0 + $0x28] sm:$0xf]
  %v47 = vld [vmem:[%s0 + $0x2c] sm:$0xf]
  %v48 = vld [vmem:[%s0 + $0x30] sm:$0xf]
  %v49 = vld [vmem:[%s0 + $0x34] sm:$0xf]
  %v50 = vld [vmem:[%s0 + $0x38] sm:$0xf]
  %v51 = vld [vmem:[%s0 + $0x3c] sm:$0xf]
  %v52 = vld [vmem:[%s0 + $0x40] sm:$0xf]
  %v53 = vld [vmem:[%s0 + $0x44] sm:$0xf]
  %v54 = vld [vmem:[%s0 + $0x48] sm:$0xf]
  %v55 = vld [vmem:[%s0 + $0x4c] sm:$0xf]
  %v56 = vld [vmem:[%s0 + $0x50] sm:$0xf]
  %v57 = vld [vmem:[%s0 + $0x54] sm:$0xf]
  %v58 = vld [vmem:[%s0 + $0x58] sm:$0xf]
  %v59 = vld [vmem:[%s0 + $0x5c] sm:$0xf]
  %v60 = vld [vmem:[%s0 + $0x60] sm:$0xf]
  %v61 = vld [vmem:[%s0 + $0x64] sm:$0xf]
  %v62 = vld [vmem:[%s0 + $0x68] sm:$0xf]
  %v63 = vld [vmem:[%s0 + $0x6c] sm:$0xf]
  %v64 = vld [vmem:[%s0 + $0x70] sm:$0xf]
  %v65 = vld [vmem:[%s0 + $0x74] sm:$0xf]
  %v66 = vld [vmem:[%s0 + $0x78] sm:$0xf]
  %v67 = vld [vmem:[%s0 + $0x7c] sm:$0xf]
  %v68 = vld [vmem:[%s0 + $0x80] sm:$0xf]
  %v69 = vld [vmem:[%s0 + $0x84] sm:$0xf]
  %v70 = vld [vmem:[%s0 + $0x88] sm:$0xf]
  %v71 = vld [vmem:[%s0 + $0x8c] sm:$0xf]
  %v72 = vld [vmem:[%s0 + $0x90] sm:$0xf]
  %v73 = vld [vmem:[%s0 + $0x94] sm:$0xf]
  %v74 = vld [vmem:[%s0 + $0x98] sm:$0xf]
  %v75 = vld [vmem:[%s0 + $0x9c] sm:$0xf]
  %v76 = vld [vmem:[%s0 + $0xa0] sm:$0xf]
  %v77 = vld [vmem:[%s0 + $0xa4] sm:$0xf]
  %v78 = vld [vmem:[%s0 + $0xa8] sm:$0xf]
  %v79 = vld [vmem:[%s0 + $0xac] sm:$0xf]
  %v80 = vld [vmem:[%s0 + $0xb0] sm:$0xf]
  %v81 = vld [vmem:[%s0 + $0xb4] sm:$0xf]
  %v82 = vld [vmem:[%s0 + $0xb8] sm:$0xf]
  %v83 = vld [vmem:[%s0 + $0xbc] sm:$0xf]
  %v84 = vld [vmem:[%s0 + $0xc0] sm:$0xf]
  %v85 = vld [vmem:[%s0 + $0xc4] sm:$0xf]
  %v86 = vld [vmem:[%s0 + $0xc8] sm:$0xf]
  %v87 = vld [vmem:[%s0 + $0xcc] sm:$0xf]
  %v88 = vld [vmem:[%s0 + $0xd0] sm:$0xf]
  %v89 = vld [vmem:[%s0 + $0xd4] sm:$0xf]
  %v90 = vld [vmem:[%s0 + $0xd8] sm:$0xf]
  %v91 = vld [vmem:[%s0 + $0xdc] sm:$0xf]
  %v92 = vld [vmem:[%s0 + $0xe0] sm:$0xf]
  %v93 = vld [vmem:[%s0 + $0xe4] sm:$0xf]
  %v94 = vld [vmem:[%s0 + $0xe8] sm:$0xf]
  %v95 = vld [vmem:[%s0 + $0xec] sm:$0xf]
  %v96 = vld [vmem:[%s0 + $0xf0] sm:$0xf]
  %v97 = vld [vmem:[%s0 + $0xf4] sm:$0xf]
  %v98 = vld [vmem:[%s0 + $0xf8] sm:$0xf]
  %v99 = vld [vmem:[%s0 + $0xfc] sm:$0xf]
  %v100 = vld [vmem:[%s1] sm:$0xf]
  %v101 = vld [vmem:[%s1 + $0x4] sm:$0xf]
  %v102 = vld [vmem:[%s1 + $0x8] sm:$0xf]
  %v103 = vld [vmem:[%s1 + $0xc] sm:$0xf]
  %v104 = vld [vmem:[%s1 + $0x10] sm:$0xf]
  %v105 = vld [vmem:[%s1 + $0x14] sm:$0xf]
  %v106 = vld [vmem:[%s1 + $0x18] sm:$0xf]
  %v107 = vld [vmem:[%s1 + $0x1c] sm:$0xf]
  %v108 = vld [vmem:[%s1 + $0x20] sm:$0xf]
  %v109 = vld [vmem:[%s1 + $0x24] sm:$0xf]
  %v110 = vld [vmem:[%s1 + $0x28] sm:$0xf]
  %v111 = vld [vmem:[%s1 + $0x2c] sm:$0xf]
  %v112 = vld [vmem:[%s1 + $0x30] sm:$0xf]
  %v113 = vld [vmem:[%s1 + $0x34] sm:$0xf]
  %v114 = vld [vmem:[%s1 + $0x38] sm:$0xf]
  %v115 = vld [vmem:[%s1 + $0x3c] sm:$0xf]
  %v180 = vunpack.c.l.b16 %v36
  %v181 = vunpack.c.l.b16 %v37
  %v182 = vunpack.c.l.b16 %v38
  %v183 = vunpack.c.l.b16 %v39
  %v184 = vunpack.c.l.b16 %v40
  %v185 = vunpack.c.l.b16 %v41
  %v186 = vunpack.c.l.b16 %v42
  %v187 = vunpack.c.l.b16 %v43
  %v188 = vunpack.c.l.b16 %v44
  %v189 = vunpack.c.l.b16 %v45
  %v190 = vunpack.c.l.b16 %v46
  %v191 = vunpack.c.l.b16 %v47
  %v192 = vunpack.c.l.b16 %v48
  %v193 = vunpack.c.l.b16 %v49
  %v194 = vunpack.c.l.b16 %v50
  %v195 = vunpack.c.l.b16 %v51
  %v196 = vunpack.c.l.b16 %v52
  %v197 = vunpack.c.l.b16 %v53
  %v198 = vunpack.c.l.b16 %v54
  %v199 = vunpack.c.l.b16 %v55
  %v200 = vunpack.c.l.b16 %v56
  %v201 = vunpack.c.l.b16 %v57
  %v202 = vunpack.c.l.b16 %v58
  %v203 = vunpack.c.l.b16 %v59
  %v204 = vunpack.c.l.b16 %v60
  %v205 = vunpack.c.l.b16 %v61
  %v206 = vunpack.c.l.b16 %v62
  %v207 = vunpack.c.l.b16 %v63
  %v208 = vunpack.c.l.b16 %v64
  %v209 = vunpack.c.l.b16 %v65
  %v210 = vunpack.c.l.b16 %v66
  %v211 = vunpack.c.l.b16 %v67
  %v212 = vunpack.c.l.b16 %v68
  %v213 = vunpack.c.l.b16 %v69
  %v214 = vunpack.c.l.b16 %v70
  %v215 = vunpack.c.l.b16 %v71
  %v216 = vunpack.c.l.b16 %v72
  %v217 = vunpack.c.l.b16 %v73
  %v218 = vunpack.c.l.b16 %v74
  %v219 = vunpack.c.l.b16 %v75
  %v220 = vunpack.c.l.b16 %v76
  %v221 = vunpack.c.l.b16 %v77
  %v222 = vunpack.c.l.b16 %v78
  %v223 = vunpack.c.l.b16 %v79
  %v224 = vunpack.c.l.b16 %v80
  %v225 = vunpack.c.l.b16 %v81
  %v226 = vunpack.c.l.b16 %v82
  %v227 = vunpack.c.l.b16 %v83
  %v228 = vunpack.c.l.b16 %v84
  %v229 = vunpack.c.l.b16 %v85
  %v230 = vunpack.c.l.b16 %v86
  %v231 = vunpack.c.l.b16 %v87
  %v232 = vunpack.c.l.b16 %v88
  %v233 = vunpack.c.l.b16 %v89
  %v234 = vunpack.c.l.b16 %v90
  %v235 = vunpack.c.l.b16 %v91
  %v236 = vunpack.c.l.b16 %v92
  %v237 = vunpack.c.l.b16 %v93
  %v238 = vunpack.c.l.b16 %v94
  %v239 = vunpack.c.l.b16 %v95
  %v240 = vunpack.c.l.b16 %v96
  %v241 = vunpack.c.l.b16 %v97
  %v242 = vunpack.c.l.b16 %v98
  %v243 = vunpack.c.l.b16 %v99
  %v244 = vpack.c.b16 %v181, %v180
  %v245 = vpack.c.b16 %v183, %v182
  %v246 = vpack.c.b16 %v185, %v184
  %v247 = vpack.c.b16 %v187, %v186
  %v248 = vpack.c.b16 %v189, %v188
  %v249 = vpack.c.b16 %v191, %v190
  %v250 = vpack.c.b16 %v193, %v192
  %v251 = vpack.c.b16 %v195, %v194
  %v252 = vpack.c.b16 %v197, %v196
  %v253 = vpack.c.b16 %v199, %v198
  %v254 = vpack.c.b16 %v201, %v200
  %v255 = vpack.c.b16 %v203, %v202
  %v256 = vpack.c.b16 %v205, %v204
  %v257 = vpack.c.b16 %v207, %v206
  %v258 = vpack.c.b16 %v209, %v208
  %v259 = vpack.c.b16 %v211, %v210
  %v260 = vpack.c.b16 %v213, %v212
  %v261 = vpack.c.b16 %v215, %v214
  %v262 = vpack.c.b16 %v217, %v216
  %v263 = vpack.c.b16 %v219, %v218
  %v264 = vpack.c.b16 %v221, %v220
  %v265 = vpack.c.b16 %v223, %v222
  %v266 = vpack.c.b16 %v225, %v224
  %v267 = vpack.c.b16 %v227, %v226
  %v268 = vpack.c.b16 %v229, %v228
  %v269 = vpack.c.b16 %v231, %v230
  %v270 = vpack.c.b16 %v233, %v232
  %v271 = vpack.c.b16 %v235, %v234
  %v272 = vpack.c.b16 %v237, %v236
  %v273 = vpack.c.b16 %v239, %v238
  %v274 = vpack.c.b16 %v241, %v240
  %v275 = vpack.c.b16 %v243, %v242
  %v324 = vunpack.c.l.b16 %v100
  %v325 = vunpack.c.l.b16 %v101
  %v326 = vunpack.c.l.b16 %v102
  %v327 = vunpack.c.l.b16 %v103
  %v328 = vunpack.c.l.b16 %v104
  %v329 = vunpack.c.l.b16 %v105
  %v330 = vunpack.c.l.b16 %v106
  %v331 = vunpack.c.l.b16 %v107
  %v332 = vunpack.c.l.b16 %v108
  %v333 = vunpack.c.l.b16 %v109
  %v334 = vunpack.c.l.b16 %v110
  %v335 = vunpack.c.l.b16 %v111
  %v336 = vunpack.c.l.b16 %v112
  %v337 = vunpack.c.l.b16 %v113
  %v338 = vunpack.c.l.b16 %v114
  %v339 = vunpack.c.l.b16 %v115
  %v340 = vpack.c.b16 %v325, %v324
  %v341 = vpack.c.b16 %v327, %v326
  %v342 = vpack.c.b16 %v329, %v328
  %v343 = vpack.c.b16 %v331, %v330
  %v344 = vpack.c.b16 %v333, %v332
  %v345 = vpack.c.b16 %v335, %v334
  %v346 = vpack.c.b16 %v337, %v336
  %v347 = vpack.c.b16 %v339, %v338
  %356 = vmatprep.subr.bf16.mxu0 0
  %357 = vmatpush1.bf16.msra.mxu0 %v347
  %358 = vmatprep.subr.bf16.mxu0 0
  %359 = vmatpush1.bf16.msra.mxu0 %v346
  %360 = vmatprep.subr.bf16.mxu0 0
  %361 = vmatpush1.bf16.msra.mxu0 %v345
  %362 = vmatprep.subr.bf16.mxu0 0
  %363 = vmatpush1.bf16.msra.mxu0 %v344
  %364 = vmatprep.subr.bf16.mxu0 0
  %365 = vmatpush1.bf16.msra.mxu0 %v343
  %366 = vmatprep.subr.bf16.mxu0 0
  %367 = vmatpush1.bf16.msra.mxu0 %v342
  %368 = vmatprep.subr.bf16.mxu0 0
  %369 = vmatpush1.bf16.msra.mxu0 %v341
  %370 = vmatprep.subr.bf16.mxu0 0
  %371 = vmatpush1.bf16.msra.mxu0 %v340
  %372 = vmatprep.subr.bf16.mxu0 0
  %373 = vmatpush2.bf16.msra.mxu0 0
  %374 = vmatprep.subr.bf16.mxu0 0
  %375 = vmatpush2.bf16.msra.mxu0 0
  %376 = vmatprep.subr.bf16.mxu0 0
  %377 = vmatpush2.bf16.msra.mxu0 0
  %378 = vmatprep.subr.bf16.mxu0 0
  %379 = vmatpush2.bf16.msra.mxu0 0
  %380 = vmatprep.subr.bf16.mxu0 0
  %381 = vmatpush2.bf16.msra.mxu0 0
  %382 = vmatprep.subr.bf16.mxu0 0
  %383 = vmatpush2.bf16.msra.mxu0 0
  %384 = vmatprep.subr.bf16.mxu0 0
  %385 = vmatpush2.bf16.msra.mxu0 0
  %386 = vmatprep.subr.bf16.mxu0 0
  %387 = vmatpush2.bf16.msra.mxu0 0
  %388 = vmatprep.mubr.bf16.mxu0 0
  %389 = vmatmul.mubr.bf16.gmra.mxu0 %v244
  %v390 = vpop.f32.mrf.mxu0
  %v391 = vadd.f32 0.0, %v390
  %v392 = vpop.f32.mrf.mxu0
  %v393 = vpop.f32.mrf.mxu0
  %v394 = vadd.f32 0.0, %v393
  %v395 = vpop.f32.mrf.mxu0
  %396 = vmatprep.mubr.bf16.mxu0 0
  %397 = vmatmul.mubr.bf16.gmra.mxu0 %v245
  %v398 = vpop.f32.mrf.mxu0
  %v399 = vadd.f32 0.0, %v398
  %v400 = vpop.f32.mrf.mxu0
  %v401 = vpop.f32.mrf.mxu0
  %v402 = vadd.f32 0.0, %v401
  %v403 = vpop.f32.mrf.mxu0
  %404 = vmatprep.mubr.bf16.mxu0 0
  %405 = vmatmul.mubr.bf16.gmra.mxu0 %v246
  %v406 = vpop.f32.mrf.mxu0
  %v407 = vadd.f32 0.0, %v406
  %v408 = vpop.f32.mrf.mxu0
  %v409 = vpop.f32.mrf.mxu0
  %v410 = vadd.f32 0.0, %v409
  %v411 = vpop.f32.mrf.mxu0
  %412 = vmatprep.mubr.bf16.mxu0 0
  %413 = vmatmul.mubr.bf16.gmra.mxu0 %v247
  %v414 = vpop.f32.mrf.mxu0
  %v415 = vadd.f32 0.0, %v414
  %v416 = vpop.f32.mrf.mxu0
  %v417 = vpop.f32.mrf.mxu0
  %v418 = vadd.f32 0.0, %v417
  %v419 = vpop.f32.mrf.mxu0
  %420 = vmatprep.mubr.bf16.mxu0 0
  %421 = vmatmul.mubr.bf16.gmra.mxu0 %v248
  %v422 = vpop.f32.mrf.mxu0
  %v423 = vadd.f32 0.0, %v422
  %v424 = vpop.f32.mrf.mxu0
  %v425 = vpop.f32.mrf.mxu0
  %v426 = vadd.f32 0.0, %v425
  %v427 = vpop.f32.mrf.mxu0
  %428 = vmatprep.mubr.bf16.mxu0 0
  %429 = vmatmul.mubr.bf16.gmra.mxu0 %v249
  %v430 = vpop.f32.mrf.mxu0
  %v431 = vadd.f32 0.0, %v430
  %v432 = vpop.f32.mrf.mxu0
  %v433 = vpop.f32.mrf.mxu0
  %v434 = vadd.f32 0.0, %v433
  %v435 = vpop.f32.mrf.mxu0
  %436 = vmatprep.mubr.bf16.mxu0 0
  %437 = vmatmul.mubr.bf16.gmra.mxu0 %v250
  %v438 = vpop.f32.mrf.mxu0
  %v439 = vadd.f32 0.0, %v438
  %v440 = vpop.f32.mrf.mxu0
  %v441 = vpop.f32.mrf.mxu0
  %v442 = vadd.f32 0.0, %v441
  %v443 = vpop.f32.mrf.mxu0
  %444 = vmatprep.mubr.bf16.mxu0 0
  %445 = vmatmul.mubr.bf16.gmra.mxu0 %v251
  %v446 = vpop.f32.mrf.mxu0
  %v447 = vadd.f32 0.0, %v446
  %v448 = vpop.f32.mrf.mxu0
  %v449 = vpop.f32.mrf.mxu0
  %v450 = vadd.f32 0.0, %v449
  %v451 = vpop.f32.mrf.mxu0
  %452 = vmatprep.mubr.bf16.mxu0 0
  %453 = vmatmul.mubr.bf16.gmra.mxu0 %v252
  %v454 = vpop.f32.mrf.mxu0
  %v455 = vadd.f32 0.0, %v454
  %v456 = vpop.f32.mrf.mxu0
  %v457 = vpop.f32.mrf.mxu0
  %v458 = vadd.f32 0.0, %v457
  %v459 = vpop.f32.mrf.mxu0
  %460 = vmatprep.mubr.bf16.mxu0 0
  %461 = vmatmul.mubr.bf16.gmra.mxu0 %v253
  %v462 = vpop.f32.mrf.mxu0
  %v463 = vadd.f32 0.0, %v462
  %v464 = vpop.f32.mrf.mxu0
  %v465 = vpop.f32.mrf.mxu0
  %v466 = vadd.f32 0.0, %v465
  %v467 = vpop.f32.mrf.mxu0
  %468 = vmatprep.mubr.bf16.mxu0 0
  %469 = vmatmul.mubr.bf16.gmra.mxu0 %v254
  %v470 = vpop.f32.mrf.mxu0
  %v471 = vadd.f32 0.0, %v470
  %v472 = vpop.f32.mrf.mxu0
  %v473 = vpop.f32.mrf.mxu0
  %v474 = vadd.f32 0.0, %v473
  %v475 = vpop.f32.mrf.mxu0
  %476 = vmatprep.mubr.bf16.mxu0 0
  %477 = vmatmul.mubr.bf16.gmra.mxu0 %v255
  %v478 = vpop.f32.mrf.mxu0
  %v479 = vadd.f32 0.0, %v478
  %v480 = vpop.f32.mrf.mxu0
  %v481 = vpop.f32.mrf.mxu0
  %v482 = vadd.f32 0.0, %v481
  %v483 = vpop.f32.mrf.mxu0
  %484 = vmatprep.mubr.bf16.mxu0 0
  %485 = vmatmul.mubr.bf16.gmra.mxu0 %v256
  %v486 = vpop.f32.mrf.mxu0
  %v487 = vadd.f32 0.0, %v486
  %v488 = vpop.f32.mrf.mxu0
  %v489 = vpop.f32.mrf.mxu0
  %v490 = vadd.f32 0.0, %v489
  %v491 = vpop.f32.mrf.mxu0
  %492 = vmatprep.mubr.bf16.mxu0 0
  %493 = vmatmul.mubr.bf16.gmra.mxu0 %v257
  %v494 = vpop.f32.mrf.mxu0
  %v495 = vadd.f32 0.0, %v494
  %v496 = vpop.f32.mrf.mxu0
  %v497 = vpop.f32.mrf.mxu0
  %v498 = vadd.f32 0.0, %v497
  %v499 = vpop.f32.mrf.mxu0
  %500 = vmatprep.mubr.bf16.mxu0 0
  %501 = vmatmul.mubr.bf16.gmra.mxu0 %v258
  %v502 = vpop.f32.mrf.mxu0
  %v503 = vadd.f32 0.0, %v502
  %v504 = vpop.f32.mrf.mxu0
  %v505 = vpop.f32.mrf.mxu0
  %v506 = vadd.f32 0.0, %v505
  %v507 = vpop.f32.mrf.mxu0
  %508 = vmatprep.mubr.bf16.mxu0 0
  %509 = vmatmul.mubr.bf16.gmra.mxu0 %v259
  %v510 = vpop.f32.mrf.mxu0
  %v511 = vadd.f32 0.0, %v510
  %v512 = vpop.f32.mrf.mxu0
  %v513 = vpop.f32.mrf.mxu0
  %v514 = vadd.f32 0.0, %v513
  %v515 = vpop.f32.mrf.mxu0
  %516 = vmatprep.mubr.bf16.mxu0 0
  %517 = vmatmul.mubr.bf16.gmra.mxu0 %v260
  %v518 = vpop.f32.mrf.mxu0
  %v519 = vadd.f32 0.0, %v518
  %v520 = vpop.f32.mrf.mxu0
  %v521 = vpop.f32.mrf.mxu0
  %v522 = vadd.f32 0.0, %v521
  %v523 = vpop.f32.mrf.mxu0
  %524 = vmatprep.mubr.bf16.mxu0 0
  %525 = vmatmul.mubr.bf16.gmra.mxu0 %v261
  %v526 = vpop.f32.mrf.mxu0
  %v527 = vadd.f32 0.0, %v526
  %v528 = vpop.f32.mrf.mxu0
  %v529 = vpop.f32.mrf.mxu0
  %v530 = vadd.f32 0.0, %v529
  %v531 = vpop.f32.mrf.mxu0
  %532 = vmatprep.mubr.bf16.mxu0 0
  %533 = vmatmul.mubr.bf16.gmra.mxu0 %v262
  %v534 = vpop.f32.mrf.mxu0
  %v535 = vadd.f32 0.0, %v534
  %v536 = vpop.f32.mrf.mxu0
  %v537 = vpop.f32.mrf.mxu0
  %v538 = vadd.f32 0.0, %v537
  %v539 = vpop.f32.mrf.mxu0
  %540 = vmatprep.mubr.bf16.mxu0 0
  %541 = vmatmul.mubr.bf16.gmra.mxu0 %v263
  %v542 = vpop.f32.mrf.mxu0
  %v543 = vadd.f32 0.0, %v542
  %v544 = vpop.f32.mrf.mxu0
  %v545 = vpop.f32.mrf.mxu0
  %v546 = vadd.f32 0.0, %v545
  %v547 = vpop.f32.mrf.mxu0
  %548 = vmatprep.mubr.bf16.mxu0 0
  %549 = vmatmul.mubr.bf16.gmra.mxu0 %v264
  %v550 = vpop.f32.mrf.mxu0
  %v551 = vadd.f32 0.0, %v550
  %v552 = vpop.f32.mrf.mxu0
  %v553 = vpop.f32.mrf.mxu0
  %v554 = vadd.f32 0.0, %v553
  %v555 = vpop.f32.mrf.mxu0
  %556 = vmatprep.mubr.bf16.mxu0 0
  %557 = vmatmul.mubr.bf16.gmra.mxu0 %v265
  %v558 = vpop.f32.mrf.mxu0
  %v559 = vadd.f32 0.0, %v558
  %v560 = vpop.f32.mrf.mxu0
  %v561 = vpop.f32.mrf.mxu0
  %v562 = vadd.f32 0.0, %v561
  %v563 = vpop.f32.mrf.mxu0
  %564 = vmatprep.mubr.bf16.mxu0 0
  %565 = vmatmul.mubr.bf16.gmra.mxu0 %v266
  %v566 = vpop.f32.mrf.mxu0
  %v567 = vadd.f32 0.0, %v566
  %v568 = vpop.f32.mrf.mxu0
  %v569 = vpop.f32.mrf.mxu0
  %v570 = vadd.f32 0.0, %v569
  %v571 = vpop.f32.mrf.mxu0
  %572 = vmatprep.mubr.bf16.mxu0 0
  %573 = vmatmul.mubr.bf16.gmra.mxu0 %v267
  %v574 = vpop.f32.mrf.mxu0
  %v575 = vadd.f32 0.0, %v574
  %v576 = vpop.f32.mrf.mxu0
  %v577 = vpop.f32.mrf.mxu0
  %v578 = vadd.f32 0.0, %v577
  %v579 = vpop.f32.mrf.mxu0
  %580 = vmatprep.mubr.bf16.mxu0 0
  %581 = vmatmul.mubr.bf16.gmra.mxu0 %v268
  %v582 = vpop.f32.mrf.mxu0
  %v583 = vadd.f32 0.0, %v582
  %v584 = vpop.f32.mrf.mxu0
  %v585 = vpop.f32.mrf.mxu0
  %v586 = vadd.f32 0.0, %v585
  %v587 = vpop.f32.mrf.mxu0
  %588 = vmatprep.mubr.bf16.mxu0 0
  %589 = vmatmul.mubr.bf16.gmra.mxu0 %v269
  %v590 = vpop.f32.mrf.mxu0
  %v591 = vadd.f32 0.0, %v590
  %v592 = vpop.f32.mrf.mxu0
  %v593 = vpop.f32.mrf.mxu0
  %v594 = vadd.f32 0.0, %v593
  %v595 = vpop.f32.mrf.mxu0
  %596 = vmatprep.mubr.bf16.mxu0 0
  %597 = vmatmul.mubr.bf16.gmra.mxu0 %v270
  %v598 = vpop.f32.mrf.mxu0
  %v599 = vadd.f32 0.0, %v598
  %v600 = vpop.f32.mrf.mxu0
  %v601 = vpop.f32.mrf.mxu0
  %v602 = vadd.f32 0.0, %v601
  %v603 = vpop.f32.mrf.mxu0
  %604 = vmatprep.mubr.bf16.mxu0 0
  %605 = vmatmul.mubr.bf16.gmra.mxu0 %v271
  %v606 = vpop.f32.mrf.mxu0
  %v607 = vadd.f32 0.0, %v606
  %v608 = vpop.f32.mrf.mxu0
  %v609 = vpop.f32.mrf.mxu0
  %v610 = vadd.f32 0.0, %v609
  %v611 = vpop.f32.mrf.mxu0
  %612 = vmatprep.mubr.bf16.mxu0 0
  %613 = vmatmul.mubr.bf16.gmra.mxu0 %v272
  %v614 = vpop.f32.mrf.mxu0
  %v615 = vadd.f32 0.0, %v614
  %v616 = vpop.f32.mrf.mxu0
  %v617 = vpop.f32.mrf.mxu0
  %v618 = vadd.f32 0.0, %v617
  %v619 = vpop.f32.mrf.mxu0
  %620 = vmatprep.mubr.bf16.mxu0 0
  %621 = vmatmul.mubr.bf16.gmra.mxu0 %v273
  %v622 = vpop.f32.mrf.mxu0
  %v623 = vadd.f32 0.0, %v622
  %v624 = vpop.f32.mrf.mxu0
  %v625 = vpop.f32.mrf.mxu0
  %v626 = vadd.f32 0.0, %v625
  %v627 = vpop.f32.mrf.mxu0
  %628 = vmatprep.mubr.bf16.mxu0 0
  %629 = vmatmul.mubr.bf16.gmra.mxu0 %v274
  %v630 = vpop.f32.mrf.mxu0
  %v631 = vadd.f32 0.0, %v630
  %v632 = vpop.f32.mrf.mxu0
  %v633 = vpop.f32.mrf.mxu0
  %v634 = vadd.f32 0.0, %v633
  %v635 = vpop.f32.mrf.mxu0
  %636 = vmatprep.mubr.bf16.mxu0 0
  %637 = vmatmul.mubr.bf16.gmra.mxu0 %v275
  %v638 = vpop.f32.mrf.mxu0
  %v639 = vadd.f32 0.0, %v638
  %v640 = vpop.f32.mrf.mxu0
  %v641 = vpop.f32.mrf.mxu0
  %v642 = vadd.f32 0.0, %v641
  %v643 = vpop.f32.mrf.mxu0
  %644 = vdwg.mxu0
  %v645 = vld [vmem:[%s4] sm:$0x1]
  %v646 = vld [vmem:[%s5] sm:$0x1]
  %v647 = vadd.f32 %v391, %v394
  %v648 = vadd.f32 %v647, %v399
  %v649 = vadd.f32 %v648, %v402
  %v650 = vadd.f32 %v649, %v407
  %v651 = vadd.f32 %v650, %v410
  %v652 = vadd.f32 %v651, %v415
  %v653 = vadd.f32 %v652, %v418
  %v654 = vadd.f32 %v653, %v423
  %v655 = vadd.f32 %v654, %v426
  %v656 = vadd.f32 %v655, %v431
  %v657 = vadd.f32 %v656, %v434
  %v658 = vadd.f32 %v657, %v439
  %v659 = vadd.f32 %v658, %v442
  %v660 = vadd.f32 %v659, %v447
  %v661 = vadd.f32 %v660, %v450
  %v662 = vadd.f32 %v661, %v455
  %v663 = vadd.f32 %v662, %v458
  %v664 = vadd.f32 %v663, %v463
  %v665 = vadd.f32 %v664, %v466
  %v666 = vadd.f32 %v665, %v471
  %v667 = vadd.f32 %v666, %v474
  %v668 = vadd.f32 %v667, %v479
  %v669 = vadd.f32 %v668, %v482
  %v670 = vadd.f32 %v669, %v487
  %v671 = vadd.f32 %v670, %v490
  %v672 = vadd.f32 %v671, %v495
  %v673 = vadd.f32 %v672, %v498
  %v674 = vadd.f32 %v673, %v503
  %v675 = vadd.f32 %v674, %v506
  %v676 = vadd.f32 %v675, %v511
  %v677 = vadd.f32 %v676, %v514
  %v678 = vadd.f32 %v677, %v519
  %v679 = vadd.f32 %v678, %v522
  %v680 = vadd.f32 %v679, %v527
  %v681 = vadd.f32 %v680, %v530
  %v682 = vadd.f32 %v681, %v535
  %v683 = vadd.f32 %v682, %v538
  %v684 = vadd.f32 %v683, %v543
  %v685 = vadd.f32 %v684, %v546
  %v686 = vadd.f32 %v685, %v551
  %v687 = vadd.f32 %v686, %v554
  %v688 = vadd.f32 %v687, %v559
  %v689 = vadd.f32 %v688, %v562
  %v690 = vadd.f32 %v689, %v567
  %v691 = vadd.f32 %v690, %v570
  %v692 = vadd.f32 %v691, %v575
  %v693 = vadd.f32 %v692, %v578
  %v694 = vadd.f32 %v693, %v583
  %v695 = vadd.f32 %v694, %v586
  %v696 = vadd.f32 %v695, %v591
  %v697 = vadd.f32 %v696, %v594
  %v698 = vadd.f32 %v697, %v599
  %v699 = vadd.f32 %v698, %v602
  %v700 = vadd.f32 %v699, %v607
  %v701 = vadd.f32 %v700, %v610
  %v702 = vadd.f32 %v701, %v615
  %v703 = vadd.f32 %v702, %v618
  %v704 = vadd.f32 %v703, %v623
  %v705 = vadd.f32 %v704, %v626
  %v706 = vadd.f32 %v705, %v631
  %v707 = vadd.f32 %v706, %v634
  %v708 = vadd.f32 %v707, %v639
  %v709 = vadd.f32 %v708, %v642
  %v710 = vrot.slane %v709, 4
  %v711 = vadd.f32 %v709, %v710
  %v712 = vrot.slane %v711, 2
  %v713 = vadd.f32 %v711, %v712
  %v714 = vrot.slane %v713, 1
  %v715 = vadd.f32 %v713, %v714
  %v716 = vrcp.pop 512.0
  %v717 = vmul.f32 %v715, %v716
  %v718 = vmul.f32 %v391, %v391
  %v719 = vmul.f32 %v394, %v394
  %v720 = vmul.f32 %v399, %v399
  %v721 = vmul.f32 %v402, %v402
  %v722 = vmul.f32 %v407, %v407
  %v723 = vmul.f32 %v410, %v410
  %v724 = vmul.f32 %v415, %v415
  %v725 = vmul.f32 %v418, %v418
  %v726 = vmul.f32 %v423, %v423
  %v727 = vmul.f32 %v426, %v426
  %v728 = vmul.f32 %v431, %v431
  %v729 = vmul.f32 %v434, %v434
  %v730 = vmul.f32 %v439, %v439
  %v731 = vmul.f32 %v442, %v442
  %v732 = vmul.f32 %v447, %v447
  %v733 = vmul.f32 %v450, %v450
  %v734 = vmul.f32 %v455, %v455
  %v735 = vmul.f32 %v458, %v458
  %v736 = vmul.f32 %v463, %v463
  %v737 = vmul.f32 %v466, %v466
  %v738 = vmul.f32 %v471, %v471
  %v739 = vmul.f32 %v474, %v474
  %v740 = vmul.f32 %v479, %v479
  %v741 = vmul.f32 %v482, %v482
  %v742 = vmul.f32 %v487, %v487
  %v743 = vmul.f32 %v490, %v490
  %v744 = vmul.f32 %v495, %v495
  %v745 = vmul.f32 %v498, %v498
  %v746 = vmul.f32 %v503, %v503
  %v747 = vmul.f32 %v506, %v506
  %v748 = vmul.f32 %v511, %v511
  %v749 = vmul.f32 %v514, %v514
  %v750 = vmul.f32 %v519, %v519
  %v751 = vmul.f32 %v522, %v522
  %v752 = vmul.f32 %v527, %v527
  %v753 = vmul.f32 %v530, %v530
  %v754 = vmul.f32 %v535, %v535
  %v755 = vmul.f32 %v538, %v538
  %v756 = vmul.f32 %v543, %v543
  %v757 = vmul.f32 %v546, %v546
  %v758 = vmul.f32 %v551, %v551
  %v759 = vmul.f32 %v554, %v554
  %v760 = vmul.f32 %v559, %v559
  %v761 = vmul.f32 %v562, %v562
  %v762 = vmul.f32 %v567, %v567
  %v763 = vmul.f32 %v570, %v570
  %v764 = vmul.f32 %v575, %v575
  %v765 = vmul.f32 %v578, %v578
  %v766 = vmul.f32 %v583, %v583
  %v767 = vmul.f32 %v586, %v586
  %v768 = vmul.f32 %v591, %v591
  %v769 = vmul.f32 %v594, %v594
  %v770 = vmul.f32 %v599, %v599
  %v771 = vmul.f32 %v602, %v602
  %v772 = vmul.f32 %v607, %v607
  %v773 = vmul.f32 %v610, %v610
  %v774 = vmul.f32 %v615, %v615
  %v775 = vmul.f32 %v618, %v618
  %v776 = vmul.f32 %v623, %v623
  %v777 = vmul.f32 %v626, %v626
  %v778 = vmul.f32 %v631, %v631
  %v779 = vmul.f32 %v634, %v634
  %v780 = vmul.f32 %v639, %v639
  %v781 = vmul.f32 %v642, %v642
  %v782 = vadd.f32 %v718, %v719
  %v783 = vadd.f32 %v782, %v720
  %v784 = vadd.f32 %v783, %v721
  %v785 = vadd.f32 %v784, %v722
  %v786 = vadd.f32 %v785, %v723
  %v787 = vadd.f32 %v786, %v724
  %v788 = vadd.f32 %v787, %v725
  %v789 = vadd.f32 %v788, %v726
  %v790 = vadd.f32 %v789, %v727
  %v791 = vadd.f32 %v790, %v728
  %v792 = vadd.f32 %v791, %v729
  %v793 = vadd.f32 %v792, %v730
  %v794 = vadd.f32 %v793, %v731
  %v795 = vadd.f32 %v794, %v732
  %v796 = vadd.f32 %v795, %v733
  %v797 = vadd.f32 %v796, %v734
  %v798 = vadd.f32 %v797, %v735
  %v799 = vadd.f32 %v798, %v736
  %v800 = vadd.f32 %v799, %v737
  %v801 = vadd.f32 %v800, %v738
  %v802 = vadd.f32 %v801, %v739
  %v803 = vadd.f32 %v802, %v740
  %v804 = vadd.f32 %v803, %v741
  %v805 = vadd.f32 %v804, %v742
  %v806 = vadd.f32 %v805, %v743
  %v807 = vadd.f32 %v806, %v744
  %v808 = vadd.f32 %v807, %v745
  %v809 = vadd.f32 %v808, %v746
  %v810 = vadd.f32 %v809, %v747
  %v811 = vadd.f32 %v810, %v748
  %v812 = vadd.f32 %v811, %v749
  %v813 = vadd.f32 %v812, %v750
  %v814 = vadd.f32 %v813, %v751
  %v815 = vadd.f32 %v814, %v752
  %v816 = vadd.f32 %v815, %v753
  %v817 = vadd.f32 %v816, %v754
  %v818 = vadd.f32 %v817, %v755
  %v819 = vadd.f32 %v818, %v756
  %v820 = vadd.f32 %v819, %v757
  %v821 = vadd.f32 %v820, %v758
  %v822 = vadd.f32 %v821, %v759
  %v823 = vadd.f32 %v822, %v760
  %v824 = vadd.f32 %v823, %v761
  %v825 = vadd.f32 %v824, %v762
  %v826 = vadd.f32 %v825, %v763
  %v827 = vadd.f32 %v826, %v764
  %v828 = vadd.f32 %v827, %v765
  %v829 = vadd.f32 %v828, %v766
  %v830 = vadd.f32 %v829, %v767
  %v831 = vadd.f32 %v830, %v768
  %v832 = vadd.f32 %v831, %v769
  %v833 = vadd.f32 %v832, %v770
  %v834 = vadd.f32 %v833, %v771
  %v835 = vadd.f32 %v834, %v772
  %v836 = vadd.f32 %v835, %v773
  %v837 = vadd.f32 %v836, %v774
  %v838 = vadd.f32 %v837, %v775
  %v839 = vadd.f32 %v838, %v776
  %v840 = vadd.f32 %v839, %v777
  %v841 = vadd.f32 %v840, %v778
  %v842 = vadd.f32 %v841, %v779
  %v843 = vadd.f32 %v842, %v780
  %v844 = vadd.f32 %v843, %v781
  %v845 = vrot.slane %v844, 4
  %v846 = vadd.f32 %v844, %v845
  %v847 = vrot.slane %v846, 2
  %v848 = vadd.f32 %v846, %v847
  %v849 = vrot.slane %v848, 1
  %v850 = vadd.f32 %v848, %v849
  %v851 = vmul.f32 %v850, %v716
  %v852 = vmul.f32 %v717, %v717
  %v853 = vsub.f32 %v851, %v852
  %v854 = vmax.f32 %v853, 0.0
  %v855 = vsub.f32 %v391, %v717
  %v856 = vsub.f32 %v394, %v717
  %v857 = vsub.f32 %v399, %v717
  %v858 = vsub.f32 %v402, %v717
  %v859 = vsub.f32 %v407, %v717
  %v860 = vsub.f32 %v410, %v717
  %v861 = vsub.f32 %v415, %v717
  %v862 = vsub.f32 %v418, %v717
  %v863 = vsub.f32 %v423, %v717
  %v864 = vsub.f32 %v426, %v717
  %v865 = vsub.f32 %v431, %v717
  %v866 = vsub.f32 %v434, %v717
  %v867 = vsub.f32 %v439, %v717
  %v868 = vsub.f32 %v442, %v717
  %v869 = vsub.f32 %v447, %v717
  %v870 = vsub.f32 %v450, %v717
  %v871 = vsub.f32 %v455, %v717
  %v872 = vsub.f32 %v458, %v717
  %v873 = vsub.f32 %v463, %v717
  %v874 = vsub.f32 %v466, %v717
  %v875 = vsub.f32 %v471, %v717
  %v876 = vsub.f32 %v474, %v717
  %v877 = vsub.f32 %v479, %v717
  %v878 = vsub.f32 %v482, %v717
  %v879 = vsub.f32 %v487, %v717
  %v880 = vsub.f32 %v490, %v717
  %v881 = vsub.f32 %v495, %v717
  %v882 = vsub.f32 %v498, %v717
  %v883 = vsub.f32 %v503, %v717
  %v884 = vsub.f32 %v506, %v717
  %v885 = vsub.f32 %v511, %v717
  %v886 = vsub.f32 %v514, %v717
  %v887 = vsub.f32 %v519, %v717
  %v888 = vsub.f32 %v522, %v717
  %v889 = vsub.f32 %v527, %v717
  %v890 = vsub.f32 %v530, %v717
  %v891 = vsub.f32 %v535, %v717
  %v892 = vsub.f32 %v538, %v717
  %v893 = vsub.f32 %v543, %v717
  %v894 = vsub.f32 %v546, %v717
  %v895 = vsub.f32 %v551, %v717
  %v896 = vsub.f32 %v554, %v717
  %v897 = vsub.f32 %v559, %v717
  %v898 = vsub.f32 %v562, %v717
  %v899 = vsub.f32 %v567, %v717
  %v900 = vsub.f32 %v570, %v717
  %v901 = vsub.f32 %v575, %v717
  %v902 = vsub.f32 %v578, %v717
  %v903 = vsub.f32 %v583, %v717
  %v904 = vsub.f32 %v586, %v717
  %v905 = vsub.f32 %v591, %v717
  %v906 = vsub.f32 %v594, %v717
  %v907 = vsub.f32 %v599, %v717
  %v908 = vsub.f32 %v602, %v717
  %v909 = vsub.f32 %v607, %v717
  %v910 = vsub.f32 %v610, %v717
  %v911 = vsub.f32 %v615, %v717
  %v912 = vsub.f32 %v618, %v717
  %v913 = vsub.f32 %v623, %v717
  %v914 = vsub.f32 %v626, %v717
  %v915 = vsub.f32 %v631, %v717
  %v916 = vsub.f32 %v634, %v717
  %v917 = vsub.f32 %v639, %v717
  %v918 = vsub.f32 %v642, %v717
  %v919 = vadd.f32 %v854, 1e-05
  %v920 = vrsqrt.pop %v919
  %v921 = vmul.f32 %v855, %v920
  %v922 = vmul.f32 %v856, %v920
  %v923 = vmul.f32 %v857, %v920
  %v924 = vmul.f32 %v858, %v920
  %v925 = vmul.f32 %v859, %v920
  %v926 = vmul.f32 %v860, %v920
  %v927 = vmul.f32 %v861, %v920
  %v928 = vmul.f32 %v862, %v920
  %v929 = vmul.f32 %v863, %v920
  %v930 = vmul.f32 %v864, %v920
  %v931 = vmul.f32 %v865, %v920
  %v932 = vmul.f32 %v866, %v920
  %v933 = vmul.f32 %v867, %v920
  %v934 = vmul.f32 %v868, %v920
  %v935 = vmul.f32 %v869, %v920
  %v936 = vmul.f32 %v870, %v920
  %v937 = vmul.f32 %v871, %v920
  %v938 = vmul.f32 %v872, %v920
  %v939 = vmul.f32 %v873, %v920
  %v940 = vmul.f32 %v874, %v920
  %v941 = vmul.f32 %v875, %v920
  %v942 = vmul.f32 %v876, %v920
  %v943 = vmul.f32 %v877, %v920
  %v944 = vmul.f32 %v878, %v920
  %v945 = vmul.f32 %v879, %v920
  %v946 = vmul.f32 %v880, %v920
  %v947 = vmul.f32 %v881, %v920
  %v948 = vmul.f32 %v882, %v920
  %v949 = vmul.f32 %v883, %v920
  %v950 = vmul.f32 %v884, %v920
  %v951 = vmul.f32 %v885, %v920
  %v952 = vmul.f32 %v886, %v920
  %v953 = vmul.f32 %v887, %v920
  %v954 = vmul.f32 %v888, %v920
  %v955 = vmul.f32 %v889, %v920
  %v956 = vmul.f32 %v890, %v920
  %v957 = vmul.f32 %v891, %v920
  %v958 = vmul.f32 %v892, %v920
  %v959 = vmul.f32 %v893, %v920
  %v960 = vmul.f32 %v894, %v920
  %v961 = vmul.f32 %v895, %v920
  %v962 = vmul.f32 %v896, %v920
  %v963 = vmul.f32 %v897, %v920
  %v964 = vmul.f32 %v898, %v920
  %v965 = vmul.f32 %v899, %v920
  %v966 = vmul.f32 %v900, %v920
  %v967 = vmul.f32 %v901, %v920
  %v968 = vmul.f32 %v902, %v920
  %v969 = vmul.f32 %v903, %v920
  %v970 = vmul.f32 %v904, %v920
  %v971 = vmul.f32 %v905, %v920
  %v972 = vmul.f32 %v906, %v920
  %v973 = vmul.f32 %v907, %v920
  %v974 = vmul.f32 %v908, %v920
  %v975 = vmul.f32 %v909, %v920
  %v976 = vmul.f32 %v910, %v920
  %v977 = vmul.f32 %v911, %v920
  %v978 = vmul.f32 %v912, %v920
  %v979 = vmul.f32 %v913, %v920
  %v980 = vmul.f32 %v914, %v920
  %v981 = vmul.f32 %v915, %v920
  %v982 = vmul.f32 %v916, %v920
  %v983 = vmul.f32 %v917, %v920
  %v984 = vmul.f32 %v918, %v920
  %v986 = vlaneseq
  %v987 = vshrl.u32 %v986, 7
  %v988 = vsub.s32 0, %v987
  %v989 = vrot.slane %v645, %v988
  %v991 = vmul.f32 %v921, %v989
  %v992 = vmul.f32 %v922, %v989
  %v993 = vmul.f32 %v923, %v989
  %v994 = vmul.f32 %v924, %v989
  %v995 = vmul.f32 %v925, %v989
  %v996 = vmul.f32 %v926, %v989
  %v997 = vmul.f32 %v927, %v989
  %v998 = vmul.f32 %v928, %v989
  %v999 = vmul.f32 %v929, %v989
  %v1000 = vmul.f32 %v930, %v989
  %v1001 = vmul.f32 %v931, %v989
  %v1002 = vmul.f32 %v932, %v989
  %v1003 = vmul.f32 %v933, %v989
  %v1004 = vmul.f32 %v934, %v989
  %v1005 = vmul.f32 %v935, %v989
  %v1006 = vmul.f32 %v936, %v989
  %v1007 = vmul.f32 %v937, %v989
  %v1008 = vmul.f32 %v938, %v989
  %v1009 = vmul.f32 %v939, %v989
  %v1010 = vmul.f32 %v940, %v989
  %v1011 = vmul.f32 %v941, %v989
  %v1012 = vmul.f32 %v942, %v989
  %v1013 = vmul.f32 %v943, %v989
  %v1014 = vmul.f32 %v944, %v989
  %v1015 = vmul.f32 %v945, %v989
  %v1016 = vmul.f32 %v946, %v989
  %v1017 = vmul.f32 %v947, %v989
  %v1018 = vmul.f32 %v948, %v989
  %v1019 = vmul.f32 %v949, %v989
  %v1020 = vmul.f32 %v950, %v989
  %v1021 = vmul.f32 %v951, %v989
  %v1022 = vmul.f32 %v952, %v989
  %v1023 = vmul.f32 %v953, %v989
  %v1024 = vmul.f32 %v954, %v989
  %v1025 = vmul.f32 %v955, %v989
  %v1026 = vmul.f32 %v956, %v989
  %v1027 = vmul.f32 %v957, %v989
  %v1028 = vmul.f32 %v958, %v989
  %v1029 = vmul.f32 %v959, %v989
  %v1030 = vmul.f32 %v960, %v989
  %v1031 = vmul.f32 %v961, %v989
  %v1032 = vmul.f32 %v962, %v989
  %v1033 = vmul.f32 %v963, %v989
  %v1034 = vmul.f32 %v964, %v989
  %v1035 = vmul.f32 %v965, %v989
  %v1036 = vmul.f32 %v966, %v989
  %v1037 = vmul.f32 %v967, %v989
  %v1038 = vmul.f32 %v968, %v989
  %v1039 = vmul.f32 %v969, %v989
  %v1040 = vmul.f32 %v970, %v989
  %v1041 = vmul.f32 %v971, %v989
  %v1042 = vmul.f32 %v972, %v989
  %v1043 = vmul.f32 %v973, %v989
  %v1044 = vmul.f32 %v974, %v989
  %v1045 = vmul.f32 %v975, %v989
  %v1046 = vmul.f32 %v976, %v989
  %v1047 = vmul.f32 %v977, %v989
  %v1048 = vmul.f32 %v978, %v989
  %v1049 = vmul.f32 %v979, %v989
  %v1050 = vmul.f32 %v980, %v989
  %v1051 = vmul.f32 %v981, %v989
  %v1052 = vmul.f32 %v982, %v989
  %v1053 = vmul.f32 %v983, %v989
  %v1054 = vmul.f32 %v984, %v989
  %v1056 = vlaneseq
  %v1057 = vshrl.u32 %v1056, 7
  %v1058 = vsub.s32 0, %v1057
  %v1059 = vrot.slane %v646, %v1058
  %v1061 = vadd.f32 %v991, %v1059
  %v1062 = vadd.f32 %v992, %v1059
  %v1063 = vadd.f32 %v993, %v1059
  %v1064 = vadd.f32 %v994, %v1059
  %v1065 = vadd.f32 %v995, %v1059
  %v1066 = vadd.f32 %v996, %v1059
  %v1067 = vadd.f32 %v997, %v1059
  %v1068 = vadd.f32 %v998, %v1059
  %v1069 = vadd.f32 %v999, %v1059
  %v1070 = vadd.f32 %v1000, %v1059
  %v1071 = vadd.f32 %v1001, %v1059
  %v1072 = vadd.f32 %v1002, %v1059
  %v1073 = vadd.f32 %v1003, %v1059
  %v1074 = vadd.f32 %v1004, %v1059
  %v1075 = vadd.f32 %v1005, %v1059
  %v1076 = vadd.f32 %v1006, %v1059
  %v1077 = vadd.f32 %v1007, %v1059
  %v1078 = vadd.f32 %v1008, %v1059
  %v1079 = vadd.f32 %v1009, %v1059
  %v1080 = vadd.f32 %v1010, %v1059
  %v1081 = vadd.f32 %v1011, %v1059
  %v1082 = vadd.f32 %v1012, %v1059
  %v1083 = vadd.f32 %v1013, %v1059
  %v1084 = vadd.f32 %v1014, %v1059
  %v1085 = vadd.f32 %v1015, %v1059
  %v1086 = vadd.f32 %v1016, %v1059
  %v1087 = vadd.f32 %v1017, %v1059
  %v1088 = vadd.f32 %v1018, %v1059
  %v1089 = vadd.f32 %v1019, %v1059
  %v1090 = vadd.f32 %v1020, %v1059
  %v1091 = vadd.f32 %v1021, %v1059
  %v1092 = vadd.f32 %v1022, %v1059
  %v1093 = vadd.f32 %v1023, %v1059
  %v1094 = vadd.f32 %v1024, %v1059
  %v1095 = vadd.f32 %v1025, %v1059
  %v1096 = vadd.f32 %v1026, %v1059
  %v1097 = vadd.f32 %v1027, %v1059
  %v1098 = vadd.f32 %v1028, %v1059
  %v1099 = vadd.f32 %v1029, %v1059
  %v1100 = vadd.f32 %v1030, %v1059
  %v1101 = vadd.f32 %v1031, %v1059
  %v1102 = vadd.f32 %v1032, %v1059
  %v1103 = vadd.f32 %v1033, %v1059
  %v1104 = vadd.f32 %v1034, %v1059
  %v1105 = vadd.f32 %v1035, %v1059
  %v1106 = vadd.f32 %v1036, %v1059
  %v1107 = vadd.f32 %v1037, %v1059
  %v1108 = vadd.f32 %v1038, %v1059
  %v1109 = vadd.f32 %v1039, %v1059
  %v1110 = vadd.f32 %v1040, %v1059
  %v1111 = vadd.f32 %v1041, %v1059
  %v1112 = vadd.f32 %v1042, %v1059
  %v1113 = vadd.f32 %v1043, %v1059
  %v1114 = vadd.f32 %v1044, %v1059
  %v1115 = vadd.f32 %v1045, %v1059
  %v1116 = vadd.f32 %v1046, %v1059
  %v1117 = vadd.f32 %v1047, %v1059
  %v1118 = vadd.f32 %v1048, %v1059
  %v1119 = vadd.f32 %v1049, %v1059
  %v1120 = vadd.f32 %v1050, %v1059
  %v1121 = vadd.f32 %v1051, %v1059
  %v1122 = vadd.f32 %v1052, %v1059
  %v1123 = vadd.f32 %v1053, %v1059
  %v1124 = vadd.f32 %v1054, %v1059
  %v1125 = vmax.f32 %v1061, 0.0
  %v1126 = vmax.f32 %v1062, 0.0
  %v1127 = vmax.f32 %v1063, 0.0
  %v1128 = vmax.f32 %v1064, 0.0
  %v1129 = vmax.f32 %v1065, 0.0
  %v1130 = vmax.f32 %v1066, 0.0
  %v1131 = vmax.f32 %v1067, 0.0
  %v1132 = vmax.f32 %v1068, 0.0
  %v1133 = vmax.f32 %v1069, 0.0
  %v1134 = vmax.f32 %v1070, 0.0
  %v1135 = vmax.f32 %v1071, 0.0
  %v1136 = vmax.f32 %v1072, 0.0
  %v1137 = vmax.f32 %v1073, 0.0
  %v1138 = vmax.f32 %v1074, 0.0
  %v1139 = vmax.f32 %v1075, 0.0
  %v1140 = vmax.f32 %v1076, 0.0
  %v1141 = vmax.f32 %v1077, 0.0
  %v1142 = vmax.f32 %v1078, 0.0
  %v1143 = vmax.f32 %v1079, 0.0
  %v1144 = vmax.f32 %v1080, 0.0
  %v1145 = vmax.f32 %v1081, 0.0
  %v1146 = vmax.f32 %v1082, 0.0
  %v1147 = vmax.f32 %v1083, 0.0
  %v1148 = vmax.f32 %v1084, 0.0
  %v1149 = vmax.f32 %v1085, 0.0
  %v1150 = vmax.f32 %v1086, 0.0
  %v1151 = vmax.f32 %v1087, 0.0
  %v1152 = vmax.f32 %v1088, 0.0
  %v1153 = vmax.f32 %v1089, 0.0
  %v1154 = vmax.f32 %v1090, 0.0
  %v1155 = vmax.f32 %v1091, 0.0
  %v1156 = vmax.f32 %v1092, 0.0
  %v1157 = vmax.f32 %v1093, 0.0
  %v1158 = vmax.f32 %v1094, 0.0
  %v1159 = vmax.f32 %v1095, 0.0
  %v1160 = vmax.f32 %v1096, 0.0
  %v1161 = vmax.f32 %v1097, 0.0
  %v1162 = vmax.f32 %v1098, 0.0
  %v1163 = vmax.f32 %v1099, 0.0
  %v1164 = vmax.f32 %v1100, 0.0
  %v1165 = vmax.f32 %v1101, 0.0
  %v1166 = vmax.f32 %v1102, 0.0
  %v1167 = vmax.f32 %v1103, 0.0
  %v1168 = vmax.f32 %v1104, 0.0
  %v1169 = vmax.f32 %v1105, 0.0
  %v1170 = vmax.f32 %v1106, 0.0
  %v1171 = vmax.f32 %v1107, 0.0
  %v1172 = vmax.f32 %v1108, 0.0
  %v1173 = vmax.f32 %v1109, 0.0
  %v1174 = vmax.f32 %v1110, 0.0
  %v1175 = vmax.f32 %v1111, 0.0
  %v1176 = vmax.f32 %v1112, 0.0
  %v1177 = vmax.f32 %v1113, 0.0
  %v1178 = vmax.f32 %v1114, 0.0
  %v1179 = vmax.f32 %v1115, 0.0
  %v1180 = vmax.f32 %v1116, 0.0
  %v1181 = vmax.f32 %v1117, 0.0
  %v1182 = vmax.f32 %v1118, 0.0
  %v1183 = vmax.f32 %v1119, 0.0
  %v1184 = vmax.f32 %v1120, 0.0
  %v1185 = vmax.f32 %v1121, 0.0
  %v1186 = vmax.f32 %v1122, 0.0
  %v1187 = vmax.f32 %v1123, 0.0
  %v1188 = vmax.f32 %v1124, 0.0
  %1189 = vst [vmem:[#allocation2] sm:$0xf] 0
  %1190 = vst [vmem:[#allocation2 + $0x4] sm:$0xf] 0
  %1191 = vst [vmem:[#allocation2 + $0x8] sm:$0x1] 0
  %1192 = vst [vmem:[#allocation2 + $0xd8] sm:$0xf] 0
  %1193 = vst [vmem:[#allocation2 + $0xdc] sm:$0xf] 0
  %1194 = vst [vmem:[#allocation2 + $0xe0] sm:$0x1] 0
  %s1195 = scalar_lea.vmem [#allocation2], 204
  %1196 = vst [vmem:[%s1195] sm:$0xf] 0
  %1197 = vst [vmem:[%s1195 + $0x4] sm:$0xf] 0
  %1198 = vst [vmem:[%s1195 + $0x8] sm:$0x1] 0
  %1199 = vst [vmem:[%s1195 + $0xd8] sm:$0xf] 0
  %1200 = vst [vmem:[%s1195 + $0xdc] sm:$0xf] 0
  %1201 = vst [vmem:[%s1195 + $0xe0] sm:$0x1] 0
  %vm1202 = vcmask 1040384
  %vm1203 = vsmask.f32 256
  %vm1204 = vmand %vm1202, %vm1203
  %v1205 = vld [vmem:[#allocation2] sm:$0x1]
  %v1206 = vsel %vm1204, 0, %v1205
  %1207 = vst [vmem:[#allocation2] sm:$0x1] %v1206
  %v1208 = vld [vmem:[#allocation2 + $0xc] sm:$0x1]
  %v1209 = vsel %vm1204, 0, %v1208
  %1210 = vst [vmem:[#allocation2 + $0xc] sm:$0x1] %v1209
  %v1211 = vld [vmem:[#allocation2 + $0x18] sm:$0x1]
  %v1212 = vsel %vm1204, 0, %v1211
  %1213 = vst [vmem:[#allocation2 + $0x18] sm:$0x1] %v1212
  %v1214 = vld [vmem:[#allocation2 + $0x24] sm:$0x1]
  %v1215 = vsel %vm1204, 0, %v1214
  %1216 = vst [vmem:[#allocation2 + $0x24] sm:$0x1] %v1215
  %v1217 = vld [vmem:[#allocation2 + $0x30] sm:$0x1]
  %v1218 = vsel %vm1204, 0, %v1217
  %1219 = vst [vmem:[#allocation2 + $0x30] sm:$0x1] %v1218
  %v1220 = vld [vmem:[#allocation2 + $0x3c] sm:$0x1]
  %v1221 = vsel %vm1204, 0, %v1220
  %1222 = vst [vmem:[#allocation2 + $0x3c] sm:$0x1] %v1221
  %v1223 = vld [vmem:[#allocation2 + $0x48] sm:$0x1]
  %v1224 = vsel %vm1204, 0, %v1223
  %1225 = vst [vmem:[#allocation2 + $0x48] sm:$0x1] %v1224
  %v1226 = vld [vmem:[#allocation2 + $0x54] sm:$0x1]
  %v1227 = vsel %vm1204, 0, %v1226
  %1228 = vst [vmem:[#allocation2 + $0x54] sm:$0x1] %v1227
  %v1229 = vld [vmem:[#allocation2 + $0x60] sm:$0x1]
  %v1230 = vsel %vm1204, 0, %v1229
  %1231 = vst [vmem:[#allocation2 + $0x60] sm:$0x1] %v1230
  %v1232 = vld [vmem:[#allocation2 + $0x6c] sm:$0x1]
  %v1233 = vsel %vm1204, 0, %v1232
  %1234 = vst [vmem:[#allocation2 + $0x6c] sm:$0x1] %v1233
  %v1235 = vld [vmem:[#allocation2 + $0x78] sm:$0x1]
  %v1236 = vsel %vm1204, 0, %v1235
  %1237 = vst [vmem:[#allocation2 + $0x78] sm:$0x1] %v1236
  %v1238 = vld [vmem:[#allocation2 + $0x84] sm:$0x1]
  %v1239 = vsel %vm1204, 0, %v1238
  %1240 = vst [vmem:[#allocation2 + $0x84] sm:$0x1] %v1239
  %v1241 = vld [vmem:[#allocation2 + $0x90] sm:$0x1]
  %v1242 = vsel %vm1204, 0, %v1241
  %1243 = vst [vmem:[#allocation2 + $0x90] sm:$0x1] %v1242
  %v1244 = vld [vmem:[#allocation2 + $0x9c] sm:$0x1]
  %v1245 = vsel %vm1204, 0, %v1244
  %1246 = vst [vmem:[#allocation2 + $0x9c] sm:$0x1] %v1245
  %v1247 = vld [vmem:[#allocation2 + $0xa8] sm:$0x1]
  %v1248 = vsel %vm1204, 0, %v1247
  %1249 = vst [vmem:[#allocation2 + $0xa8] sm:$0x1] %v1248
  %v1250 = vld [vmem:[#allocation2 + $0xb4] sm:$0x1]
  %v1251 = vsel %vm1204, 0, %v1250
  %1252 = vst [vmem:[#allocation2 + $0xb4] sm:$0x1] %v1251
  %v1253 = vld [vmem:[#allocation2 + $0xc0] sm:$0x1]
  %v1254 = vsel %vm1204, 0, %v1253
  %1255 = vst [vmem:[#allocation2 + $0xc0] sm:$0x1] %v1254
  %v1256 = vld [vmem:[#allocation2 + $0xcc] sm:$0x1]
  %v1257 = vsel %vm1204, 0, %v1256
  %1258 = vst [vmem:[#allocation2 + $0xcc] sm:$0x1] %v1257
  %v1259 = vld [vmem:[#allocation2 + $0xd8] sm:$0x1]
  %v1260 = vsel %vm1204, 0, %v1259
  %1261 = vst [vmem:[#allocation2 + $0xd8] sm:$0x1] %v1260
  %v1262 = vld [vmem:[#allocation2 + $0xe4] sm:$0x1]
  %v1263 = vsel %vm1204, 0, %v1262
  %1264 = vst [vmem:[#allocation2 + $0xe4] sm:$0x1] %v1263
  %v1265 = vld [vmem:[#allocation2 + $0xf0] sm:$0x1]
  %v1266 = vsel %vm1204, 0, %v1265
  %1267 = vst [vmem:[#allocation2 + $0xf0] sm:$0x1] %v1266
  %v1268 = vld [vmem:[#allocation2 + $0xfc] sm:$0x1]
  %v1269 = vsel %vm1204, 0, %v1268
  %1270 = vst [vmem:[#allocation2 + $0xfc] sm:$0x1] %v1269
  %v1271 = vld [vmem:[#allocation2 + $0x108] sm:$0x1]
  %v1272 = vsel %vm1204, 0, %v1271
  %1273 = vst [vmem:[#allocation2 + $0x108] sm:$0x1] %v1272
  %v1274 = vld [vmem:[#allocation2 + $0x114] sm:$0x1]
  %v1275 = vsel %vm1204, 0, %v1274
  %1276 = vst [vmem:[#allocation2 + $0x114] sm:$0x1] %v1275
  %v1277 = vld [vmem:[#allocation2 + $0x120] sm:$0x1]
  %v1278 = vsel %vm1204, 0, %v1277
  %1279 = vst [vmem:[#allocation2 + $0x120] sm:$0x1] %v1278
  %v1280 = vld [vmem:[#allocation2 + $0x12c] sm:$0x1]
  %v1281 = vsel %vm1204, 0, %v1280
  %1282 = vst [vmem:[#allocation2 + $0x12c] sm:$0x1] %v1281
  %v1283 = vld [vmem:[#allocation2 + $0x138] sm:$0x1]
  %v1284 = vsel %vm1204, 0, %v1283
  %1285 = vst [vmem:[#allocation2 + $0x138] sm:$0x1] %v1284
  %v1286 = vld [vmem:[#allocation2 + $0x144] sm:$0x1]
  %v1287 = vsel %vm1204, 0, %v1286
  %1288 = vst [vmem:[#allocation2 + $0x144] sm:$0x1] %v1287
  %v1289 = vld [vmem:[#allocation2 + $0x150] sm:$0x1]
  %v1290 = vsel %vm1204, 0, %v1289
  %1291 = vst [vmem:[#allocation2 + $0x150] sm:$0x1] %v1290
  %v1292 = vld [vmem:[#allocation2 + $0x15c] sm:$0x1]
  %v1293 = vsel %vm1204, 0, %v1292
  %1294 = vst [vmem:[#allocation2 + $0x15c] sm:$0x1] %v1293
  %v1295 = vld [vmem:[#allocation2 + $0x168] sm:$0x1]
  %v1296 = vsel %vm1204, 0, %v1295
  %1297 = vst [vmem:[#allocation2 + $0x168] sm:$0x1] %v1296
  %v1298 = vld [vmem:[#allocation2 + $0x174] sm:$0x1]
  %v1299 = vsel %vm1204, 0, %v1298
  %1300 = vst [vmem:[#allocation2 + $0x174] sm:$0x1] %v1299
  %v1301 = vld [vmem:[#allocation2 + $0x180] sm:$0x1]
  %v1302 = vsel %vm1204, 0, %v1301
  %1303 = vst [vmem:[#allocation2 + $0x180] sm:$0x1] %v1302
  %v1304 = vld [vmem:[#allocation2 + $0x18c] sm:$0x1]
  %v1305 = vsel %vm1204, 0, %v1304
  %1306 = vst [vmem:[#allocation2 + $0x18c] sm:$0x1] %v1305
  %v1307 = vld [vmem:[#allocation2 + $0x198] sm:$0x1]
  %v1308 = vsel %vm1204, 0, %v1307
  %1309 = vst [vmem:[#allocation2 + $0x198] sm:$0x1] %v1308
  %v1310 = vld [vmem:[#allocation2 + $0x1a4] sm:$0x1]
  %v1311 = vsel %vm1204, 0, %v1310
  %1312 = vst [vmem:[#allocation2 + $0x1a4] sm:$0x1] %v1311
  %vm1313 = vsmask.f32 7938
  %vm1314 = vmand %vm1202, %vm1313
  %v1315 = vld [vmem:[#allocation2 + $0x8] sm:$0x1]
  %v1316 = vsel %vm1314, 0, %v1315
  %1317 = vst [vmem:[#allocation2 + $0x8] sm:$0x1] %v1316
  %v1318 = vld [vmem:[#allocation2 + $0x14] sm:$0x1]
  %v1319 = vsel %vm1314, 0, %v1318
  %1320 = vst [vmem:[#allocation2 + $0x14] sm:$0x1] %v1319
  %v1321 = vld [vmem:[#allocation2 + $0x20] sm:$0x1]
  %v1322 = vsel %vm1314, 0, %v1321
  %1323 = vst [vmem:[#allocation2 + $0x20] sm:$0x1] %v1322
  %v1324 = vld [vmem:[#allocation2 + $0x2c] sm:$0x1]
  %v1325 = vsel %vm1314, 0, %v1324
  %1326 = vst [vmem:[#allocation2 + $0x2c] sm:$0x1] %v1325
  %v1327 = vld [vmem:[#allocation2 + $0x38] sm:$0x1]
  %v1328 = vsel %vm1314, 0, %v1327
  %1329 = vst [vmem:[#allocation2 + $0x38] sm:$0x1] %v1328
  %v1330 = vld [vmem:[#allocation2 + $0x44] sm:$0x1]
  %v1331 = vsel %vm1314, 0, %v1330
  %1332 = vst [vmem:[#allocation2 + $0x44] sm:$0x1] %v1331
  %v1333 = vld [vmem:[#allocation2 + $0x50] sm:$0x1]
  %v1334 = vsel %vm1314, 0, %v1333
  %1335 = vst [vmem:[#allocation2 + $0x50] sm:$0x1] %v1334
  %v1336 = vld [vmem:[#allocation2 + $0x5c] sm:$0x1]
  %v1337 = vsel %vm1314, 0, %v1336
  %1338 = vst [vmem:[#allocation2 + $0x5c] sm:$0x1] %v1337
  %v1339 = vld [vmem:[#allocation2 + $0x68] sm:$0x1]
  %v1340 = vsel %vm1314, 0, %v1339
  %1341 = vst [vmem:[#allocation2 + $0x68] sm:$0x1] %v1340
  %v1342 = vld [vmem:[#allocation2 + $0x74] sm:$0x1]
  %v1343 = vsel %vm1314, 0, %v1342
  %1344 = vst [vmem:[#allocation2 + $0x74] sm:$0x1] %v1343
  %v1345 = vld [vmem:[#allocation2 + $0x80] sm:$0x1]
  %v1346 = vsel %vm1314, 0, %v1345
  %1347 = vst [vmem:[#allocation2 + $0x80] sm:$0x1] %v1346
  %v1348 = vld [vmem:[#allocation2 + $0x8c] sm:$0x1]
  %v1349 = vsel %vm1314, 0, %v1348
  %1350 = vst [vmem:[#allocation2 + $0x8c] sm:$0x1] %v1349
  %v1351 = vld [vmem:[#allocation2 + $0x98] sm:$0x1]
  %v1352 = vsel %vm1314, 0, %v1351
  %1353 = vst [vmem:[#allocation2 + $0x98] sm:$0x1] %v1352
  %v1354 = vld [vmem:[#allocation2 + $0xa4] sm:$0x1]
  %v1355 = vsel %vm1314, 0, %v1354
  %1356 = vst [vmem:[#allocation2 + $0xa4] sm:$0x1] %v1355
  %v1357 = vld [vmem:[#allocation2 + $0xb0] sm:$0x1]
  %v1358 = vsel %vm1314, 0, %v1357
  %1359 = vst [vmem:[#allocation2 + $0xb0] sm:$0x1] %v1358
  %v1360 = vld [vmem:[#allocation2 + $0xbc] sm:$0x1]
  %v1361 = vsel %vm1314, 0, %v1360
  %1362 = vst [vmem:[#allocation2 + $0xbc] sm:$0x1] %v1361
  %v1363 = vld [vmem:[#allocation2 + $0xc8] sm:$0x1]
  %v1364 = vsel %vm1314, 0, %v1363
  %1365 = vst [vmem:[#allocation2 + $0xc8] sm:$0x1] %v1364
  %v1366 = vld [vmem:[#allocation2 + $0xd4] sm:$0x1]
  %v1367 = vsel %vm1314, 0, %v1366
  %1368 = vst [vmem:[#allocation2 + $0xd4] sm:$0x1] %v1367
  %v1369 = vld [vmem:[#allocation2 + $0xe0] sm:$0x1]
  %v1370 = vsel %vm1314, 0, %v1369
  %1371 = vst [vmem:[#allocation2 + $0xe0] sm:$0x1] %v1370
  %v1372 = vld [vmem:[#allocation2 + $0xec] sm:$0x1]
  %v1373 = vsel %vm1314, 0, %v1372
  %1374 = vst [vmem:[#allocation2 + $0xec] sm:$0x1] %v1373
  %v1375 = vld [vmem:[#allocation2 + $0xf8] sm:$0x1]
  %v1376 = vsel %vm1314, 0, %v1375
  %1377 = vst [vmem:[#allocation2 + $0xf8] sm:$0x1] %v1376
  %v1378 = vld [vmem:[#allocation2 + $0x104] sm:$0x1]
  %v1379 = vsel %vm1314, 0, %v1378
  %1380 = vst [vmem:[#allocation2 + $0x104] sm:$0x1] %v1379
  %v1381 = vld [vmem:[#allocation2 + $0x110] sm:$0x1]
  %v1382 = vsel %vm1314, 0, %v1381
  %1383 = vst [vmem:[#allocation2 + $0x110] sm:$0x1] %v1382
  %v1384 = vld [vmem:[#allocation2 + $0x11c] sm:$0x1]
  %v1385 = vsel %vm1314, 0, %v1384
  %1386 = vst [vmem:[#allocation2 + $0x11c] sm:$0x1] %v1385
  %v1387 = vld [vmem:[#allocation2 + $0x128] sm:$0x1]
  %v1388 = vsel %vm1314, 0, %v1387
  %1389 = vst [vmem:[#allocation2 + $0x128] sm:$0x1] %v1388
  %v1390 = vld [vmem:[#allocation2 + $0x134] sm:$0x1]
  %v1391 = vsel %vm1314, 0, %v1390
  %1392 = vst [vmem:[#allocation2 + $0x134] sm:$0x1] %v1391
  %v1393 = vld [vmem:[#allocation2 + $0x140] sm:$0x1]
  %v1394 = vsel %vm1314, 0, %v1393
  %1395 = vst [vmem:[#allocation2 + $0x140] sm:$0x1] %v1394
  %v1396 = vld [vmem:[#allocation2 + $0x14c] sm:$0x1]
  %v1397 = vsel %vm1314, 0, %v1396
  %1398 = vst [vmem:[#allocation2 + $0x14c] sm:$0x1] %v1397
  %v1399 = vld [vmem:[#allocation2 + $0x158] sm:$0x1]
  %v1400 = vsel %vm1314, 0, %v1399
  %1401 = vst [vmem:[#allocation2 + $0x158] sm:$0x1] %v1400
  %v1402 = vld [vmem:[#allocation2 + $0x164] sm:$0x1]
  %v1403 = vsel %vm1314, 0, %v1402
  %1404 = vst [vmem:[#allocation2 + $0x164] sm:$0x1] %v1403
  %v1405 = vld [vmem:[#allocation2 + $0x170] sm:$0x1]
  %v1406 = vsel %vm1314, 0, %v1405
  %1407 = vst [vmem:[#allocation2 + $0x170] sm:$0x1] %v1406
  %v1408 = vld [vmem:[#allocation2 + $0x17c] sm:$0x1]
  %v1409 = vsel %vm1314, 0, %v1408
  %1410 = vst [vmem:[#allocation2 + $0x17c] sm:$0x1] %v1409
  %v1411 = vld [vmem:[#allocation2 + $0x188] sm:$0x1]
  %v1412 = vsel %vm1314, 0, %v1411
  %1413 = vst [vmem:[#allocation2 + $0x188] sm:$0x1] %v1412
  %v1414 = vld [vmem:[#allocation2 + $0x194] sm:$0x1]
  %v1415 = vsel %vm1314, 0, %v1414
  %1416 = vst [vmem:[#allocation2 + $0x194] sm:$0x1] %v1415
  %v1417 = vld [vmem:[#allocation2 + $0x1a0] sm:$0x1]
  %v1418 = vsel %vm1314, 0, %v1417
  %1419 = vst [vmem:[#allocation2 + $0x1a0] sm:$0x1] %v1418
  %v1420 = vld [vmem:[#allocation2 + $0x1ac] sm:$0x1]
  %v1421 = vsel %vm1314, 0, %v1420
  %1422 = vst [vmem:[#allocation2 + $0x1ac] sm:$0x1] %v1421
  %v1423 = vpack.c.bf16 %v1126, %v1125
  %v1424 = vpack.c.bf16 %v1128, %v1127
  %v1425 = vpack.c.bf16 %v1130, %v1129
  %v1426 = vpack.c.bf16 %v1132, %v1131
  %v1427 = vpack.c.bf16 %v1134, %v1133
  %v1428 = vpack.c.bf16 %v1136, %v1135
  %v1429 = vpack.c.bf16 %v1138, %v1137
  %v1430 = vpack.c.bf16 %v1140, %v1139
  %v1431 = vpack.c.bf16 %v1142, %v1141
  %v1432 = vpack.c.bf16 %v1144, %v1143
  %v1433 = vpack.c.bf16 %v1146, %v1145
  %v1434 = vpack.c.bf16 %v1148, %v1147
  %v1435 = vpack.c.bf16 %v1150, %v1149
  %v1436 = vpack.c.bf16 %v1152, %v1151
  %v1437 = vpack.c.bf16 %v1154, %v1153
  %v1438 = vpack.c.bf16 %v1156, %v1155
  %v1439 = vpack.c.bf16 %v1158, %v1157
  %v1440 = vpack.c.bf16 %v1160, %v1159
  %v1441 = vpack.c.bf16 %v1162, %v1161
  %v1442 = vpack.c.bf16 %v1164, %v1163
  %v1443 = vpack.c.bf16 %v1166, %v1165
  %v1444 = vpack.c.bf16 %v1168, %v1167
  %v1445 = vpack.c.bf16 %v1170, %v1169
  %v1446 = vpack.c.bf16 %v1172, %v1171
  %v1447 = vpack.c.bf16 %v1174, %v1173
  %v1448 = vpack.c.bf16 %v1176, %v1175
  %v1449 = vpack.c.bf16 %v1178, %v1177
  %v1450 = vpack.c.bf16 %v1180, %v1179
  %v1451 = vpack.c.bf16 %v1182, %v1181
  %v1452 = vpack.c.bf16 %v1184, %v1183
  %v1453 = vpack.c.bf16 %v1186, %v1185
  %v1454 = vpack.c.bf16 %v1188, %v1187
  %v1487 = vunpack.c.l.b16 %v1423
  %v1488 = vunpack.c.h.b16 %v1423
  %v1489 = vunpack.c.l.b16 %v1424
  %v1490 = vunpack.c.h.b16 %v1424
  %v1491 = vunpack.c.l.b16 %v1425
  %v1492 = vunpack.c.h.b16 %v1425
  %v1493 = vunpack.c.l.b16 %v1426
  %v1494 = vunpack.c.h.b16 %v1426
  %v1495 = vunpack.c.l.b16 %v1427
  %v1496 = vunpack.c.h.b16 %v1427
  %v1497 = vunpack.c.l.b16 %v1428
  %v1498 = vunpack.c.h.b16 %v1428
  %v1499 = vunpack.c.l.b16 %v1429
  %v1500 = vunpack.c.h.b16 %v1429
  %v1501 = vunpack.c.l.b16 %v1430
  %v1502 = vunpack.c.h.b16 %v1430
  %v1503 = vunpack.c.l.b16 %v1431
  %v1504 = vunpack.c.h.b16 %v1431
  %v1505 = vunpack.c.l.b16 %v1432
  %v1506 = vunpack.c.h.b16 %v1432
  %v1507 = vunpack.c.l.b16 %v1433
  %v1508 = vunpack.c.h.b16 %v1433
  %v1509 = vunpack.c.l.b16 %v1434
  %v1510 = vunpack.c.h.b16 %v1434
  %v1511 = vunpack.c.l.b16 %v1435
  %v1512 = vunpack.c.h.b16 %v1435
  %v1513 = vunpack.c.l.b16 %v1436
  %v1514 = vunpack.c.h.b16 %v1436
  %v1515 = vunpack.c.l.b16 %v1437
  %v1516 = vunpack.c.h.b16 %v1437
  %v1517 = vunpack.c.l.b16 %v1438
  %v1518 = vunpack.c.h.b16 %v1438
  %v1519 = vunpack.c.l.b16 %v1439
  %v1520 = vunpack.c.h.b16 %v1439
  %v1521 = vunpack.c.l.b16 %v1440
  %v1522 = vunpack.c.h.b16 %v1440
  %v1523 = vunpack.c.l.b16 %v1441
  %v1524 = vunpack.c.h.b16 %v1441
  %v1525 = vunpack.c.l.b16 %v1442
  %v1526 = vunpack.c.h.b16 %v1442
  %v1527 = vunpack.c.l.b16 %v1443
  %v1528 = vunpack.c.h.b16 %v1443
  %v1529 = vunpack.c.l.b16 %v1444
  %v1530 = vunpack.c.h.b16 %v1444
  %v1531 = vunpack.c.l.b16 %v1445
  %v1532 = vunpack.c.h.b16 %v1445
  %v1533 = vunpack.c.l.b16 %v1446
  %v1534 = vunpack.c.h.b16 %v1446
  %v1535 = vunpack.c.l.b16 %v1447
  %v1536 = vunpack.c.h.b16 %v1447
  %v1537 = vunpack.c.l.b16 %v1448
  %v1538 = vunpack.c.h.b16 %v1448
  %v1539 = vunpack.c.l.b16 %v1449
  %v1540 = vunpack.c.h.b16 %v1449
  %v1541 = vunpack.c.l.b16 %v1450
  %v1542 = vunpack.c.h.b16 %v1450
  %v1543 = vunpack.c.l.b16 %v1451
  %v1544 = vunpack.c.h.b16 %v1451
  %v1545 = vunpack.c.l.b16 %v1452
  %v1546 = vunpack.c.h.b16 %v1452
  %v1547 = vunpack.c.l.b16 %v1453
  %v1548 = vunpack.c.h.b16 %v1453
  %v1549 = vunpack.c.l.b16 %v1454
  %v1550 = vunpack.c.h.b16 %v1454
  %v1551 = vpack.c.b16 %v1487, %v1487
  %v1552 = vpack.c.b16 %v1488, %v1488
  %v1553 = vpack.c.b16 %v1489, %v1489
  %v1554 = vpack.c.b16 %v1490, %v1490
  %v1555 = vpack.c.b16 %v1491, %v1491
  %v1556 = vpack.c.b16 %v1492, %v1492
  %v1557 = vpack.c.b16 %v1493, %v1493
  %v1558 = vpack.c.b16 %v1494, %v1494
  %v1559 = vpack.c.b16 %v1495, %v1495
  %v1560 = vpack.c.b16 %v1496, %v1496
  %v1561 = vpack.c.b16 %v1497, %v1497
  %v1562 = vpack.c.b16 %v1498, %v1498
  %v1563 = vpack.c.b16 %v1499, %v1499
  %v1564 = vpack.c.b16 %v1500, %v1500
  %v1565 = vpack.c.b16 %v1501, %v1501
  %v1566 = vpack.c.b16 %v1502, %v1502
  %v1567 = vpack.c.b16 %v1503, %v1503
  %v1568 = vpack.c.b16 %v1504, %v1504
  %v1569 = vpack.c.b16 %v1505, %v1505
  %v1570 = vpack.c.b16 %v1506, %v1506
  %v1571 = vpack.c.b16 %v1507, %v1507
  %v1572 = vpack.c.b16 %v1508, %v1508
  %v1573 = vpack.c.b16 %v1509, %v1509
  %v1574 = vpack.c.b16 %v1510, %v1510
  %v1575 = vpack.c.b16 %v1511, %v1511
  %v1576 = vpack.c.b16 %v1512, %v1512
  %v1577 = vpack.c.b16 %v1513, %v1513
  %v1578 = vpack.c.b16 %v1514, %v1514
  %v1579 = vpack.c.b16 %v1515, %v1515
  %v1580 = vpack.c.b16 %v1516, %v1516
  %v1581 = vpack.c.b16 %v1517, %v1517
  %v1582 = vpack.c.b16 %v1518, %v1518
  %v1583 = vpack.c.b16 %v1519, %v1519
  %v1584 = vpack.c.b16 %v1520, %v1520
  %v1585 = vpack.c.b16 %v1521, %v1521
  %v1586 = vpack.c.b16 %v1522, %v1522
  %v1587 = vpack.c.b16 %v1523, %v1523
  %v1588 = vpack.c.b16 %v1524, %v1524
  %v1589 = vpack.c.b16 %v1525, %v1525
  %v1590 = vpack.c.b16 %v1526, %v1526
  %v1591 = vpack.c.b16 %v1527, %v1527
  %v1592 = vpack.c.b16 %v1528, %v1528
  %v1593 = vpack.c.b16 %v1529, %v1529
  %v1594 = vpack.c.b16 %v1530, %v1530
  %v1595 = vpack.c.b16 %v1531, %v1531
  %v1596 = vpack.c.b16 %v1532, %v1532
  %v1597 = vpack.c.b16 %v1533, %v1533
  %v1598 = vpack.c.b16 %v1534, %v1534
  %v1599 = vpack.c.b16 %v1535, %v1535
  %v1600 = vpack.c.b16 %v1536, %v1536
  %v1601 = vpack.c.b16 %v1537, %v1537
  %v1602 = vpack.c.b16 %v1538, %v1538
  %v1603 = vpack.c.b16 %v1539, %v1539
  %v1604 = vpack.c.b16 %v1540, %v1540
  %v1605 = vpack.c.b16 %v1541, %v1541
  %v1606 = vpack.c.b16 %v1542, %v1542
  %v1607 = vpack.c.b16 %v1543, %v1543
  %v1608 = vpack.c.b16 %v1544, %v1544
  %v1609 = vpack.c.b16 %v1545, %v1545
  %v1610 = vpack.c.b16 %v1546, %v1546
  %v1611 = vpack.c.b16 %v1547, %v1547
  %v1612 = vpack.c.b16 %v1548, %v1548
  %v1613 = vpack.c.b16 %v1549, %v1549
  %v1614 = vpack.c.b16 %v1550, %v1550
  %vm1615 = vsmask.f32 4368
  %vm1616 = vmor %vm1203, %vm1615
  %v1618 = vshrl.u32 %v1551, 16
  %v1620 = vrot.slane %v1618, 7
  %v1621 = vshll.u32 %v1551, 16
  %v1623 = vor.u32 %v1620, %v1621
  %v1624 = vrot.slane %v1620, 4
  %v1626 = vshrl.u32 %v1552, 16
  %v1628 = vrot.slane %v1626, 7
  %v1629 = vshll.u32 %v1552, 16
  %v1631 = vor.u32 %v1628, %v1629
  %v1632 = vsel %vm1616, %v1624, %v1631
  %v1633 = vrot.slane %v1628, 4
  %v1635 = vshrl.u32 %v1553, 16
  %v1637 = vrot.slane %v1635, 7
  %v1638 = vshll.u32 %v1553, 16
  %v1640 = vor.u32 %v1637, %v1638
  %v1641 = vrot.slane %v1637, 4
  %v1643 = vshrl.u32 %v1554, 16
  %v1645 = vrot.slane %v1643, 7
  %v1646 = vshll.u32 %v1554, 16
  %v1648 = vor.u32 %v1645, %v1646
  %v1649 = vsel %vm1616, %v1641, %v1648
  %v1650 = vrot.slane %v1645, 4
  %v1652 = vshrl.u32 %v1555, 16
  %v1654 = vrot.slane %v1652, 7
  %v1655 = vshll.u32 %v1555, 16
  %v1657 = vor.u32 %v1654, %v1655
  %v1658 = vrot.slane %v1654, 4
  %v1660 = vshrl.u32 %v1556, 16
  %v1662 = vrot.slane %v1660, 7
  %v1663 = vshll.u32 %v1556, 16
  %v1665 = vor.u32 %v1662, %v1663
  %v1666 = vsel %vm1616, %v1658, %v1665
  %v1667 = vrot.slane %v1662, 4
  %v1669 = vshrl.u32 %v1557, 16
  %v1671 = vrot.slane %v1669, 7
  %v1672 = vshll.u32 %v1557, 16
  %v1674 = vor.u32 %v1671, %v1672
  %v1675 = vrot.slane %v1671, 4
  %v1677 = vshrl.u32 %v1558, 16
  %v1679 = vrot.slane %v1677, 7
  %v1680 = vshll.u32 %v1558, 16
  %v1682 = vor.u32 %v1679, %v1680
  %v1683 = vsel %vm1616, %v1675, %v1682
  %v1684 = vrot.slane %v1679, 4
  %v1686 = vshrl.u32 %v1559, 16
  %v1688 = vrot.slane %v1686, 7
  %v1689 = vshll.u32 %v1559, 16
  %v1691 = vor.u32 %v1688, %v1689
  %v1692 = vrot.slane %v1688, 4
  %v1694 = vshrl.u32 %v1560, 16
  %v1696 = vrot.slane %v1694, 7
  %v1697 = vshll.u32 %v1560, 16
  %v1699 = vor.u32 %v1696, %v1697
  %v1700 = vsel %vm1616, %v1692, %v1699
  %v1701 = vrot.slane %v1696, 4
  %v1703 = vshrl.u32 %v1561, 16
  %v1705 = vrot.slane %v1703, 7
  %v1706 = vshll.u32 %v1561, 16
  %v1708 = vor.u32 %v1705, %v1706
  %v1709 = vrot.slane %v1705, 4
  %v1711 = vshrl.u32 %v1562, 16
  %v1713 = vrot.slane %v1711, 7
  %v1714 = vshll.u32 %v1562, 16
  %v1716 = vor.u32 %v1713, %v1714
  %v1717 = vsel %vm1616, %v1709, %v1716
  %v1718 = vrot.slane %v1713, 4
  %v1720 = vshrl.u32 %v1563, 16
  %v1722 = vrot.slane %v1720, 7
  %v1723 = vshll.u32 %v1563, 16
  %v1725 = vor.u32 %v1722, %v1723
  %v1726 = vrot.slane %v1722, 4
  %v1728 = vshrl.u32 %v1564, 16
  %v1730 = vrot.slane %v1728, 7
  %v1731 = vshll.u32 %v1564, 16
  %v1733 = vor.u32 %v1730, %v1731
  %v1734 = vsel %vm1616, %v1726, %v1733
  %v1735 = vrot.slane %v1730, 4
  %v1737 = vshrl.u32 %v1565, 16
  %v1739 = vrot.slane %v1737, 7
  %v1740 = vshll.u32 %v1565, 16
  %v1742 = vor.u32 %v1739, %v1740
  %v1743 = vrot.slane %v1739, 4
  %v1745 = vshrl.u32 %v1566, 16
  %v1747 = vrot.slane %v1745, 7
  %v1748 = vshll.u32 %v1566, 16
  %v1750 = vor.u32 %v1747, %v1748
  %v1751 = vsel %vm1616, %v1743, %v1750
  %v1752 = vrot.slane %v1747, 4
  %v1754 = vshrl.u32 %v1567, 16
  %v1756 = vrot.slane %v1754, 7
  %v1757 = vshll.u32 %v1567, 16
  %v1759 = vor.u32 %v1756, %v1757
  %v1760 = vrot.slane %v1756, 4
  %v1762 = vshrl.u32 %v1568, 16
  %v1764 = vrot.slane %v1762, 7
  %v1765 = vshll.u32 %v1568, 16
  %v1767 = vor.u32 %v1764, %v1765
  %v1768 = vsel %vm1616, %v1760, %v1767
  %v1769 = vrot.slane %v1764, 4
  %v1771 = vshrl.u32 %v1569, 16
  %v1773 = vrot.slane %v1771, 7
  %v1774 = vshll.u32 %v1569, 16
  %v1776 = vor.u32 %v1773, %v1774
  %v1777 = vrot.slane %v1773, 4
  %v1779 = vshrl.u32 %v1570, 16
  %v1781 = vrot.slane %v1779, 7
  %v1782 = vshll.u32 %v1570, 16
  %v1784 = vor.u32 %v1781, %v1782
  %v1785 = vsel %vm1616, %v1777, %v1784
  %v1786 = vrot.slane %v1781, 4
  %v1788 = vshrl.u32 %v1571, 16
  %v1790 = vrot.slane %v1788, 7
  %v1791 = vshll.u32 %v1571, 16
  %v1793 = vor.u32 %v1790, %v1791
  %v1794 = vrot.slane %v1790, 4
  %v1796 = vshrl.u32 %v1572, 16
  %v1798 = vrot.slane %v1796, 7
  %v1799 = vshll.u32 %v1572, 16
  %v1801 = vor.u32 %v1798, %v1799
  %v1802 = vsel %vm1616, %v1794, %v1801
  %v1803 = vrot.slane %v1798, 4
  %v1805 = vshrl.u32 %v1573, 16
  %v1807 = vrot.slane %v1805, 7
  %v1808 = vshll.u32 %v1573, 16
  %v1810 = vor.u32 %v1807, %v1808
  %v1811 = vrot.slane %v1807, 4
  %v1813 = vshrl.u32 %v1574, 16
  %v1815 = vrot.slane %v1813, 7
  %v1816 = vshll.u32 %v1574, 16
  %v1818 = vor.u32 %v1815, %v1816
  %v1819 = vsel %vm1616, %v1811, %v1818
  %v1820 = vrot.slane %v1815, 4
  %v1822 = vshrl.u32 %v1575, 16
  %v1824 = vrot.slane %v1822, 7
  %v1825 = vshll.u32 %v1575, 16
  %v1827 = vor.u32 %v1824, %v1825
  %v1828 = vrot.slane %v1824, 4
  %v1830 = vshrl.u32 %v1576, 16
  %v1832 = vrot.slane %v1830, 7
  %v1833 = vshll.u32 %v1576, 16
  %v1835 = vor.u32 %v1832, %v1833
  %v1836 = vsel %vm1616, %v1828, %v1835
  %v1837 = vrot.slane %v1832, 4
  %v1839 = vshrl.u32 %v1577, 16
  %v1841 = vrot.slane %v1839, 7
  %v1842 = vshll.u32 %v1577, 16
  %v1844 = vor.u32 %v1841, %v1842
  %v1845 = vrot.slane %v1841, 4
  %v1847 = vshrl.u32 %v1578, 16
  %v1849 = vrot.slane %v1847, 7
  %v1850 = vshll.u32 %v1578, 16
  %v1852 = vor.u32 %v1849, %v1850
  %v1853 = vsel %vm1616, %v1845, %v1852
  %v1854 = vrot.slane %v1849, 4
  %v1856 = vshrl.u32 %v1579, 16
  %v1858 = vrot.slane %v1856, 7
  %v1859 = vshll.u32 %v1579, 16
  %v1861 = vor.u32 %v1858, %v1859
  %v1862 = vrot.slane %v1858, 4
  %v1864 = vshrl.u32 %v1580, 16
  %v1866 = vrot.slane %v1864, 7
  %v1867 = vshll.u32 %v1580, 16
  %v1869 = vor.u32 %v1866, %v1867
  %v1870 = vsel %vm1616, %v1862, %v1869
  %v1871 = vrot.slane %v1866, 4
  %v1873 = vshrl.u32 %v1581, 16
  %v1875 = vrot.slane %v1873, 7
  %v1876 = vshll.u32 %v1581, 16
  %v1878 = vor.u32 %v1875, %v1876
  %v1879 = vrot.slane %v1875, 4
  %v1881 = vshrl.u32 %v1582, 16
  %v1883 = vrot.slane %v1881, 7
  %v1884 = vshll.u32 %v1582, 16
  %v1886 = vor.u32 %v1883, %v1884
  %v1887 = vsel %vm1616, %v1879, %v1886
  %v1888 = vrot.slane %v1883, 4
  %v1890 = vshrl.u32 %v1583, 16
  %v1892 = vrot.slane %v1890, 7
  %v1893 = vshll.u32 %v1583, 16
  %v1895 = vor.u32 %v1892, %v1893
  %v1896 = vrot.slane %v1892, 4
  %v1898 = vshrl.u32 %v1584, 16
  %v1900 = vrot.slane %v1898, 7
  %v1901 = vshll.u32 %v1584, 16
  %v1903 = vor.u32 %v1900, %v1901
  %v1904 = vsel %vm1616, %v1896, %v1903
  %v1905 = vrot.slane %v1900, 4
  %v1907 = vshrl.u32 %v1585, 16
  %v1909 = vrot.slane %v1907, 7
  %v1910 = vshll.u32 %v1585, 16
  %v1912 = vor.u32 %v1909, %v1910
  %v1913 = vrot.slane %v1909, 4
  %v1915 = vshrl.u32 %v1586, 16
  %v1917 = vrot.slane %v1915, 7
  %v1918 = vshll.u32 %v1586, 16
  %v1920 = vor.u32 %v1917, %v1918
  %v1921 = vsel %vm1616, %v1913, %v1920
  %v1922 = vrot.slane %v1917, 4
  %v1924 = vshrl.u32 %v1587, 16
  %v1926 = vrot.slane %v1924, 7
  %v1927 = vshll.u32 %v1587, 16
  %v1929 = vor.u32 %v1926, %v1927
  %v1930 = vrot.slane %v1926, 4
  %v1932 = vshrl.u32 %v1588, 16
  %v1934 = vrot.slane %v1932, 7
  %v1935 = vshll.u32 %v1588, 16
  %v1937 = vor.u32 %v1934, %v1935
  %v1938 = vsel %vm1616, %v1930, %v1937
  %v1939 = vrot.slane %v1934, 4
  %v1941 = vshrl.u32 %v1589, 16
  %v1943 = vrot.slane %v1941, 7
  %v1944 = vshll.u32 %v1589, 16
  %v1946 = vor.u32 %v1943, %v1944
  %v1947 = vrot.slane %v1943, 4
  %v1949 = vshrl.u32 %v1590, 16
  %v1951 = vrot.slane %v1949, 7
  %v1952 = vshll.u32 %v1590, 16
  %v1954 = vor.u32 %v1951, %v1952
  %v1955 = vsel %vm1616, %v1947, %v1954
  %v1956 = vrot.slane %v1951, 4
  %v1958 = vshrl.u32 %v1591, 16
  %v1960 = vrot.slane %v1958, 7
  %v1961 = vshll.u32 %v1591, 16
  %v1963 = vor.u32 %v1960, %v1961
  %v1964 = vrot.slane %v1960, 4
  %v1966 = vshrl.u32 %v1592, 16
  %v1968 = vrot.slane %v1966, 7
  %v1969 = vshll.u32 %v1592, 16
  %v1971 = vor.u32 %v1968, %v1969
  %v1972 = vsel %vm1616, %v1964, %v1971
  %v1973 = vrot.slane %v1968, 4
  %v1975 = vshrl.u32 %v1593, 16
  %v1977 = vrot.slane %v1975, 7
  %v1978 = vshll.u32 %v1593, 16
  %v1980 = vor.u32 %v1977, %v1978
  %v1981 = vrot.slane %v1977, 4
  %v1983 = vshrl.u32 %v1594, 16
  %v1985 = vrot.slane %v1983, 7
  %v1986 = vshll.u32 %v1594, 16
  %v1988 = vor.u32 %v1985, %v1986
  %v1989 = vsel %vm1616, %v1981, %v1988
  %v1990 = vrot.slane %v1985, 4
  %v1992 = vshrl.u32 %v1595, 16
  %v1994 = vrot.slane %v1992, 7
  %v1995 = vshll.u32 %v1595, 16
  %v1997 = vor.u32 %v1994, %v1995
  %v1998 = vrot.slane %v1994, 4
  %v2000 = vshrl.u32 %v1596, 16
  %v2002 = vrot.slane %v2000, 7
  %v2003 = vshll.u32 %v1596, 16
  %v2005 = vor.u32 %v2002, %v2003
  %v2006 = vsel %vm1616, %v1998, %v2005
  %v2007 = vrot.slane %v2002, 4
  %v2009 = vshrl.u32 %v1597, 16
  %v2011 = vrot.slane %v2009, 7
  %v2012 = vshll.u32 %v1597, 16
  %v2014 = vor.u32 %v2011, %v2012
  %v2015 = vrot.slane %v2011, 4
  %v2017 = vshrl.u32 %v1598, 16
  %v2019 = vrot.slane %v2017, 7
  %v2020 = vshll.u32 %v1598, 16
  %v2022 = vor.u32 %v2019, %v2020
  %v2023 = vsel %vm1616, %v2015, %v2022
  %v2024 = vrot.slane %v2019, 4
  %v2026 = vshrl.u32 %v1599, 16
  %v2028 = vrot.slane %v2026, 7
  %v2029 = vshll.u32 %v1599, 16
  %v2031 = vor.u32 %v2028, %v2029
  %v2032 = vrot.slane %v2028, 4
  %v2034 = vshrl.u32 %v1600, 16
  %v2036 = vrot.slane %v2034, 7
  %v2037 = vshll.u32 %v1600, 16
  %v2039 = vor.u32 %v2036, %v2037
  %v2040 = vsel %vm1616, %v2032, %v2039
  %v2041 = vrot.slane %v2036, 4
  %v2043 = vshrl.u32 %v1601, 16
  %v2045 = vrot.slane %v2043, 7
  %v2046 = vshll.u32 %v1601, 16
  %v2048 = vor.u32 %v2045, %v2046
  %v2049 = vrot.slane %v2045, 4
  %v2051 = vshrl.u32 %v1602, 16
  %v2053 = vrot.slane %v2051, 7
  %v2054 = vshll.u32 %v1602, 16
  %v2056 = vor.u32 %v2053, %v2054
  %v2057 = vsel %vm1616, %v2049, %v2056
  %v2058 = vrot.slane %v2053, 4
  %v2060 = vshrl.u32 %v1603, 16
  %v2062 = vrot.slane %v2060, 7
  %v2063 = vshll.u32 %v1603, 16
  %v2065 = vor.u32 %v2062, %v2063
  %v2066 = vrot.slane %v2062, 4
  %v2068 = vshrl.u32 %v1604, 16
  %v2070 = vrot.slane %v2068, 7
  %v2071 = vshll.u32 %v1604, 16
  %v2073 = vor.u32 %v2070, %v2071
  %v2074 = vsel %vm1616, %v2066, %v2073
  %v2075 = vrot.slane %v2070, 4
  %v2077 = vshrl.u32 %v1605, 16
  %v2079 = vrot.slane %v2077, 7
  %v2080 = vshll.u32 %v1605, 16
  %v2082 = vor.u32 %v2079, %v2080
  %v2083 = vrot.slane %v2079, 4
  %v2085 = vshrl.u32 %v1606, 16
  %v2087 = vrot.slane %v2085, 7
  %v2088 = vshll.u32 %v1606, 16
  %v2090 = vor.u32 %v2087, %v2088
  %v2091 = vsel %vm1616, %v2083, %v2090
  %v2092 = vrot.slane %v2087, 4
  %v2094 = vshrl.u32 %v1607, 16
  %v2096 = vrot.slane %v2094, 7
  %v2097 = vshll.u32 %v1607, 16
  %v2099 = vor.u32 %v2096, %v2097
  %v2100 = vrot.slane %v2096, 4
  %v2102 = vshrl.u32 %v1608, 16
  %v2104 = vrot.slane %v2102, 7
  %v2105 = vshll.u32 %v1608, 16
  %v2107 = vor.u32 %v2104, %v2105
  %v2108 = vsel %vm1616, %v2100, %v2107
  %v2109 = vrot.slane %v2104, 4
  %v2111 = vshrl.u32 %v1609, 16
  %v2113 = vrot.slane %v2111, 7
  %v2114 = vshll.u32 %v1609, 16
  %v2116 = vor.u32 %v2113, %v2114
  %v2117 = vrot.slane %v2113, 4
  %v2119 = vshrl.u32 %v1610, 16
  %v2121 = vrot.slane %v2119, 7
  %v2122 = vshll.u32 %v1610, 16
  %v2124 = vor.u32 %v2121, %v2122
  %v2125 = vsel %vm1616, %v2117, %v2124
  %v2126 = vrot.slane %v2121, 4
  %v2128 = vshrl.u32 %v1611, 16
  %v2130 = vrot.slane %v2128, 7
  %v2131 = vshll.u32 %v1611, 16
  %v2133 = vor.u32 %v2130, %v2131
  %v2134 = vrot.slane %v2130, 4
  %v2136 = vshrl.u32 %v1612, 16
  %v2138 = vrot.slane %v2136, 7
  %v2139 = vshll.u32 %v1612, 16
  %v2141 = vor.u32 %v2138, %v2139
  %v2142 = vsel %vm1616, %v2134, %v2141
  %v2143 = vrot.slane %v2138, 4
  %v2145 = vshrl.u32 %v1613, 16
  %v2147 = vrot.slane %v2145, 7
  %v2148 = vshll.u32 %v1613, 16
  %v2150 = vor.u32 %v2147, %v2148
  %v2151 = vrot.slane %v2147, 4
  %v2153 = vshrl.u32 %v1614, 16
  %v2155 = vrot.slane %v2153, 7
  %v2156 = vshll.u32 %v1614, 16
  %v2158 = vor.u32 %v2155, %v2156
  %v2159 = vsel %vm1616, %v2151, %v2158
  %v2160 = vrot.slane %v2155, 4
  %s2257 = scalar_lea.vmem [#allocation2], 12
  %vm2258 = vcmask 1043456
  %vm2259 = vmand %vm2258, %vm1313
  %v2260 = vld [vmem:[%s2257] sm:$0xf]
  %v2261 = vsel %vm2259, %v1623, %v2260
  %2262 = vst [vmem:[%s2257] sm:$0xf] %v2261
  %2263 = vst [vmem:[%s2257 + $0x4] sm:$0xf] %v1632
  %v2264 = vld [vmem:[%s2257 + $0x8] sm:$0x1]
  %v2265 = vsel %vm1204, %v1633, %v2264
  %2266 = vst [vmem:[%s2257 + $0x8] sm:$0x1] %v2265
  %v2267 = vld [vmem:[%s2257 + $0xc] sm:$0xf]
  %v2268 = vsel %vm2259, %v1640, %v2267
  %2269 = vst [vmem:[%s2257 + $0xc] sm:$0xf] %v2268
  %2270 = vst [vmem:[%s2257 + $0x10] sm:$0xf] %v1649
  %v2271 = vld [vmem:[%s2257 + $0x14] sm:$0x1]
  %v2272 = vsel %vm1204, %v1650, %v2271
  %2273 = vst [vmem:[%s2257 + $0x14] sm:$0x1] %v2272
  %v2274 = vld [vmem:[%s2257 + $0x18] sm:$0xf]
  %v2275 = vsel %vm2259, %v1657, %v2274
  %2276 = vst [vmem:[%s2257 + $0x18] sm:$0xf] %v2275
  %2277 = vst [vmem:[%s2257 + $0x1c] sm:$0xf] %v1666
  %v2278 = vld [vmem:[%s2257 + $0x20] sm:$0x1]
  %v2279 = vsel %vm1204, %v1667, %v2278
  %2280 = vst [vmem:[%s2257 + $0x20] sm:$0x1] %v2279
  %v2281 = vld [vmem:[%s2257 + $0x24] sm:$0xf]
  %v2282 = vsel %vm2259, %v1674, %v2281
  %2283 = vst [vmem:[%s2257 + $0x24] sm:$0xf] %v2282
  %2284 = vst [vmem:[%s2257 + $0x28] sm:$0xf] %v1683
  %v2285 = vld [vmem:[%s2257 + $0x2c] sm:$0x1]
  %v2286 = vsel %vm1204, %v1684, %v2285
  %2287 = vst [vmem:[%s2257 + $0x2c] sm:$0x1] %v2286
  %v2288 = vld [vmem:[%s2257 + $0x30] sm:$0xf]
  %v2289 = vsel %vm2259, %v1691, %v2288
  %2290 = vst [vmem:[%s2257 + $0x30] sm:$0xf] %v2289
  %2291 = vst [vmem:[%s2257 + $0x34] sm:$0xf] %v1700
  %v2292 = vld [vmem:[%s2257 + $0x38] sm:$0x1]
  %v2293 = vsel %vm1204, %v1701, %v2292
  %2294 = vst [vmem:[%s2257 + $0x38] sm:$0x1] %v2293
  %v2295 = vld [vmem:[%s2257 + $0x3c] sm:$0xf]
  %v2296 = vsel %vm2259, %v1708, %v2295
  %2297 = vst [vmem:[%s2257 + $0x3c] sm:$0xf] %v2296
  %2298 = vst [vmem:[%s2257 + $0x40] sm:$0xf] %v1717
  %v2299 = vld [vmem:[%s2257 + $0x44] sm:$0x1]
  %v2300 = vsel %vm1204, %v1718, %v2299
  %2301 = vst [vmem:[%s2257 + $0x44] sm:$0x1] %v2300
  %v2302 = vld [vmem:[%s2257 + $0x48] sm:$0xf]
  %v2303 = vsel %vm2259, %v1725, %v2302
  %2304 = vst [vmem:[%s2257 + $0x48] sm:$0xf] %v2303
  %2305 = vst [vmem:[%s2257 + $0x4c] sm:$0xf] %v1734
  %v2306 = vld [vmem:[%s2257 + $0x50] sm:$0x1]
  %v2307 = vsel %vm1204, %v1735, %v2306
  %2308 = vst [vmem:[%s2257 + $0x50] sm:$0x1] %v2307
  %v2309 = vld [vmem:[%s2257 + $0x54] sm:$0xf]
  %v2310 = vsel %vm2259, %v1742, %v2309
  %2311 = vst [vmem:[%s2257 + $0x54] sm:$0xf] %v2310
  %2312 = vst [vmem:[%s2257 + $0x58] sm:$0xf] %v1751
  %v2313 = vld [vmem:[%s2257 + $0x5c] sm:$0x1]
  %v2314 = vsel %vm1204, %v1752, %v2313
  %2315 = vst [vmem:[%s2257 + $0x5c] sm:$0x1] %v2314
  %v2316 = vld [vmem:[%s2257 + $0x60] sm:$0xf]
  %v2317 = vsel %vm2259, %v1759, %v2316
  %2318 = vst [vmem:[%s2257 + $0x60] sm:$0xf] %v2317
  %2319 = vst [vmem:[%s2257 + $0x64] sm:$0xf] %v1768
  %v2320 = vld [vmem:[%s2257 + $0x68] sm:$0x1]
  %v2321 = vsel %vm1204, %v1769, %v2320
  %2322 = vst [vmem:[%s2257 + $0x68] sm:$0x1] %v2321
  %v2323 = vld [vmem:[%s2257 + $0x6c] sm:$0xf]
  %v2324 = vsel %vm2259, %v1776, %v2323
  %2325 = vst [vmem:[%s2257 + $0x6c] sm:$0xf] %v2324
  %2326 = vst [vmem:[%s2257 + $0x70] sm:$0xf] %v1785
  %v2327 = vld [vmem:[%s2257 + $0x74] sm:$0x1]
  %v2328 = vsel %vm1204, %v1786, %v2327
  %2329 = vst [vmem:[%s2257 + $0x74] sm:$0x1] %v2328
  %v2330 = vld [vmem:[%s2257 + $0x78] sm:$0xf]
  %v2331 = vsel %vm2259, %v1793, %v2330
  %2332 = vst [vmem:[%s2257 + $0x78] sm:$0xf] %v2331
  %2333 = vst [vmem:[%s2257 + $0x7c] sm:$0xf] %v1802
  %v2334 = vld [vmem:[%s2257 + $0x80] sm:$0x1]
  %v2335 = vsel %vm1204, %v1803, %v2334
  %2336 = vst [vmem:[%s2257 + $0x80] sm:$0x1] %v2335
  %v2337 = vld [vmem:[%s2257 + $0x84] sm:$0xf]
  %v2338 = vsel %vm2259, %v1810, %v2337
  %2339 = vst [vmem:[%s2257 + $0x84] sm:$0xf] %v2338
  %2340 = vst [vmem:[%s2257 + $0x88] sm:$0xf] %v1819
  %v2341 = vld [vmem:[%s2257 + $0x8c] sm:$0x1]
  %v2342 = vsel %vm1204, %v1820, %v2341
  %2343 = vst [vmem:[%s2257 + $0x8c] sm:$0x1] %v2342
  %v2344 = vld [vmem:[%s2257 + $0x90] sm:$0xf]
  %v2345 = vsel %vm2259, %v1827, %v2344
  %2346 = vst [vmem:[%s2257 + $0x90] sm:$0xf] %v2345
  %2347 = vst [vmem:[%s2257 + $0x94] sm:$0xf] %v1836
  %v2348 = vld [vmem:[%s2257 + $0x98] sm:$0x1]
  %v2349 = vsel %vm1204, %v1837, %v2348
  %2350 = vst [vmem:[%s2257 + $0x98] sm:$0x1] %v2349
  %v2351 = vld [vmem:[%s2257 + $0x9c] sm:$0xf]
  %v2352 = vsel %vm2259, %v1844, %v2351
  %2353 = vst [vmem:[%s2257 + $0x9c] sm:$0xf] %v2352
  %2354 = vst [vmem:[%s2257 + $0xa0] sm:$0xf] %v1853
  %v2355 = vld [vmem:[%s2257 + $0xa4] sm:$0x1]
  %v2356 = vsel %vm1204, %v1854, %v2355
  %2357 = vst [vmem:[%s2257 + $0xa4] sm:$0x1] %v2356
  %v2358 = vld [vmem:[%s2257 + $0xa8] sm:$0xf]
  %v2359 = vsel %vm2259, %v1861, %v2358
  %2360 = vst [vmem:[%s2257 + $0xa8] sm:$0xf] %v2359
  %2361 = vst [vmem:[%s2257 + $0xac] sm:$0xf] %v1870
  %v2362 = vld [vmem:[%s2257 + $0xb0] sm:$0x1]
  %v2363 = vsel %vm1204, %v1871, %v2362
  %2364 = vst [vmem:[%s2257 + $0xb0] sm:$0x1] %v2363
  %v2365 = vld [vmem:[%s2257 + $0xb4] sm:$0xf]
  %v2366 = vsel %vm2259, %v1878, %v2365
  %2367 = vst [vmem:[%s2257 + $0xb4] sm:$0xf] %v2366
  %2368 = vst [vmem:[%s2257 + $0xb8] sm:$0xf] %v1887
  %v2369 = vld [vmem:[%s2257 + $0xbc] sm:$0x1]
  %v2370 = vsel %vm1204, %v1888, %v2369
  %2371 = vst [vmem:[%s2257 + $0xbc] sm:$0x1] %v2370
  %v2372 = vld [vmem:[%s2257 + $0xd8] sm:$0xf]
  %v2373 = vsel %vm2259, %v1895, %v2372
  %2374 = vst [vmem:[%s2257 + $0xd8] sm:$0xf] %v2373
  %2375 = vst [vmem:[%s2257 + $0xdc] sm:$0xf] %v1904
  %v2376 = vld [vmem:[%s2257 + $0xe0] sm:$0x1]
  %v2377 = vsel %vm1204, %v1905, %v2376
  %2378 = vst [vmem:[%s2257 + $0xe0] sm:$0x1] %v2377
  %v2379 = vld [vmem:[%s2257 + $0xe4] sm:$0xf]
  %v2380 = vsel %vm2259, %v1912, %v2379
  %2381 = vst [vmem:[%s2257 + $0xe4] sm:$0xf] %v2380
  %2382 = vst [vmem:[%s2257 + $0xe8] sm:$0xf] %v1921
  %v2383 = vld [vmem:[%s2257 + $0xec] sm:$0x1]
  %v2384 = vsel %vm1204, %v1922, %v2383
  %2385 = vst [vmem:[%s2257 + $0xec] sm:$0x1] %v2384
  %v2386 = vld [vmem:[%s2257 + $0xf0] sm:$0xf]
  %v2387 = vsel %vm2259, %v1929, %v2386
  %2388 = vst [vmem:[%s2257 + $0xf0] sm:$0xf] %v2387
  %2389 = vst [vmem:[%s2257 + $0xf4] sm:$0xf] %v1938
  %v2390 = vld [vmem:[%s2257 + $0xf8] sm:$0x1]
  %v2391 = vsel %vm1204, %v1939, %v2390
  %2392 = vst [vmem:[%s2257 + $0xf8] sm:$0x1] %v2391
  %v2393 = vld [vmem:[%s2257 + $0xfc] sm:$0xf]
  %v2394 = vsel %vm2259, %v1946, %v2393
  %2395 = vst [vmem:[%s2257 + $0xfc] sm:$0xf] %v2394
  %2396 = vst [vmem:[%s2257 + $0x100] sm:$0xf] %v1955
  %v2397 = vld [vmem:[%s2257 + $0x104] sm:$0x1]
  %v2398 = vsel %vm1204, %v1956, %v2397
  %2399 = vst [vmem:[%s2257 + $0x104] sm:$0x1] %v2398
  %v2400 = vld [vmem:[%s2257 + $0x108] sm:$0xf]
  %v2401 = vsel %vm2259, %v1963, %v2400
  %2402 = vst [vmem:[%s2257 + $0x108] sm:$0xf] %v2401
  %2403 = vst [vmem:[%s2257 + $0x10c] sm:$0xf] %v1972
  %v2404 = vld [vmem:[%s2257 + $0x110] sm:$0x1]
  %v2405 = vsel %vm1204, %v1973, %v2404
  %2406 = vst [vmem:[%s2257 + $0x110] sm:$0x1] %v2405
  %v2407 = vld [vmem:[%s2257 + $0x114] sm:$0xf]
  %v2408 = vsel %vm2259, %v1980, %v2407
  %2409 = vst [vmem:[%s2257 + $0x114] sm:$0xf] %v2408
  %2410 = vst [vmem:[%s2257 + $0x118] sm:$0xf] %v1989
  %v2411 = vld [vmem:[%s2257 + $0x11c] sm:$0x1]
  %v2412 = vsel %vm1204, %v1990, %v2411
  %2413 = vst [vmem:[%s2257 + $0x11c] sm:$0x1] %v2412
  %v2414 = vld [vmem:[%s2257 + $0x120] sm:$0xf]
  %v2415 = vsel %vm2259, %v1997, %v2414
  %2416 = vst [vmem:[%s2257 + $0x120] sm:$0xf] %v2415
  %2417 = vst [vmem:[%s2257 + $0x124] sm:$0xf] %v2006
  %v2418 = vld [vmem:[%s2257 + $0x128] sm:$0x1]
  %v2419 = vsel %vm1204, %v2007, %v2418
  %2420 = vst [vmem:[%s2257 + $0x128] sm:$0x1] %v2419
  %v2421 = vld [vmem:[%s2257 + $0x12c] sm:$0xf]
  %v2422 = vsel %vm2259, %v2014, %v2421
  %2423 = vst [vmem:[%s2257 + $0x12c] sm:$0xf] %v2422
  %2424 = vst [vmem:[%s2257 + $0x130] sm:$0xf] %v2023
  %v2425 = vld [vmem:[%s2257 + $0x134] sm:$0x1]
  %v2426 = vsel %vm1204, %v2024, %v2425
  %2427 = vst [vmem:[%s2257 + $0x134] sm:$0x1] %v2426
  %v2428 = vld [vmem:[%s2257 + $0x138] sm:$0xf]
  %v2429 = vsel %vm2259, %v2031, %v2428
  %2430 = vst [vmem:[%s2257 + $0x138] sm:$0xf] %v2429
  %2431 = vst [vmem:[%s2257 + $0x13c] sm:$0xf] %v2040
  %v2432 = vld [vmem:[%s2257 + $0x140] sm:$0x1]
  %v2433 = vsel %vm1204, %v2041, %v2432
  %2434 = vst [vmem:[%s2257 + $0x140] sm:$0x1] %v2433
  %v2435 = vld [vmem:[%s2257 + $0x144] sm:$0xf]
  %v2436 = vsel %vm2259, %v2048, %v2435
  %2437 = vst [vmem:[%s2257 + $0x144] sm:$0xf] %v2436
  %2438 = vst [vmem:[%s2257 + $0x148] sm:$0xf] %v2057
  %v2439 = vld [vmem:[%s2257 + $0x14c] sm:$0x1]
  %v2440 = vsel %vm1204, %v2058, %v2439
  %2441 = vst [vmem:[%s2257 + $0x14c] sm:$0x1] %v2440
  %v2442 = vld [vmem:[%s2257 + $0x150] sm:$0xf]
  %v2443 = vsel %vm2259, %v2065, %v2442
  %2444 = vst [vmem:[%s2257 + $0x150] sm:$0xf] %v2443
  %2445 = vst [vmem:[%s2257 + $0x154] sm:$0xf] %v2074
  %v2446 = vld [vmem:[%s2257 + $0x158] sm:$0x1]
  %v2447 = vsel %vm1204, %v2075, %v2446
  %2448 = vst [vmem:[%s2257 + $0x158] sm:$0x1] %v2447
  %v2449 = vld [vmem:[%s2257 + $0x15c] sm:$0xf]
  %v2450 = vsel %vm2259, %v2082, %v2449
  %2451 = vst [vmem:[%s2257 + $0x15c] sm:$0xf] %v2450
  %2452 = vst [vmem:[%s2257 + $0x160] sm:$0xf] %v2091
  %v2453 = vld [vmem:[%s2257 + $0x164] sm:$0x1]
  %v2454 = vsel %vm1204, %v2092, %v2453
  %2455 = vst [vmem:[%s2257 + $0x164] sm:$0x1] %v2454
  %v2456 = vld [vmem:[%s2257 + $0x168] sm:$0xf]
  %v2457 = vsel %vm2259, %v2099, %v2456
  %2458 = vst [vmem:[%s2257 + $0x168] sm:$0xf] %v2457
  %2459 = vst [vmem:[%s2257 + $0x16c] sm:$0xf] %v2108
  %v2460 = vld [vmem:[%s2257 + $0x170] sm:$0x1]
  %v2461 = vsel %vm1204, %v2109, %v2460
  %2462 = vst [vmem:[%s2257 + $0x170] sm:$0x1] %v2461
  %v2463 = vld [vmem:[%s2257 + $0x174] sm:$0xf]
  %v2464 = vsel %vm2259, %v2116, %v2463
  %2465 = vst [vmem:[%s2257 + $0x174] sm:$0xf] %v2464
  %2466 = vst [vmem:[%s2257 + $0x178] sm:$0xf] %v2125
  %v2467 = vld [vmem:[%s2257 + $0x17c] sm:$0x1]
  %v2468 = vsel %vm1204, %v2126, %v2467
  %2469 = vst [vmem:[%s2257 + $0x17c] sm:$0x1] %v2468
  %v2470 = vld [vmem:[%s2257 + $0x180] sm:$0xf]
  %v2471 = vsel %vm2259, %v2133, %v2470
  %2472 = vst [vmem:[%s2257 + $0x180] sm:$0xf] %v2471
  %2473 = vst [vmem:[%s2257 + $0x184] sm:$0xf] %v2142
  %v2474 = vld [vmem:[%s2257 + $0x188] sm:$0x1]
  %v2475 = vsel %vm1204, %v2143, %v2474
  %2476 = vst [vmem:[%s2257 + $0x188] sm:$0x1] %v2475
  %v2477 = vld [vmem:[%s2257 + $0x18c] sm:$0xf]
  %v2478 = vsel %vm2259, %v2150, %v2477
  %2479 = vst [vmem:[%s2257 + $0x18c] sm:$0xf] %v2478
  %2480 = vst [vmem:[%s2257 + $0x190] sm:$0xf] %v2159
  %v2481 = vld [vmem:[%s2257 + $0x194] sm:$0x1]
  %v2482 = vsel %vm1204, %v2160, %v2481
  %2483 = vst [vmem:[%s2257 + $0x194] sm:$0x1] %v2482
  %v2484 = vld [vmem:[#allocation2] sm:$0xf]
  %v2485 = vld [vmem:[#allocation2 + $0x4] sm:$0xf]
  %v2486 = vld [vmem:[#allocation2 + $0xc] sm:$0xf]
  %v2487 = vld [vmem:[#allocation2 + $0x10] sm:$0xf]
  %v2488 = vld [vmem:[#allocation2 + $0x18] sm:$0xf]
  %v2489 = vld [vmem:[#allocation2 + $0x1c] sm:$0xf]
  %v2490 = vld [vmem:[#allocation2 + $0x24] sm:$0xf]
  %v2491 = vld [vmem:[#allocation2 + $0x28] sm:$0xf]
  %v2492 = vld [vmem:[#allocation2 + $0x30] sm:$0xf]
  %v2493 = vld [vmem:[#allocation2 + $0x34] sm:$0xf]
  %v2494 = vld [vmem:[#allocation2 + $0x3c] sm:$0xf]
  %v2495 = vld [vmem:[#allocation2 + $0x40] sm:$0xf]
  %v2496 = vld [vmem:[#allocation2 + $0x48] sm:$0xf]
  %v2497 = vld [vmem:[#allocation2 + $0x4c] sm:$0xf]
  %v2498 = vld [vmem:[#allocation2 + $0x54] sm:$0xf]
  %v2499 = vld [vmem:[#allocation2 + $0x58] sm:$0xf]
  %v2500 = vld [vmem:[#allocation2 + $0x60] sm:$0xf]
  %v2501 = vld [vmem:[#allocation2 + $0x64] sm:$0xf]
  %v2502 = vld [vmem:[#allocation2 + $0x6c] sm:$0xf]
  %v2503 = vld [vmem:[#allocation2 + $0x70] sm:$0xf]
  %v2504 = vld [vmem:[#allocation2 + $0x78] sm:$0xf]
  %v2505 = vld [vmem:[#allocation2 + $0x7c] sm:$0xf]
  %v2506 = vld [vmem:[#allocation2 + $0x84] sm:$0xf]
  %v2507 = vld [vmem:[#allocation2 + $0x88] sm:$0xf]
  %v2508 = vld [vmem:[#allocation2 + $0x90] sm:$0xf]
  %v2509 = vld [vmem:[#allocation2 + $0x94] sm:$0xf]
  %v2510 = vld [vmem:[#allocation2 + $0x9c] sm:$0xf]
  %v2511 = vld [vmem:[#allocation2 + $0xa0] sm:$0xf]
  %v2512 = vld [vmem:[#allocation2 + $0xa8] sm:$0xf]
  %v2513 = vld [vmem:[#allocation2 + $0xac] sm:$0xf]
  %v2514 = vld [vmem:[#allocation2 + $0xb4] sm:$0xf]
  %v2515 = vld [vmem:[#allocation2 + $0xb8] sm:$0xf]
  %v2516 = vld [vmem:[#allocation2 + $0xd8] sm:$0xf]
  %v2517 = vld [vmem:[#allocation2 + $0xdc] sm:$0xf]
  %v2518 = vld [vmem:[#allocation2 + $0xe4] sm:$0xf]
  %v2519 = vld [vmem:[#allocation2 + $0xe8] sm:$0xf]
  %v2520 = vld [vmem:[#allocation2 + $0xf0] sm:$0xf]
  %v2521 = vld [vmem:[#allocation2 + $0xf4] sm:$0xf]
  %v2522 = vld [vmem:[#allocation2 + $0xfc] sm:$0xf]
  %v2523 = vld [vmem:[#allocation2 + $0x100] sm:$0xf]
  %v2524 = vld [vmem:[#allocation2 + $0x108] sm:$0xf]
  %v2525 = vld [vmem:[#allocation2 + $0x10c] sm:$0xf]
  %v2526 = vld [vmem:[#allocation2 + $0x114] sm:$0xf]
  %v2527 = vld [vmem:[#allocation2 + $0x118] sm:$0xf]
  %v2528 = vld [vmem:[#allocation2 + $0x120] sm:$0xf]
  %v2529 = vld [vmem:[#allocation2 + $0x124] sm:$0xf]
  %v2530 = vld [vmem:[#allocation2 + $0x12c] sm:$0xf]
  %v2531 = vld [vmem:[#allocation2 + $0x130] sm:$0xf]
  %v2532 = vld [vmem:[#allocation2 + $0x138] sm:$0xf]
  %v2533 = vld [vmem:[#allocation2 + $0x13c] sm:$0xf]
  %v2534 = vld [vmem:[#allocation2 + $0x144] sm:$0xf]
  %v2535 = vld [vmem:[#allocation2 + $0x148] sm:$0xf]
  %v2536 = vld [vmem:[#allocation2 + $0x150] sm:$0xf]
  %v2537 = vld [vmem:[#allocation2 + $0x154] sm:$0xf]
  %v2538 = vld [vmem:[#allocation2 + $0x15c] sm:$0xf]
  %v2539 = vld [vmem:[#allocation2 + $0x160] sm:$0xf]
  %v2540 = vld [vmem:[#allocation2 + $0x168] sm:$0xf]
  %v2541 = vld [vmem:[#allocation2 + $0x16c] sm:$0xf]
  %v2542 = vld [vmem:[#allocation2 + $0x174] sm:$0xf]
  %v2543 = vld [vmem:[#allocation2 + $0x178] sm:$0xf]
  %v2544 = vld [vmem:[#allocation2 + $0x180] sm:$0xf]
  %v2545 = vld [vmem:[#allocation2 + $0x184] sm:$0xf]
  %v2546 = vld [vmem:[#allocation2 + $0x18c] sm:$0xf]
  %v2547 = vld [vmem:[#allocation2 + $0x190] sm:$0xf]
  %2548 = vst [vmem:[#allocation3] sm:$0xf] %v2484
  %2549 = vst [vmem:[#allocation3 + $0x24] sm:$0xf] %v2485
  %2550 = vst [vmem:[#allocation3 + $0x48] sm:$0xf] %v2486
  %2551 = vst [vmem:[#allocation3 + $0x6c] sm:$0xf] %v2487
  %2552 = vst [vmem:[#allocation3 + $0x90] sm:$0xf] %v2488
  %2553 = vst [vmem:[#allocation3 + $0xb4] sm:$0xf] %v2489
  %2554 = vst [vmem:[#allocation3 + $0xd8] sm:$0xf] %v2490
  %2555 = vst [vmem:[#allocation3 + $0xfc] sm:$0xf] %v2491
  %2556 = vst [vmem:[#allocation3 + $0x120] sm:$0xf] %v2492
  %2557 = vst [vmem:[#allocation3 + $0x144] sm:$0xf] %v2493
  %2558 = vst [vmem:[#allocation3 + $0x168] sm:$0xf] %v2494
  %2559 = vst [vmem:[#allocation3 + $0x18c] sm:$0xf] %v2495
  %2560 = vst [vmem:[#allocation3 + $0x1b0] sm:$0xf] %v2496
  %2561 = vst [vmem:[#allocation3 + $0x1d4] sm:$0xf] %v2497
  %2562 = vst [vmem:[#allocation3 + $0x1f8] sm:$0xf] %v2498
  %2563 = vst [vmem:[#allocation3 + $0x21c] sm:$0xf] %v2499
  %2564 = vst [vmem:[#allocation3 + $0x240] sm:$0xf] %v2500
  %2565 = vst [vmem:[#allocation3 + $0x264] sm:$0xf] %v2501
  %2566 = vst [vmem:[#allocation3 + $0x288] sm:$0xf] %v2502
  %2567 = vst [vmem:[#allocation3 + $0x2ac] sm:$0xf] %v2503
  %2568 = vst [vmem:[#allocation3 + $0x2d0] sm:$0xf] %v2504
  %2569 = vst [vmem:[#allocation3 + $0x2f4] sm:$0xf] %v2505
  %2570 = vst [vmem:[#allocation3 + $0x318] sm:$0xf] %v2506
  %2571 = vst [vmem:[#allocation3 + $0x33c] sm:$0xf] %v2507
  %2572 = vst [vmem:[#allocation3 + $0x360] sm:$0xf] %v2508
  %2573 = vst [vmem:[#allocation3 + $0x384] sm:$0xf] %v2509
  %2574 = vst [vmem:[#allocation3 + $0x3a8] sm:$0xf] %v2510
  %2575 = vst [vmem:[#allocation3 + $0x3cc] sm:$0xf] %v2511
  %2576 = vst [vmem:[#allocation3 + $0x3f0] sm:$0xf] %v2512
  %2577 = vst [vmem:[#allocation3 + $0x414] sm:$0xf] %v2513
  %2578 = vst [vmem:[#allocation3 + $0x438] sm:$0xf] %v2514
  %2579 = vst [vmem:[#allocation3 + $0x45c] sm:$0xf] %v2515
  %2580 = vst [vmem:[#allocation3 + $0x480] sm:$0xf] %v2516
  %2581 = vst [vmem:[#allocation3 + $0x4a4] sm:$0xf] %v2517
  %2582 = vst [vmem:[#allocation3 + $0x4c8] sm:$0xf] %v2518
  %2583 = vst [vmem:[#allocation3 + $0x4ec] sm:$0xf] %v2519
  %2584 = vst [vmem:[#allocation3 + $0x510] sm:$0xf] %v2520
  %2585 = vst [vmem:[#allocation3 + $0x534] sm:$0xf] %v2521
  %2586 = vst [vmem:[#allocation3 + $0x558] sm:$0xf] %v2522
  %2587 = vst [vmem:[#allocation3 + $0x57c] sm:$0xf] %v2523
  %2588 = vst [vmem:[#allocation3 + $0x5a0] sm:$0xf] %v2524
  %2589 = vst [vmem:[#allocation3 + $0x5c4] sm:$0xf] %v2525
  %2590 = vst [vmem:[#allocation3 + $0x5e8] sm:$0xf] %v2526
  %2591 = vst [vmem:[#allocation3 + $0x60c] sm:$0xf] %v2527
  %2592 = vst [vmem:[#allocation3 + $0x630] sm:$0xf] %v2528
  %2593 = vst [vmem:[#allocation3 + $0x654] sm:$0xf] %v2529
  %2594 = vst [vmem:[#allocation3 + $0x678] sm:$0xf] %v2530
  %2595 = vst [vmem:[#allocation3 + $0x69c] sm:$0xf] %v2531
  %2596 = vst [vmem:[#allocation3 + $0x6c0] sm:$0xf] %v2532
  %2597 = vst [vmem:[#allocation3 + $0x6e4] sm:$0xf] %v2533
  %2598 = vst [vmem:[#allocation3 + $0x708] sm:$0xf] %v2534
  %2599 = vst [vmem:[#allocation3 + $0x72c] sm:$0xf] %v2535
  %2600 = vst [vmem:[#allocation3 + $0x750] sm:$0xf] %v2536
  %2601 = vst [vmem:[#allocation3 + $0x774] sm:$0xf] %v2537
  %2602 = vst [vmem:[#allocation3 + $0x798] sm:$0xf] %v2538
  %2603 = vst [vmem:[#allocation3 + $0x7bc] sm:$0xf] %v2539
  %2604 = vst [vmem:[#allocation3 + $0x7e0] sm:$0xf] %v2540
  %2605 = vst [vmem:[#allocation3 + $0x804] sm:$0xf] %v2541
  %2606 = vst [vmem:[#allocation3 + $0x828] sm:$0xf] %v2542
  %2607 = vst [vmem:[#allocation3 + $0x84c] sm:$0xf] %v2543
  %2608 = vst [vmem:[#allocation3 + $0x870] sm:$0xf] %v2544
  %2609 = vst [vmem:[#allocation3 + $0x894] sm:$0xf] %v2545
  %2610 = vst [vmem:[#allocation3 + $0x8b8] sm:$0xf] %v2546
  %2611 = vst [vmem:[#allocation3 + $0x8dc] sm:$0xf] %v2547
  %v2612 = vld [vmem:[#allocation2] sm:$0xf]
  %v2613 = vld [vmem:[#allocation2 + $0x4] sm:$0xf]
  %v2614 = vld [vmem:[#allocation2 + $0x8] sm:$0x1]
  %v2615 = vld [vmem:[#allocation2 + $0xc] sm:$0xf]
  %v2616 = vld [vmem:[#allocation2 + $0x10] sm:$0xf]
  %v2617 = vld [vmem:[#allocation2 + $0x14] sm:$0x1]
  %v2618 = vld [vmem:[#allocation2 + $0x18] sm:$0xf]
  %v2619 = vld [vmem:[#allocation2 + $0x1c] sm:$0xf]
  %v2620 = vld [vmem:[#allocation2 + $0x20] sm:$0x1]
  %v2621 = vld [vmem:[#allocation2 + $0x24] sm:$0xf]
  %v2622 = vld [vmem:[#allocation2 + $0x28] sm:$0xf]
  %v2623 = vld [vmem:[#allocation2 + $0x2c] sm:$0x1]
  %v2624 = vld [vmem:[#allocation2 + $0x30] sm:$0xf]
  %v2625 = vld [vmem:[#allocation2 + $0x34] sm:$0xf]
  %v2626 = vld [vmem:[#allocation2 + $0x38] sm:$0x1]
  %v2627 = vld [vmem:[#allocation2 + $0x3c] sm:$0xf]
  %v2628 = vld [vmem:[#allocation2 + $0x40] sm:$0xf]
  %v2629 = vld [vmem:[#allocation2 + $0x44] sm:$0x1]
  %v2630 = vld [vmem:[#allocation2 + $0x48] sm:$0xf]
  %v2631 = vld [vmem:[#allocation2 + $0x4c] sm:$0xf]
  %v2632 = vld [vmem:[#allocation2 + $0x50] sm:$0x1]
  %v2633 = vld [vmem:[#allocation2 + $0x54] sm:$0xf]
  %v2634 = vld [vmem:[#allocation2 + $0x58] sm:$0xf]
  %v2635 = vld [vmem:[#allocation2 + $0x5c] sm:$0x1]
  %v2636 = vld [vmem:[#allocation2 + $0x60] sm:$0xf]
  %v2637 = vld [vmem:[#allocation2 + $0x64] sm:$0xf]
  %v2638 = vld [vmem:[#allocation2 + $0x68] sm:$0x1]
  %v2639 = vld [vmem:[#allocation2 + $0x6c] sm:$0xf]
  %v2640 = vld [vmem:[#allocation2 + $0x70] sm:$0xf]
  %v2641 = vld [vmem:[#allocation2 + $0x74] sm:$0x1]
  %v2642 = vld [vmem:[#allocation2 + $0x78] sm:$0xf]
  %v2643 = vld [vmem:[#allocation2 + $0x7c] sm:$0xf]
  %v2644 = vld [vmem:[#allocation2 + $0x80] sm:$0x1]
  %v2645 = vld [vmem:[#allocation2 + $0x84] sm:$0xf]
  %v2646 = vld [vmem:[#allocation2 + $0x88] sm:$0xf]
  %v2647 = vld [vmem:[#allocation2 + $0x8c] sm:$0x1]
  %v2648 = vld [vmem:[#allocation2 + $0x90] sm:$0xf]
  %v2649 = vld [vmem:[#allocation2 + $0x94] sm:$0xf]
  %v2650 = vld [vmem:[#allocation2 + $0x98] sm:$0x1]
  %v2651 = vld [vmem:[#allocation2 + $0x9c] sm:$0xf]
  %v2652 = vld [vmem:[#allocation2 + $0xa0] sm:$0xf]
  %v2653 = vld [vmem:[#allocation2 + $0xa4] sm:$0x1]
  %v2654 = vld [vmem:[#allocation2 + $0xa8] sm:$0xf]
  %v2655 = vld [vmem:[#allocation2 + $0xac] sm:$0xf]
  %v2656 = vld [vmem:[#allocation2 + $0xb0] sm:$0x1]
  %v2657 = vld [vmem:[#allocation2 + $0xb4] sm:$0xf]
  %v2658 = vld [vmem:[#allocation2 + $0xb8] sm:$0xf]
  %v2659 = vld [vmem:[#allocation2 + $0xbc] sm:$0x1]
  %v2660 = vld [vmem:[#allocation2 + $0xd8] sm:$0xf]
  %v2661 = vld [vmem:[#allocation2 + $0xdc] sm:$0xf]
  %v2662 = vld [vmem:[#allocation2 + $0xe0] sm:$0x1]
  %v2663 = vld [vmem:[#allocation2 + $0xe4] sm:$0xf]
  %v2664 = vld [vmem:[#allocation2 + $0xe8] sm:$0xf]
  %v2665 = vld [vmem:[#allocation2 + $0xec] sm:$0x1]
  %v2666 = vld [vmem:[#allocation2 + $0xf0] sm:$0xf]
  %v2667 = vld [vmem:[#allocation2 + $0xf4] sm:$0xf]
  %v2668 = vld [vmem:[#allocation2 + $0xf8] sm:$0x1]
  %v2669 = vld [vmem:[#allocation2 + $0xfc] sm:$0xf]
  %v2670 = vld [vmem:[#allocation2 + $0x100] sm:$0xf]
  %v2671 = vld [vmem:[#allocation2 + $0x104] sm:$0x1]
  %v2672 = vld [vmem:[#allocation2 + $0x108] sm:$0xf]
  %v2673 = vld [vmem:[#allocation2 + $0x10c] sm:$0xf]
  %v2674 = vld [vmem:[#allocation2 + $0x110] sm:$0x1]
  %v2675 = vld [vmem:[#allocation2 + $0x114] sm:$0xf]
  %v2676 = vld [vmem:[#allocation2 + $0x118] sm:$0xf]
  %v2677 = vld [vmem:[#allocation2 + $0x11c] sm:$0x1]
  %v2678 = vld [vmem:[#allocation2 + $0x120] sm:$0xf]
  %v2679 = vld [vmem:[#allocation2 + $0x124] sm:$0xf]
  %v2680 = vld [vmem:[#allocation2 + $0x128] sm:$0x1]
  %v2681 = vld [vmem:[#allocation2 + $0x12c] sm:$0xf]
  %v2682 = vld [vmem:[#allocation2 + $0x130] sm:$0xf]
  %v2683 = vld [vmem:[#allocation2 + $0x134] sm:$0x1]
  %v2684 = vld [vmem:[#allocation2 + $0x138] sm:$0xf]
  %v2685 = vld [vmem:[#allocation2 + $0x13c] sm:$0xf]
  %v2686 = vld [vmem:[#allocation2 + $0x140] sm:$0x1]
  %v2687 = vld [vmem:[#allocation2 + $0x144] sm:$0xf]
  %v2688 = vld [vmem:[#allocation2 + $0x148] sm:$0xf]
  %v2689 = vld [vmem:[#allocation2 + $0x14c] sm:$0x1]
  %v2690 = vld [vmem:[#allocation2 + $0x150] sm:$0xf]
  %v2691 = vld [vmem:[#allocation2 + $0x154] sm:$0xf]
  %v2692 = vld [vmem:[#allocation2 + $0x158] sm:$0x1]
  %v2693 = vld [vmem:[#allocation2 + $0x15c] sm:$0xf]
  %v2694 = vld [vmem:[#allocation2 + $0x160] sm:$0xf]
  %v2695 = vld [vmem:[#allocation2 + $0x164] sm:$0x1]
  %v2696 = vld [vmem:[#allocation2 + $0x168] sm:$0xf]
  %v2697 = vld [vmem:[#allocation2 + $0x16c] sm:$0xf]
  %v2698 = vld [vmem:[#allocation2 + $0x170] sm:$0x1]
  %v2699 = vld [vmem:[#allocation2 + $0x174] sm:$0xf]
  %v2700 = vld [vmem:[#allocation2 + $0x178] sm:$0xf]
  %v2701 = vld [vmem:[#allocation2 + $0x17c] sm:$0x1]
  %v2702 = vld [vmem:[#allocation2 + $0x180] sm:$0xf]
  %v2703 = vld [vmem:[#allocation2 + $0x184] sm:$0xf]
  %v2704 = vld [vmem:[#allocation2 + $0x188] sm:$0x1]
  %v2705 = vld [vmem:[#allocation2 + $0x18c] sm:$0xf]
  %v2706 = vld [vmem:[#allocation2 + $0x190] sm:$0xf]
  %v2707 = vld [vmem:[#allocation2 + $0x194] sm:$0x1]
  %vm2708 = vsmask.f32 3328
  %vm2709 = vsmask.f32 7440
  %vm2710 = vmor %vm2708, %vm2709
  %v2712 = vshrl.u32 %v2612, 16
  %v2714 = vrot.slane %v2712, 4
  %v2715 = vshll.u32 %v2612, 16
  %v2717 = vrot.slane %v2715, 5
  %v2718 = vor.u32 %v2714, %v2717
  %v2719 = vrot.slane %v2718, 4
  %v2721 = vshll.u32 %v2613, 16
  %v2723 = vrot.slane %v2721, 5
  %v2724 = vsel %vm2710, %v2719, %v2723
  %v2725 = vshrl.u32 %v2613, 16
  %v2727 = vrot.slane %v2725, 4
  %v2728 = vor.u32 %v2727, %v2723
  %v2729 = vrot.slane %v2728, 4
  %v2731 = vshll.u32 %v2614, 16
  %v2733 = vrot.slane %v2731, 5
  %v2734 = vsel %vm2710, %v2729, %v2733
  %v2736 = vshrl.u32 %v2615, 16
  %v2738 = vrot.slane %v2736, 4
  %v2739 = vshll.u32 %v2615, 16
  %v2741 = vrot.slane %v2739, 5
  %v2742 = vor.u32 %v2738, %v2741
  %v2743 = vrot.slane %v2742, 4
  %v2745 = vshll.u32 %v2616, 16
  %v2747 = vrot.slane %v2745, 5
  %v2748 = vsel %vm2710, %v2743, %v2747
  %v2749 = vshrl.u32 %v2616, 16
  %v2751 = vrot.slane %v2749, 4
  %v2752 = vor.u32 %v2751, %v2747
  %v2753 = vrot.slane %v2752, 4
  %v2755 = vshll.u32 %v2617, 16
  %v2757 = vrot.slane %v2755, 5
  %v2758 = vsel %vm2710, %v2753, %v2757
  %v2760 = vshrl.u32 %v2618, 16
  %v2762 = vrot.slane %v2760, 4
  %v2763 = vshll.u32 %v2618, 16
  %v2765 = vrot.slane %v2763, 5
  %v2766 = vor.u32 %v2762, %v2765
  %v2767 = vrot.slane %v2766, 4
  %v2769 = vshll.u32 %v2619, 16
  %v2771 = vrot.slane %v2769, 5
  %v2772 = vsel %vm2710, %v2767, %v2771
  %v2773 = vshrl.u32 %v2619, 16
  %v2775 = vrot.slane %v2773, 4
  %v2776 = vor.u32 %v2775, %v2771
  %v2777 = vrot.slane %v2776, 4
  %v2779 = vshll.u32 %v2620, 16
  %v2781 = vrot.slane %v2779, 5
  %v2782 = vsel %vm2710, %v2777, %v2781
  %v2784 = vshrl.u32 %v2621, 16
  %v2786 = vrot.slane %v2784, 4
  %v2787 = vshll.u32 %v2621, 16
  %v2789 = vrot.slane %v2787, 5
  %v2790 = vor.u32 %v2786, %v2789
  %v2791 = vrot.slane %v2790, 4
  %v2793 = vshll.u32 %v2622, 16
  %v2795 = vrot.slane %v2793, 5
  %v2796 = vsel %vm2710, %v2791, %v2795
  %v2797 = vshrl.u32 %v2622, 16
  %v2799 = vrot.slane %v2797, 4
  %v2800 = vor.u32 %v2799, %v2795
  %v2801 = vrot.slane %v2800, 4
  %v2803 = vshll.u32 %v2623, 16
  %v2805 = vrot.slane %v2803, 5
  %v2806 = vsel %vm2710, %v2801, %v2805
  %v2808 = vshrl.u32 %v2624, 16
  %v2810 = vrot.slane %v2808, 4
  %v2811 = vshll.u32 %v2624, 16
  %v2813 = vrot.slane %v2811, 5
  %v2814 = vor.u32 %v2810, %v2813
  %v2815 = vrot.slane %v2814, 4
  %v2817 = vshll.u32 %v2625, 16
  %v2819 = vrot.slane %v2817, 5
  %v2820 = vsel %vm2710, %v2815, %v2819
  %v2821 = vshrl.u32 %v2625, 16
  %v2823 = vrot.slane %v2821, 4
  %v2824 = vor.u32 %v2823, %v2819
  %v2825 = vrot.slane %v2824, 4
  %v2827 = vshll.u32 %v2626, 16
  %v2829 = vrot.slane %v2827, 5
  %v2830 = vsel %vm2710, %v2825, %v2829
  %v2832 = vshrl.u32 %v2627, 16
  %v2834 = vrot.slane %v2832, 4
  %v2835 = vshll.u32 %v2627, 16
  %v2837 = vrot.slane %v2835, 5
  %v2838 = vor.u32 %v2834, %v2837
  %v2839 = vrot.slane %v2838, 4
  %v2841 = vshll.u32 %v2628, 16
  %v2843 = vrot.slane %v2841, 5
  %v2844 = vsel %vm2710, %v2839, %v2843
  %v2845 = vshrl.u32 %v2628, 16
  %v2847 = vrot.slane %v2845, 4
  %v2848 = vor.u32 %v2847, %v2843
  %v2849 = vrot.slane %v2848, 4
  %v2851 = vshll.u32 %v2629, 16
  %v2853 = vrot.slane %v2851, 5
  %v2854 = vsel %vm2710, %v2849, %v2853
  %v2856 = vshrl.u32 %v2630, 16
  %v2858 = vrot.slane %v2856, 4
  %v2859 = vshll.u32 %v2630, 16
  %v2861 = vrot.slane %v2859, 5
  %v2862 = vor.u32 %v2858, %v2861
  %v2863 = vrot.slane %v2862, 4
  %v2865 = vshll.u32 %v2631, 16
  %v2867 = vrot.slane %v2865, 5
  %v2868 = vsel %vm2710, %v2863, %v2867
  %v2869 = vshrl.u32 %v2631, 16
  %v2871 = vrot.slane %v2869, 4
  %v2872 = vor.u32 %v2871, %v2867
  %v2873 = vrot.slane %v2872, 4
  %v2875 = vshll.u32 %v2632, 16
  %v2877 = vrot.slane %v2875, 5
  %v2878 = vsel %vm2710, %v2873, %v2877
  %v2880 = vshrl.u32 %v2633, 16
  %v2882 = vrot.slane %v2880, 4
  %v2883 = vshll.u32 %v2633, 16
  %v2885 = vrot.slane %v2883, 5
  %v2886 = vor.u32 %v2882, %v2885
  %v2887 = vrot.slane %v2886, 4
  %v2889 = vshll.u32 %v2634, 16
  %v2891 = vrot.slane %v2889, 5
  %v2892 = vsel %vm2710, %v2887, %v2891
  %v2893 = vshrl.u32 %v2634, 16
  %v2895 = vrot.slane %v2893, 4
  %v2896 = vor.u32 %v2895, %v2891
  %v2897 = vrot.slane %v2896, 4
  %v2899 = vshll.u32 %v2635, 16
  %v2901 = vrot.slane %v2899, 5
  %v2902 = vsel %vm2710, %v2897, %v2901
  %v2904 = vshrl.u32 %v2636, 16
  %v2906 = vrot.slane %v2904, 4
  %v2907 = vshll.u32 %v2636, 16
  %v2909 = vrot.slane %v2907, 5
  %v2910 = vor.u32 %v2906, %v2909
  %v2911 = vrot.slane %v2910, 4
  %v2913 = vshll.u32 %v2637, 16
  %v2915 = vrot.slane %v2913, 5
  %v2916 = vsel %vm2710, %v2911, %v2915
  %v2917 = vshrl.u32 %v2637, 16
  %v2919 = vrot.slane %v2917, 4
  %v2920 = vor.u32 %v2919, %v2915
  %v2921 = vrot.slane %v2920, 4
  %v2923 = vshll.u32 %v2638, 16
  %v2925 = vrot.slane %v2923, 5
  %v2926 = vsel %vm2710, %v2921, %v2925
  %v2928 = vshrl.u32 %v2639, 16
  %v2930 = vrot.slane %v2928, 4
  %v2931 = vshll.u32 %v2639, 16
  %v2933 = vrot.slane %v2931, 5
  %v2934 = vor.u32 %v2930, %v2933
  %v2935 = vrot.slane %v2934, 4
  %v2937 = vshll.u32 %v2640, 16
  %v2939 = vrot.slane %v2937, 5
  %v2940 = vsel %vm2710, %v2935, %v2939
  %v2941 = vshrl.u32 %v2640, 16
  %v2943 = vrot.slane %v2941, 4
  %v2944 = vor.u32 %v2943, %v2939
  %v2945 = vrot.slane %v2944, 4
  %v2947 = vshll.u32 %v2641, 16
  %v2949 = vrot.slane %v2947, 5
  %v2950 = vsel %vm2710, %v2945, %v2949
  %v2952 = vshrl.u32 %v2642, 16
  %v2954 = vrot.slane %v2952, 4
  %v2955 = vshll.u32 %v2642, 16
  %v2957 = vrot.slane %v2955, 5
  %v2958 = vor.u32 %v2954, %v2957
  %v2959 = vrot.slane %v2958, 4
  %v2961 = vshll.u32 %v2643, 16
  %v2963 = vrot.slane %v2961, 5
  %v2964 = vsel %vm2710, %v2959, %v2963
  %v2965 = vshrl.u32 %v2643, 16
  %v2967 = vrot.slane %v2965, 4
  %v2968 = vor.u32 %v2967, %v2963
  %v2969 = vrot.slane %v2968, 4
  %v2971 = vshll.u32 %v2644, 16
  %v2973 = vrot.slane %v2971, 5
  %v2974 = vsel %vm2710, %v2969, %v2973
  %v2976 = vshrl.u32 %v2645, 16
  %v2978 = vrot.slane %v2976, 4
  %v2979 = vshll.u32 %v2645, 16
  %v2981 = vrot.slane %v2979, 5
  %v2982 = vor.u32 %v2978, %v2981
  %v2983 = vrot.slane %v2982, 4
  %v2985 = vshll.u32 %v2646, 16
  %v2987 = vrot.slane %v2985, 5
  %v2988 = vsel %vm2710, %v2983, %v2987
  %v2989 = vshrl.u32 %v2646, 16
  %v2991 = vrot.slane %v2989, 4
  %v2992 = vor.u32 %v2991, %v2987
  %v2993 = vrot.slane %v2992, 4
  %v2995 = vshll.u32 %v2647, 16
  %v2997 = vrot.slane %v2995, 5
  %v2998 = vsel %vm2710, %v2993, %v2997
  %v3000 = vshrl.u32 %v2648, 16
  %v3002 = vrot.slane %v3000, 4
  %v3003 = vshll.u32 %v2648, 16
  %v3005 = vrot.slane %v3003, 5
  %v3006 = vor.u32 %v3002, %v3005
  %v3007 = vrot.slane %v3006, 4
  %v3009 = vshll.u32 %v2649, 16
  %v3011 = vrot.slane %v3009, 5
  %v3012 = vsel %vm2710, %v3007, %v3011
  %v3013 = vshrl.u32 %v2649, 16
  %v3015 = vrot.slane %v3013, 4
  %v3016 = vor.u32 %v3015, %v3011
  %v3017 = vrot.slane %v3016, 4
  %v3019 = vshll.u32 %v2650, 16
  %v3021 = vrot.slane %v3019, 5
  %v3022 = vsel %vm2710, %v3017, %v3021
  %v3024 = vshrl.u32 %v2651, 16
  %v3026 = vrot.slane %v3024, 4
  %v3027 = vshll.u32 %v2651, 16
  %v3029 = vrot.slane %v3027, 5
  %v3030 = vor.u32 %v3026, %v3029
  %v3031 = vrot.slane %v3030, 4
  %v3033 = vshll.u32 %v2652, 16
  %v3035 = vrot.slane %v3033, 5
  %v3036 = vsel %vm2710, %v3031, %v3035
  %v3037 = vshrl.u32 %v2652, 16
  %v3039 = vrot.slane %v3037, 4
  %v3040 = vor.u32 %v3039, %v3035
  %v3041 = vrot.slane %v3040, 4
  %v3043 = vshll.u32 %v2653, 16
  %v3045 = vrot.slane %v3043, 5
  %v3046 = vsel %vm2710, %v3041, %v3045
  %v3048 = vshrl.u32 %v2654, 16
  %v3050 = vrot.slane %v3048, 4
  %v3051 = vshll.u32 %v2654, 16
  %v3053 = vrot.slane %v3051, 5
  %v3054 = vor.u32 %v3050, %v3053
  %v3055 = vrot.slane %v3054, 4
  %v3057 = vshll.u32 %v2655, 16
  %v3059 = vrot.slane %v3057, 5
  %v3060 = vsel %vm2710, %v3055, %v3059
  %v3061 = vshrl.u32 %v2655, 16
  %v3063 = vrot.slane %v3061, 4
  %v3064 = vor.u32 %v3063, %v3059
  %v3065 = vrot.slane %v3064, 4
  %v3067 = vshll.u32 %v2656, 16
  %v3069 = vrot.slane %v3067, 5
  %v3070 = vsel %vm2710, %v3065, %v3069
  %v3072 = vshrl.u32 %v2657, 16
  %v3074 = vrot.slane %v3072, 4
  %v3075 = vshll.u32 %v2657, 16
  %v3077 = vrot.slane %v3075, 5
  %v3078 = vor.u32 %v3074, %v3077
  %v3079 = vrot.slane %v3078, 4
  %v3081 = vshll.u32 %v2658, 16
  %v3083 = vrot.slane %v3081, 5
  %v3084 = vsel %vm2710, %v3079, %v3083
  %v3085 = vshrl.u32 %v2658, 16
  %v3087 = vrot.slane %v3085, 4
  %v3088 = vor.u32 %v3087, %v3083
  %v3089 = vrot.slane %v3088, 4
  %v3091 = vshll.u32 %v2659, 16
  %v3093 = vrot.slane %v3091, 5
  %v3094 = vsel %vm2710, %v3089, %v3093
  %v3096 = vshrl.u32 %v2660, 16
  %v3098 = vrot.slane %v3096, 4
  %v3099 = vshll.u32 %v2660, 16
  %v3101 = vrot.slane %v3099, 5
  %v3102 = vor.u32 %v3098, %v3101
  %v3103 = vrot.slane %v3102, 4
  %v3105 = vshll.u32 %v2661, 16
  %v3107 = vrot.slane %v3105, 5
  %v3108 = vsel %vm2710, %v3103, %v3107
  %v3109 = vshrl.u32 %v2661, 16
  %v3111 = vrot.slane %v3109, 4
  %v3112 = vor.u32 %v3111, %v3107
  %v3113 = vrot.slane %v3112, 4
  %v3115 = vshll.u32 %v2662, 16
  %v3117 = vrot.slane %v3115, 5
  %v3118 = vsel %vm2710, %v3113, %v3117
  %v3120 = vshrl.u32 %v2663, 16
  %v3122 = vrot.slane %v3120, 4
  %v3123 = vshll.u32 %v2663, 16
  %v3125 = vrot.slane %v3123, 5
  %v3126 = vor.u32 %v3122, %v3125
  %v3127 = vrot.slane %v3126, 4
  %v3129 = vshll.u32 %v2664, 16
  %v3131 = vrot.slane %v3129, 5
  %v3132 = vsel %vm2710, %v3127, %v3131
  %v3133 = vshrl.u32 %v2664, 16
  %v3135 = vrot.slane %v3133, 4
  %v3136 = vor.u32 %v3135, %v3131
  %v3137 = vrot.slane %v3136, 4
  %v3139 = vshll.u32 %v2665, 16
  %v3141 = vrot.slane %v3139, 5
  %v3142 = vsel %vm2710, %v3137, %v3141
  %v3144 = vshrl.u32 %v2666, 16
  %v3146 = vrot.slane %v3144, 4
  %v3147 = vshll.u32 %v2666, 16
  %v3149 = vrot.slane %v3147, 5
  %v3150 = vor.u32 %v3146, %v3149
  %v3151 = vrot.slane %v3150, 4
  %v3153 = vshll.u32 %v2667, 16
  %v3155 = vrot.slane %v3153, 5
  %v3156 = vsel %vm2710, %v3151, %v3155
  %v3157 = vshrl.u32 %v2667, 16
  %v3159 = vrot.slane %v3157, 4
  %v3160 = vor.u32 %v3159, %v3155
  %v3161 = vrot.slane %v3160, 4
  %v3163 = vshll.u32 %v2668, 16
  %v3165 = vrot.slane %v3163, 5
  %v3166 = vsel %vm2710, %v3161, %v3165
  %v3168 = vshrl.u32 %v2669, 16
  %v3170 = vrot.slane %v3168, 4
  %v3171 = vshll.u32 %v2669, 16
  %v3173 = vrot.slane %v3171, 5
  %v3174 = vor.u32 %v3170, %v3173
  %v3175 = vrot.slane %v3174, 4
  %v3177 = vshll.u32 %v2670, 16
  %v3179 = vrot.slane %v3177, 5
  %v3180 = vsel %vm2710, %v3175, %v3179
  %v3181 = vshrl.u32 %v2670, 16
  %v3183 = vrot.slane %v3181, 4
  %v3184 = vor.u32 %v3183, %v3179
  %v3185 = vrot.slane %v3184, 4
  %v3187 = vshll.u32 %v2671, 16
  %v3189 = vrot.slane %v3187, 5
  %v3190 = vsel %vm2710, %v3185, %v3189
  %v3192 = vshrl.u32 %v2672, 16
  %v3194 = vrot.slane %v3192, 4
  %v3195 = vshll.u32 %v2672, 16
  %v3197 = vrot.slane %v3195, 5
  %v3198 = vor.u32 %v3194, %v3197
  %v3199 = vrot.slane %v3198, 4
  %v3201 = vshll.u32 %v2673, 16
  %v3203 = vrot.slane %v3201, 5
  %v3204 = vsel %vm2710, %v3199, %v3203
  %v3205 = vshrl.u32 %v2673, 16
  %v3207 = vrot.slane %v3205, 4
  %v3208 = vor.u32 %v3207, %v3203
  %v3209 = vrot.slane %v3208, 4
  %v3211 = vshll.u32 %v2674, 16
  %v3213 = vrot.slane %v3211, 5
  %v3214 = vsel %vm2710, %v3209, %v3213
  %v3216 = vshrl.u32 %v2675, 16
  %v3218 = vrot.slane %v3216, 4
  %v3219 = vshll.u32 %v2675, 16
  %v3221 = vrot.slane %v3219, 5
  %v3222 = vor.u32 %v3218, %v3221
  %v3223 = vrot.slane %v3222, 4
  %v3225 = vshll.u32 %v2676, 16
  %v3227 = vrot.slane %v3225, 5
  %v3228 = vsel %vm2710, %v3223, %v3227
  %v3229 = vshrl.u32 %v2676, 16
  %v3231 = vrot.slane %v3229, 4
  %v3232 = vor.u32 %v3231, %v3227
  %v3233 = vrot.slane %v3232, 4
  %v3235 = vshll.u32 %v2677, 16
  %v3237 = vrot.slane %v3235, 5
  %v3238 = vsel %vm2710, %v3233, %v3237
  %v3240 = vshrl.u32 %v2678, 16
  %v3242 = vrot.slane %v3240, 4
  %v3243 = vshll.u32 %v2678, 16
  %v3245 = vrot.slane %v3243, 5
  %v3246 = vor.u32 %v3242, %v3245
  %v3247 = vrot.slane %v3246, 4
  %v3249 = vshll.u32 %v2679, 16
  %v3251 = vrot.slane %v3249, 5
  %v3252 = vsel %vm2710, %v3247, %v3251
  %v3253 = vshrl.u32 %v2679, 16
  %v3255 = vrot.slane %v3253, 4
  %v3256 = vor.u32 %v3255, %v3251
  %v3257 = vrot.slane %v3256, 4
  %v3259 = vshll.u32 %v2680, 16
  %v3261 = vrot.slane %v3259, 5
  %v3262 = vsel %vm2710, %v3257, %v3261
  %v3264 = vshrl.u32 %v2681, 16
  %v3266 = vrot.slane %v3264, 4
  %v3267 = vshll.u32 %v2681, 16
  %v3269 = vrot.slane %v3267, 5
  %v3270 = vor.u32 %v3266, %v3269
  %v3271 = vrot.slane %v3270, 4
  %v3273 = vshll.u32 %v2682, 16
  %v3275 = vrot.slane %v3273, 5
  %v3276 = vsel %vm2710, %v3271, %v3275
  %v3277 = vshrl.u32 %v2682, 16
  %v3279 = vrot.slane %v3277, 4
  %v3280 = vor.u32 %v3279, %v3275
  %v3281 = vrot.slane %v3280, 4
  %v3283 = vshll.u32 %v2683, 16
  %v3285 = vrot.slane %v3283, 5
  %v3286 = vsel %vm2710, %v3281, %v3285
  %v3288 = vshrl.u32 %v2684, 16
  %v3290 = vrot.slane %v3288, 4
  %v3291 = vshll.u32 %v2684, 16
  %v3293 = vrot.slane %v3291, 5
  %v3294 = vor.u32 %v3290, %v3293
  %v3295 = vrot.slane %v3294, 4
  %v3297 = vshll.u32 %v2685, 16
  %v3299 = vrot.slane %v3297, 5
  %v3300 = vsel %vm2710, %v3295, %v3299
  %v3301 = vshrl.u32 %v2685, 16
  %v3303 = vrot.slane %v3301, 4
  %v3304 = vor.u32 %v3303, %v3299
  %v3305 = vrot.slane %v3304, 4
  %v3307 = vshll.u32 %v2686, 16
  %v3309 = vrot.slane %v3307, 5
  %v3310 = vsel %vm2710, %v3305, %v3309
  %v3312 = vshrl.u32 %v2687, 16
  %v3314 = vrot.slane %v3312, 4
  %v3315 = vshll.u32 %v2687, 16
  %v3317 = vrot.slane %v3315, 5
  %v3318 = vor.u32 %v3314, %v3317
  %v3319 = vrot.slane %v3318, 4
  %v3321 = vshll.u32 %v2688, 16
  %v3323 = vrot.slane %v3321, 5
  %v3324 = vsel %vm2710, %v3319, %v3323
  %v3325 = vshrl.u32 %v2688, 16
  %v3327 = vrot.slane %v3325, 4
  %v3328 = vor.u32 %v3327, %v3323
  %v3329 = vrot.slane %v3328, 4
  %v3331 = vshll.u32 %v2689, 16
  %v3333 = vrot.slane %v3331, 5
  %v3334 = vsel %vm2710, %v3329, %v3333
  %v3336 = vshrl.u32 %v2690, 16
  %v3338 = vrot.slane %v3336, 4
  %v3339 = vshll.u32 %v2690, 16
  %v3341 = vrot.slane %v3339, 5
  %v3342 = vor.u32 %v3338, %v3341
  %v3343 = vrot.slane %v3342, 4
  %v3345 = vshll.u32 %v2691, 16
  %v3347 = vrot.slane %v3345, 5
  %v3348 = vsel %vm2710, %v3343, %v3347
  %v3349 = vshrl.u32 %v2691, 16
  %v3351 = vrot.slane %v3349, 4
  %v3352 = vor.u32 %v3351, %v3347
  %v3353 = vrot.slane %v3352, 4
  %v3355 = vshll.u32 %v2692, 16
  %v3357 = vrot.slane %v3355, 5
  %v3358 = vsel %vm2710, %v3353, %v3357
  %v3360 = vshrl.u32 %v2693, 16
  %v3362 = vrot.slane %v3360, 4
  %v3363 = vshll.u32 %v2693, 16
  %v3365 = vrot.slane %v3363, 5
  %v3366 = vor.u32 %v3362, %v3365
  %v3367 = vrot.slane %v3366, 4
  %v3369 = vshll.u32 %v2694, 16
  %v3371 = vrot.slane %v3369, 5
  %v3372 = vsel %vm2710, %v3367, %v3371
  %v3373 = vshrl.u32 %v2694, 16
  %v3375 = vrot.slane %v3373, 4
  %v3376 = vor.u32 %v3375, %v3371
  %v3377 = vrot.slane %v3376, 4
  %v3379 = vshll.u32 %v2695, 16
  %v3381 = vrot.slane %v3379, 5
  %v3382 = vsel %vm2710, %v3377, %v3381
  %v3384 = vshrl.u32 %v2696, 16
  %v3386 = vrot.slane %v3384, 4
  %v3387 = vshll.u32 %v2696, 16
  %v3389 = vrot.slane %v3387, 5
  %v3390 = vor.u32 %v3386, %v3389
  %v3391 = vrot.slane %v3390, 4
  %v3393 = vshll.u32 %v2697, 16
  %v3395 = vrot.slane %v3393, 5
  %v3396 = vsel %vm2710, %v3391, %v3395
  %v3397 = vshrl.u32 %v2697, 16
  %v3399 = vrot.slane %v3397, 4
  %v3400 = vor.u32 %v3399, %v3395
  %v3401 = vrot.slane %v3400, 4
  %v3403 = vshll.u32 %v2698, 16
  %v3405 = vrot.slane %v3403, 5
  %v3406 = vsel %vm2710, %v3401, %v3405
  %v3408 = vshrl.u32 %v2699, 16
  %v3410 = vrot.slane %v3408, 4
  %v3411 = vshll.u32 %v2699, 16
  %v3413 = vrot.slane %v3411, 5
  %v3414 = vor.u32 %v3410, %v3413
  %v3415 = vrot.slane %v3414, 4
  %v3417 = vshll.u32 %v2700, 16
  %v3419 = vrot.slane %v3417, 5
  %v3420 = vsel %vm2710, %v3415, %v3419
  %v3421 = vshrl.u32 %v2700, 16
  %v3423 = vrot.slane %v3421, 4
  %v3424 = vor.u32 %v3423, %v3419
  %v3425 = vrot.slane %v3424, 4
  %v3427 = vshll.u32 %v2701, 16
  %v3429 = vrot.slane %v3427, 5
  %v3430 = vsel %vm2710, %v3425, %v3429
  %v3432 = vshrl.u32 %v2702, 16
  %v3434 = vrot.slane %v3432, 4
  %v3435 = vshll.u32 %v2702, 16
  %v3437 = vrot.slane %v3435, 5
  %v3438 = vor.u32 %v3434, %v3437
  %v3439 = vrot.slane %v3438, 4
  %v3441 = vshll.u32 %v2703, 16
  %v3443 = vrot.slane %v3441, 5
  %v3444 = vsel %vm2710, %v3439, %v3443
  %v3445 = vshrl.u32 %v2703, 16
  %v3447 = vrot.slane %v3445, 4
  %v3448 = vor.u32 %v3447, %v3443
  %v3449 = vrot.slane %v3448, 4
  %v3451 = vshll.u32 %v2704, 16
  %v3453 = vrot.slane %v3451, 5
  %v3454 = vsel %vm2710, %v3449, %v3453
  %v3456 = vshrl.u32 %v2705, 16
  %v3458 = vrot.slane %v3456, 4
  %v3459 = vshll.u32 %v2705, 16
  %v3461 = vrot.slane %v3459, 5
  %v3462 = vor.u32 %v3458, %v3461
  %v3463 = vrot.slane %v3462, 4
  %v3465 = vshll.u32 %v2706, 16
  %v3467 = vrot.slane %v3465, 5
  %v3468 = vsel %vm2710, %v3463, %v3467
  %v3469 = vshrl.u32 %v2706, 16
  %v3471 = vrot.slane %v3469, 4
  %v3472 = vor.u32 %v3471, %v3467
  %v3473 = vrot.slane %v3472, 4
  %v3475 = vshll.u32 %v2707, 16
  %v3477 = vrot.slane %v3475, 5
  %v3478 = vsel %vm2710, %v3473, %v3477
  %3543 = vst [vmem:[#allocation3 + $0x4] sm:$0xf] %v2724
  %3544 = vst [vmem:[#allocation3 + $0x28] sm:$0xf] %v2734
  %3545 = vst [vmem:[#allocation3 + $0x4c] sm:$0xf] %v2748
  %3546 = vst [vmem:[#allocation3 + $0x70] sm:$0xf] %v2758
  %3547 = vst [vmem:[#allocation3 + $0x94] sm:$0xf] %v2772
  %3548 = vst [vmem:[#allocation3 + $0xb8] sm:$0xf] %v2782
  %3549 = vst [vmem:[#allocation3 + $0xdc] sm:$0xf] %v2796
  %3550 = vst [vmem:[#allocation3 + $0x100] sm:$0xf] %v2806
  %3551 = vst [vmem:[#allocation3 + $0x124] sm:$0xf] %v2820
  %3552 = vst [vmem:[#allocation3 + $0x148] sm:$0xf] %v2830
  %3553 = vst [vmem:[#allocation3 + $0x16c] sm:$0xf] %v2844
  %3554 = vst [vmem:[#allocation3 + $0x190] sm:$0xf] %v2854
  %3555 = vst [vmem:[#allocation3 + $0x1b4] sm:$0xf] %v2868
  %3556 = vst [vmem:[#allocation3 + $0x1d8] sm:$0xf] %v2878
  %3557 = vst [vmem:[#allocation3 + $0x1fc] sm:$0xf] %v2892
  %3558 = vst [vmem:[#allocation3 + $0x220] sm:$0xf] %v2902
  %3559 = vst [vmem:[#allocation3 + $0x244] sm:$0xf] %v2916
  %3560 = vst [vmem:[#allocation3 + $0x268] sm:$0xf] %v2926
  %3561 = vst [vmem:[#allocation3 + $0x28c] sm:$0xf] %v2940
  %3562 = vst [vmem:[#allocation3 + $0x2b0] sm:$0xf] %v2950
  %3563 = vst [vmem:[#allocation3 + $0x2d4] sm:$0xf] %v2964
  %3564 = vst [vmem:[#allocation3 + $0x2f8] sm:$0xf] %v2974
  %3565 = vst [vmem:[#allocation3 + $0x31c] sm:$0xf] %v2988
  %3566 = vst [vmem:[#allocation3 + $0x340] sm:$0xf] %v2998
  %3567 = vst [vmem:[#allocation3 + $0x364] sm:$0xf] %v3012
  %3568 = vst [vmem:[#allocation3 + $0x388] sm:$0xf] %v3022
  %3569 = vst [vmem:[#allocation3 + $0x3ac] sm:$0xf] %v3036
  %3570 = vst [vmem:[#allocation3 + $0x3d0] sm:$0xf] %v3046
  %3571 = vst [vmem:[#allocation3 + $0x3f4] sm:$0xf] %v3060
  %3572 = vst [vmem:[#allocation3 + $0x418] sm:$0xf] %v3070
  %3573 = vst [vmem:[#allocation3 + $0x43c] sm:$0xf] %v3084
  %3574 = vst [vmem:[#allocation3 + $0x460] sm:$0xf] %v3094
  %3575 = vst [vmem:[#allocation3 + $0x484] sm:$0xf] %v3108
  %3576 = vst [vmem:[#allocation3 + $0x4a8] sm:$0xf] %v3118
  %3577 = vst [vmem:[#allocation3 + $0x4cc] sm:$0xf] %v3132
  %3578 = vst [vmem:[#allocation3 + $0x4f0] sm:$0xf] %v3142
  %3579 = vst [vmem:[#allocation3 + $0x514] sm:$0xf] %v3156
  %3580 = vst [vmem:[#allocation3 + $0x538] sm:$0xf] %v3166
  %3581 = vst [vmem:[#allocation3 + $0x55c] sm:$0xf] %v3180
  %3582 = vst [vmem:[#allocation3 + $0x580] sm:$0xf] %v3190
  %3583 = vst [vmem:[#allocation3 + $0x5a4] sm:$0xf] %v3204
  %3584 = vst [vmem:[#allocation3 + $0x5c8] sm:$0xf] %v3214
  %3585 = vst [vmem:[#allocation3 + $0x5ec] sm:$0xf] %v3228
  %3586 = vst [vmem:[#allocation3 + $0x610] sm:$0xf] %v3238
  %3587 = vst [vmem:[#allocation3 + $0x634] sm:$0xf] %v3252
  %3588 = vst [vmem:[#allocation3 + $0x658] sm:$0xf] %v3262
  %3589 = vst [vmem:[#allocation3 + $0x67c] sm:$0xf] %v3276
  %3590 = vst [vmem:[#allocation3 + $0x6a0] sm:$0xf] %v3286
  %3591 = vst [vmem:[#allocation3 + $0x6c4] sm:$0xf] %v3300
  %3592 = vst [vmem:[#allocation3 + $0x6e8] sm:$0xf] %v3310
  %3593 = vst [vmem:[#allocation3 + $0x70c] sm:$0xf] %v3324
  %3594 = vst [vmem:[#allocation3 + $0x730] sm:$0xf] %v3334
  %3595 = vst [vmem:[#allocation3 + $0x754] sm:$0xf] %v3348
  %3596 = vst [vmem:[#allocation3 + $0x778] sm:$0xf] %v3358
  %3597 = vst [vmem:[#allocation3 + $0x79c] sm:$0xf] %v3372
  %3598 = vst [vmem:[#allocation3 + $0x7c0] sm:$0xf] %v3382
  %3599 = vst [vmem:[#allocation3 + $0x7e4] sm:$0xf] %v3396
  %3600 = vst [vmem:[#allocation3 + $0x808] sm:$0xf] %v3406
  %3601 = vst [vmem:[#allocation3 + $0x82c] sm:$0xf] %v3420
  %3602 = vst [vmem:[#allocation3 + $0x850] sm:$0xf] %v3430
  %3603 = vst [vmem:[#allocation3 + $0x874] sm:$0xf] %v3444
  %3604 = vst [vmem:[#allocation3 + $0x898] sm:$0xf] %v3454
  %3605 = vst [vmem:[#allocation3 + $0x8bc] sm:$0xf] %v3468
  %3606 = vst [vmem:[#allocation3 + $0x8e0] sm:$0xf] %v3478
  %v3607 = vld [vmem:[#allocation2] sm:$0xe]
  %v3608 = vld [vmem:[#allocation2 + $0x4] sm:$0xf]
  %v3609 = vld [vmem:[#allocation2 + $0x8] sm:$0x1]
  %v3610 = vld [vmem:[#allocation2 + $0xc] sm:$0xe]
  %v3611 = vld [vmem:[#allocation2 + $0x10] sm:$0xf]
  %v3612 = vld [vmem:[#allocation2 + $0x14] sm:$0x1]
  %v3613 = vld [vmem:[#allocation2 + $0x18] sm:$0xe]
  %v3614 = vld [vmem:[#allocation2 + $0x1c] sm:$0xf]
  %v3615 = vld [vmem:[#allocation2 + $0x20] sm:$0x1]
  %v3616 = vld [vmem:[#allocation2 + $0x24] sm:$0xe]
  %v3617 = vld [vmem:[#allocation2 + $0x28] sm:$0xf]
  %v3618 = vld [vmem:[#allocation2 + $0x2c] sm:$0x1]
  %v3619 = vld [vmem:[#allocation2 + $0x30] sm:$0xe]
  %v3620 = vld [vmem:[#allocation2 + $0x34] sm:$0xf]
  %v3621 = vld [vmem:[#allocation2 + $0x38] sm:$0x1]
  %v3622 = vld [vmem:[#allocation2 + $0x3c] sm:$0xe]
  %v3623 = vld [vmem:[#allocation2 + $0x40] sm:$0xf]
  %v3624 = vld [vmem:[#allocation2 + $0x44] sm:$0x1]
  %v3625 = vld [vmem:[#allocation2 + $0x48] sm:$0xe]
  %v3626 = vld [vmem:[#allocation2 + $0x4c] sm:$0xf]
  %v3627 = vld [vmem:[#allocation2 + $0x50] sm:$0x1]
  %v3628 = vld [vmem:[#allocation2 + $0x54] sm:$0xe]
  %v3629 = vld [vmem:[#allocation2 + $0x58] sm:$0xf]
  %v3630 = vld [vmem:[#allocation2 + $0x5c] sm:$0x1]
  %v3631 = vld [vmem:[#allocation2 + $0x60] sm:$0xe]
  %v3632 = vld [vmem:[#allocation2 + $0x64] sm:$0xf]
  %v3633 = vld [vmem:[#allocation2 + $0x68] sm:$0x1]
  %v3634 = vld [vmem:[#allocation2 + $0x6c] sm:$0xe]
  %v3635 = vld [vmem:[#allocation2 + $0x70] sm:$0xf]
  %v3636 = vld [vmem:[#allocation2 + $0x74] sm:$0x1]
  %v3637 = vld [vmem:[#allocation2 + $0x78] sm:$0xe]
  %v3638 = vld [vmem:[#allocation2 + $0x7c] sm:$0xf]
  %v3639 = vld [vmem:[#allocation2 + $0x80] sm:$0x1]
  %v3640 = vld [vmem:[#allocation2 + $0x84] sm:$0xe]
  %v3641 = vld [vmem:[#allocation2 + $0x88] sm:$0xf]
  %v3642 = vld [vmem:[#allocation2 + $0x8c] sm:$0x1]
  %v3643 = vld [vmem:[#allocation2 + $0x90] sm:$0xe]
  %v3644 = vld [vmem:[#allocation2 + $0x94] sm:$0xf]
  %v3645 = vld [vmem:[#allocation2 + $0x98] sm:$0x1]
  %v3646 = vld [vmem:[#allocation2 + $0x9c] sm:$0xe]
  %v3647 = vld [vmem:[#allocation2 + $0xa0] sm:$0xf]
  %v3648 = vld [vmem:[#allocation2 + $0xa4] sm:$0x1]
  %v3649 = vld [vmem:[#allocation2 + $0xa8] sm:$0xe]
  %v3650 = vld [vmem:[#allocation2 + $0xac] sm:$0xf]
  %v3651 = vld [vmem:[#allocation2 + $0xb0] sm:$0x1]
  %v3652 = vld [vmem:[#allocation2 + $0xb4] sm:$0xe]
  %v3653 = vld [vmem:[#allocation2 + $0xb8] sm:$0xf]
  %v3654 = vld [vmem:[#allocation2 + $0xbc] sm:$0x1]
  %v3655 = vld [vmem:[#allocation2 + $0xd8] sm:$0xe]
  %v3656 = vld [vmem:[#allocation2 + $0xdc] sm:$0xf]
  %v3657 = vld [vmem:[#allocation2 + $0xe0] sm:$0x1]
  %v3658 = vld [vmem:[#allocation2 + $0xe4] sm:$0xe]
  %v3659 = vld [vmem:[#allocation2 + $0xe8] sm:$0xf]
  %v3660 = vld [vmem:[#allocation2 + $0xec] sm:$0x1]
  %v3661 = vld [vmem:[#allocation2 + $0xf0] sm:$0xe]
  %v3662 = vld [vmem:[#allocation2 + $0xf4] sm:$0xf]
  %v3663 = vld [vmem:[#allocation2 + $0xf8] sm:$0x1]
  %v3664 = vld [vmem:[#allocation2 + $0xfc] sm:$0xe]
  %v3665 = vld [vmem:[#allocation2 + $0x100] sm:$0xf]
  %v3666 = vld [vmem:[#allocation2 + $0x104] sm:$0x1]
  %v3667 = vld [vmem:[#allocation2 + $0x108] sm:$0xe]
  %v3668 = vld [vmem:[#allocation2 + $0x10c] sm:$0xf]
  %v3669 = vld [vmem:[#allocation2 + $0x110] sm:$0x1]
  %v3670 = vld [vmem:[#allocation2 + $0x114] sm:$0xe]
  %v3671 = vld [vmem:[#allocation2 + $0x118] sm:$0xf]
  %v3672 = vld [vmem:[#allocation2 + $0x11c] sm:$0x1]
  %v3673 = vld [vmem:[#allocation2 + $0x120] sm:$0xe]
  %v3674 = vld [vmem:[#allocation2 + $0x124] sm:$0xf]
  %v3675 = vld [vmem:[#allocation2 + $0x128] sm:$0x1]
  %v3676 = vld [vmem:[#allocation2 + $0x12c] sm:$0xe]
  %v3677 = vld [vmem:[#allocation2 + $0x130] sm:$0xf]
  %v3678 = vld [vmem:[#allocation2 + $0x134] sm:$0x1]
  %v3679 = vld [vmem:[#allocation2 + $0x138] sm:$0xe]
  %v3680 = vld [vmem:[#allocation2 + $0x13c] sm:$0xf]
  %v3681 = vld [vmem:[#allocation2 + $0x140] sm:$0x1]
  %v3682 = vld [vmem:[#allocation2 + $0x144] sm:$0xe]
  %v3683 = vld [vmem:[#allocation2 + $0x148] sm:$0xf]
  %v3684 = vld [vmem:[#allocation2 + $0x14c] sm:$0x1]
  %v3685 = vld [vmem:[#allocation2 + $0x150] sm:$0xe]
  %v3686 = vld [vmem:[#allocation2 + $0x154] sm:$0xf]
  %v3687 = vld [vmem:[#allocation2 + $0x158] sm:$0x1]
  %v3688 = vld [vmem:[#allocation2 + $0x15c] sm:$0xe]
  %v3689 = vld [vmem:[#allocation2 + $0x160] sm:$0xf]
  %v3690 = vld [vmem:[#allocation2 + $0x164] sm:$0x1]
  %v3691 = vld [vmem:[#allocation2 + $0x168] sm:$0xe]
  %v3692 = vld [vmem:[#allocation2 + $0x16c] sm:$0xf]
  %v3693 = vld [vmem:[#allocation2 + $0x170] sm:$0x1]
  %v3694 = vld [vmem:[#allocation2 + $0x174] sm:$0xe]
  %v3695 = vld [vmem:[#allocation2 + $0x178] sm:$0xf]
  %v3696 = vld [vmem:[#allocation2 + $0x17c] sm:$0x1]
  %v3697 = vld [vmem:[#allocation2 + $0x180] sm:$0xe]
  %v3698 = vld [vmem:[#allocation2 + $0x184] sm:$0xf]
  %v3699 = vld [vmem:[#allocation2 + $0x188] sm:$0x1]
  %v3700 = vld [vmem:[#allocation2 + $0x18c] sm:$0xe]
  %v3701 = vld [vmem:[#allocation2 + $0x190] sm:$0xf]
  %v3702 = vld [vmem:[#allocation2 + $0x194] sm:$0x1]
  %vm3799 = vcmask 1042432
  %vm3800 = vcmask 1046532
  %vm3801 = vmor %vm3799, %vm3800
  %v3802 = vrot.slane %v3607, 5
  %v3803 = vrot.slane %v3802, 4
  %v3804 = vrot.slane %v3608, 5
  %v3805 = vsel %vm3801, %v3803, %v3804
  %v3806 = vrot.slane %v3804, 4
  %v3807 = vrot.slane %v3609, 5
  %v3808 = vsel %vm3801, %v3806, %v3807
  %v3809 = vrot.slane %v3610, 5
  %v3810 = vrot.slane %v3809, 4
  %v3811 = vrot.slane %v3611, 5
  %v3812 = vsel %vm3801, %v3810, %v3811
  %v3813 = vrot.slane %v3811, 4
  %v3814 = vrot.slane %v3612, 5
  %v3815 = vsel %vm3801, %v3813, %v3814
  %v3816 = vrot.slane %v3613, 5
  %v3817 = vrot.slane %v3816, 4
  %v3818 = vrot.slane %v3614, 5
  %v3819 = vsel %vm3801, %v3817, %v3818
  %v3820 = vrot.slane %v3818, 4
  %v3821 = vrot.slane %v3615, 5
  %v3822 = vsel %vm3801, %v3820, %v3821
  %v3823 = vrot.slane %v3616, 5
  %v3824 = vrot.slane %v3823, 4
  %v3825 = vrot.slane %v3617, 5
  %v3826 = vsel %vm3801, %v3824, %v3825
  %v3827 = vrot.slane %v3825, 4
  %v3828 = vrot.slane %v3618, 5
  %v3829 = vsel %vm3801, %v3827, %v3828
  %v3830 = vrot.slane %v3619, 5
  %v3831 = vrot.slane %v3830, 4
  %v3832 = vrot.slane %v3620, 5
  %v3833 = vsel %vm3801, %v3831, %v3832
  %v3834 = vrot.slane %v3832, 4
  %v3835 = vrot.slane %v3621, 5
  %v3836 = vsel %vm3801, %v3834, %v3835
  %v3837 = vrot.slane %v3622, 5
  %v3838 = vrot.slane %v3837, 4
  %v3839 = vrot.slane %v3623, 5
  %v3840 = vsel %vm3801, %v3838, %v3839
  %v3841 = vrot.slane %v3839, 4
  %v3842 = vrot.slane %v3624, 5
  %v3843 = vsel %vm3801, %v3841, %v3842
  %v3844 = vrot.slane %v3625, 5
  %v3845 = vrot.slane %v3844, 4
  %v3846 = vrot.slane %v3626, 5
  %v3847 = vsel %vm3801, %v3845, %v3846
  %v3848 = vrot.slane %v3846, 4
  %v3849 = vrot.slane %v3627, 5
  %v3850 = vsel %vm3801, %v3848, %v3849
  %v3851 = vrot.slane %v3628, 5
  %v3852 = vrot.slane %v3851, 4
  %v3853 = vrot.slane %v3629, 5
  %v3854 = vsel %vm3801, %v3852, %v3853
  %v3855 = vrot.slane %v3853, 4
  %v3856 = vrot.slane %v3630, 5
  %v3857 = vsel %vm3801, %v3855, %v3856
  %v3858 = vrot.slane %v3631, 5
  %v3859 = vrot.slane %v3858, 4
  %v3860 = vrot.slane %v3632, 5
  %v3861 = vsel %vm3801, %v3859, %v3860
  %v3862 = vrot.slane %v3860, 4
  %v3863 = vrot.slane %v3633, 5
  %v3864 = vsel %vm3801, %v3862, %v3863
  %v3865 = vrot.slane %v3634, 5
  %v3866 = vrot.slane %v3865, 4
  %v3867 = vrot.slane %v3635, 5
  %v3868 = vsel %vm3801, %v3866, %v3867
  %v3869 = vrot.slane %v3867, 4
  %v3870 = vrot.slane %v3636, 5
  %v3871 = vsel %vm3801, %v3869, %v3870
  %v3872 = vrot.slane %v3637, 5
  %v3873 = vrot.slane %v3872, 4
  %v3874 = vrot.slane %v3638, 5
  %v3875 = vsel %vm3801, %v3873, %v3874
  %v3876 = vrot.slane %v3874, 4
  %v3877 = vrot.slane %v3639, 5
  %v3878 = vsel %vm3801, %v3876, %v3877
  %v3879 = vrot.slane %v3640, 5
  %v3880 = vrot.slane %v3879, 4
  %v3881 = vrot.slane %v3641, 5
  %v3882 = vsel %vm3801, %v3880, %v3881
  %v3883 = vrot.slane %v3881, 4
  %v3884 = vrot.slane %v3642, 5
  %v3885 = vsel %vm3801, %v3883, %v3884
  %v3886 = vrot.slane %v3643, 5
  %v3887 = vrot.slane %v3886, 4
  %v3888 = vrot.slane %v3644, 5
  %v3889 = vsel %vm3801, %v3887, %v3888
  %v3890 = vrot.slane %v3888, 4
  %v3891 = vrot.slane %v3645, 5
  %v3892 = vsel %vm3801, %v3890, %v3891
  %v3893 = vrot.slane %v3646, 5
  %v3894 = vrot.slane %v3893, 4
  %v3895 = vrot.slane %v3647, 5
  %v3896 = vsel %vm3801, %v3894, %v3895
  %v3897 = vrot.slane %v3895, 4
  %v3898 = vrot.slane %v3648, 5
  %v3899 = vsel %vm3801, %v3897, %v3898
  %v3900 = vrot.slane %v3649, 5
  %v3901 = vrot.slane %v3900, 4
  %v3902 = vrot.slane %v3650, 5
  %v3903 = vsel %vm3801, %v3901, %v3902
  %v3904 = vrot.slane %v3902, 4
  %v3905 = vrot.slane %v3651, 5
  %v3906 = vsel %vm3801, %v3904, %v3905
  %v3907 = vrot.slane %v3652, 5
  %v3908 = vrot.slane %v3907, 4
  %v3909 = vrot.slane %v3653, 5
  %v3910 = vsel %vm3801, %v3908, %v3909
  %v3911 = vrot.slane %v3909, 4
  %v3912 = vrot.slane %v3654, 5
  %v3913 = vsel %vm3801, %v3911, %v3912
  %v3914 = vrot.slane %v3655, 5
  %v3915 = vrot.slane %v3914, 4
  %v3916 = vrot.slane %v3656, 5
  %v3917 = vsel %vm3801, %v3915, %v3916
  %v3918 = vrot.slane %v3916, 4
  %v3919 = vrot.slane %v3657, 5
  %v3920 = vsel %vm3801, %v3918, %v3919
  %v3921 = vrot.slane %v3658, 5
  %v3922 = vrot.slane %v3921, 4
  %v3923 = vrot.slane %v3659, 5
  %v3924 = vsel %vm3801, %v3922, %v3923
  %v3925 = vrot.slane %v3923, 4
  %v3926 = vrot.slane %v3660, 5
  %v3927 = vsel %vm3801, %v3925, %v3926
  %v3928 = vrot.slane %v3661, 5
  %v3929 = vrot.slane %v3928, 4
  %v3930 = vrot.slane %v3662, 5
  %v3931 = vsel %vm3801, %v3929, %v3930
  %v3932 = vrot.slane %v3930, 4
  %v3933 = vrot.slane %v3663, 5
  %v3934 = vsel %vm3801, %v3932, %v3933
  %v3935 = vrot.slane %v3664, 5
  %v3936 = vrot.slane %v3935, 4
  %v3937 = vrot.slane %v3665, 5
  %v3938 = vsel %vm3801, %v3936, %v3937
  %v3939 = vrot.slane %v3937, 4
  %v3940 = vrot.slane %v3666, 5
  %v3941 = vsel %vm3801, %v3939, %v3940
  %v3942 = vrot.slane %v3667, 5
  %v3943 = vrot.slane %v3942, 4
  %v3944 = vrot.slane %v3668, 5
  %v3945 = vsel %vm3801, %v3943, %v3944
  %v3946 = vrot.slane %v3944, 4
  %v3947 = vrot.slane %v3669, 5
  %v3948 = vsel %vm3801, %v3946, %v3947
  %v3949 = vrot.slane %v3670, 5
  %v3950 = vrot.slane %v3949, 4
  %v3951 = vrot.slane %v3671, 5
  %v3952 = vsel %vm3801, %v3950, %v3951
  %v3953 = vrot.slane %v3951, 4
  %v3954 = vrot.slane %v3672, 5
  %v3955 = vsel %vm3801, %v3953, %v3954
  %v3956 = vrot.slane %v3673, 5
  %v3957 = vrot.slane %v3956, 4
  %v3958 = vrot.slane %v3674, 5
  %v3959 = vsel %vm3801, %v3957, %v3958
  %v3960 = vrot.slane %v3958, 4
  %v3961 = vrot.slane %v3675, 5
  %v3962 = vsel %vm3801, %v3960, %v3961
  %v3963 = vrot.slane %v3676, 5
  %v3964 = vrot.slane %v3963, 4
  %v3965 = vrot.slane %v3677, 5
  %v3966 = vsel %vm3801, %v3964, %v3965
  %v3967 = vrot.slane %v3965, 4
  %v3968 = vrot.slane %v3678, 5
  %v3969 = vsel %vm3801, %v3967, %v3968
  %v3970 = vrot.slane %v3679, 5
  %v3971 = vrot.slane %v3970, 4
  %v3972 = vrot.slane %v3680, 5
  %v3973 = vsel %vm3801, %v3971, %v3972
  %v3974 = vrot.slane %v3972, 4
  %v3975 = vrot.slane %v3681, 5
  %v3976 = vsel %vm3801, %v3974, %v3975
  %v3977 = vrot.slane %v3682, 5
  %v3978 = vrot.slane %v3977, 4
  %v3979 = vrot.slane %v3683, 5
  %v3980 = vsel %vm3801, %v3978, %v3979
  %v3981 = vrot.slane %v3979, 4
  %v3982 = vrot.slane %v3684, 5
  %v3983 = vsel %vm3801, %v3981, %v3982
  %v3984 = vrot.slane %v3685, 5
  %v3985 = vrot.slane %v3984, 4
  %v3986 = vrot.slane %v3686, 5
  %v3987 = vsel %vm3801, %v3985, %v3986
  %v3988 = vrot.slane %v3986, 4
  %v3989 = vrot.slane %v3687, 5
  %v3990 = vsel %vm3801, %v3988, %v3989
  %v3991 = vrot.slane %v3688, 5
  %v3992 = vrot.slane %v3991, 4
  %v3993 = vrot.slane %v3689, 5
  %v3994 = vsel %vm3801, %v3992, %v3993
  %v3995 = vrot.slane %v3993, 4
  %v3996 = vrot.slane %v3690, 5
  %v3997 = vsel %vm3801, %v3995, %v3996
  %v3998 = vrot.slane %v3691, 5
  %v3999 = vrot.slane %v3998, 4
  %v4000 = vrot.slane %v3692, 5
  %v4001 = vsel %vm3801, %v3999, %v4000
  %v4002 = vrot.slane %v4000, 4
  %v4003 = vrot.slane %v3693, 5
  %v4004 = vsel %vm3801, %v4002, %v4003
  %v4005 = vrot.slane %v3694, 5
  %v4006 = vrot.slane %v4005, 4
  %v4007 = vrot.slane %v3695, 5
  %v4008 = vsel %vm3801, %v4006, %v4007
  %v4009 = vrot.slane %v4007, 4
  %v4010 = vrot.slane %v3696, 5
  %v4011 = vsel %vm3801, %v4009, %v4010
  %v4012 = vrot.slane %v3697, 5
  %v4013 = vrot.slane %v4012, 4
  %v4014 = vrot.slane %v3698, 5
  %v4015 = vsel %vm3801, %v4013, %v4014
  %v4016 = vrot.slane %v4014, 4
  %v4017 = vrot.slane %v3699, 5
  %v4018 = vsel %vm3801, %v4016, %v4017
  %v4019 = vrot.slane %v3700, 5
  %v4020 = vrot.slane %v4019, 4
  %v4021 = vrot.slane %v3701, 5
  %v4022 = vsel %vm3801, %v4020, %v4021
  %v4023 = vrot.slane %v4021, 4
  %v4024 = vrot.slane %v3702, 5
  %v4025 = vsel %vm3801, %v4023, %v4024
  %4090 = vst [vmem:[#allocation3 + $0x8] sm:$0xf] %v3805
  %4091 = vst [vmem:[#allocation3 + $0x2c] sm:$0xf] %v3808
  %4092 = vst [vmem:[#allocation3 + $0x50] sm:$0xf] %v3812
  %4093 = vst [vmem:[#allocation3 + $0x74] sm:$0xf] %v3815
  %4094 = vst [vmem:[#allocation3 + $0x98] sm:$0xf] %v3819
  %4095 = vst [vmem:[#allocation3 + $0xbc] sm:$0xf] %v3822
  %4096 = vst [vmem:[#allocation3 + $0xe0] sm:$0xf] %v3826
  %4097 = vst [vmem:[#allocation3 + $0x104] sm:$0xf] %v3829
  %4098 = vst [vmem:[#allocation3 + $0x128] sm:$0xf] %v3833
  %4099 = vst [vmem:[#allocation3 + $0x14c] sm:$0xf] %v3836
  %4100 = vst [vmem:[#allocation3 + $0x170] sm:$0xf] %v3840
  %4101 = vst [vmem:[#allocation3 + $0x194] sm:$0xf] %v3843
  %4102 = vst [vmem:[#allocation3 + $0x1b8] sm:$0xf] %v3847
  %4103 = vst [vmem:[#allocation3 + $0x1dc] sm:$0xf] %v3850
  %4104 = vst [vmem:[#allocation3 + $0x200] sm:$0xf] %v3854
  %4105 = vst [vmem:[#allocation3 + $0x224] sm:$0xf] %v3857
  %4106 = vst [vmem:[#allocation3 + $0x248] sm:$0xf] %v3861
  %4107 = vst [vmem:[#allocation3 + $0x26c] sm:$0xf] %v3864
  %4108 = vst [vmem:[#allocation3 + $0x290] sm:$0xf] %v3868
  %4109 = vst [vmem:[#allocation3 + $0x2b4] sm:$0xf] %v3871
  %4110 = vst [vmem:[#allocation3 + $0x2d8] sm:$0xf] %v3875
  %4111 = vst [vmem:[#allocation3 + $0x2fc] sm:$0xf] %v3878
  %4112 = vst [vmem:[#allocation3 + $0x320] sm:$0xf] %v3882
  %4113 = vst [vmem:[#allocation3 + $0x344] sm:$0xf] %v3885
  %4114 = vst [vmem:[#allocation3 + $0x368] sm:$0xf] %v3889
  %4115 = vst [vmem:[#allocation3 + $0x38c] sm:$0xf] %v3892
  %4116 = vst [vmem:[#allocation3 + $0x3b0] sm:$0xf] %v3896
  %4117 = vst [vmem:[#allocation3 + $0x3d4] sm:$0xf] %v3899
  %4118 = vst [vmem:[#allocation3 + $0x3f8] sm:$0xf] %v3903
  %4119 = vst [vmem:[#allocation3 + $0x41c] sm:$0xf] %v3906
  %4120 = vst [vmem:[#allocation3 + $0x440] sm:$0xf] %v3910
  %4121 = vst [vmem:[#allocation3 + $0x464] sm:$0xf] %v3913
  %4122 = vst [vmem:[#allocation3 + $0x488] sm:$0xf] %v3917
  %4123 = vst [vmem:[#allocation3 + $0x4ac] sm:$0xf] %v3920
  %4124 = vst [vmem:[#allocation3 + $0x4d0] sm:$0xf] %v3924
  %4125 = vst [vmem:[#allocation3 + $0x4f4] sm:$0xf] %v3927
  %4126 = vst [vmem:[#allocation3 + $0x518] sm:$0xf] %v3931
  %4127 = vst [vmem:[#allocation3 + $0x53c] sm:$0xf] %v3934
  %4128 = vst [vmem:[#allocation3 + $0x560] sm:$0xf] %v3938
  %4129 = vst [vmem:[#allocation3 + $0x584] sm:$0xf] %v3941
  %4130 = vst [vmem:[#allocation3 + $0x5a8] sm:$0xf] %v3945
  %4131 = vst [vmem:[#allocation3 + $0x5cc] sm:$0xf] %v3948
  %4132 = vst [vmem:[#allocation3 + $0x5f0] sm:$0xf] %v3952
  %4133 = vst [vmem:[#allocation3 + $0x614] sm:$0xf] %v3955
  %4134 = vst [vmem:[#allocation3 + $0x638] sm:$0xf] %v3959
  %4135 = vst [vmem:[#allocation3 + $0x65c] sm:$0xf] %v3962
  %4136 = vst [vmem:[#allocation3 + $0x680] sm:$0xf] %v3966
  %4137 = vst [vmem:[#allocation3 + $0x6a4] sm:$0xf] %v3969
  %4138 = vst [vmem:[#allocation3 + $0x6c8] sm:$0xf] %v3973
  %4139 = vst [vmem:[#allocation3 + $0x6ec] sm:$0xf] %v3976
  %4140 = vst [vmem:[#allocation3 + $0x710] sm:$0xf] %v3980
  %4141 = vst [vmem:[#allocation3 + $0x734] sm:$0xf] %v3983
  %4142 = vst [vmem:[#allocation3 + $0x758] sm:$0xf] %v3987
  %4143 = vst [vmem:[#allocation3 + $0x77c] sm:$0xf] %v3990
  %4144 = vst [vmem:[#allocation3 + $0x7a0] sm:$0xf] %v3994
  %4145 = vst [vmem:[#allocation3 + $0x7c4] sm:$0xf] %v3997
  %4146 = vst [vmem:[#allocation3 + $0x7e8] sm:$0xf] %v4001
  %4147 = vst [vmem:[#allocation3 + $0x80c] sm:$0xf] %v4004
  %4148 = vst [vmem:[#allocation3 + $0x830] sm:$0xf] %v4008
  %4149 = vst [vmem:[#allocation3 + $0x854] sm:$0xf] %v4011
  %4150 = vst [vmem:[#allocation3 + $0x878] sm:$0xf] %v4015
  %4151 = vst [vmem:[#allocation3 + $0x89c] sm:$0xf] %v4018
  %4152 = vst [vmem:[#allocation3 + $0x8c0] sm:$0xf] %v4022
  %4153 = vst [vmem:[#allocation3 + $0x8e4] sm:$0xf] %v4025
  %v4154 = vld [vmem:[%s2257] sm:$0xf]
  %v4155 = vld [vmem:[%s2257 + $0x4] sm:$0xf]
  %v4156 = vld [vmem:[%s2257 + $0xc] sm:$0xf]
  %v4157 = vld [vmem:[%s2257 + $0x10] sm:$0xf]
  %v4158 = vld [vmem:[%s2257 + $0x18] sm:$0xf]
  %v4159 = vld [vmem:[%s2257 + $0x1c] sm:$0xf]
  %v4160 = vld [vmem:[%s2257 + $0x24] sm:$0xf]
  %v4161 = vld [vmem:[%s2257 + $0x28] sm:$0xf]
  %v4162 = vld [vmem:[%s2257 + $0x30] sm:$0xf]
  %v4163 = vld [vmem:[%s2257 + $0x34] sm:$0xf]
  %v4164 = vld [vmem:[%s2257 + $0x3c] sm:$0xf]
  %v4165 = vld [vmem:[%s2257 + $0x40] sm:$0xf]
  %v4166 = vld [vmem:[%s2257 + $0x48] sm:$0xf]
  %v4167 = vld [vmem:[%s2257 + $0x4c] sm:$0xf]
  %v4168 = vld [vmem:[%s2257 + $0x54] sm:$0xf]
  %v4169 = vld [vmem:[%s2257 + $0x58] sm:$0xf]
  %v4170 = vld [vmem:[%s2257 + $0x60] sm:$0xf]
  %v4171 = vld [vmem:[%s2257 + $0x64] sm:$0xf]
  %v4172 = vld [vmem:[%s2257 + $0x6c] sm:$0xf]
  %v4173 = vld [vmem:[%s2257 + $0x70] sm:$0xf]
  %v4174 = vld [vmem:[%s2257 + $0x78] sm:$0xf]
  %v4175 = vld [vmem:[%s2257 + $0x7c] sm:$0xf]
  %v4176 = vld [vmem:[%s2257 + $0x84] sm:$0xf]
  %v4177 = vld [vmem:[%s2257 + $0x88] sm:$0xf]
  %v4178 = vld [vmem:[%s2257 + $0x90] sm:$0xf]
  %v4179 = vld [vmem:[%s2257 + $0x94] sm:$0xf]
  %v4180 = vld [vmem:[%s2257 + $0x9c] sm:$0xf]
  %v4181 = vld [vmem:[%s2257 + $0xa0] sm:$0xf]
  %v4182 = vld [vmem:[%s2257 + $0xa8] sm:$0xf]
  %v4183 = vld [vmem:[%s2257 + $0xac] sm:$0xf]
  %v4184 = vld [vmem:[%s2257 + $0xb4] sm:$0xf]
  %v4185 = vld [vmem:[%s2257 + $0xb8] sm:$0xf]
  %v4186 = vld [vmem:[%s2257 + $0xd8] sm:$0xf]
  %v4187 = vld [vmem:[%s2257 + $0xdc] sm:$0xf]
  %v4188 = vld [vmem:[%s2257 + $0xe4] sm:$0xf]
  %v4189 = vld [vmem:[%s2257 + $0xe8] sm:$0xf]
  %v4190 = vld [vmem:[%s2257 + $0xf0] sm:$0xf]
  %v4191 = vld [vmem:[%s2257 + $0xf4] sm:$0xf]
  %v4192 = vld [vmem:[%s2257 + $0xfc] sm:$0xf]
  %v4193 = vld [vmem:[%s2257 + $0x100] sm:$0xf]
  %v4194 = vld [vmem:[%s2257 + $0x108] sm:$0xf]
  %v4195 = vld [vmem:[%s2257 + $0x10c] sm:$0xf]
  %v4196 = vld [vmem:[%s2257 + $0x114] sm:$0xf]
  %v4197 = vld [vmem:[%s2257 + $0x118] sm:$0xf]
  %v4198 = vld [vmem:[%s2257 + $0x120] sm:$0xf]
  %v4199 = vld [vmem:[%s2257 + $0x124] sm:$0xf]
  %v4200 = vld [vmem:[%s2257 + $0x12c] sm:$0xf]
  %v4201 = vld [vmem:[%s2257 + $0x130] sm:$0xf]
  %v4202 = vld [vmem:[%s2257 + $0x138] sm:$0xf]
  %v4203 = vld [vmem:[%s2257 + $0x13c] sm:$0xf]
  %v4204 = vld [vmem:[%s2257 + $0x144] sm:$0xf]
  %v4205 = vld [vmem:[%s2257 + $0x148] sm:$0xf]
  %v4206 = vld [vmem:[%s2257 + $0x150] sm:$0xf]
  %v4207 = vld [vmem:[%s2257 + $0x154] sm:$0xf]
  %v4208 = vld [vmem:[%s2257 + $0x15c] sm:$0xf]
  %v4209 = vld [vmem:[%s2257 + $0x160] sm:$0xf]
  %v4210 = vld [vmem:[%s2257 + $0x168] sm:$0xf]
  %v4211 = vld [vmem:[%s2257 + $0x16c] sm:$0xf]
  %v4212 = vld [vmem:[%s2257 + $0x174] sm:$0xf]
  %v4213 = vld [vmem:[%s2257 + $0x178] sm:$0xf]
  %v4214 = vld [vmem:[%s2257 + $0x180] sm:$0xf]
  %v4215 = vld [vmem:[%s2257 + $0x184] sm:$0xf]
  %v4216 = vld [vmem:[%s2257 + $0x18c] sm:$0xf]
  %v4217 = vld [vmem:[%s2257 + $0x190] sm:$0xf]
  %4218 = vst [vmem:[#allocation3 + $0xc] sm:$0xf] %v4154
  %4219 = vst [vmem:[#allocation3 + $0x30] sm:$0xf] %v4155
  %4220 = vst [vmem:[#allocation3 + $0x54] sm:$0xf] %v4156
  %4221 = vst [vmem:[#allocation3 + $0x78] sm:$0xf] %v4157
  %4222 = vst [vmem:[#allocation3 + $0x9c] sm:$0xf] %v4158
  %4223 = vst [vmem:[#allocation3 + $0xc0] sm:$0xf] %v4159
  %4224 = vst [vmem:[#allocation3 + $0xe4] sm:$0xf] %v4160
  %4225 = vst [vmem:[#allocation3 + $0x108] sm:$0xf] %v4161
  %4226 = vst [vmem:[#allocation3 + $0x12c] sm:$0xf] %v4162
  %4227 = vst [vmem:[#allocation3 + $0x150] sm:$0xf] %v4163
  %4228 = vst [vmem:[#allocation3 + $0x174] sm:$0xf] %v4164
  %4229 = vst [vmem:[#allocation3 + $0x198] sm:$0xf] %v4165
  %4230 = vst [vmem:[#allocation3 + $0x1bc] sm:$0xf] %v4166
  %4231 = vst [vmem:[#allocation3 + $0x1e0] sm:$0xf] %v4167
  %4232 = vst [vmem:[#allocation3 + $0x204] sm:$0xf] %v4168
  %4233 = vst [vmem:[#allocation3 + $0x228] sm:$0xf] %v4169
  %4234 = vst [vmem:[#allocation3 + $0x24c] sm:$0xf] %v4170
  %4235 = vst [vmem:[#allocation3 + $0x270] sm:$0xf] %v4171
  %4236 = vst [vmem:[#allocation3 + $0x294] sm:$0xf] %v4172
  %4237 = vst [vmem:[#allocation3 + $0x2b8] sm:$0xf] %v4173
  %4238 = vst [vmem:[#allocation3 + $0x2dc] sm:$0xf] %v4174
  %4239 = vst [vmem:[#allocation3 + $0x300] sm:$0xf] %v4175
  %4240 = vst [vmem:[#allocation3 + $0x324] sm:$0xf] %v4176
  %4241 = vst [vmem:[#allocation3 + $0x348] sm:$0xf] %v4177
  %4242 = vst [vmem:[#allocation3 + $0x36c] sm:$0xf] %v4178
  %4243 = vst [vmem:[#allocation3 + $0x390] sm:$0xf] %v4179
  %4244 = vst [vmem:[#allocation3 + $0x3b4] sm:$0xf] %v4180
  %4245 = vst [vmem:[#allocation3 + $0x3d8] sm:$0xf] %v4181
  %4246 = vst [vmem:[#allocation3 + $0x3fc] sm:$0xf] %v4182
  %4247 = vst [vmem:[#allocation3 + $0x420] sm:$0xf] %v4183
  %4248 = vst [vmem:[#allocation3 + $0x444] sm:$0xf] %v4184
  %4249 = vst [vmem:[#allocation3 + $0x468] sm:$0xf] %v4185
  %4250 = vst [vmem:[#allocation3 + $0x48c] sm:$0xf] %v4186
  %4251 = vst [vmem:[#allocation3 + $0x4b0] sm:$0xf] %v4187
  %4252 = vst [vmem:[#allocation3 + $0x4d4] sm:$0xf] %v4188
  %4253 = vst [vmem:[#allocation3 + $0x4f8] sm:$0xf] %v4189
  %4254 = vst [vmem:[#allocation3 + $0x51c] sm:$0xf] %v4190
  %4255 = vst [vmem:[#allocation3 + $0x540] sm:$0xf] %v4191
  %4256 = vst [vmem:[#allocation3 + $0x564] sm:$0xf] %v4192
  %4257 = vst [vmem:[#allocation3 + $0x588] sm:$0xf] %v4193
  %4258 = vst [vmem:[#allocation3 + $0x5ac] sm:$0xf] %v4194
  %4259 = vst [vmem:[#allocation3 + $0x5d0] sm:$0xf] %v4195
  %4260 = vst [vmem:[#allocation3 + $0x5f4] sm:$0xf] %v4196
  %4261 = vst [vmem:[#allocation3 + $0x618] sm:$0xf] %v4197
  %4262 = vst [vmem:[#allocation3 + $0x63c] sm:$0xf] %v4198
  %4263 = vst [vmem:[#allocation3 + $0x660] sm:$0xf] %v4199
  %4264 = vst [vmem:[#allocation3 + $0x684] sm:$0xf] %v4200
  %4265 = vst [vmem:[#allocation3 + $0x6a8] sm:$0xf] %v4201
  %4266 = vst [vmem:[#allocation3 + $0x6cc] sm:$0xf] %v4202
  %4267 = vst [vmem:[#allocation3 + $0x6f0] sm:$0xf] %v4203
  %4268 = vst [vmem:[#allocation3 + $0x714] sm:$0xf] %v4204
  %4269 = vst [vmem:[#allocation3 + $0x738] sm:$0xf] %v4205
  %4270 = vst [vmem:[#allocation3 + $0x75c] sm:$0xf] %v4206
  %4271 = vst [vmem:[#allocation3 + $0x780] sm:$0xf] %v4207
  %4272 = vst [vmem:[#allocation3 + $0x7a4] sm:$0xf] %v4208
  %4273 = vst [vmem:[#allocation3 + $0x7c8] sm:$0xf] %v4209
  %4274 = vst [vmem:[#allocation3 + $0x7ec] sm:$0xf] %v4210
  %4275 = vst [vmem:[#allocation3 + $0x810] sm:$0xf] %v4211
  %4276 = vst [vmem:[#allocation3 + $0x834] sm:$0xf] %v4212
  %4277 = vst [vmem:[#allocation3 + $0x858] sm:$0xf] %v4213
  %4278 = vst [vmem:[#allocation3 + $0x87c] sm:$0xf] %v4214
  %4279 = vst [vmem:[#allocation3 + $0x8a0] sm:$0xf] %v4215
  %4280 = vst [vmem:[#allocation3 + $0x8c4] sm:$0xf] %v4216
  %4281 = vst [vmem:[#allocation3 + $0x8e8] sm:$0xf] %v4217
  %v4282 = vld [vmem:[%s2257] sm:$0xf]
  %v4283 = vld [vmem:[%s2257 + $0x4] sm:$0xf]
  %v4284 = vld [vmem:[%s2257 + $0x8] sm:$0x1]
  %v4285 = vld [vmem:[%s2257 + $0xc] sm:$0xf]
  %v4286 = vld [vmem:[%s2257 + $0x10] sm:$0xf]
  %v4287 = vld [vmem:[%s2257 + $0x14] sm:$0x1]
  %v4288 = vld [vmem:[%s2257 + $0x18] sm:$0xf]
  %v4289 = vld [vmem:[%s2257 + $0x1c] sm:$0xf]
  %v4290 = vld [vmem:[%s2257 + $0x20] sm:$0x1]
  %v4291 = vld [vmem:[%s2257 + $0x24] sm:$0xf]
  %v4292 = vld [vmem:[%s2257 + $0x28] sm:$0xf]
  %v4293 = vld [vmem:[%s2257 + $0x2c] sm:$0x1]
  %v4294 = vld [vmem:[%s2257 + $0x30] sm:$0xf]
  %v4295 = vld [vmem:[%s2257 + $0x34] sm:$0xf]
  %v4296 = vld [vmem:[%s2257 + $0x38] sm:$0x1]
  %v4297 = vld [vmem:[%s2257 + $0x3c] sm:$0xf]
  %v4298 = vld [vmem:[%s2257 + $0x40] sm:$0xf]
  %v4299 = vld [vmem:[%s2257 + $0x44] sm:$0x1]
  %v4300 = vld [vmem:[%s2257 + $0x48] sm:$0xf]
  %v4301 = vld [vmem:[%s2257 + $0x4c] sm:$0xf]
  %v4302 = vld [vmem:[%s2257 + $0x50] sm:$0x1]
  %v4303 = vld [vmem:[%s2257 + $0x54] sm:$0xf]
  %v4304 = vld [vmem:[%s2257 + $0x58] sm:$0xf]
  %v4305 = vld [vmem:[%s2257 + $0x5c] sm:$0x1]
  %v4306 = vld [vmem:[%s2257 + $0x60] sm:$0xf]
  %v4307 = vld [vmem:[%s2257 + $0x64] sm:$0xf]
  %v4308 = vld [vmem:[%s2257 + $0x68] sm:$0x1]
  %v4309 = vld [vmem:[%s2257 + $0x6c] sm:$0xf]
  %v4310 = vld [vmem:[%s2257 + $0x70] sm:$0xf]
  %v4311 = vld [vmem:[%s2257 + $0x74] sm:$0x1]
  %v4312 = vld [vmem:[%s2257 + $0x78] sm:$0xf]
  %v4313 = vld [vmem:[%s2257 + $0x7c] sm:$0xf]
  %v4314 = vld [vmem:[%s2257 + $0x80] sm:$0x1]
  %v4315 = vld [vmem:[%s2257 + $0x84] sm:$0xf]
  %v4316 = vld [vmem:[%s2257 + $0x88] sm:$0xf]
  %v4317 = vld [vmem:[%s2257 + $0x8c] sm:$0x1]
  %v4318 = vld [vmem:[%s2257 + $0x90] sm:$0xf]
  %v4319 = vld [vmem:[%s2257 + $0x94] sm:$0xf]
  %v4320 = vld [vmem:[%s2257 + $0x98] sm:$0x1]
  %v4321 = vld [vmem:[%s2257 + $0x9c] sm:$0xf]
  %v4322 = vld [vmem:[%s2257 + $0xa0] sm:$0xf]
  %v4323 = vld [vmem:[%s2257 + $0xa4] sm:$0x1]
  %v4324 = vld [vmem:[%s2257 + $0xa8] sm:$0xf]
  %v4325 = vld [vmem:[%s2257 + $0xac] sm:$0xf]
  %v4326 = vld [vmem:[%s2257 + $0xb0] sm:$0x1]
  %v4327 = vld [vmem:[%s2257 + $0xb4] sm:$0xf]
  %v4328 = vld [vmem:[%s2257 + $0xb8] sm:$0xf]
  %v4329 = vld [vmem:[%s2257 + $0xbc] sm:$0x1]
  %v4330 = vld [vmem:[%s2257 + $0xd8] sm:$0xf]
  %v4331 = vld [vmem:[%s2257 + $0xdc] sm:$0xf]
  %v4332 = vld [vmem:[%s2257 + $0xe0] sm:$0x1]
  %v4333 = vld [vmem:[%s2257 + $0xe4] sm:$0xf]
  %v4334 = vld [vmem:[%s2257 + $0xe8] sm:$0xf]
  %v4335 = vld [vmem:[%s2257 + $0xec] sm:$0x1]
  %v4336 = vld [vmem:[%s2257 + $0xf0] sm:$0xf]
  %v4337 = vld [vmem:[%s2257 + $0xf4] sm:$0xf]
  %v4338 = vld [vmem:[%s2257 + $0xf8] sm:$0x1]
  %v4339 = vld [vmem:[%s2257 + $0xfc] sm:$0xf]
  %v4340 = vld [vmem:[%s2257 + $0x100] sm:$0xf]
  %v4341 = vld [vmem:[%s2257 + $0x104] sm:$0x1]
  %v4342 = vld [vmem:[%s2257 + $0x108] sm:$0xf]
  %v4343 = vld [vmem:[%s2257 + $0x10c] sm:$0xf]
  %v4344 = vld [vmem:[%s2257 + $0x110] sm:$0x1]
  %v4345 = vld [vmem:[%s2257 + $0x114] sm:$0xf]
  %v4346 = vld [vmem:[%s2257 + $0x118] sm:$0xf]
  %v4347 = vld [vmem:[%s2257 + $0x11c] sm:$0x1]
  %v4348 = vld [vmem:[%s2257 + $0x120] sm:$0xf]
  %v4349 = vld [vmem:[%s2257 + $0x124] sm:$0xf]
  %v4350 = vld [vmem:[%s2257 + $0x128] sm:$0x1]
  %v4351 = vld [vmem:[%s2257 + $0x12c] sm:$0xf]
  %v4352 = vld [vmem:[%s2257 + $0x130] sm:$0xf]
  %v4353 = vld [vmem:[%s2257 + $0x134] sm:$0x1]
  %v4354 = vld [vmem:[%s2257 + $0x138] sm:$0xf]
  %v4355 = vld [vmem:[%s2257 + $0x13c] sm:$0xf]
  %v4356 = vld [vmem:[%s2257 + $0x140] sm:$0x1]
  %v4357 = vld [vmem:[%s2257 + $0x144] sm:$0xf]
  %v4358 = vld [vmem:[%s2257 + $0x148] sm:$0xf]
  %v4359 = vld [vmem:[%s2257 + $0x14c] sm:$0x1]
  %v4360 = vld [vmem:[%s2257 + $0x150] sm:$0xf]
  %v4361 = vld [vmem:[%s2257 + $0x154] sm:$0xf]
  %v4362 = vld [vmem:[%s2257 + $0x158] sm:$0x1]
  %v4363 = vld [vmem:[%s2257 + $0x15c] sm:$0xf]
  %v4364 = vld [vmem:[%s2257 + $0x160] sm:$0xf]
  %v4365 = vld [vmem:[%s2257 + $0x164] sm:$0x1]
  %v4366 = vld [vmem:[%s2257 + $0x168] sm:$0xf]
  %v4367 = vld [vmem:[%s2257 + $0x16c] sm:$0xf]
  %v4368 = vld [vmem:[%s2257 + $0x170] sm:$0x1]
  %v4369 = vld [vmem:[%s2257 + $0x174] sm:$0xf]
  %v4370 = vld [vmem:[%s2257 + $0x178] sm:$0xf]
  %v4371 = vld [vmem:[%s2257 + $0x17c] sm:$0x1]
  %v4372 = vld [vmem:[%s2257 + $0x180] sm:$0xf]
  %v4373 = vld [vmem:[%s2257 + $0x184] sm:$0xf]
  %v4374 = vld [vmem:[%s2257 + $0x188] sm:$0x1]
  %v4375 = vld [vmem:[%s2257 + $0x18c] sm:$0xf]
  %v4376 = vld [vmem:[%s2257 + $0x190] sm:$0xf]
  %v4377 = vld [vmem:[%s2257 + $0x194] sm:$0x1]
  %v4379 = vshrl.u32 %v4282, 16
  %v4381 = vrot.slane %v4379, 4
  %v4382 = vshll.u32 %v4282, 16
  %v4384 = vrot.slane %v4382, 5
  %v4385 = vor.u32 %v4381, %v4384
  %v4386 = vrot.slane %v4385, 4
  %v4388 = vshll.u32 %v4283, 16
  %v4390 = vrot.slane %v4388, 5
  %v4391 = vsel %vm2710, %v4386, %v4390
  %v4392 = vshrl.u32 %v4283, 16
  %v4394 = vrot.slane %v4392, 4
  %v4395 = vor.u32 %v4394, %v4390
  %v4396 = vrot.slane %v4395, 4
  %v4398 = vshll.u32 %v4284, 16
  %v4400 = vrot.slane %v4398, 5
  %v4401 = vsel %vm2710, %v4396, %v4400
  %v4403 = vshrl.u32 %v4285, 16
  %v4405 = vrot.slane %v4403, 4
  %v4406 = vshll.u32 %v4285, 16
  %v4408 = vrot.slane %v4406, 5
  %v4409 = vor.u32 %v4405, %v4408
  %v4410 = vrot.slane %v4409, 4
  %v4412 = vshll.u32 %v4286, 16
  %v4414 = vrot.slane %v4412, 5
  %v4415 = vsel %vm2710, %v4410, %v4414
  %v4416 = vshrl.u32 %v4286, 16
  %v4418 = vrot.slane %v4416, 4
  %v4419 = vor.u32 %v4418, %v4414
  %v4420 = vrot.slane %v4419, 4
  %v4422 = vshll.u32 %v4287, 16
  %v4424 = vrot.slane %v4422, 5
  %v4425 = vsel %vm2710, %v4420, %v4424
  %v4427 = vshrl.u32 %v4288, 16
  %v4429 = vrot.slane %v4427, 4
  %v4430 = vshll.u32 %v4288, 16
  %v4432 = vrot.slane %v4430, 5
  %v4433 = vor.u32 %v4429, %v4432
  %v4434 = vrot.slane %v4433, 4
  %v4436 = vshll.u32 %v4289, 16
  %v4438 = vrot.slane %v4436, 5
  %v4439 = vsel %vm2710, %v4434, %v4438
  %v4440 = vshrl.u32 %v4289, 16
  %v4442 = vrot.slane %v4440, 4
  %v4443 = vor.u32 %v4442, %v4438
  %v4444 = vrot.slane %v4443, 4
  %v4446 = vshll.u32 %v4290, 16
  %v4448 = vrot.slane %v4446, 5
  %v4449 = vsel %vm2710, %v4444, %v4448
  %v4451 = vshrl.u32 %v4291, 16
  %v4453 = vrot.slane %v4451, 4
  %v4454 = vshll.u32 %v4291, 16
  %v4456 = vrot.slane %v4454, 5
  %v4457 = vor.u32 %v4453, %v4456
  %v4458 = vrot.slane %v4457, 4
  %v4460 = vshll.u32 %v4292, 16
  %v4462 = vrot.slane %v4460, 5
  %v4463 = vsel %vm2710, %v4458, %v4462
  %v4464 = vshrl.u32 %v4292, 16
  %v4466 = vrot.slane %v4464, 4
  %v4467 = vor.u32 %v4466, %v4462
  %v4468 = vrot.slane %v4467, 4
  %v4470 = vshll.u32 %v4293, 16
  %v4472 = vrot.slane %v4470, 5
  %v4473 = vsel %vm2710, %v4468, %v4472
  %v4475 = vshrl.u32 %v4294, 16
  %v4477 = vrot.slane %v4475, 4
  %v4478 = vshll.u32 %v4294, 16
  %v4480 = vrot.slane %v4478, 5
  %v4481 = vor.u32 %v4477, %v4480
  %v4482 = vrot.slane %v4481, 4
  %v4484 = vshll.u32 %v4295, 16
  %v4486 = vrot.slane %v4484, 5
  %v4487 = vsel %vm2710, %v4482, %v4486
  %v4488 = vshrl.u32 %v4295, 16
  %v4490 = vrot.slane %v4488, 4
  %v4491 = vor.u32 %v4490, %v4486
  %v4492 = vrot.slane %v4491, 4
  %v4494 = vshll.u32 %v4296, 16
  %v4496 = vrot.slane %v4494, 5
  %v4497 = vsel %vm2710, %v4492, %v4496
  %v4499 = vshrl.u32 %v4297, 16
  %v4501 = vrot.slane %v4499, 4
  %v4502 = vshll.u32 %v4297, 16
  %v4504 = vrot.slane %v4502, 5
  %v4505 = vor.u32 %v4501, %v4504
  %v4506 = vrot.slane %v4505, 4
  %v4508 = vshll.u32 %v4298, 16
  %v4510 = vrot.slane %v4508, 5
  %v4511 = vsel %vm2710, %v4506, %v4510
  %v4512 = vshrl.u32 %v4298, 16
  %v4514 = vrot.slane %v4512, 4
  %v4515 = vor.u32 %v4514, %v4510
  %v4516 = vrot.slane %v4515, 4
  %v4518 = vshll.u32 %v4299, 16
  %v4520 = vrot.slane %v4518, 5
  %v4521 = vsel %vm2710, %v4516, %v4520
  %v4523 = vshrl.u32 %v4300, 16
  %v4525 = vrot.slane %v4523, 4
  %v4526 = vshll.u32 %v4300, 16
  %v4528 = vrot.slane %v4526, 5
  %v4529 = vor.u32 %v4525, %v4528
  %v4530 = vrot.slane %v4529, 4
  %v4532 = vshll.u32 %v4301, 16
  %v4534 = vrot.slane %v4532, 5
  %v4535 = vsel %vm2710, %v4530, %v4534
  %v4536 = vshrl.u32 %v4301, 16
  %v4538 = vrot.slane %v4536, 4
  %v4539 = vor.u32 %v4538, %v4534
  %v4540 = vrot.slane %v4539, 4
  %v4542 = vshll.u32 %v4302, 16
  %v4544 = vrot.slane %v4542, 5
  %v4545 = vsel %vm2710, %v4540, %v4544
  %v4547 = vshrl.u32 %v4303, 16
  %v4549 = vrot.slane %v4547, 4
  %v4550 = vshll.u32 %v4303, 16
  %v4552 = vrot.slane %v4550, 5
  %v4553 = vor.u32 %v4549, %v4552
  %v4554 = vrot.slane %v4553, 4
  %v4556 = vshll.u32 %v4304, 16
  %v4558 = vrot.slane %v4556, 5
  %v4559 = vsel %vm2710, %v4554, %v4558
  %v4560 = vshrl.u32 %v4304, 16
  %v4562 = vrot.slane %v4560, 4
  %v4563 = vor.u32 %v4562, %v4558
  %v4564 = vrot.slane %v4563, 4
  %v4566 = vshll.u32 %v4305, 16
  %v4568 = vrot.slane %v4566, 5
  %v4569 = vsel %vm2710, %v4564, %v4568
  %v4571 = vshrl.u32 %v4306, 16
  %v4573 = vrot.slane %v4571, 4
  %v4574 = vshll.u32 %v4306, 16
  %v4576 = vrot.slane %v4574, 5
  %v4577 = vor.u32 %v4573, %v4576
  %v4578 = vrot.slane %v4577, 4
  %v4580 = vshll.u32 %v4307, 16
  %v4582 = vrot.slane %v4580, 5
  %v4583 = vsel %vm2710, %v4578, %v4582
  %v4584 = vshrl.u32 %v4307, 16
  %v4586 = vrot.slane %v4584, 4
  %v4587 = vor.u32 %v4586, %v4582
  %v4588 = vrot.slane %v4587, 4
  %v4590 = vshll.u32 %v4308, 16
  %v4592 = vrot.slane %v4590, 5
  %v4593 = vsel %vm2710, %v4588, %v4592
  %v4595 = vshrl.u32 %v4309, 16
  %v4597 = vrot.slane %v4595, 4
  %v4598 = vshll.u32 %v4309, 16
  %v4600 = vrot.slane %v4598, 5
  %v4601 = vor.u32 %v4597, %v4600
  %v4602 = vrot.slane %v4601, 4
  %v4604 = vshll.u32 %v4310, 16
  %v4606 = vrot.slane %v4604, 5
  %v4607 = vsel %vm2710, %v4602, %v4606
  %v4608 = vshrl.u32 %v4310, 16
  %v4610 = vrot.slane %v4608, 4
  %v4611 = vor.u32 %v4610, %v4606
  %v4612 = vrot.slane %v4611, 4
  %v4614 = vshll.u32 %v4311, 16
  %v4616 = vrot.slane %v4614, 5
  %v4617 = vsel %vm2710, %v4612, %v4616
  %v4619 = vshrl.u32 %v4312, 16
  %v4621 = vrot.slane %v4619, 4
  %v4622 = vshll.u32 %v4312, 16
  %v4624 = vrot.slane %v4622, 5
  %v4625 = vor.u32 %v4621, %v4624
  %v4626 = vrot.slane %v4625, 4
  %v4628 = vshll.u32 %v4313, 16
  %v4630 = vrot.slane %v4628, 5
  %v4631 = vsel %vm2710, %v4626, %v4630
  %v4632 = vshrl.u32 %v4313, 16
  %v4634 = vrot.slane %v4632, 4
  %v4635 = vor.u32 %v4634, %v4630
  %v4636 = vrot.slane %v4635, 4
  %v4638 = vshll.u32 %v4314, 16
  %v4640 = vrot.slane %v4638, 5
  %v4641 = vsel %vm2710, %v4636, %v4640
  %v4643 = vshrl.u32 %v4315, 16
  %v4645 = vrot.slane %v4643, 4
  %v4646 = vshll.u32 %v4315, 16
  %v4648 = vrot.slane %v4646, 5
  %v4649 = vor.u32 %v4645, %v4648
  %v4650 = vrot.slane %v4649, 4
  %v4652 = vshll.u32 %v4316, 16
  %v4654 = vrot.slane %v4652, 5
  %v4655 = vsel %vm2710, %v4650, %v4654
  %v4656 = vshrl.u32 %v4316, 16
  %v4658 = vrot.slane %v4656, 4
  %v4659 = vor.u32 %v4658, %v4654
  %v4660 = vrot.slane %v4659, 4
  %v4662 = vshll.u32 %v4317, 16
  %v4664 = vrot.slane %v4662, 5
  %v4665 = vsel %vm2710, %v4660, %v4664
  %v4667 = vshrl.u32 %v4318, 16
  %v4669 = vrot.slane %v4667, 4
  %v4670 = vshll.u32 %v4318, 16
  %v4672 = vrot.slane %v4670, 5
  %v4673 = vor.u32 %v4669, %v4672
  %v4674 = vrot.slane %v4673, 4
  %v4676 = vshll.u32 %v4319, 16
  %v4678 = vrot.slane %v4676, 5
  %v4679 = vsel %vm2710, %v4674, %v4678
  %v4680 = vshrl.u32 %v4319, 16
  %v4682 = vrot.slane %v4680, 4
  %v4683 = vor.u32 %v4682, %v4678
  %v4684 = vrot.slane %v4683, 4
  %v4686 = vshll.u32 %v4320, 16
  %v4688 = vrot.slane %v4686, 5
  %v4689 = vsel %vm2710, %v4684, %v4688
  %v4691 = vshrl.u32 %v4321, 16
  %v4693 = vrot.slane %v4691, 4
  %v4694 = vshll.u32 %v4321, 16
  %v4696 = vrot.slane %v4694, 5
  %v4697 = vor.u32 %v4693, %v4696
  %v4698 = vrot.slane %v4697, 4
  %v4700 = vshll.u32 %v4322, 16
  %v4702 = vrot.slane %v4700, 5
  %v4703 = vsel %vm2710, %v4698, %v4702
  %v4704 = vshrl.u32 %v4322, 16
  %v4706 = vrot.slane %v4704, 4
  %v4707 = vor.u32 %v4706, %v4702
  %v4708 = vrot.slane %v4707, 4
  %v4710 = vshll.u32 %v4323, 16
  %v4712 = vrot.slane %v4710, 5
  %v4713 = vsel %vm2710, %v4708, %v4712
  %v4715 = vshrl.u32 %v4324, 16
  %v4717 = vrot.slane %v4715, 4
  %v4718 = vshll.u32 %v4324, 16
  %v4720 = vrot.slane %v4718, 5
  %v4721 = vor.u32 %v4717, %v4720
  %v4722 = vrot.slane %v4721, 4
  %v4724 = vshll.u32 %v4325, 16
  %v4726 = vrot.slane %v4724, 5
  %v4727 = vsel %vm2710, %v4722, %v4726
  %v4728 = vshrl.u32 %v4325, 16
  %v4730 = vrot.slane %v4728, 4
  %v4731 = vor.u32 %v4730, %v4726
  %v4732 = vrot.slane %v4731, 4
  %v4734 = vshll.u32 %v4326, 16
  %v4736 = vrot.slane %v4734, 5
  %v4737 = vsel %vm2710, %v4732, %v4736
  %v4739 = vshrl.u32 %v4327, 16
  %v4741 = vrot.slane %v4739, 4
  %v4742 = vshll.u32 %v4327, 16
  %v4744 = vrot.slane %v4742, 5
  %v4745 = vor.u32 %v4741, %v4744
  %v4746 = vrot.slane %v4745, 4
  %v4748 = vshll.u32 %v4328, 16
  %v4750 = vrot.slane %v4748, 5
  %v4751 = vsel %vm2710, %v4746, %v4750
  %v4752 = vshrl.u32 %v4328, 16
  %v4754 = vrot.slane %v4752, 4
  %v4755 = vor.u32 %v4754, %v4750
  %v4756 = vrot.slane %v4755, 4
  %v4758 = vshll.u32 %v4329, 16
  %v4760 = vrot.slane %v4758, 5
  %v4761 = vsel %vm2710, %v4756, %v4760
  %v4763 = vshrl.u32 %v4330, 16
  %v4765 = vrot.slane %v4763, 4
  %v4766 = vshll.u32 %v4330, 16
  %v4768 = vrot.slane %v4766, 5
  %v4769 = vor.u32 %v4765, %v4768
  %v4770 = vrot.slane %v4769, 4
  %v4772 = vshll.u32 %v4331, 16
  %v4774 = vrot.slane %v4772, 5
  %v4775 = vsel %vm2710, %v4770, %v4774
  %v4776 = vshrl.u32 %v4331, 16
  %v4778 = vrot.slane %v4776, 4
  %v4779 = vor.u32 %v4778, %v4774
  %v4780 = vrot.slane %v4779, 4
  %v4782 = vshll.u32 %v4332, 16
  %v4784 = vrot.slane %v4782, 5
  %v4785 = vsel %vm2710, %v4780, %v4784
  %v4787 = vshrl.u32 %v4333, 16
  %v4789 = vrot.slane %v4787, 4
  %v4790 = vshll.u32 %v4333, 16
  %v4792 = vrot.slane %v4790, 5
  %v4793 = vor.u32 %v4789, %v4792
  %v4794 = vrot.slane %v4793, 4
  %v4796 = vshll.u32 %v4334, 16
  %v4798 = vrot.slane %v4796, 5
  %v4799 = vsel %vm2710, %v4794, %v4798
  %v4800 = vshrl.u32 %v4334, 16
  %v4802 = vrot.slane %v4800, 4
  %v4803 = vor.u32 %v4802, %v4798
  %v4804 = vrot.slane %v4803, 4
  %v4806 = vshll.u32 %v4335, 16
  %v4808 = vrot.slane %v4806, 5
  %v4809 = vsel %vm2710, %v4804, %v4808
  %v4811 = vshrl.u32 %v4336, 16
  %v4813 = vrot.slane %v4811, 4
  %v4814 = vshll.u32 %v4336, 16
  %v4816 = vrot.slane %v4814, 5
  %v4817 = vor.u32 %v4813, %v4816
  %v4818 = vrot.slane %v4817, 4
  %v4820 = vshll.u32 %v4337, 16
  %v4822 = vrot.slane %v4820, 5
  %v4823 = vsel %vm2710, %v4818, %v4822
  %v4824 = vshrl.u32 %v4337, 16
  %v4826 = vrot.slane %v4824, 4
  %v4827 = vor.u32 %v4826, %v4822
  %v4828 = vrot.slane %v4827, 4
  %v4830 = vshll.u32 %v4338, 16
  %v4832 = vrot.slane %v4830, 5
  %v4833 = vsel %vm2710, %v4828, %v4832
  %v4835 = vshrl.u32 %v4339, 16
  %v4837 = vrot.slane %v4835, 4
  %v4838 = vshll.u32 %v4339, 16
  %v4840 = vrot.slane %v4838, 5
  %v4841 = vor.u32 %v4837, %v4840
  %v4842 = vrot.slane %v4841, 4
  %v4844 = vshll.u32 %v4340, 16
  %v4846 = vrot.slane %v4844, 5
  %v4847 = vsel %vm2710, %v4842, %v4846
  %v4848 = vshrl.u32 %v4340, 16
  %v4850 = vrot.slane %v4848, 4
  %v4851 = vor.u32 %v4850, %v4846
  %v4852 = vrot.slane %v4851, 4
  %v4854 = vshll.u32 %v4341, 16
  %v4856 = vrot.slane %v4854, 5
  %v4857 = vsel %vm2710, %v4852, %v4856
  %v4859 = vshrl.u32 %v4342, 16
  %v4861 = vrot.slane %v4859, 4
  %v4862 = vshll.u32 %v4342, 16
  %v4864 = vrot.slane %v4862, 5
  %v4865 = vor.u32 %v4861, %v4864
  %v4866 = vrot.slane %v4865, 4
  %v4868 = vshll.u32 %v4343, 16
  %v4870 = vrot.slane %v4868, 5
  %v4871 = vsel %vm2710, %v4866, %v4870
  %v4872 = vshrl.u32 %v4343, 16
  %v4874 = vrot.slane %v4872, 4
  %v4875 = vor.u32 %v4874, %v4870
  %v4876 = vrot.slane %v4875, 4
  %v4878 = vshll.u32 %v4344, 16
  %v4880 = vrot.slane %v4878, 5
  %v4881 = vsel %vm2710, %v4876, %v4880
  %v4883 = vshrl.u32 %v4345, 16
  %v4885 = vrot.slane %v4883, 4
  %v4886 = vshll.u32 %v4345, 16
  %v4888 = vrot.slane %v4886, 5
  %v4889 = vor.u32 %v4885, %v4888
  %v4890 = vrot.slane %v4889, 4
  %v4892 = vshll.u32 %v4346, 16
  %v4894 = vrot.slane %v4892, 5
  %v4895 = vsel %vm2710, %v4890, %v4894
  %v4896 = vshrl.u32 %v4346, 16
  %v4898 = vrot.slane %v4896, 4
  %v4899 = vor.u32 %v4898, %v4894
  %v4900 = vrot.slane %v4899, 4
  %v4902 = vshll.u32 %v4347, 16
  %v4904 = vrot.slane %v4902, 5
  %v4905 = vsel %vm2710, %v4900, %v4904
  %v4907 = vshrl.u32 %v4348, 16
  %v4909 = vrot.slane %v4907, 4
  %v4910 = vshll.u32 %v4348, 16
  %v4912 = vrot.slane %v4910, 5
  %v4913 = vor.u32 %v4909, %v4912
  %v4914 = vrot.slane %v4913, 4
  %v4916 = vshll.u32 %v4349, 16
  %v4918 = vrot.slane %v4916, 5
  %v4919 = vsel %vm2710, %v4914, %v4918
  %v4920 = vshrl.u32 %v4349, 16
  %v4922 = vrot.slane %v4920, 4
  %v4923 = vor.u32 %v4922, %v4918
  %v4924 = vrot.slane %v4923, 4
  %v4926 = vshll.u32 %v4350, 16
  %v4928 = vrot.slane %v4926, 5
  %v4929 = vsel %vm2710, %v4924, %v4928
  %v4931 = vshrl.u32 %v4351, 16
  %v4933 = vrot.slane %v4931, 4
  %v4934 = vshll.u32 %v4351, 16
  %v4936 = vrot.slane %v4934, 5
  %v4937 = vor.u32 %v4933, %v4936
  %v4938 = vrot.slane %v4937, 4
  %v4940 = vshll.u32 %v4352, 16
  %v4942 = vrot.slane %v4940, 5
  %v4943 = vsel %vm2710, %v4938, %v4942
  %v4944 = vshrl.u32 %v4352, 16
  %v4946 = vrot.slane %v4944, 4
  %v4947 = vor.u32 %v4946, %v4942
  %v4948 = vrot.slane %v4947, 4
  %v4950 = vshll.u32 %v4353, 16
  %v4952 = vrot.slane %v4950, 5
  %v4953 = vsel %vm2710, %v4948, %v4952
  %v4955 = vshrl.u32 %v4354, 16
  %v4957 = vrot.slane %v4955, 4
  %v4958 = vshll.u32 %v4354, 16
  %v4960 = vrot.slane %v4958, 5
  %v4961 = vor.u32 %v4957, %v4960
  %v4962 = vrot.slane %v4961, 4
  %v4964 = vshll.u32 %v4355, 16
  %v4966 = vrot.slane %v4964, 5
  %v4967 = vsel %vm2710, %v4962, %v4966
  %v4968 = vshrl.u32 %v4355, 16
  %v4970 = vrot.slane %v4968, 4
  %v4971 = vor.u32 %v4970, %v4966
  %v4972 = vrot.slane %v4971, 4
  %v4974 = vshll.u32 %v4356, 16
  %v4976 = vrot.slane %v4974, 5
  %v4977 = vsel %vm2710, %v4972, %v4976
  %v4979 = vshrl.u32 %v4357, 16
  %v4981 = vrot.slane %v4979, 4
  %v4982 = vshll.u32 %v4357, 16
  %v4984 = vrot.slane %v4982, 5
  %v4985 = vor.u32 %v4981, %v4984
  %v4986 = vrot.slane %v4985, 4
  %v4988 = vshll.u32 %v4358, 16
  %v4990 = vrot.slane %v4988, 5
  %v4991 = vsel %vm2710, %v4986, %v4990
  %v4992 = vshrl.u32 %v4358, 16
  %v4994 = vrot.slane %v4992, 4
  %v4995 = vor.u32 %v4994, %v4990
  %v4996 = vrot.slane %v4995, 4
  %v4998 = vshll.u32 %v4359, 16
  %v5000 = vrot.slane %v4998, 5
  %v5001 = vsel %vm2710, %v4996, %v5000
  %v5003 = vshrl.u32 %v4360, 16
  %v5005 = vrot.slane %v5003, 4
  %v5006 = vshll.u32 %v4360, 16
  %v5008 = vrot.slane %v5006, 5
  %v5009 = vor.u32 %v5005, %v5008
  %v5010 = vrot.slane %v5009, 4
  %v5012 = vshll.u32 %v4361, 16
  %v5014 = vrot.slane %v5012, 5
  %v5015 = vsel %vm2710, %v5010, %v5014
  %v5016 = vshrl.u32 %v4361, 16
  %v5018 = vrot.slane %v5016, 4
  %v5019 = vor.u32 %v5018, %v5014
  %v5020 = vrot.slane %v5019, 4
  %v5022 = vshll.u32 %v4362, 16
  %v5024 = vrot.slane %v5022, 5
  %v5025 = vsel %vm2710, %v5020, %v5024
  %v5027 = vshrl.u32 %v4363, 16
  %v5029 = vrot.slane %v5027, 4
  %v5030 = vshll.u32 %v4363, 16
  %v5032 = vrot.slane %v5030, 5
  %v5033 = vor.u32 %v5029, %v5032
  %v5034 = vrot.slane %v5033, 4
  %v5036 = vshll.u32 %v4364, 16
  %v5038 = vrot.slane %v5036, 5
  %v5039 = vsel %vm2710, %v5034, %v5038
  %v5040 = vshrl.u32 %v4364, 16
  %v5042 = vrot.slane %v5040, 4
  %v5043 = vor.u32 %v5042, %v5038
  %v5044 = vrot.slane %v5043, 4
  %v5046 = vshll.u32 %v4365, 16
  %v5048 = vrot.slane %v5046, 5
  %v5049 = vsel %vm2710, %v5044, %v5048
  %v5051 = vshrl.u32 %v4366, 16
  %v5053 = vrot.slane %v5051, 4
  %v5054 = vshll.u32 %v4366, 16
  %v5056 = vrot.slane %v5054, 5
  %v5057 = vor.u32 %v5053, %v5056
  %v5058 = vrot.slane %v5057, 4
  %v5060 = vshll.u32 %v4367, 16
  %v5062 = vrot.slane %v5060, 5
  %v5063 = vsel %vm2710, %v5058, %v5062
  %v5064 = vshrl.u32 %v4367, 16
  %v5066 = vrot.slane %v5064, 4
  %v5067 = vor.u32 %v5066, %v5062
  %v5068 = vrot.slane %v5067, 4
  %v5070 = vshll.u32 %v4368, 16
  %v5072 = vrot.slane %v5070, 5
  %v5073 = vsel %vm2710, %v5068, %v5072
  %v5075 = vshrl.u32 %v4369, 16
  %v5077 = vrot.slane %v5075, 4
  %v5078 = vshll.u32 %v4369, 16
  %v5080 = vrot.slane %v5078, 5
  %v5081 = vor.u32 %v5077, %v5080
  %v5082 = vrot.slane %v5081, 4
  %v5084 = vshll.u32 %v4370, 16
  %v5086 = vrot.slane %v5084, 5
  %v5087 = vsel %vm2710, %v5082, %v5086
  %v5088 = vshrl.u32 %v4370, 16
  %v5090 = vrot.slane %v5088, 4
  %v5091 = vor.u32 %v5090, %v5086
  %v5092 = vrot.slane %v5091, 4
  %v5094 = vshll.u32 %v4371, 16
  %v5096 = vrot.slane %v5094, 5
  %v5097 = vsel %vm2710, %v5092, %v5096
  %v5099 = vshrl.u32 %v4372, 16
  %v5101 = vrot.slane %v5099, 4
  %v5102 = vshll.u32 %v4372, 16
  %v5104 = vrot.slane %v5102, 5
  %v5105 = vor.u32 %v5101, %v5104
  %v5106 = vrot.slane %v5105, 4
  %v5108 = vshll.u32 %v4373, 16
  %v5110 = vrot.slane %v5108, 5
  %v5111 = vsel %vm2710, %v5106, %v5110
  %v5112 = vshrl.u32 %v4373, 16
  %v5114 = vrot.slane %v5112, 4
  %v5115 = vor.u32 %v5114, %v5110
  %v5116 = vrot.slane %v5115, 4
  %v5118 = vshll.u32 %v4374, 16
  %v5120 = vrot.slane %v5118, 5
  %v5121 = vsel %vm2710, %v5116, %v5120
  %v5123 = vshrl.u32 %v4375, 16
  %v5125 = vrot.slane %v5123, 4
  %v5126 = vshll.u32 %v4375, 16
  %v5128 = vrot.slane %v5126, 5
  %v5129 = vor.u32 %v5125, %v5128
  %v5130 = vrot.slane %v5129, 4
  %v5132 = vshll.u32 %v4376, 16
  %v5134 = vrot.slane %v5132, 5
  %v5135 = vsel %vm2710, %v5130, %v5134
  %v5136 = vshrl.u32 %v4376, 16
  %v5138 = vrot.slane %v5136, 4
  %v5139 = vor.u32 %v5138, %v5134
  %v5140 = vrot.slane %v5139, 4
  %v5142 = vshll.u32 %v4377, 16
  %v5144 = vrot.slane %v5142, 5
  %v5145 = vsel %vm2710, %v5140, %v5144
  %5210 = vst [vmem:[#allocation3 + $0x10] sm:$0xf] %v4391
  %5211 = vst [vmem:[#allocation3 + $0x34] sm:$0xf] %v4401
  %5212 = vst [vmem:[#allocation3 + $0x58] sm:$0xf] %v4415
  %5213 = vst [vmem:[#allocation3 + $0x7c] sm:$0xf] %v4425
  %5214 = vst [vmem:[#allocation3 + $0xa0] sm:$0xf] %v4439
  %5215 = vst [vmem:[#allocation3 + $0xc4] sm:$0xf] %v4449
  %5216 = vst [vmem:[#allocation3 + $0xe8] sm:$0xf] %v4463
  %5217 = vst [vmem:[#allocation3 + $0x10c] sm:$0xf] %v4473
  %5218 = vst [vmem:[#allocation3 + $0x130] sm:$0xf] %v4487
  %5219 = vst [vmem:[#allocation3 + $0x154] sm:$0xf] %v4497
  %5220 = vst [vmem:[#allocation3 + $0x178] sm:$0xf] %v4511
  %5221 = vst [vmem:[#allocation3 + $0x19c] sm:$0xf] %v4521
  %5222 = vst [vmem:[#allocation3 + $0x1c0] sm:$0xf] %v4535
  %5223 = vst [vmem:[#allocation3 + $0x1e4] sm:$0xf] %v4545
  %5224 = vst [vmem:[#allocation3 + $0x208] sm:$0xf] %v4559
  %5225 = vst [vmem:[#allocation3 + $0x22c] sm:$0xf] %v4569
  %5226 = vst [vmem:[#allocation3 + $0x250] sm:$0xf] %v4583
  %5227 = vst [vmem:[#allocation3 + $0x274] sm:$0xf] %v4593
  %5228 = vst [vmem:[#allocation3 + $0x298] sm:$0xf] %v4607
  %5229 = vst [vmem:[#allocation3 + $0x2bc] sm:$0xf] %v4617
  %5230 = vst [vmem:[#allocation3 + $0x2e0] sm:$0xf] %v4631
  %5231 = vst [vmem:[#allocation3 + $0x304] sm:$0xf] %v4641
  %5232 = vst [vmem:[#allocation3 + $0x328] sm:$0xf] %v4655
  %5233 = vst [vmem:[#allocation3 + $0x34c] sm:$0xf] %v4665
  %5234 = vst [vmem:[#allocation3 + $0x370] sm:$0xf] %v4679
  %5235 = vst [vmem:[#allocation3 + $0x394] sm:$0xf] %v4689
  %5236 = vst [vmem:[#allocation3 + $0x3b8] sm:$0xf] %v4703
  %5237 = vst [vmem:[#allocation3 + $0x3dc] sm:$0xf] %v4713
  %5238 = vst [vmem:[#allocation3 + $0x400] sm:$0xf] %v4727
  %5239 = vst [vmem:[#allocation3 + $0x424] sm:$0xf] %v4737
  %5240 = vst [vmem:[#allocation3 + $0x448] sm:$0xf] %v4751
  %5241 = vst [vmem:[#allocation3 + $0x46c] sm:$0xf] %v4761
  %5242 = vst [vmem:[#allocation3 + $0x490] sm:$0xf] %v4775
  %5243 = vst [vmem:[#allocation3 + $0x4b4] sm:$0xf] %v4785
  %5244 = vst [vmem:[#allocation3 + $0x4d8] sm:$0xf] %v4799
  %5245 = vst [vmem:[#allocation3 + $0x4fc] sm:$0xf] %v4809
  %5246 = vst [vmem:[#allocation3 + $0x520] sm:$0xf] %v4823
  %5247 = vst [vmem:[#allocation3 + $0x544] sm:$0xf] %v4833
  %5248 = vst [vmem:[#allocation3 + $0x568] sm:$0xf] %v4847
  %5249 = vst [vmem:[#allocation3 + $0x58c] sm:$0xf] %v4857
  %5250 = vst [vmem:[#allocation3 + $0x5b0] sm:$0xf] %v4871
  %5251 = vst [vmem:[#allocation3 + $0x5d4] sm:$0xf] %v4881
  %5252 = vst [vmem:[#allocation3 + $0x5f8] sm:$0xf] %v4895
  %5253 = vst [vmem:[#allocation3 + $0x61c] sm:$0xf] %v4905
  %5254 = vst [vmem:[#allocation3 + $0x640] sm:$0xf] %v4919
  %5255 = vst [vmem:[#allocation3 + $0x664] sm:$0xf] %v4929
  %5256 = vst [vmem:[#allocation3 + $0x688] sm:$0xf] %v4943
  %5257 = vst [vmem:[#allocation3 + $0x6ac] sm:$0xf] %v4953
  %5258 = vst [vmem:[#allocation3 + $0x6d0] sm:$0xf] %v4967
  %5259 = vst [vmem:[#allocation3 + $0x6f4] sm:$0xf] %v4977
  %5260 = vst [vmem:[#allocation3 + $0x718] sm:$0xf] %v4991
  %5261 = vst [vmem:[#allocation3 + $0x73c] sm:$0xf] %v5001
  %5262 = vst [vmem:[#allocation3 + $0x760] sm:$0xf] %v5015
  %5263 = vst [vmem:[#allocation3 + $0x784] sm:$0xf] %v5025
  %5264 = vst [vmem:[#allocation3 + $0x7a8] sm:$0xf] %v5039
  %5265 = vst [vmem:[#allocation3 + $0x7cc] sm:$0xf] %v5049
  %5266 = vst [vmem:[#allocation3 + $0x7f0] sm:$0xf] %v5063
  %5267 = vst [vmem:[#allocation3 + $0x814] sm:$0xf] %v5073
  %5268 = vst [vmem:[#allocation3 + $0x838] sm:$0xf] %v5087
  %5269 = vst [vmem:[#allocation3 + $0x85c] sm:$0xf] %v5097
  %5270 = vst [vmem:[#allocation3 + $0x880] sm:$0xf] %v5111
  %5271 = vst [vmem:[#allocation3 + $0x8a4] sm:$0xf] %v5121
  %5272 = vst [vmem:[#allocation3 + $0x8c8] sm:$0xf] %v5135
  %5273 = vst [vmem:[#allocation3 + $0x8ec] sm:$0xf] %v5145
  %v5274 = vld [vmem:[%s2257] sm:$0xe]
  %v5275 = vld [vmem:[%s2257 + $0x4] sm:$0xf]
  %v5276 = vld [vmem:[%s2257 + $0x8] sm:$0x1]
  %v5277 = vld [vmem:[%s2257 + $0xc] sm:$0xe]
  %v5278 = vld [vmem:[%s2257 + $0x10] sm:$0xf]
  %v5279 = vld [vmem:[%s2257 + $0x14] sm:$0x1]
  %v5280 = vld [vmem:[%s2257 + $0x18] sm:$0xe]
  %v5281 = vld [vmem:[%s2257 + $0x1c] sm:$0xf]
  %v5282 = vld [vmem:[%s2257 + $0x20] sm:$0x1]
  %v5283 = vld [vmem:[%s2257 + $0x24] sm:$0xe]
  %v5284 = vld [vmem:[%s2257 + $0x28] sm:$0xf]
  %v5285 = vld [vmem:[%s2257 + $0x2c] sm:$0x1]
  %v5286 = vld [vmem:[%s2257 + $0x30] sm:$0xe]
  %v5287 = vld [vmem:[%s2257 + $0x34] sm:$0xf]
  %v5288 = vld [vmem:[%s2257 + $0x38] sm:$0x1]
  %v5289 = vld [vmem:[%s2257 + $0x3c] sm:$0xe]
  %v5290 = vld [vmem:[%s2257 + $0x40] sm:$0xf]
  %v5291 = vld [vmem:[%s2257 + $0x44] sm:$0x1]
  %v5292 = vld [vmem:[%s2257 + $0x48] sm:$0xe]
  %v5293 = vld [vmem:[%s2257 + $0x4c] sm:$0xf]
  %v5294 = vld [vmem:[%s2257 + $0x50] sm:$0x1]
  %v5295 = vld [vmem:[%s2257 + $0x54] sm:$0xe]
  %v5296 = vld [vmem:[%s2257 + $0x58] sm:$0xf]
  %v5297 = vld [vmem:[%s2257 + $0x5c] sm:$0x1]
  %v5298 = vld [vmem:[%s2257 + $0x60] sm:$0xe]
  %v5299 = vld [vmem:[%s2257 + $0x64] sm:$0xf]
  %v5300 = vld [vmem:[%s2257 + $0x68] sm:$0x1]
  %v5301 = vld [vmem:[%s2257 + $0x6c] sm:$0xe]
  %v5302 = vld [vmem:[%s2257 + $0x70] sm:$0xf]
  %v5303 = vld [vmem:[%s2257 + $0x74] sm:$0x1]
  %v5304 = vld [vmem:[%s2257 + $0x78] sm:$0xe]
  %v5305 = vld [vmem:[%s2257 + $0x7c] sm:$0xf]
  %v5306 = vld [vmem:[%s2257 + $0x80] sm:$0x1]
  %v5307 = vld [vmem:[%s2257 + $0x84] sm:$0xe]
  %v5308 = vld [vmem:[%s2257 + $0x88] sm:$0xf]
  %v5309 = vld [vmem:[%s2257 + $0x8c] sm:$0x1]
  %v5310 = vld [vmem:[%s2257 + $0x90] sm:$0xe]
  %v5311 = vld [vmem:[%s2257 + $0x94] sm:$0xf]
  %v5312 = vld [vmem:[%s2257 + $0x98] sm:$0x1]
  %v5313 = vld [vmem:[%s2257 + $0x9c] sm:$0xe]
  %v5314 = vld [vmem:[%s2257 + $0xa0] sm:$0xf]
  %v5315 = vld [vmem:[%s2257 + $0xa4] sm:$0x1]
  %v5316 = vld [vmem:[%s2257 + $0xa8] sm:$0xe]
  %v5317 = vld [vmem:[%s2257 + $0xac] sm:$0xf]
  %v5318 = vld [vmem:[%s2257 + $0xb0] sm:$0x1]
  %v5319 = vld [vmem:[%s2257 + $0xb4] sm:$0xe]
  %v5320 = vld [vmem:[%s2257 + $0xb8] sm:$0xf]
  %v5321 = vld [vmem:[%s2257 + $0xbc] sm:$0x1]
  %v5322 = vld [vmem:[%s2257 + $0xd8] sm:$0xe]
  %v5323 = vld [vmem:[%s2257 + $0xdc] sm:$0xf]
  %v5324 = vld [vmem:[%s2257 + $0xe0] sm:$0x1]
  %v5325 = vld [vmem:[%s2257 + $0xe4] sm:$0xe]
  %v5326 = vld [vmem:[%s2257 + $0xe8] sm:$0xf]
  %v5327 = vld [vmem:[%s2257 + $0xec] sm:$0x1]
  %v5328 = vld [vmem:[%s2257 + $0xf0] sm:$0xe]
  %v5329 = vld [vmem:[%s2257 + $0xf4] sm:$0xf]
  %v5330 = vld [vmem:[%s2257 + $0xf8] sm:$0x1]
  %v5331 = vld [vmem:[%s2257 + $0xfc] sm:$0xe]
  %v5332 = vld [vmem:[%s2257 + $0x100] sm:$0xf]
  %v5333 = vld [vmem:[%s2257 + $0x104] sm:$0x1]
  %v5334 = vld [vmem:[%s2257 + $0x108] sm:$0xe]
  %v5335 = vld [vmem:[%s2257 + $0x10c] sm:$0xf]
  %v5336 = vld [vmem:[%s2257 + $0x110] sm:$0x1]
  %v5337 = vld [vmem:[%s2257 + $0x114] sm:$0xe]
  %v5338 = vld [vmem:[%s2257 + $0x118] sm:$0xf]
  %v5339 = vld [vmem:[%s2257 + $0x11c] sm:$0x1]
  %v5340 = vld [vmem:[%s2257 + $0x120] sm:$0xe]
  %v5341 = vld [vmem:[%s2257 + $0x124] sm:$0xf]
  %v5342 = vld [vmem:[%s2257 + $0x128] sm:$0x1]
  %v5343 = vld [vmem:[%s2257 + $0x12c] sm:$0xe]
  %v5344 = vld [vmem:[%s2257 + $0x130] sm:$0xf]
  %v5345 = vld [vmem:[%s2257 + $0x134] sm:$0x1]
  %v5346 = vld [vmem:[%s2257 + $0x138] sm:$0xe]
  %v5347 = vld [vmem:[%s2257 + $0x13c] sm:$0xf]
  %v5348 = vld [vmem:[%s2257 + $0x140] sm:$0x1]
  %v5349 = vld [vmem:[%s2257 + $0x144] sm:$0xe]
  %v5350 = vld [vmem:[%s2257 + $0x148] sm:$0xf]
  %v5351 = vld [vmem:[%s2257 + $0x14c] sm:$0x1]
  %v5352 = vld [vmem:[%s2257 + $0x150] sm:$0xe]
  %v5353 = vld [vmem:[%s2257 + $0x154] sm:$0xf]
  %v5354 = vld [vmem:[%s2257 + $0x158] sm:$0x1]
  %v5355 = vld [vmem:[%s2257 + $0x15c] sm:$0xe]
  %v5356 = vld [vmem:[%s2257 + $0x160] sm:$0xf]
  %v5357 = vld [vmem:[%s2257 + $0x164] sm:$0x1]
  %v5358 = vld [vmem:[%s2257 + $0x168] sm:$0xe]
  %v5359 = vld [vmem:[%s2257 + $0x16c] sm:$0xf]
  %v5360 = vld [vmem:[%s2257 + $0x170] sm:$0x1]
  %v5361 = vld [vmem:[%s2257 + $0x174] sm:$0xe]
  %v5362 = vld [vmem:[%s2257 + $0x178] sm:$0xf]
  %v5363 = vld [vmem:[%s2257 + $0x17c] sm:$0x1]
  %v5364 = vld [vmem:[%s2257 + $0x180] sm:$0xe]
  %v5365 = vld [vmem:[%s2257 + $0x184] sm:$0xf]
  %v5366 = vld [vmem:[%s2257 + $0x188] sm:$0x1]
  %v5367 = vld [vmem:[%s2257 + $0x18c] sm:$0xe]
  %v5368 = vld [vmem:[%s2257 + $0x190] sm:$0xf]
  %v5369 = vld [vmem:[%s2257 + $0x194] sm:$0x1]
  %v5466 = vrot.slane %v5274, 5
  %v5467 = vrot.slane %v5466, 4
  %v5468 = vrot.slane %v5275, 5
  %v5469 = vsel %vm3801, %v5467, %v5468
  %v5470 = vrot.slane %v5468, 4
  %v5471 = vrot.slane %v5276, 5
  %v5472 = vsel %vm3801, %v5470, %v5471
  %v5473 = vrot.slane %v5277, 5
  %v5474 = vrot.slane %v5473, 4
  %v5475 = vrot.slane %v5278, 5
  %v5476 = vsel %vm3801, %v5474, %v5475
  %v5477 = vrot.slane %v5475, 4
  %v5478 = vrot.slane %v5279, 5
  %v5479 = vsel %vm3801, %v5477, %v5478
  %v5480 = vrot.slane %v5280, 5
  %v5481 = vrot.slane %v5480, 4
  %v5482 = vrot.slane %v5281, 5
  %v5483 = vsel %vm3801, %v5481, %v5482
  %v5484 = vrot.slane %v5482, 4
  %v5485 = vrot.slane %v5282, 5
  %v5486 = vsel %vm3801, %v5484, %v5485
  %v5487 = vrot.slane %v5283, 5
  %v5488 = vrot.slane %v5487, 4
  %v5489 = vrot.slane %v5284, 5
  %v5490 = vsel %vm3801, %v5488, %v5489
  %v5491 = vrot.slane %v5489, 4
  %v5492 = vrot.slane %v5285, 5
  %v5493 = vsel %vm3801, %v5491, %v5492
  %v5494 = vrot.slane %v5286, 5
  %v5495 = vrot.slane %v5494, 4
  %v5496 = vrot.slane %v5287, 5
  %v5497 = vsel %vm3801, %v5495, %v5496
  %v5498 = vrot.slane %v5496, 4
  %v5499 = vrot.slane %v5288, 5
  %v5500 = vsel %vm3801, %v5498, %v5499
  %v5501 = vrot.slane %v5289, 5
  %v5502 = vrot.slane %v5501, 4
  %v5503 = vrot.slane %v5290, 5
  %v5504 = vsel %vm3801, %v5502, %v5503
  %v5505 = vrot.slane %v5503, 4
  %v5506 = vrot.slane %v5291, 5
  %v5507 = vsel %vm3801, %v5505, %v5506
  %v5508 = vrot.slane %v5292, 5
  %v5509 = vrot.slane %v5508, 4
  %v5510 = vrot.slane %v5293, 5
  %v5511 = vsel %vm3801, %v5509, %v5510
  %v5512 = vrot.slane %v5510, 4
  %v5513 = vrot.slane %v5294, 5
  %v5514 = vsel %vm3801, %v5512, %v5513
  %v5515 = vrot.slane %v5295, 5
  %v5516 = vrot.slane %v5515, 4
  %v5517 = vrot.slane %v5296, 5
  %v5518 = vsel %vm3801, %v5516, %v5517
  %v5519 = vrot.slane %v5517, 4
  %v5520 = vrot.slane %v5297, 5
  %v5521 = vsel %vm3801, %v5519, %v5520
  %v5522 = vrot.slane %v5298, 5
  %v5523 = vrot.slane %v5522, 4
  %v5524 = vrot.slane %v5299, 5
  %v5525 = vsel %vm3801, %v5523, %v5524
  %v5526 = vrot.slane %v5524, 4
  %v5527 = vrot.slane %v5300, 5
  %v5528 = vsel %vm3801, %v5526, %v5527
  %v5529 = vrot.slane %v5301, 5
  %v5530 = vrot.slane %v5529, 4
  %v5531 = vrot.slane %v5302, 5
  %v5532 = vsel %vm3801, %v5530, %v5531
  %v5533 = vrot.slane %v5531, 4
  %v5534 = vrot.slane %v5303, 5
  %v5535 = vsel %vm3801, %v5533, %v5534
  %v5536 = vrot.slane %v5304, 5
  %v5537 = vrot.slane %v5536, 4
  %v5538 = vrot.slane %v5305, 5
  %v5539 = vsel %vm3801, %v5537, %v5538
  %v5540 = vrot.slane %v5538, 4
  %v5541 = vrot.slane %v5306, 5
  %v5542 = vsel %vm3801, %v5540, %v5541
  %v5543 = vrot.slane %v5307, 5
  %v5544 = vrot.slane %v5543, 4
  %v5545 = vrot.slane %v5308, 5
  %v5546 = vsel %vm3801, %v5544, %v5545
  %v5547 = vrot.slane %v5545, 4
  %v5548 = vrot.slane %v5309, 5
  %v5549 = vsel %vm3801, %v5547, %v5548
  %v5550 = vrot.slane %v5310, 5
  %v5551 = vrot.slane %v5550, 4
  %v5552 = vrot.slane %v5311, 5
  %v5553 = vsel %vm3801, %v5551, %v5552
  %v5554 = vrot.slane %v5552, 4
  %v5555 = vrot.slane %v5312, 5
  %v5556 = vsel %vm3801, %v5554, %v5555
  %v5557 = vrot.slane %v5313, 5
  %v5558 = vrot.slane %v5557, 4
  %v5559 = vrot.slane %v5314, 5
  %v5560 = vsel %vm3801, %v5558, %v5559
  %v5561 = vrot.slane %v5559, 4
  %v5562 = vrot.slane %v5315, 5
  %v5563 = vsel %vm3801, %v5561, %v5562
  %v5564 = vrot.slane %v5316, 5
  %v5565 = vrot.slane %v5564, 4
  %v5566 = vrot.slane %v5317, 5
  %v5567 = vsel %vm3801, %v5565, %v5566
  %v5568 = vrot.slane %v5566, 4
  %v5569 = vrot.slane %v5318, 5
  %v5570 = vsel %vm3801, %v5568, %v5569
  %v5571 = vrot.slane %v5319, 5
  %v5572 = vrot.slane %v5571, 4
  %v5573 = vrot.slane %v5320, 5
  %v5574 = vsel %vm3801, %v5572, %v5573
  %v5575 = vrot.slane %v5573, 4
  %v5576 = vrot.slane %v5321, 5
  %v5577 = vsel %vm3801, %v5575, %v5576
  %v5578 = vrot.slane %v5322, 5
  %v5579 = vrot.slane %v5578, 4
  %v5580 = vrot.slane %v5323, 5
  %v5581 = vsel %vm3801, %v5579, %v5580
  %v5582 = vrot.slane %v5580, 4
  %v5583 = vrot.slane %v5324, 5
  %v5584 = vsel %vm3801, %v5582, %v5583
  %v5585 = vrot.slane %v5325, 5
  %v5586 = vrot.slane %v5585, 4
  %v5587 = vrot.slane %v5326, 5
  %v5588 = vsel %vm3801, %v5586, %v5587
  %v5589 = vrot.slane %v5587, 4
  %v5590 = vrot.slane %v5327, 5
  %v5591 = vsel %vm3801, %v5589, %v5590
  %v5592 = vrot.slane %v5328, 5
  %v5593 = vrot.slane %v5592, 4
  %v5594 = vrot.slane %v5329, 5
  %v5595 = vsel %vm3801, %v5593, %v5594
  %v5596 = vrot.slane %v5594, 4
  %v5597 = vrot.slane %v5330, 5
  %v5598 = vsel %vm3801, %v5596, %v5597
  %v5599 = vrot.slane %v5331, 5
  %v5600 = vrot.slane %v5599, 4
  %v5601 = vrot.slane %v5332, 5
  %v5602 = vsel %vm3801, %v5600, %v5601
  %v5603 = vrot.slane %v5601, 4
  %v5604 = vrot.slane %v5333, 5
  %v5605 = vsel %vm3801, %v5603, %v5604
  %v5606 = vrot.slane %v5334, 5
  %v5607 = vrot.slane %v5606, 4
  %v5608 = vrot.slane %v5335, 5
  %v5609 = vsel %vm3801, %v5607, %v5608
  %v5610 = vrot.slane %v5608, 4
  %v5611 = vrot.slane %v5336, 5
  %v5612 = vsel %vm3801, %v5610, %v5611
  %v5613 = vrot.slane %v5337, 5
  %v5614 = vrot.slane %v5613, 4
  %v5615 = vrot.slane %v5338, 5
  %v5616 = vsel %vm3801, %v5614, %v5615
  %v5617 = vrot.slane %v5615, 4
  %v5618 = vrot.slane %v5339, 5
  %v5619 = vsel %vm3801, %v5617, %v5618
  %v5620 = vrot.slane %v5340, 5
  %v5621 = vrot.slane %v5620, 4
  %v5622 = vrot.slane %v5341, 5
  %v5623 = vsel %vm3801, %v5621, %v5622
  %v5624 = vrot.slane %v5622, 4
  %v5625 = vrot.slane %v5342, 5
  %v5626 = vsel %vm3801, %v5624, %v5625
  %v5627 = vrot.slane %v5343, 5
  %v5628 = vrot.slane %v5627, 4
  %v5629 = vrot.slane %v5344, 5
  %v5630 = vsel %vm3801, %v5628, %v5629
  %v5631 = vrot.slane %v5629, 4
  %v5632 = vrot.slane %v5345, 5
  %v5633 = vsel %vm3801, %v5631, %v5632
  %v5634 = vrot.slane %v5346, 5
  %v5635 = vrot.slane %v5634, 4
  %v5636 = vrot.slane %v5347, 5
  %v5637 = vsel %vm3801, %v5635, %v5636
  %v5638 = vrot.slane %v5636, 4
  %v5639 = vrot.slane %v5348, 5
  %v5640 = vsel %vm3801, %v5638, %v5639
  %v5641 = vrot.slane %v5349, 5
  %v5642 = vrot.slane %v5641, 4
  %v5643 = vrot.slane %v5350, 5
  %v5644 = vsel %vm3801, %v5642, %v5643
  %v5645 = vrot.slane %v5643, 4
  %v5646 = vrot.slane %v5351, 5
  %v5647 = vsel %vm3801, %v5645, %v5646
  %v5648 = vrot.slane %v5352, 5
  %v5649 = vrot.slane %v5648, 4
  %v5650 = vrot.slane %v5353, 5
  %v5651 = vsel %vm3801, %v5649, %v5650
  %v5652 = vrot.slane %v5650, 4
  %v5653 = vrot.slane %v5354, 5
  %v5654 = vsel %vm3801, %v5652, %v5653
  %v5655 = vrot.slane %v5355, 5
  %v5656 = vrot.slane %v5655, 4
  %v5657 = vrot.slane %v5356, 5
  %v5658 = vsel %vm3801, %v5656, %v5657
  %v5659 = vrot.slane %v5657, 4
  %v5660 = vrot.slane %v5357, 5
  %v5661 = vsel %vm3801, %v5659, %v5660
  %v5662 = vrot.slane %v5358, 5
  %v5663 = vrot.slane %v5662, 4
  %v5664 = vrot.slane %v5359, 5
  %v5665 = vsel %vm3801, %v5663, %v5664
  %v5666 = vrot.slane %v5664, 4
  %v5667 = vrot.slane %v5360, 5
  %v5668 = vsel %vm3801, %v5666, %v5667
  %v5669 = vrot.slane %v5361, 5
  %v5670 = vrot.slane %v5669, 4
  %v5671 = vrot.slane %v5362, 5
  %v5672 = vsel %vm3801, %v5670, %v5671
  %v5673 = vrot.slane %v5671, 4
  %v5674 = vrot.slane %v5363, 5
  %v5675 = vsel %vm3801, %v5673, %v5674
  %v5676 = vrot.slane %v5364, 5
  %v5677 = vrot.slane %v5676, 4
  %v5678 = vrot.slane %v5365, 5
  %v5679 = vsel %vm3801, %v5677, %v5678
  %v5680 = vrot.slane %v5678, 4
  %v5681 = vrot.slane %v5366, 5
  %v5682 = vsel %vm3801, %v5680, %v5681
  %v5683 = vrot.slane %v5367, 5
  %v5684 = vrot.slane %v5683, 4
  %v5685 = vrot.slane %v5368, 5
  %v5686 = vsel %vm3801, %v5684, %v5685
  %v5687 = vrot.slane %v5685, 4
  %v5688 = vrot.slane %v5369, 5
  %v5689 = vsel %vm3801, %v5687, %v5688
  %5754 = vst [vmem:[#allocation3 + $0x14] sm:$0xf] %v5469
  %5755 = vst [vmem:[#allocation3 + $0x38] sm:$0xf] %v5472
  %5756 = vst [vmem:[#allocation3 + $0x5c] sm:$0xf] %v5476
  %5757 = vst [vmem:[#allocation3 + $0x80] sm:$0xf] %v5479
  %5758 = vst [vmem:[#allocation3 + $0xa4] sm:$0xf] %v5483
  %5759 = vst [vmem:[#allocation3 + $0xc8] sm:$0xf] %v5486
  %5760 = vst [vmem:[#allocation3 + $0xec] sm:$0xf] %v5490
  %5761 = vst [vmem:[#allocation3 + $0x110] sm:$0xf] %v5493
  %5762 = vst [vmem:[#allocation3 + $0x134] sm:$0xf] %v5497
  %5763 = vst [vmem:[#allocation3 + $0x158] sm:$0xf] %v5500
  %5764 = vst [vmem:[#allocation3 + $0x17c] sm:$0xf] %v5504
  %5765 = vst [vmem:[#allocation3 + $0x1a0] sm:$0xf] %v5507
  %5766 = vst [vmem:[#allocation3 + $0x1c4] sm:$0xf] %v5511
  %5767 = vst [vmem:[#allocation3 + $0x1e8] sm:$0xf] %v5514
  %5768 = vst [vmem:[#allocation3 + $0x20c] sm:$0xf] %v5518
  %5769 = vst [vmem:[#allocation3 + $0x230] sm:$0xf] %v5521
  %5770 = vst [vmem:[#allocation3 + $0x254] sm:$0xf] %v5525
  %5771 = vst [vmem:[#allocation3 + $0x278] sm:$0xf] %v5528
  %5772 = vst [vmem:[#allocation3 + $0x29c] sm:$0xf] %v5532
  %5773 = vst [vmem:[#allocation3 + $0x2c0] sm:$0xf] %v5535
  %5774 = vst [vmem:[#allocation3 + $0x2e4] sm:$0xf] %v5539
  %5775 = vst [vmem:[#allocation3 + $0x308] sm:$0xf] %v5542
  %5776 = vst [vmem:[#allocation3 + $0x32c] sm:$0xf] %v5546
  %5777 = vst [vmem:[#allocation3 + $0x350] sm:$0xf] %v5549
  %5778 = vst [vmem:[#allocation3 + $0x374] sm:$0xf] %v5553
  %5779 = vst [vmem:[#allocation3 + $0x398] sm:$0xf] %v5556
  %5780 = vst [vmem:[#allocation3 + $0x3bc] sm:$0xf] %v5560
  %5781 = vst [vmem:[#allocation3 + $0x3e0] sm:$0xf] %v5563
  %5782 = vst [vmem:[#allocation3 + $0x404] sm:$0xf] %v5567
  %5783 = vst [vmem:[#allocation3 + $0x428] sm:$0xf] %v5570
  %5784 = vst [vmem:[#allocation3 + $0x44c] sm:$0xf] %v5574
  %5785 = vst [vmem:[#allocation3 + $0x470] sm:$0xf] %v5577
  %5786 = vst [vmem:[#allocation3 + $0x494] sm:$0xf] %v5581
  %5787 = vst [vmem:[#allocation3 + $0x4b8] sm:$0xf] %v5584
  %5788 = vst [vmem:[#allocation3 + $0x4dc] sm:$0xf] %v5588
  %5789 = vst [vmem:[#allocation3 + $0x500] sm:$0xf] %v5591
  %5790 = vst [vmem:[#allocation3 + $0x524] sm:$0xf] %v5595
  %5791 = vst [vmem:[#allocation3 + $0x548] sm:$0xf] %v5598
  %5792 = vst [vmem:[#allocation3 + $0x56c] sm:$0xf] %v5602
  %5793 = vst [vmem:[#allocation3 + $0x590] sm:$0xf] %v5605
  %5794 = vst [vmem:[#allocation3 + $0x5b4] sm:$0xf] %v5609
  %5795 = vst [vmem:[#allocation3 + $0x5d8] sm:$0xf] %v5612
  %5796 = vst [vmem:[#allocation3 + $0x5fc] sm:$0xf] %v5616
  %5797 = vst [vmem:[#allocation3 + $0x620] sm:$0xf] %v5619
  %5798 = vst [vmem:[#allocation3 + $0x644] sm:$0xf] %v5623
  %5799 = vst [vmem:[#allocation3 + $0x668] sm:$0xf] %v5626
  %5800 = vst [vmem:[#allocation3 + $0x68c] sm:$0xf] %v5630
  %5801 = vst [vmem:[#allocation3 + $0x6b0] sm:$0xf] %v5633
  %5802 = vst [vmem:[#allocation3 + $0x6d4] sm:$0xf] %v5637
  %5803 = vst [vmem:[#allocation3 + $0x6f8] sm:$0xf] %v5640
  %5804 = vst [vmem:[#allocation3 + $0x71c] sm:$0xf] %v5644
  %5805 = vst [vmem:[#allocation3 + $0x740] sm:$0xf] %v5647
  %5806 = vst [vmem:[#allocation3 + $0x764] sm:$0xf] %v5651
  %5807 = vst [vmem:[#allocation3 + $0x788] sm:$0xf] %v5654
  %5808 = vst [vmem:[#allocation3 + $0x7ac] sm:$0xf] %v5658
  %5809 = vst [vmem:[#allocation3 + $0x7d0] sm:$0xf] %v5661
  %5810 = vst [vmem:[#allocation3 + $0x7f4] sm:$0xf] %v5665
  %5811 = vst [vmem:[#allocation3 + $0x818] sm:$0xf] %v5668
  %5812 = vst [vmem:[#allocation3 + $0x83c] sm:$0xf] %v5672
  %5813 = vst [vmem:[#allocation3 + $0x860] sm:$0xf] %v5675
  %5814 = vst [vmem:[#allocation3 + $0x884] sm:$0xf] %v5679
  %5815 = vst [vmem:[#allocation3 + $0x8a8] sm:$0xf] %v5682
  %5816 = vst [vmem:[#allocation3 + $0x8cc] sm:$0xf] %v5686
  %5817 = vst [vmem:[#allocation3 + $0x8f0] sm:$0xf] %v5689
  %s5818 = scalar_lea.vmem [#allocation2], 24
  %v5819 = vld [vmem:[%s5818] sm:$0xf]
  %v5820 = vld [vmem:[%s5818 + $0x4] sm:$0xf]
  %v5821 = vld [vmem:[%s5818 + $0xc] sm:$0xf]
  %v5822 = vld [vmem:[%s5818 + $0x10] sm:$0xf]
  %v5823 = vld [vmem:[%s5818 + $0x18] sm:$0xf]
  %v5824 = vld [vmem:[%s5818 + $0x1c] sm:$0xf]
  %v5825 = vld [vmem:[%s5818 + $0x24] sm:$0xf]
  %v5826 = vld [vmem:[%s5818 + $0x28] sm:$0xf]
  %v5827 = vld [vmem:[%s5818 + $0x30] sm:$0xf]
  %v5828 = vld [vmem:[%s5818 + $0x34] sm:$0xf]
  %v5829 = vld [vmem:[%s5818 + $0x3c] sm:$0xf]
  %v5830 = vld [vmem:[%s5818 + $0x40] sm:$0xf]
  %v5831 = vld [vmem:[%s5818 + $0x48] sm:$0xf]
  %v5832 = vld [vmem:[%s5818 + $0x4c] sm:$0xf]
  %v5833 = vld [vmem:[%s5818 + $0x54] sm:$0xf]
  %v5834 = vld [vmem:[%s5818 + $0x58] sm:$0xf]
  %v5835 = vld [vmem:[%s5818 + $0x60] sm:$0xf]
  %v5836 = vld [vmem:[%s5818 + $0x64] sm:$0xf]
  %v5837 = vld [vmem:[%s5818 + $0x6c] sm:$0xf]
  %v5838 = vld [vmem:[%s5818 + $0x70] sm:$0xf]
  %v5839 = vld [vmem:[%s5818 + $0x78] sm:$0xf]
  %v5840 = vld [vmem:[%s5818 + $0x7c] sm:$0xf]
  %v5841 = vld [vmem:[%s5818 + $0x84] sm:$0xf]
  %v5842 = vld [vmem:[%s5818 + $0x88] sm:$0xf]
  %v5843 = vld [vmem:[%s5818 + $0x90] sm:$0xf]
  %v5844 = vld [vmem:[%s5818 + $0x94] sm:$0xf]
  %v5845 = vld [vmem:[%s5818 + $0x9c] sm:$0xf]
  %v5846 = vld [vmem:[%s5818 + $0xa0] sm:$0xf]
  %v5847 = vld [vmem:[%s5818 + $0xa8] sm:$0xf]
  %v5848 = vld [vmem:[%s5818 + $0xac] sm:$0xf]
  %v5849 = vld [vmem:[%s5818 + $0xb4] sm:$0xf]
  %v5850 = vld [vmem:[%s5818 + $0xb8] sm:$0xf]
  %v5851 = vld [vmem:[%s5818 + $0xd8] sm:$0xf]
  %v5852 = vld [vmem:[%s5818 + $0xdc] sm:$0xf]
  %v5853 = vld [vmem:[%s5818 + $0xe4] sm:$0xf]
  %v5854 = vld [vmem:[%s5818 + $0xe8] sm:$0xf]
  %v5855 = vld [vmem:[%s5818 + $0xf0] sm:$0xf]
  %v5856 = vld [vmem:[%s5818 + $0xf4] sm:$0xf]
  %v5857 = vld [vmem:[%s5818 + $0xfc] sm:$0xf]
  %v5858 = vld [vmem:[%s5818 + $0x100] sm:$0xf]
  %v5859 = vld [vmem:[%s5818 + $0x108] sm:$0xf]
  %v5860 = vld [vmem:[%s5818 + $0x10c] sm:$0xf]
  %v5861 = vld [vmem:[%s5818 + $0x114] sm:$0xf]
  %v5862 = vld [vmem:[%s5818 + $0x118] sm:$0xf]
  %v5863 = vld [vmem:[%s5818 + $0x120] sm:$0xf]
  %v5864 = vld [vmem:[%s5818 + $0x124] sm:$0xf]
  %v5865 = vld [vmem:[%s5818 + $0x12c] sm:$0xf]
  %v5866 = vld [vmem:[%s5818 + $0x130] sm:$0xf]
  %v5867 = vld [vmem:[%s5818 + $0x138] sm:$0xf]
  %v5868 = vld [vmem:[%s5818 + $0x13c] sm:$0xf]
  %v5869 = vld [vmem:[%s5818 + $0x144] sm:$0xf]
  %v5870 = vld [vmem:[%s5818 + $0x148] sm:$0xf]
  %v5871 = vld [vmem:[%s5818 + $0x150] sm:$0xf]
  %v5872 = vld [vmem:[%s5818 + $0x154] sm:$0xf]
  %v5873 = vld [vmem:[%s5818 + $0x15c] sm:$0xf]
  %v5874 = vld [vmem:[%s5818 + $0x160] sm:$0xf]
  %v5875 = vld [vmem:[%s5818 + $0x168] sm:$0xf]
  %v5876 = vld [vmem:[%s5818 + $0x16c] sm:$0xf]
  %v5877 = vld [vmem:[%s5818 + $0x174] sm:$0xf]
  %v5878 = vld [vmem:[%s5818 + $0x178] sm:$0xf]
  %v5879 = vld [vmem:[%s5818 + $0x180] sm:$0xf]
  %v5880 = vld [vmem:[%s5818 + $0x184] sm:$0xf]
  %v5881 = vld [vmem:[%s5818 + $0x18c] sm:$0xf]
  %v5882 = vld [vmem:[%s5818 + $0x190] sm:$0xf]
  %5883 = vst [vmem:[#allocation3 + $0x18] sm:$0xf] %v5819
  %5884 = vst [vmem:[#allocation3 + $0x3c] sm:$0xf] %v5820
  %5885 = vst [vmem:[#allocation3 + $0x60] sm:$0xf] %v5821
  %5886 = vst [vmem:[#allocation3 + $0x84] sm:$0xf] %v5822
  %5887 = vst [vmem:[#allocation3 + $0xa8] sm:$0xf] %v5823
  %5888 = vst [vmem:[#allocation3 + $0xcc] sm:$0xf] %v5824
  %5889 = vst [vmem:[#allocation3 + $0xf0] sm:$0xf] %v5825
  %5890 = vst [vmem:[#allocation3 + $0x114] sm:$0xf] %v5826
  %5891 = vst [vmem:[#allocation3 + $0x138] sm:$0xf] %v5827
  %5892 = vst [vmem:[#allocation3 + $0x15c] sm:$0xf] %v5828
  %5893 = vst [vmem:[#allocation3 + $0x180] sm:$0xf] %v5829
  %5894 = vst [vmem:[#allocation3 + $0x1a4] sm:$0xf] %v5830
  %5895 = vst [vmem:[#allocation3 + $0x1c8] sm:$0xf] %v5831
  %5896 = vst [vmem:[#allocation3 + $0x1ec] sm:$0xf] %v5832
  %5897 = vst [vmem:[#allocation3 + $0x210] sm:$0xf] %v5833
  %5898 = vst [vmem:[#allocation3 + $0x234] sm:$0xf] %v5834
  %5899 = vst [vmem:[#allocation3 + $0x258] sm:$0xf] %v5835
  %5900 = vst [vmem:[#allocation3 + $0x27c] sm:$0xf] %v5836
  %5901 = vst [vmem:[#allocation3 + $0x2a0] sm:$0xf] %v5837
  %5902 = vst [vmem:[#allocation3 + $0x2c4] sm:$0xf] %v5838
  %5903 = vst [vmem:[#allocation3 + $0x2e8] sm:$0xf] %v5839
  %5904 = vst [vmem:[#allocation3 + $0x30c] sm:$0xf] %v5840
  %5905 = vst [vmem:[#allocation3 + $0x330] sm:$0xf] %v5841
  %5906 = vst [vmem:[#allocation3 + $0x354] sm:$0xf] %v5842
  %5907 = vst [vmem:[#allocation3 + $0x378] sm:$0xf] %v5843
  %5908 = vst [vmem:[#allocation3 + $0x39c] sm:$0xf] %v5844
  %5909 = vst [vmem:[#allocation3 + $0x3c0] sm:$0xf] %v5845
  %5910 = vst [vmem:[#allocation3 + $0x3e4] sm:$0xf] %v5846
  %5911 = vst [vmem:[#allocation3 + $0x408] sm:$0xf] %v5847
  %5912 = vst [vmem:[#allocation3 + $0x42c] sm:$0xf] %v5848
  %5913 = vst [vmem:[#allocation3 + $0x450] sm:$0xf] %v5849
  %5914 = vst [vmem:[#allocation3 + $0x474] sm:$0xf] %v5850
  %5915 = vst [vmem:[#allocation3 + $0x498] sm:$0xf] %v5851
  %5916 = vst [vmem:[#allocation3 + $0x4bc] sm:$0xf] %v5852
  %5917 = vst [vmem:[#allocation3 + $0x4e0] sm:$0xf] %v5853
  %5918 = vst [vmem:[#allocation3 + $0x504] sm:$0xf] %v5854
  %5919 = vst [vmem:[#allocation3 + $0x528] sm:$0xf] %v5855
  %5920 = vst [vmem:[#allocation3 + $0x54c] sm:$0xf] %v5856
  %5921 = vst [vmem:[#allocation3 + $0x570] sm:$0xf] %v5857
  %5922 = vst [vmem:[#allocation3 + $0x594] sm:$0xf] %v5858
  %5923 = vst [vmem:[#allocation3 + $0x5b8] sm:$0xf] %v5859
  %5924 = vst [vmem:[#allocation3 + $0x5dc] sm:$0xf] %v5860
  %5925 = vst [vmem:[#allocation3 + $0x600] sm:$0xf] %v5861
  %5926 = vst [vmem:[#allocation3 + $0x624] sm:$0xf] %v5862
  %5927 = vst [vmem:[#allocation3 + $0x648] sm:$0xf] %v5863
  %5928 = vst [vmem:[#allocation3 + $0x66c] sm:$0xf] %v5864
  %5929 = vst [vmem:[#allocation3 + $0x690] sm:$0xf] %v5865
  %5930 = vst [vmem:[#allocation3 + $0x6b4] sm:$0xf] %v5866
  %5931 = vst [vmem:[#allocation3 + $0x6d8] sm:$0xf] %v5867
  %5932 = vst [vmem:[#allocation3 + $0x6fc] sm:$0xf] %v5868
  %5933 = vst [vmem:[#allocation3 + $0x720] sm:$0xf] %v5869
  %5934 = vst [vmem:[#allocation3 + $0x744] sm:$0xf] %v5870
  %5935 = vst [vmem:[#allocation3 + $0x768] sm:$0xf] %v5871
  %5936 = vst [vmem:[#allocation3 + $0x78c] sm:$0xf] %v5872
  %5937 = vst [vmem:[#allocation3 + $0x7b0] sm:$0xf] %v5873
  %5938 = vst [vmem:[#allocation3 + $0x7d4] sm:$0xf] %v5874
  %5939 = vst [vmem:[#allocation3 + $0x7f8] sm:$0xf] %v5875
  %5940 = vst [vmem:[#allocation3 + $0x81c] sm:$0xf] %v5876
  %5941 = vst [vmem:[#allocation3 + $0x840] sm:$0xf] %v5877
  %5942 = vst [vmem:[#allocation3 + $0x864] sm:$0xf] %v5878
  %5943 = vst [vmem:[#allocation3 + $0x888] sm:$0xf] %v5879
  %5944 = vst [vmem:[#allocation3 + $0x8ac] sm:$0xf] %v5880
  %5945 = vst [vmem:[#allocation3 + $0x8d0] sm:$0xf] %v5881
  %5946 = vst [vmem:[#allocation3 + $0x8f4] sm:$0xf] %v5882
  %v5947 = vld [vmem:[%s5818] sm:$0xf]
  %v5948 = vld [vmem:[%s5818 + $0x4] sm:$0xf]
  %v5949 = vld [vmem:[%s5818 + $0x8] sm:$0x1]
  %v5950 = vld [vmem:[%s5818 + $0xc] sm:$0xf]
  %v5951 = vld [vmem:[%s5818 + $0x10] sm:$0xf]
  %v5952 = vld [vmem:[%s5818 + $0x14] sm:$0x1]
  %v5953 = vld [vmem:[%s5818 + $0x18] sm:$0xf]
  %v5954 = vld [vmem:[%s5818 + $0x1c] sm:$0xf]
  %v5955 = vld [vmem:[%s5818 + $0x20] sm:$0x1]
  %v5956 = vld [vmem:[%s5818 + $0x24] sm:$0xf]
  %v5957 = vld [vmem:[%s5818 + $0x28] sm:$0xf]
  %v5958 = vld [vmem:[%s5818 + $0x2c] sm:$0x1]
  %v5959 = vld [vmem:[%s5818 + $0x30] sm:$0xf]
  %v5960 = vld [vmem:[%s5818 + $0x34] sm:$0xf]
  %v5961 = vld [vmem:[%s5818 + $0x38] sm:$0x1]
  %v5962 = vld [vmem:[%s5818 + $0x3c] sm:$0xf]
  %v5963 = vld [vmem:[%s5818 + $0x40] sm:$0xf]
  %v5964 = vld [vmem:[%s5818 + $0x44] sm:$0x1]
  %v5965 = vld [vmem:[%s5818 + $0x48] sm:$0xf]
  %v5966 = vld [vmem:[%s5818 + $0x4c] sm:$0xf]
  %v5967 = vld [vmem:[%s5818 + $0x50] sm:$0x1]
  %v5968 = vld [vmem:[%s5818 + $0x54] sm:$0xf]
  %v5969 = vld [vmem:[%s5818 + $0x58] sm:$0xf]
  %v5970 = vld [vmem:[%s5818 + $0x5c] sm:$0x1]
  %v5971 = vld [vmem:[%s5818 + $0x60] sm:$0xf]
  %v5972 = vld [vmem:[%s5818 + $0x64] sm:$0xf]
  %v5973 = vld [vmem:[%s5818 + $0x68] sm:$0x1]
  %v5974 = vld [vmem:[%s5818 + $0x6c] sm:$0xf]
  %v5975 = vld [vmem:[%s5818 + $0x70] sm:$0xf]
  %v5976 = vld [vmem:[%s5818 + $0x74] sm:$0x1]
  %v5977 = vld [vmem:[%s5818 + $0x78] sm:$0xf]
  %v5978 = vld [vmem:[%s5818 + $0x7c] sm:$0xf]
  %v5979 = vld [vmem:[%s5818 + $0x80] sm:$0x1]
  %v5980 = vld [vmem:[%s5818 + $0x84] sm:$0xf]
  %v5981 = vld [vmem:[%s5818 + $0x88] sm:$0xf]
  %v5982 = vld [vmem:[%s5818 + $0x8c] sm:$0x1]
  %v5983 = vld [vmem:[%s5818 + $0x90] sm:$0xf]
  %v5984 = vld [vmem:[%s5818 + $0x94] sm:$0xf]
  %v5985 = vld [vmem:[%s5818 + $0x98] sm:$0x1]
  %v5986 = vld [vmem:[%s5818 + $0x9c] sm:$0xf]
  %v5987 = vld [vmem:[%s5818 + $0xa0] sm:$0xf]
  %v5988 = vld [vmem:[%s5818 + $0xa4] sm:$0x1]
  %v5989 = vld [vmem:[%s5818 + $0xa8] sm:$0xf]
  %v5990 = vld [vmem:[%s5818 + $0xac] sm:$0xf]
  %v5991 = vld [vmem:[%s5818 + $0xb0] sm:$0x1]
  %v5992 = vld [vmem:[%s5818 + $0xb4] sm:$0xf]
  %v5993 = vld [vmem:[%s5818 + $0xb8] sm:$0xf]
  %v5994 = vld [vmem:[%s5818 + $0xbc] sm:$0x1]
  %v5995 = vld [vmem:[%s5818 + $0xd8] sm:$0xf]
  %v5996 = vld [vmem:[%s5818 + $0xdc] sm:$0xf]
  %v5997 = vld [vmem:[%s5818 + $0xe0] sm:$0x1]
  %v5998 = vld [vmem:[%s5818 + $0xe4] sm:$0xf]
  %v5999 = vld [vmem:[%s5818 + $0xe8] sm:$0xf]
  %v6000 = vld [vmem:[%s5818 + $0xec] sm:$0x1]
  %v6001 = vld [vmem:[%s5818 + $0xf0] sm:$0xf]
  %v6002 = vld [vmem:[%s5818 + $0xf4] sm:$0xf]
  %v6003 = vld [vmem:[%s5818 + $0xf8] sm:$0x1]
  %v6004 = vld [vmem:[%s5818 + $0xfc] sm:$0xf]
  %v6005 = vld [vmem:[%s5818 + $0x100] sm:$0xf]
  %v6006 = vld [vmem:[%s5818 + $0x104] sm:$0x1]
  %v6007 = vld [vmem:[%s5818 + $0x108] sm:$0xf]
  %v6008 = vld [vmem:[%s5818 + $0x10c] sm:$0xf]
  %v6009 = vld [vmem:[%s5818 + $0x110] sm:$0x1]
  %v6010 = vld [vmem:[%s5818 + $0x114] sm:$0xf]
  %v6011 = vld [vmem:[%s5818 + $0x118] sm:$0xf]
  %v6012 = vld [vmem:[%s5818 + $0x11c] sm:$0x1]
  %v6013 = vld [vmem:[%s5818 + $0x120] sm:$0xf]
  %v6014 = vld [vmem:[%s5818 + $0x124] sm:$0xf]
  %v6015 = vld [vmem:[%s5818 + $0x128] sm:$0x1]
  %v6016 = vld [vmem:[%s5818 + $0x12c] sm:$0xf]
  %v6017 = vld [vmem:[%s5818 + $0x130] sm:$0xf]
  %v6018 = vld [vmem:[%s5818 + $0x134] sm:$0x1]
  %v6019 = vld [vmem:[%s5818 + $0x138] sm:$0xf]
  %v6020 = vld [vmem:[%s5818 + $0x13c] sm:$0xf]
  %v6021 = vld [vmem:[%s5818 + $0x140] sm:$0x1]
  %v6022 = vld [vmem:[%s5818 + $0x144] sm:$0xf]
  %v6023 = vld [vmem:[%s5818 + $0x148] sm:$0xf]
  %v6024 = vld [vmem:[%s5818 + $0x14c] sm:$0x1]
  %v6025 = vld [vmem:[%s5818 + $0x150] sm:$0xf]
  %v6026 = vld [vmem:[%s5818 + $0x154] sm:$0xf]
  %v6027 = vld [vmem:[%s5818 + $0x158] sm:$0x1]
  %v6028 = vld [vmem:[%s5818 + $0x15c] sm:$0xf]
  %v6029 = vld [vmem:[%s5818 + $0x160] sm:$0xf]
  %v6030 = vld [vmem:[%s5818 + $0x164] sm:$0x1]
  %v6031 = vld [vmem:[%s5818 + $0x168] sm:$0xf]
  %v6032 = vld [vmem:[%s5818 + $0x16c] sm:$0xf]
  %v6033 = vld [vmem:[%s5818 + $0x170] sm:$0x1]
  %v6034 = vld [vmem:[%s5818 + $0x174] sm:$0xf]
  %v6035 = vld [vmem:[%s5818 + $0x178] sm:$0xf]
  %v6036 = vld [vmem:[%s5818 + $0x17c] sm:$0x1]
  %v6037 = vld [vmem:[%s5818 + $0x180] sm:$0xf]
  %v6038 = vld [vmem:[%s5818 + $0x184] sm:$0xf]
  %v6039 = vld [vmem:[%s5818 + $0x188] sm:$0x1]
  %v6040 = vld [vmem:[%s5818 + $0x18c] sm:$0xf]
  %v6041 = vld [vmem:[%s5818 + $0x190] sm:$0xf]
  %v6042 = vld [vmem:[%s5818 + $0x194] sm:$0x1]
  %v6044 = vshrl.u32 %v5947, 16
  %v6046 = vrot.slane %v6044, 4
  %v6047 = vshll.u32 %v5947, 16
  %v6049 = vrot.slane %v6047, 5
  %v6050 = vor.u32 %v6046, %v6049
  %v6051 = vrot.slane %v6050, 4
  %v6053 = vshll.u32 %v5948, 16
  %v6055 = vrot.slane %v6053, 5
  %v6056 = vsel %vm2710, %v6051, %v6055
  %v6057 = vshrl.u32 %v5948, 16
  %v6059 = vrot.slane %v6057, 4
  %v6060 = vor.u32 %v6059, %v6055
  %v6061 = vrot.slane %v6060, 4
  %v6063 = vshll.u32 %v5949, 16
  %v6065 = vrot.slane %v6063, 5
  %v6066 = vsel %vm2710, %v6061, %v6065
  %v6068 = vshrl.u32 %v5950, 16
  %v6070 = vrot.slane %v6068, 4
  %v6071 = vshll.u32 %v5950, 16
  %v6073 = vrot.slane %v6071, 5
  %v6074 = vor.u32 %v6070, %v6073
  %v6075 = vrot.slane %v6074, 4
  %v6077 = vshll.u32 %v5951, 16
  %v6079 = vrot.slane %v6077, 5
  %v6080 = vsel %vm2710, %v6075, %v6079
  %v6081 = vshrl.u32 %v5951, 16
  %v6083 = vrot.slane %v6081, 4
  %v6084 = vor.u32 %v6083, %v6079
  %v6085 = vrot.slane %v6084, 4
  %v6087 = vshll.u32 %v5952, 16
  %v6089 = vrot.slane %v6087, 5
  %v6090 = vsel %vm2710, %v6085, %v6089
  %v6092 = vshrl.u32 %v5953, 16
  %v6094 = vrot.slane %v6092, 4
  %v6095 = vshll.u32 %v5953, 16
  %v6097 = vrot.slane %v6095, 5
  %v6098 = vor.u32 %v6094, %v6097
  %v6099 = vrot.slane %v6098, 4
  %v6101 = vshll.u32 %v5954, 16
  %v6103 = vrot.slane %v6101, 5
  %v6104 = vsel %vm2710, %v6099, %v6103
  %v6105 = vshrl.u32 %v5954, 16
  %v6107 = vrot.slane %v6105, 4
  %v6108 = vor.u32 %v6107, %v6103
  %v6109 = vrot.slane %v6108, 4
  %v6111 = vshll.u32 %v5955, 16
  %v6113 = vrot.slane %v6111, 5
  %v6114 = vsel %vm2710, %v6109, %v6113
  %v6116 = vshrl.u32 %v5956, 16
  %v6118 = vrot.slane %v6116, 4
  %v6119 = vshll.u32 %v5956, 16
  %v6121 = vrot.slane %v6119, 5
  %v6122 = vor.u32 %v6118, %v6121
  %v6123 = vrot.slane %v6122, 4
  %v6125 = vshll.u32 %v5957, 16
  %v6127 = vrot.slane %v6125, 5
  %v6128 = vsel %vm2710, %v6123, %v6127
  %v6129 = vshrl.u32 %v5957, 16
  %v6131 = vrot.slane %v6129, 4
  %v6132 = vor.u32 %v6131, %v6127
  %v6133 = vrot.slane %v6132, 4
  %v6135 = vshll.u32 %v5958, 16
  %v6137 = vrot.slane %v6135, 5
  %v6138 = vsel %vm2710, %v6133, %v6137
  %v6140 = vshrl.u32 %v5959, 16
  %v6142 = vrot.slane %v6140, 4
  %v6143 = vshll.u32 %v5959, 16
  %v6145 = vrot.slane %v6143, 5
  %v6146 = vor.u32 %v6142, %v6145
  %v6147 = vrot.slane %v6146, 4
  %v6149 = vshll.u32 %v5960, 16
  %v6151 = vrot.slane %v6149, 5
  %v6152 = vsel %vm2710, %v6147, %v6151
  %v6153 = vshrl.u32 %v5960, 16
  %v6155 = vrot.slane %v6153, 4
  %v6156 = vor.u32 %v6155, %v6151
  %v6157 = vrot.slane %v6156, 4
  %v6159 = vshll.u32 %v5961, 16
  %v6161 = vrot.slane %v6159, 5
  %v6162 = vsel %vm2710, %v6157, %v6161
  %v6164 = vshrl.u32 %v5962, 16
  %v6166 = vrot.slane %v6164, 4
  %v6167 = vshll.u32 %v5962, 16
  %v6169 = vrot.slane %v6167, 5
  %v6170 = vor.u32 %v6166, %v6169
  %v6171 = vrot.slane %v6170, 4
  %v6173 = vshll.u32 %v5963, 16
  %v6175 = vrot.slane %v6173, 5
  %v6176 = vsel %vm2710, %v6171, %v6175
  %v6177 = vshrl.u32 %v5963, 16
  %v6179 = vrot.slane %v6177, 4
  %v6180 = vor.u32 %v6179, %v6175
  %v6181 = vrot.slane %v6180, 4
  %v6183 = vshll.u32 %v5964, 16
  %v6185 = vrot.slane %v6183, 5
  %v6186 = vsel %vm2710, %v6181, %v6185
  %v6188 = vshrl.u32 %v5965, 16
  %v6190 = vrot.slane %v6188, 4
  %v6191 = vshll.u32 %v5965, 16
  %v6193 = vrot.slane %v6191, 5
  %v6194 = vor.u32 %v6190, %v6193
  %v6195 = vrot.slane %v6194, 4
  %v6197 = vshll.u32 %v5966, 16
  %v6199 = vrot.slane %v6197, 5
  %v6200 = vsel %vm2710, %v6195, %v6199
  %v6201 = vshrl.u32 %v5966, 16
  %v6203 = vrot.slane %v6201, 4
  %v6204 = vor.u32 %v6203, %v6199
  %v6205 = vrot.slane %v6204, 4
  %v6207 = vshll.u32 %v5967, 16
  %v6209 = vrot.slane %v6207, 5
  %v6210 = vsel %vm2710, %v6205, %v6209
  %v6212 = vshrl.u32 %v5968, 16
  %v6214 = vrot.slane %v6212, 4
  %v6215 = vshll.u32 %v5968, 16
  %v6217 = vrot.slane %v6215, 5
  %v6218 = vor.u32 %v6214, %v6217
  %v6219 = vrot.slane %v6218, 4
  %v6221 = vshll.u32 %v5969, 16
  %v6223 = vrot.slane %v6221, 5
  %v6224 = vsel %vm2710, %v6219, %v6223
  %v6225 = vshrl.u32 %v5969, 16
  %v6227 = vrot.slane %v6225, 4
  %v6228 = vor.u32 %v6227, %v6223
  %v6229 = vrot.slane %v6228, 4
  %v6231 = vshll.u32 %v5970, 16
  %v6233 = vrot.slane %v6231, 5
  %v6234 = vsel %vm2710, %v6229, %v6233
  %v6236 = vshrl.u32 %v5971, 16
  %v6238 = vrot.slane %v6236, 4
  %v6239 = vshll.u32 %v5971, 16
  %v6241 = vrot.slane %v6239, 5
  %v6242 = vor.u32 %v6238, %v6241
  %v6243 = vrot.slane %v6242, 4
  %v6245 = vshll.u32 %v5972, 16
  %v6247 = vrot.slane %v6245, 5
  %v6248 = vsel %vm2710, %v6243, %v6247
  %v6249 = vshrl.u32 %v5972, 16
  %v6251 = vrot.slane %v6249, 4
  %v6252 = vor.u32 %v6251, %v6247
  %v6253 = vrot.slane %v6252, 4
  %v6255 = vshll.u32 %v5973, 16
  %v6257 = vrot.slane %v6255, 5
  %v6258 = vsel %vm2710, %v6253, %v6257
  %v6260 = vshrl.u32 %v5974, 16
  %v6262 = vrot.slane %v6260, 4
  %v6263 = vshll.u32 %v5974, 16
  %v6265 = vrot.slane %v6263, 5
  %v6266 = vor.u32 %v6262, %v6265
  %v6267 = vrot.slane %v6266, 4
  %v6269 = vshll.u32 %v5975, 16
  %v6271 = vrot.slane %v6269, 5
  %v6272 = vsel %vm2710, %v6267, %v6271
  %v6273 = vshrl.u32 %v5975, 16
  %v6275 = vrot.slane %v6273, 4
  %v6276 = vor.u32 %v6275, %v6271
  %v6277 = vrot.slane %v6276, 4
  %v6279 = vshll.u32 %v5976, 16
  %v6281 = vrot.slane %v6279, 5
  %v6282 = vsel %vm2710, %v6277, %v6281
  %v6284 = vshrl.u32 %v5977, 16
  %v6286 = vrot.slane %v6284, 4
  %v6287 = vshll.u32 %v5977, 16
  %v6289 = vrot.slane %v6287, 5
  %v6290 = vor.u32 %v6286, %v6289
  %v6291 = vrot.slane %v6290, 4
  %v6293 = vshll.u32 %v5978, 16
  %v6295 = vrot.slane %v6293, 5
  %v6296 = vsel %vm2710, %v6291, %v6295
  %v6297 = vshrl.u32 %v5978, 16
  %v6299 = vrot.slane %v6297, 4
  %v6300 = vor.u32 %v6299, %v6295
  %v6301 = vrot.slane %v6300, 4
  %v6303 = vshll.u32 %v5979, 16
  %v6305 = vrot.slane %v6303, 5
  %v6306 = vsel %vm2710, %v6301, %v6305
  %v6308 = vshrl.u32 %v5980, 16
  %v6310 = vrot.slane %v6308, 4
  %v6311 = vshll.u32 %v5980, 16
  %v6313 = vrot.slane %v6311, 5
  %v6314 = vor.u32 %v6310, %v6313
  %v6315 = vrot.slane %v6314, 4
  %v6317 = vshll.u32 %v5981, 16
  %v6319 = vrot.slane %v6317, 5
  %v6320 = vsel %vm2710, %v6315, %v6319
  %v6321 = vshrl.u32 %v5981, 16
  %v6323 = vrot.slane %v6321, 4
  %v6324 = vor.u32 %v6323, %v6319
  %v6325 = vrot.slane %v6324, 4
  %v6327 = vshll.u32 %v5982, 16
  %v6329 = vrot.slane %v6327, 5
  %v6330 = vsel %vm2710, %v6325, %v6329
  %v6332 = vshrl.u32 %v5983, 16
  %v6334 = vrot.slane %v6332, 4
  %v6335 = vshll.u32 %v5983, 16
  %v6337 = vrot.slane %v6335, 5
  %v6338 = vor.u32 %v6334, %v6337
  %v6339 = vrot.slane %v6338, 4
  %v6341 = vshll.u32 %v5984, 16
  %v6343 = vrot.slane %v6341, 5
  %v6344 = vsel %vm2710, %v6339, %v6343
  %v6345 = vshrl.u32 %v5984, 16
  %v6347 = vrot.slane %v6345, 4
  %v6348 = vor.u32 %v6347, %v6343
  %v6349 = vrot.slane %v6348, 4
  %v6351 = vshll.u32 %v5985, 16
  %v6353 = vrot.slane %v6351, 5
  %v6354 = vsel %vm2710, %v6349, %v6353
  %v6356 = vshrl.u32 %v5986, 16
  %v6358 = vrot.slane %v6356, 4
  %v6359 = vshll.u32 %v5986, 16
  %v6361 = vrot.slane %v6359, 5
  %v6362 = vor.u32 %v6358, %v6361
  %v6363 = vrot.slane %v6362, 4
  %v6365 = vshll.u32 %v5987, 16
  %v6367 = vrot.slane %v6365, 5
  %v6368 = vsel %vm2710, %v6363, %v6367
  %v6369 = vshrl.u32 %v5987, 16
  %v6371 = vrot.slane %v6369, 4
  %v6372 = vor.u32 %v6371, %v6367
  %v6373 = vrot.slane %v6372, 4
  %v6375 = vshll.u32 %v5988, 16
  %v6377 = vrot.slane %v6375, 5
  %v6378 = vsel %vm2710, %v6373, %v6377
  %v6380 = vshrl.u32 %v5989, 16
  %v6382 = vrot.slane %v6380, 4
  %v6383 = vshll.u32 %v5989, 16
  %v6385 = vrot.slane %v6383, 5
  %v6386 = vor.u32 %v6382, %v6385
  %v6387 = vrot.slane %v6386, 4
  %v6389 = vshll.u32 %v5990, 16
  %v6391 = vrot.slane %v6389, 5
  %v6392 = vsel %vm2710, %v6387, %v6391
  %v6393 = vshrl.u32 %v5990, 16
  %v6395 = vrot.slane %v6393, 4
  %v6396 = vor.u32 %v6395, %v6391
  %v6397 = vrot.slane %v6396, 4
  %v6399 = vshll.u32 %v5991, 16
  %v6401 = vrot.slane %v6399, 5
  %v6402 = vsel %vm2710, %v6397, %v6401
  %v6404 = vshrl.u32 %v5992, 16
  %v6406 = vrot.slane %v6404, 4
  %v6407 = vshll.u32 %v5992, 16
  %v6409 = vrot.slane %v6407, 5
  %v6410 = vor.u32 %v6406, %v6409
  %v6411 = vrot.slane %v6410, 4
  %v6413 = vshll.u32 %v5993, 16
  %v6415 = vrot.slane %v6413, 5
  %v6416 = vsel %vm2710, %v6411, %v6415
  %v6417 = vshrl.u32 %v5993, 16
  %v6419 = vrot.slane %v6417, 4
  %v6420 = vor.u32 %v6419, %v6415
  %v6421 = vrot.slane %v6420, 4
  %v6423 = vshll.u32 %v5994, 16
  %v6425 = vrot.slane %v6423, 5
  %v6426 = vsel %vm2710, %v6421, %v6425
  %v6428 = vshrl.u32 %v5995, 16
  %v6430 = vrot.slane %v6428, 4
  %v6431 = vshll.u32 %v5995, 16
  %v6433 = vrot.slane %v6431, 5
  %v6434 = vor.u32 %v6430, %v6433
  %v6435 = vrot.slane %v6434, 4
  %v6437 = vshll.u32 %v5996, 16
  %v6439 = vrot.slane %v6437, 5
  %v6440 = vsel %vm2710, %v6435, %v6439
  %v6441 = vshrl.u32 %v5996, 16
  %v6443 = vrot.slane %v6441, 4
  %v6444 = vor.u32 %v6443, %v6439
  %v6445 = vrot.slane %v6444, 4
  %v6447 = vshll.u32 %v5997, 16
  %v6449 = vrot.slane %v6447, 5
  %v6450 = vsel %vm2710, %v6445, %v6449
  %v6452 = vshrl.u32 %v5998, 16
  %v6454 = vrot.slane %v6452, 4
  %v6455 = vshll.u32 %v5998, 16
  %v6457 = vrot.slane %v6455, 5
  %v6458 = vor.u32 %v6454, %v6457
  %v6459 = vrot.slane %v6458, 4
  %v6461 = vshll.u32 %v5999, 16
  %v6463 = vrot.slane %v6461, 5
  %v6464 = vsel %vm2710, %v6459, %v6463
  %v6465 = vshrl.u32 %v5999, 16
  %v6467 = vrot.slane %v6465, 4
  %v6468 = vor.u32 %v6467, %v6463
  %v6469 = vrot.slane %v6468, 4
  %v6471 = vshll.u32 %v6000, 16
  %v6473 = vrot.slane %v6471, 5
  %v6474 = vsel %vm2710, %v6469, %v6473
  %v6476 = vshrl.u32 %v6001, 16
  %v6478 = vrot.slane %v6476, 4
  %v6479 = vshll.u32 %v6001, 16
  %v6481 = vrot.slane %v6479, 5
  %v6482 = vor.u32 %v6478, %v6481
  %v6483 = vrot.slane %v6482, 4
  %v6485 = vshll.u32 %v6002, 16
  %v6487 = vrot.slane %v6485, 5
  %v6488 = vsel %vm2710, %v6483, %v6487
  %v6489 = vshrl.u32 %v6002, 16
  %v6491 = vrot.slane %v6489, 4
  %v6492 = vor.u32 %v6491, %v6487
  %v6493 = vrot.slane %v6492, 4
  %v6495 = vshll.u32 %v6003, 16
  %v6497 = vrot.slane %v6495, 5
  %v6498 = vsel %vm2710, %v6493, %v6497
  %v6500 = vshrl.u32 %v6004, 16
  %v6502 = vrot.slane %v6500, 4
  %v6503 = vshll.u32 %v6004, 16
  %v6505 = vrot.slane %v6503, 5
  %v6506 = vor.u32 %v6502, %v6505
  %v6507 = vrot.slane %v6506, 4
  %v6509 = vshll.u32 %v6005, 16
  %v6511 = vrot.slane %v6509, 5
  %v6512 = vsel %vm2710, %v6507, %v6511
  %v6513 = vshrl.u32 %v6005, 16
  %v6515 = vrot.slane %v6513, 4
  %v6516 = vor.u32 %v6515, %v6511
  %v6517 = vrot.slane %v6516, 4
  %v6519 = vshll.u32 %v6006, 16
  %v6521 = vrot.slane %v6519, 5
  %v6522 = vsel %vm2710, %v6517, %v6521
  %v6524 = vshrl.u32 %v6007, 16
  %v6526 = vrot.slane %v6524, 4
  %v6527 = vshll.u32 %v6007, 16
  %v6529 = vrot.slane %v6527, 5
  %v6530 = vor.u32 %v6526, %v6529
  %v6531 = vrot.slane %v6530, 4
  %v6533 = vshll.u32 %v6008, 16
  %v6535 = vrot.slane %v6533, 5
  %v6536 = vsel %vm2710, %v6531, %v6535
  %v6537 = vshrl.u32 %v6008, 16
  %v6539 = vrot.slane %v6537, 4
  %v6540 = vor.u32 %v6539, %v6535
  %v6541 = vrot.slane %v6540, 4
  %v6543 = vshll.u32 %v6009, 16
  %v6545 = vrot.slane %v6543, 5
  %v6546 = vsel %vm2710, %v6541, %v6545
  %v6548 = vshrl.u32 %v6010, 16
  %v6550 = vrot.slane %v6548, 4
  %v6551 = vshll.u32 %v6010, 16
  %v6553 = vrot.slane %v6551, 5
  %v6554 = vor.u32 %v6550, %v6553
  %v6555 = vrot.slane %v6554, 4
  %v6557 = vshll.u32 %v6011, 16
  %v6559 = vrot.slane %v6557, 5
  %v6560 = vsel %vm2710, %v6555, %v6559
  %v6561 = vshrl.u32 %v6011, 16
  %v6563 = vrot.slane %v6561, 4
  %v6564 = vor.u32 %v6563, %v6559
  %v6565 = vrot.slane %v6564, 4
  %v6567 = vshll.u32 %v6012, 16
  %v6569 = vrot.slane %v6567, 5
  %v6570 = vsel %vm2710, %v6565, %v6569
  %v6572 = vshrl.u32 %v6013, 16
  %v6574 = vrot.slane %v6572, 4
  %v6575 = vshll.u32 %v6013, 16
  %v6577 = vrot.slane %v6575, 5
  %v6578 = vor.u32 %v6574, %v6577
  %v6579 = vrot.slane %v6578, 4
  %v6581 = vshll.u32 %v6014, 16
  %v6583 = vrot.slane %v6581, 5
  %v6584 = vsel %vm2710, %v6579, %v6583
  %v6585 = vshrl.u32 %v6014, 16
  %v6587 = vrot.slane %v6585, 4
  %v6588 = vor.u32 %v6587, %v6583
  %v6589 = vrot.slane %v6588, 4
  %v6591 = vshll.u32 %v6015, 16
  %v6593 = vrot.slane %v6591, 5
  %v6594 = vsel %vm2710, %v6589, %v6593
  %v6596 = vshrl.u32 %v6016, 16
  %v6598 = vrot.slane %v6596, 4
  %v6599 = vshll.u32 %v6016, 16
  %v6601 = vrot.slane %v6599, 5
  %v6602 = vor.u32 %v6598, %v6601
  %v6603 = vrot.slane %v6602, 4
  %v6605 = vshll.u32 %v6017, 16
  %v6607 = vrot.slane %v6605, 5
  %v6608 = vsel %vm2710, %v6603, %v6607
  %v6609 = vshrl.u32 %v6017, 16
  %v6611 = vrot.slane %v6609, 4
  %v6612 = vor.u32 %v6611, %v6607
  %v6613 = vrot.slane %v6612, 4
  %v6615 = vshll.u32 %v6018, 16
  %v6617 = vrot.slane %v6615, 5
  %v6618 = vsel %vm2710, %v6613, %v6617
  %v6620 = vshrl.u32 %v6019, 16
  %v6622 = vrot.slane %v6620, 4
  %v6623 = vshll.u32 %v6019, 16
  %v6625 = vrot.slane %v6623, 5
  %v6626 = vor.u32 %v6622, %v6625
  %v6627 = vrot.slane %v6626, 4
  %v6629 = vshll.u32 %v6020, 16
  %v6631 = vrot.slane %v6629, 5
  %v6632 = vsel %vm2710, %v6627, %v6631
  %v6633 = vshrl.u32 %v6020, 16
  %v6635 = vrot.slane %v6633, 4
  %v6636 = vor.u32 %v6635, %v6631
  %v6637 = vrot.slane %v6636, 4
  %v6639 = vshll.u32 %v6021, 16
  %v6641 = vrot.slane %v6639, 5
  %v6642 = vsel %vm2710, %v6637, %v6641
  %v6644 = vshrl.u32 %v6022, 16
  %v6646 = vrot.slane %v6644, 4
  %v6647 = vshll.u32 %v6022, 16
  %v6649 = vrot.slane %v6647, 5
  %v6650 = vor.u32 %v6646, %v6649
  %v6651 = vrot.slane %v6650, 4
  %v6653 = vshll.u32 %v6023, 16
  %v6655 = vrot.slane %v6653, 5
  %v6656 = vsel %vm2710, %v6651, %v6655
  %v6657 = vshrl.u32 %v6023, 16
  %v6659 = vrot.slane %v6657, 4
  %v6660 = vor.u32 %v6659, %v6655
  %v6661 = vrot.slane %v6660, 4
  %v6663 = vshll.u32 %v6024, 16
  %v6665 = vrot.slane %v6663, 5
  %v6666 = vsel %vm2710, %v6661, %v6665
  %v6668 = vshrl.u32 %v6025, 16
  %v6670 = vrot.slane %v6668, 4
  %v6671 = vshll.u32 %v6025, 16
  %v6673 = vrot.slane %v6671, 5
  %v6674 = vor.u32 %v6670, %v6673
  %v6675 = vrot.slane %v6674, 4
  %v6677 = vshll.u32 %v6026, 16
  %v6679 = vrot.slane %v6677, 5
  %v6680 = vsel %vm2710, %v6675, %v6679
  %v6681 = vshrl.u32 %v6026, 16
  %v6683 = vrot.slane %v6681, 4
  %v6684 = vor.u32 %v6683, %v6679
  %v6685 = vrot.slane %v6684, 4
  %v6687 = vshll.u32 %v6027, 16
  %v6689 = vrot.slane %v6687, 5
  %v6690 = vsel %vm2710, %v6685, %v6689
  %v6692 = vshrl.u32 %v6028, 16
  %v6694 = vrot.slane %v6692, 4
  %v6695 = vshll.u32 %v6028, 16
  %v6697 = vrot.slane %v6695, 5
  %v6698 = vor.u32 %v6694, %v6697
  %v6699 = vrot.slane %v6698, 4
  %v6701 = vshll.u32 %v6029, 16
  %v6703 = vrot.slane %v6701, 5
  %v6704 = vsel %vm2710, %v6699, %v6703
  %v6705 = vshrl.u32 %v6029, 16
  %v6707 = vrot.slane %v6705, 4
  %v6708 = vor.u32 %v6707, %v6703
  %v6709 = vrot.slane %v6708, 4
  %v6711 = vshll.u32 %v6030, 16
  %v6713 = vrot.slane %v6711, 5
  %v6714 = vsel %vm2710, %v6709, %v6713
  %v6716 = vshrl.u32 %v6031, 16
  %v6718 = vrot.slane %v6716, 4
  %v6719 = vshll.u32 %v6031, 16
  %v6721 = vrot.slane %v6719, 5
  %v6722 = vor.u32 %v6718, %v6721
  %v6723 = vrot.slane %v6722, 4
  %v6725 = vshll.u32 %v6032, 16
  %v6727 = vrot.slane %v6725, 5
  %v6728 = vsel %vm2710, %v6723, %v6727
  %v6729 = vshrl.u32 %v6032, 16
  %v6731 = vrot.slane %v6729, 4
  %v6732 = vor.u32 %v6731, %v6727
  %v6733 = vrot.slane %v6732, 4
  %v6735 = vshll.u32 %v6033, 16
  %v6737 = vrot.slane %v6735, 5
  %v6738 = vsel %vm2710, %v6733, %v6737
  %v6740 = vshrl.u32 %v6034, 16
  %v6742 = vrot.slane %v6740, 4
  %v6743 = vshll.u32 %v6034, 16
  %v6745 = vrot.slane %v6743, 5
  %v6746 = vor.u32 %v6742, %v6745
  %v6747 = vrot.slane %v6746, 4
  %v6749 = vshll.u32 %v6035, 16
  %v6751 = vrot.slane %v6749, 5
  %v6752 = vsel %vm2710, %v6747, %v6751
  %v6753 = vshrl.u32 %v6035, 16
  %v6755 = vrot.slane %v6753, 4
  %v6756 = vor.u32 %v6755, %v6751
  %v6757 = vrot.slane %v6756, 4
  %v6759 = vshll.u32 %v6036, 16
  %v6761 = vrot.slane %v6759, 5
  %v6762 = vsel %vm2710, %v6757, %v6761
  %v6764 = vshrl.u32 %v6037, 16
  %v6766 = vrot.slane %v6764, 4
  %v6767 = vshll.u32 %v6037, 16
  %v6769 = vrot.slane %v6767, 5
  %v6770 = vor.u32 %v6766, %v6769
  %v6771 = vrot.slane %v6770, 4
  %v6773 = vshll.u32 %v6038, 16
  %v6775 = vrot.slane %v6773, 5
  %v6776 = vsel %vm2710, %v6771, %v6775
  %v6777 = vshrl.u32 %v6038, 16
  %v6779 = vrot.slane %v6777, 4
  %v6780 = vor.u32 %v6779, %v6775
  %v6781 = vrot.slane %v6780, 4
  %v6783 = vshll.u32 %v6039, 16
  %v6785 = vrot.slane %v6783, 5
  %v6786 = vsel %vm2710, %v6781, %v6785
  %v6788 = vshrl.u32 %v6040, 16
  %v6790 = vrot.slane %v6788, 4
  %v6791 = vshll.u32 %v6040, 16
  %v6793 = vrot.slane %v6791, 5
  %v6794 = vor.u32 %v6790, %v6793
  %v6795 = vrot.slane %v6794, 4
  %v6797 = vshll.u32 %v6041, 16
  %v6799 = vrot.slane %v6797, 5
  %v6800 = vsel %vm2710, %v6795, %v6799
  %v6801 = vshrl.u32 %v6041, 16
  %v6803 = vrot.slane %v6801, 4
  %v6804 = vor.u32 %v6803, %v6799
  %v6805 = vrot.slane %v6804, 4
  %v6807 = vshll.u32 %v6042, 16
  %v6809 = vrot.slane %v6807, 5
  %v6810 = vsel %vm2710, %v6805, %v6809
  %6875 = vst [vmem:[#allocation3 + $0x1c] sm:$0xf] %v6056
  %6876 = vst [vmem:[#allocation3 + $0x40] sm:$0xf] %v6066
  %6877 = vst [vmem:[#allocation3 + $0x64] sm:$0xf] %v6080
  %6878 = vst [vmem:[#allocation3 + $0x88] sm:$0xf] %v6090
  %6879 = vst [vmem:[#allocation3 + $0xac] sm:$0xf] %v6104
  %6880 = vst [vmem:[#allocation3 + $0xd0] sm:$0xf] %v6114
  %6881 = vst [vmem:[#allocation3 + $0xf4] sm:$0xf] %v6128
  %6882 = vst [vmem:[#allocation3 + $0x118] sm:$0xf] %v6138
  %6883 = vst [vmem:[#allocation3 + $0x13c] sm:$0xf] %v6152
  %6884 = vst [vmem:[#allocation3 + $0x160] sm:$0xf] %v6162
  %6885 = vst [vmem:[#allocation3 + $0x184] sm:$0xf] %v6176
  %6886 = vst [vmem:[#allocation3 + $0x1a8] sm:$0xf] %v6186
  %6887 = vst [vmem:[#allocation3 + $0x1cc] sm:$0xf] %v6200
  %6888 = vst [vmem:[#allocation3 + $0x1f0] sm:$0xf] %v6210
  %6889 = vst [vmem:[#allocation3 + $0x214] sm:$0xf] %v6224
  %6890 = vst [vmem:[#allocation3 + $0x238] sm:$0xf] %v6234
  %6891 = vst [vmem:[#allocation3 + $0x25c] sm:$0xf] %v6248
  %6892 = vst [vmem:[#allocation3 + $0x280] sm:$0xf] %v6258
  %6893 = vst [vmem:[#allocation3 + $0x2a4] sm:$0xf] %v6272
  %6894 = vst [vmem:[#allocation3 + $0x2c8] sm:$0xf] %v6282
  %6895 = vst [vmem:[#allocation3 + $0x2ec] sm:$0xf] %v6296
  %6896 = vst [vmem:[#allocation3 + $0x310] sm:$0xf] %v6306
  %6897 = vst [vmem:[#allocation3 + $0x334] sm:$0xf] %v6320
  %6898 = vst [vmem:[#allocation3 + $0x358] sm:$0xf] %v6330
  %6899 = vst [vmem:[#allocation3 + $0x37c] sm:$0xf] %v6344
  %6900 = vst [vmem:[#allocation3 + $0x3a0] sm:$0xf] %v6354
  %6901 = vst [vmem:[#allocation3 + $0x3c4] sm:$0xf] %v6368
  %6902 = vst [vmem:[#allocation3 + $0x3e8] sm:$0xf] %v6378
  %6903 = vst [vmem:[#allocation3 + $0x40c] sm:$0xf] %v6392
  %6904 = vst [vmem:[#allocation3 + $0x430] sm:$0xf] %v6402
  %6905 = vst [vmem:[#allocation3 + $0x454] sm:$0xf] %v6416
  %6906 = vst [vmem:[#allocation3 + $0x478] sm:$0xf] %v6426
  %6907 = vst [vmem:[#allocation3 + $0x49c] sm:$0xf] %v6440
  %6908 = vst [vmem:[#allocation3 + $0x4c0] sm:$0xf] %v6450
  %6909 = vst [vmem:[#allocation3 + $0x4e4] sm:$0xf] %v6464
  %6910 = vst [vmem:[#allocation3 + $0x508] sm:$0xf] %v6474
  %6911 = vst [vmem:[#allocation3 + $0x52c] sm:$0xf] %v6488
  %6912 = vst [vmem:[#allocation3 + $0x550] sm:$0xf] %v6498
  %6913 = vst [vmem:[#allocation3 + $0x574] sm:$0xf] %v6512
  %6914 = vst [vmem:[#allocation3 + $0x598] sm:$0xf] %v6522
  %6915 = vst [vmem:[#allocation3 + $0x5bc] sm:$0xf] %v6536
  %6916 = vst [vmem:[#allocation3 + $0x5e0] sm:$0xf] %v6546
  %6917 = vst [vmem:[#allocation3 + $0x604] sm:$0xf] %v6560
  %6918 = vst [vmem:[#allocation3 + $0x628] sm:$0xf] %v6570
  %6919 = vst [vmem:[#allocation3 + $0x64c] sm:$0xf] %v6584
  %6920 = vst [vmem:[#allocation3 + $0x670] sm:$0xf] %v6594
  %6921 = vst [vmem:[#allocation3 + $0x694] sm:$0xf] %v6608
  %6922 = vst [vmem:[#allocation3 + $0x6b8] sm:$0xf] %v6618
  %6923 = vst [vmem:[#allocation3 + $0x6dc] sm:$0xf] %v6632
  %6924 = vst [vmem:[#allocation3 + $0x700] sm:$0xf] %v6642
  %6925 = vst [vmem:[#allocation3 + $0x724] sm:$0xf] %v6656
  %6926 = vst [vmem:[#allocation3 + $0x748] sm:$0xf] %v6666
  %6927 = vst [vmem:[#allocation3 + $0x76c] sm:$0xf] %v6680
  %6928 = vst [vmem:[#allocation3 + $0x790] sm:$0xf] %v6690
  %6929 = vst [vmem:[#allocation3 + $0x7b4] sm:$0xf] %v6704
  %6930 = vst [vmem:[#allocation3 + $0x7d8] sm:$0xf] %v6714
  %6931 = vst [vmem:[#allocation3 + $0x7fc] sm:$0xf] %v6728
  %6932 = vst [vmem:[#allocation3 + $0x820] sm:$0xf] %v6738
  %6933 = vst [vmem:[#allocation3 + $0x844] sm:$0xf] %v6752
  %6934 = vst [vmem:[#allocation3 + $0x868] sm:$0xf] %v6762
  %6935 = vst [vmem:[#allocation3 + $0x88c] sm:$0xf] %v6776
  %6936 = vst [vmem:[#allocation3 + $0x8b0] sm:$0xf] %v6786
  %6937 = vst [vmem:[#allocation3 + $0x8d4] sm:$0xf] %v6800
  %6938 = vst [vmem:[#allocation3 + $0x8f8] sm:$0xf] %v6810
  %v6939 = vld [vmem:[%s5818] sm:$0xe]
  %v6940 = vld [vmem:[%s5818 + $0x4] sm:$0xf]
  %v6941 = vld [vmem:[%s5818 + $0x8] sm:$0x1]
  %v6942 = vld [vmem:[%s5818 + $0xc] sm:$0xe]
  %v6943 = vld [vmem:[%s5818 + $0x10] sm:$0xf]
  %v6944 = vld [vmem:[%s5818 + $0x14] sm:$0x1]
  %v6945 = vld [vmem:[%s5818 + $0x18] sm:$0xe]
  %v6946 = vld [vmem:[%s5818 + $0x1c] sm:$0xf]
  %v6947 = vld [vmem:[%s5818 + $0x20] sm:$0x1]
  %v6948 = vld [vmem:[%s5818 + $0x24] sm:$0xe]
  %v6949 = vld [vmem:[%s5818 + $0x28] sm:$0xf]
  %v6950 = vld [vmem:[%s5818 + $0x2c] sm:$0x1]
  %v6951 = vld [vmem:[%s5818 + $0x30] sm:$0xe]
  %v6952 = vld [vmem:[%s5818 + $0x34] sm:$0xf]
  %v6953 = vld [vmem:[%s5818 + $0x38] sm:$0x1]
  %v6954 = vld [vmem:[%s5818 + $0x3c] sm:$0xe]
  %v6955 = vld [vmem:[%s5818 + $0x40] sm:$0xf]
  %v6956 = vld [vmem:[%s5818 + $0x44] sm:$0x1]
  %v6957 = vld [vmem:[%s5818 + $0x48] sm:$0xe]
  %v6958 = vld [vmem:[%s5818 + $0x4c] sm:$0xf]
  %v6959 = vld [vmem:[%s5818 + $0x50] sm:$0x1]
  %v6960 = vld [vmem:[%s5818 + $0x54] sm:$0xe]
  %v6961 = vld [vmem:[%s5818 + $0x58] sm:$0xf]
  %v6962 = vld [vmem:[%s5818 + $0x5c] sm:$0x1]
  %v6963 = vld [vmem:[%s5818 + $0x60] sm:$0xe]
  %v6964 = vld [vmem:[%s5818 + $0x64] sm:$0xf]
  %v6965 = vld [vmem:[%s5818 + $0x68] sm:$0x1]
  %v6966 = vld [vmem:[%s5818 + $0x6c] sm:$0xe]
  %v6967 = vld [vmem:[%s5818 + $0x70] sm:$0xf]
  %v6968 = vld [vmem:[%s5818 + $0x74] sm:$0x1]
  %v6969 = vld [vmem:[%s5818 + $0x78] sm:$0xe]
  %v6970 = vld [vmem:[%s5818 + $0x7c] sm:$0xf]
  %v6971 = vld [vmem:[%s5818 + $0x80] sm:$0x1]
  %v6972 = vld [vmem:[%s5818 + $0x84] sm:$0xe]
  %v6973 = vld [vmem:[%s5818 + $0x88] sm:$0xf]
  %v6974 = vld [vmem:[%s5818 + $0x8c] sm:$0x1]
  %v6975 = vld [vmem:[%s5818 + $0x90] sm:$0xe]
  %v6976 = vld [vmem:[%s5818 + $0x94] sm:$0xf]
  %v6977 = vld [vmem:[%s5818 + $0x98] sm:$0x1]
  %v6978 = vld [vmem:[%s5818 + $0x9c] sm:$0xe]
  %v6979 = vld [vmem:[%s5818 + $0xa0] sm:$0xf]
  %v6980 = vld [vmem:[%s5818 + $0xa4] sm:$0x1]
  %v6981 = vld [vmem:[%s5818 + $0xa8] sm:$0xe]
  %v6982 = vld [vmem:[%s5818 + $0xac] sm:$0xf]
  %v6983 = vld [vmem:[%s5818 + $0xb0] sm:$0x1]
  %v6984 = vld [vmem:[%s5818 + $0xb4] sm:$0xe]
  %v6985 = vld [vmem:[%s5818 + $0xb8] sm:$0xf]
  %v6986 = vld [vmem:[%s5818 + $0xbc] sm:$0x1]
  %v6987 = vld [vmem:[%s5818 + $0xd8] sm:$0xe]
  %v6988 = vld [vmem:[%s5818 + $0xdc] sm:$0xf]
  %v6989 = vld [vmem:[%s5818 + $0xe0] sm:$0x1]
  %v6990 = vld [vmem:[%s5818 + $0xe4] sm:$0xe]
  %v6991 = vld [vmem:[%s5818 + $0xe8] sm:$0xf]
  %v6992 = vld [vmem:[%s5818 + $0xec] sm:$0x1]
  %v6993 = vld [vmem:[%s5818 + $0xf0] sm:$0xe]
  %v6994 = vld [vmem:[%s5818 + $0xf4] sm:$0xf]
  %v6995 = vld [vmem:[%s5818 + $0xf8] sm:$0x1]
  %v6996 = vld [vmem:[%s5818 + $0xfc] sm:$0xe]
  %v6997 = vld [vmem:[%s5818 + $0x100] sm:$0xf]
  %v6998 = vld [vmem:[%s5818 + $0x104] sm:$0x1]
  %v6999 = vld [vmem:[%s5818 + $0x108] sm:$0xe]
  %v7000 = vld [vmem:[%s5818 + $0x10c] sm:$0xf]
  %v7001 = vld [vmem:[%s5818 + $0x110] sm:$0x1]
  %v7002 = vld [vmem:[%s5818 + $0x114] sm:$0xe]
  %v7003 = vld [vmem:[%s5818 + $0x118] sm:$0xf]
  %v7004 = vld [vmem:[%s5818 + $0x11c] sm:$0x1]
  %v7005 = vld [vmem:[%s5818 + $0x120] sm:$0xe]
  %v7006 = vld [vmem:[%s5818 + $0x124] sm:$0xf]
  %v7007 = vld [vmem:[%s5818 + $0x128] sm:$0x1]
  %v7008 = vld [vmem:[%s5818 + $0x12c] sm:$0xe]
  %v7009 = vld [vmem:[%s5818 + $0x130] sm:$0xf]
  %v7010 = vld [vmem:[%s5818 + $0x134] sm:$0x1]
  %v7011 = vld [vmem:[%s5818 + $0x138] sm:$0xe]
  %v7012 = vld [vmem:[%s5818 + $0x13c] sm:$0xf]
  %v7013 = vld [vmem:[%s5818 + $0x140] sm:$0x1]
  %v7014 = vld [vmem:[%s5818 + $0x144] sm:$0xe]
  %v7015 = vld [vmem:[%s5818 + $0x148] sm:$0xf]
  %v7016 = vld [vmem:[%s5818 + $0x14c] sm:$0x1]
  %v7017 = vld [vmem:[%s5818 + $0x150] sm:$0xe]
  %v7018 = vld [vmem:[%s5818 + $0x154] sm:$0xf]
  %v7019 = vld [vmem:[%s5818 + $0x158] sm:$0x1]
  %v7020 = vld [vmem:[%s5818 + $0x15c] sm:$0xe]
  %v7021 = vld [vmem:[%s5818 + $0x160] sm:$0xf]
  %v7022 = vld [vmem:[%s5818 + $0x164] sm:$0x1]
  %v7023 = vld [vmem:[%s5818 + $0x168] sm:$0xe]
  %v7024 = vld [vmem:[%s5818 + $0x16c] sm:$0xf]
  %v7025 = vld [vmem:[%s5818 + $0x170] sm:$0x1]
  %v7026 = vld [vmem:[%s5818 + $0x174] sm:$0xe]
  %v7027 = vld [vmem:[%s5818 + $0x178] sm:$0xf]
  %v7028 = vld [vmem:[%s5818 + $0x17c] sm:$0x1]
  %v7029 = vld [vmem:[%s5818 + $0x180] sm:$0xe]
  %v7030 = vld [vmem:[%s5818 + $0x184] sm:$0xf]
  %v7031 = vld [vmem:[%s5818 + $0x188] sm:$0x1]
  %v7032 = vld [vmem:[%s5818 + $0x18c] sm:$0xe]
  %v7033 = vld [vmem:[%s5818 + $0x190] sm:$0xf]
  %v7034 = vld [vmem:[%s5818 + $0x194] sm:$0x1]
  %v7131 = vrot.slane %v6939, 5
  %v7132 = vrot.slane %v7131, 4
  %v7133 = vrot.slane %v6940, 5
  %v7134 = vsel %vm3801, %v7132, %v7133
  %v7135 = vrot.slane %v7133, 4
  %v7136 = vrot.slane %v6941, 5
  %v7137 = vsel %vm3801, %v7135, %v7136
  %v7138 = vrot.slane %v6942, 5
  %v7139 = vrot.slane %v7138, 4
  %v7140 = vrot.slane %v6943, 5
  %v7141 = vsel %vm3801, %v7139, %v7140
  %v7142 = vrot.slane %v7140, 4
  %v7143 = vrot.slane %v6944, 5
  %v7144 = vsel %vm3801, %v7142, %v7143
  %v7145 = vrot.slane %v6945, 5
  %v7146 = vrot.slane %v7145, 4
  %v7147 = vrot.slane %v6946, 5
  %v7148 = vsel %vm3801, %v7146, %v7147
  %v7149 = vrot.slane %v7147, 4
  %v7150 = vrot.slane %v6947, 5
  %v7151 = vsel %vm3801, %v7149, %v7150
  %v7152 = vrot.slane %v6948, 5
  %v7153 = vrot.slane %v7152, 4
  %v7154 = vrot.slane %v6949, 5
  %v7155 = vsel %vm3801, %v7153, %v7154
  %v7156 = vrot.slane %v7154, 4
  %v7157 = vrot.slane %v6950, 5
  %v7158 = vsel %vm3801, %v7156, %v7157
  %v7159 = vrot.slane %v6951, 5
  %v7160 = vrot.slane %v7159, 4
  %v7161 = vrot.slane %v6952, 5
  %v7162 = vsel %vm3801, %v7160, %v7161
  %v7163 = vrot.slane %v7161, 4
  %v7164 = vrot.slane %v6953, 5
  %v7165 = vsel %vm3801, %v7163, %v7164
  %v7166 = vrot.slane %v6954, 5
  %v7167 = vrot.slane %v7166, 4
  %v7168 = vrot.slane %v6955, 5
  %v7169 = vsel %vm3801, %v7167, %v7168
  %v7170 = vrot.slane %v7168, 4
  %v7171 = vrot.slane %v6956, 5
  %v7172 = vsel %vm3801, %v7170, %v7171
  %v7173 = vrot.slane %v6957, 5
  %v7174 = vrot.slane %v7173, 4
  %v7175 = vrot.slane %v6958, 5
  %v7176 = vsel %vm3801, %v7174, %v7175
  %v7177 = vrot.slane %v7175, 4
  %v7178 = vrot.slane %v6959, 5
  %v7179 = vsel %vm3801, %v7177, %v7178
  %v7180 = vrot.slane %v6960, 5
  %v7181 = vrot.slane %v7180, 4
  %v7182 = vrot.slane %v6961, 5
  %v7183 = vsel %vm3801, %v7181, %v7182
  %v7184 = vrot.slane %v7182, 4
  %v7185 = vrot.slane %v6962, 5
  %v7186 = vsel %vm3801, %v7184, %v7185
  %v7187 = vrot.slane %v6963, 5
  %v7188 = vrot.slane %v7187, 4
  %v7189 = vrot.slane %v6964, 5
  %v7190 = vsel %vm3801, %v7188, %v7189
  %v7191 = vrot.slane %v7189, 4
  %v7192 = vrot.slane %v6965, 5
  %v7193 = vsel %vm3801, %v7191, %v7192
  %v7194 = vrot.slane %v6966, 5
  %v7195 = vrot.slane %v7194, 4
  %v7196 = vrot.slane %v6967, 5
  %v7197 = vsel %vm3801, %v7195, %v7196
  %v7198 = vrot.slane %v7196, 4
  %v7199 = vrot.slane %v6968, 5
  %v7200 = vsel %vm3801, %v7198, %v7199
  %v7201 = vrot.slane %v6969, 5
  %v7202 = vrot.slane %v7201, 4
  %v7203 = vrot.slane %v6970, 5
  %v7204 = vsel %vm3801, %v7202, %v7203
  %v7205 = vrot.slane %v7203, 4
  %v7206 = vrot.slane %v6971, 5
  %v7207 = vsel %vm3801, %v7205, %v7206
  %v7208 = vrot.slane %v6972, 5
  %v7209 = vrot.slane %v7208, 4
  %v7210 = vrot.slane %v6973, 5
  %v7211 = vsel %vm3801, %v7209, %v7210
  %v7212 = vrot.slane %v7210, 4
  %v7213 = vrot.slane %v6974, 5
  %v7214 = vsel %vm3801, %v7212, %v7213
  %v7215 = vrot.slane %v6975, 5
  %v7216 = vrot.slane %v7215, 4
  %v7217 = vrot.slane %v6976, 5
  %v7218 = vsel %vm3801, %v7216, %v7217
  %v7219 = vrot.slane %v7217, 4
  %v7220 = vrot.slane %v6977, 5
  %v7221 = vsel %vm3801, %v7219, %v7220
  %v7222 = vrot.slane %v6978, 5
  %v7223 = vrot.slane %v7222, 4
  %v7224 = vrot.slane %v6979, 5
  %v7225 = vsel %vm3801, %v7223, %v7224
  %v7226 = vrot.slane %v7224, 4
  %v7227 = vrot.slane %v6980, 5
  %v7228 = vsel %vm3801, %v7226, %v7227
  %v7229 = vrot.slane %v6981, 5
  %v7230 = vrot.slane %v7229, 4
  %v7231 = vrot.slane %v6982, 5
  %v7232 = vsel %vm3801, %v7230, %v7231
  %v7233 = vrot.slane %v7231, 4
  %v7234 = vrot.slane %v6983, 5
  %v7235 = vsel %vm3801, %v7233, %v7234
  %v7236 = vrot.slane %v6984, 5
  %v7237 = vrot.slane %v7236, 4
  %v7238 = vrot.slane %v6985, 5
  %v7239 = vsel %vm3801, %v7237, %v7238
  %v7240 = vrot.slane %v7238, 4
  %v7241 = vrot.slane %v6986, 5
  %v7242 = vsel %vm3801, %v7240, %v7241
  %v7243 = vrot.slane %v6987, 5
  %v7244 = vrot.slane %v7243, 4
  %v7245 = vrot.slane %v6988, 5
  %v7246 = vsel %vm3801, %v7244, %v7245
  %v7247 = vrot.slane %v7245, 4
  %v7248 = vrot.slane %v6989, 5
  %v7249 = vsel %vm3801, %v7247, %v7248
  %v7250 = vrot.slane %v6990, 5
  %v7251 = vrot.slane %v7250, 4
  %v7252 = vrot.slane %v6991, 5
  %v7253 = vsel %vm3801, %v7251, %v7252
  %v7254 = vrot.slane %v7252, 4
  %v7255 = vrot.slane %v6992, 5
  %v7256 = vsel %vm3801, %v7254, %v7255
  %v7257 = vrot.slane %v6993, 5
  %v7258 = vrot.slane %v7257, 4
  %v7259 = vrot.slane %v6994, 5
  %v7260 = vsel %vm3801, %v7258, %v7259
  %v7261 = vrot.slane %v7259, 4
  %v7262 = vrot.slane %v6995, 5
  %v7263 = vsel %vm3801, %v7261, %v7262
  %v7264 = vrot.slane %v6996, 5
  %v7265 = vrot.slane %v7264, 4
  %v7266 = vrot.slane %v6997, 5
  %v7267 = vsel %vm3801, %v7265, %v7266
  %v7268 = vrot.slane %v7266, 4
  %v7269 = vrot.slane %v6998, 5
  %v7270 = vsel %vm3801, %v7268, %v7269
  %v7271 = vrot.slane %v6999, 5
  %v7272 = vrot.slane %v7271, 4
  %v7273 = vrot.slane %v7000, 5
  %v7274 = vsel %vm3801, %v7272, %v7273
  %v7275 = vrot.slane %v7273, 4
  %v7276 = vrot.slane %v7001, 5
  %v7277 = vsel %vm3801, %v7275, %v7276
  %v7278 = vrot.slane %v7002, 5
  %v7279 = vrot.slane %v7278, 4
  %v7280 = vrot.slane %v7003, 5
  %v7281 = vsel %vm3801, %v7279, %v7280
  %v7282 = vrot.slane %v7280, 4
  %v7283 = vrot.slane %v7004, 5
  %v7284 = vsel %vm3801, %v7282, %v7283
  %v7285 = vrot.slane %v7005, 5
  %v7286 = vrot.slane %v7285, 4
  %v7287 = vrot.slane %v7006, 5
  %v7288 = vsel %vm3801, %v7286, %v7287
  %v7289 = vrot.slane %v7287, 4
  %v7290 = vrot.slane %v7007, 5
  %v7291 = vsel %vm3801, %v7289, %v7290
  %v7292 = vrot.slane %v7008, 5
  %v7293 = vrot.slane %v7292, 4
  %v7294 = vrot.slane %v7009, 5
  %v7295 = vsel %vm3801, %v7293, %v7294
  %v7296 = vrot.slane %v7294, 4
  %v7297 = vrot.slane %v7010, 5
  %v7298 = vsel %vm3801, %v7296, %v7297
  %v7299 = vrot.slane %v7011, 5
  %v7300 = vrot.slane %v7299, 4
  %v7301 = vrot.slane %v7012, 5
  %v7302 = vsel %vm3801, %v7300, %v7301
  %v7303 = vrot.slane %v7301, 4
  %v7304 = vrot.slane %v7013, 5
  %v7305 = vsel %vm3801, %v7303, %v7304
  %v7306 = vrot.slane %v7014, 5
  %v7307 = vrot.slane %v7306, 4
  %v7308 = vrot.slane %v7015, 5
  %v7309 = vsel %vm3801, %v7307, %v7308
  %v7310 = vrot.slane %v7308, 4
  %v7311 = vrot.slane %v7016, 5
  %v7312 = vsel %vm3801, %v7310, %v7311
  %v7313 = vrot.slane %v7017, 5
  %v7314 = vrot.slane %v7313, 4
  %v7315 = vrot.slane %v7018, 5
  %v7316 = vsel %vm3801, %v7314, %v7315
  %v7317 = vrot.slane %v7315, 4
  %v7318 = vrot.slane %v7019, 5
  %v7319 = vsel %vm3801, %v7317, %v7318
  %v7320 = vrot.slane %v7020, 5
  %v7321 = vrot.slane %v7320, 4
  %v7322 = vrot.slane %v7021, 5
  %v7323 = vsel %vm3801, %v7321, %v7322
  %v7324 = vrot.slane %v7322, 4
  %v7325 = vrot.slane %v7022, 5
  %v7326 = vsel %vm3801, %v7324, %v7325
  %v7327 = vrot.slane %v7023, 5
  %v7328 = vrot.slane %v7327, 4
  %v7329 = vrot.slane %v7024, 5
  %v7330 = vsel %vm3801, %v7328, %v7329
  %v7331 = vrot.slane %v7329, 4
  %v7332 = vrot.slane %v7025, 5
  %v7333 = vsel %vm3801, %v7331, %v7332
  %v7334 = vrot.slane %v7026, 5
  %v7335 = vrot.slane %v7334, 4
  %v7336 = vrot.slane %v7027, 5
  %v7337 = vsel %vm3801, %v7335, %v7336
  %v7338 = vrot.slane %v7336, 4
  %v7339 = vrot.slane %v7028, 5
  %v7340 = vsel %vm3801, %v7338, %v7339
  %v7341 = vrot.slane %v7029, 5
  %v7342 = vrot.slane %v7341, 4
  %v7343 = vrot.slane %v7030, 5
  %v7344 = vsel %vm3801, %v7342, %v7343
  %v7345 = vrot.slane %v7343, 4
  %v7346 = vrot.slane %v7031, 5
  %v7347 = vsel %vm3801, %v7345, %v7346
  %v7348 = vrot.slane %v7032, 5
  %v7349 = vrot.slane %v7348, 4
  %v7350 = vrot.slane %v7033, 5
  %v7351 = vsel %vm3801, %v7349, %v7350
  %v7352 = vrot.slane %v7350, 4
  %v7353 = vrot.slane %v7034, 5
  %v7354 = vsel %vm3801, %v7352, %v7353
  %7419 = vst [vmem:[#allocation3 + $0x20] sm:$0xf] %v7134
  %7420 = vst [vmem:[#allocation3 + $0x44] sm:$0xf] %v7137
  %7421 = vst [vmem:[#allocation3 + $0x68] sm:$0xf] %v7141
  %7422 = vst [vmem:[#allocation3 + $0x8c] sm:$0xf] %v7144
  %7423 = vst [vmem:[#allocation3 + $0xb0] sm:$0xf] %v7148
  %7424 = vst [vmem:[#allocation3 + $0xd4] sm:$0xf] %v7151
  %7425 = vst [vmem:[#allocation3 + $0xf8] sm:$0xf] %v7155
  %7426 = vst [vmem:[#allocation3 + $0x11c] sm:$0xf] %v7158
  %7427 = vst [vmem:[#allocation3 + $0x140] sm:$0xf] %v7162
  %7428 = vst [vmem:[#allocation3 + $0x164] sm:$0xf] %v7165
  %7429 = vst [vmem:[#allocation3 + $0x188] sm:$0xf] %v7169
  %7430 = vst [vmem:[#allocation3 + $0x1ac] sm:$0xf] %v7172
  %7431 = vst [vmem:[#allocation3 + $0x1d0] sm:$0xf] %v7176
  %7432 = vst [vmem:[#allocation3 + $0x1f4] sm:$0xf] %v7179
  %7433 = vst [vmem:[#allocation3 + $0x218] sm:$0xf] %v7183
  %7434 = vst [vmem:[#allocation3 + $0x23c] sm:$0xf] %v7186
  %7435 = vst [vmem:[#allocation3 + $0x260] sm:$0xf] %v7190
  %7436 = vst [vmem:[#allocation3 + $0x284] sm:$0xf] %v7193
  %7437 = vst [vmem:[#allocation3 + $0x2a8] sm:$0xf] %v7197
  %7438 = vst [vmem:[#allocation3 + $0x2cc] sm:$0xf] %v7200
  %7439 = vst [vmem:[#allocation3 + $0x2f0] sm:$0xf] %v7204
  %7440 = vst [vmem:[#allocation3 + $0x314] sm:$0xf] %v7207
  %7441 = vst [vmem:[#allocation3 + $0x338] sm:$0xf] %v7211
  %7442 = vst [vmem:[#allocation3 + $0x35c] sm:$0xf] %v7214
  %7443 = vst [vmem:[#allocation3 + $0x380] sm:$0xf] %v7218
  %7444 = vst [vmem:[#allocation3 + $0x3a4] sm:$0xf] %v7221
  %7445 = vst [vmem:[#allocation3 + $0x3c8] sm:$0xf] %v7225
  %7446 = vst [vmem:[#allocation3 + $0x3ec] sm:$0xf] %v7228
  %7447 = vst [vmem:[#allocation3 + $0x410] sm:$0xf] %v7232
  %7448 = vst [vmem:[#allocation3 + $0x434] sm:$0xf] %v7235
  %7449 = vst [vmem:[#allocation3 + $0x458] sm:$0xf] %v7239
  %7450 = vst [vmem:[#allocation3 + $0x47c] sm:$0xf] %v7242
  %7451 = vst [vmem:[#allocation3 + $0x4a0] sm:$0xf] %v7246
  %7452 = vst [vmem:[#allocation3 + $0x4c4] sm:$0xf] %v7249
  %7453 = vst [vmem:[#allocation3 + $0x4e8] sm:$0xf] %v7253
  %7454 = vst [vmem:[#allocation3 + $0x50c] sm:$0xf] %v7256
  %7455 = vst [vmem:[#allocation3 + $0x530] sm:$0xf] %v7260
  %7456 = vst [vmem:[#allocation3 + $0x554] sm:$0xf] %v7263
  %7457 = vst [vmem:[#allocation3 + $0x578] sm:$0xf] %v7267
  %7458 = vst [vmem:[#allocation3 + $0x59c] sm:$0xf] %v7270
  %7459 = vst [vmem:[#allocation3 + $0x5c0] sm:$0xf] %v7274
  %7460 = vst [vmem:[#allocation3 + $0x5e4] sm:$0xf] %v7277
  %7461 = vst [vmem:[#allocation3 + $0x608] sm:$0xf] %v7281
  %7462 = vst [vmem:[#allocation3 + $0x62c] sm:$0xf] %v7284
  %7463 = vst [vmem:[#allocation3 + $0x650] sm:$0xf] %v7288
  %7464 = vst [vmem:[#allocation3 + $0x674] sm:$0xf] %v7291
  %7465 = vst [vmem:[#allocation3 + $0x698] sm:$0xf] %v7295
  %7466 = vst [vmem:[#allocation3 + $0x6bc] sm:$0xf] %v7298
  %7467 = vst [vmem:[#allocation3 + $0x6e0] sm:$0xf] %v7302
  %7468 = vst [vmem:[#allocation3 + $0x704] sm:$0xf] %v7305
  %7469 = vst [vmem:[#allocation3 + $0x728] sm:$0xf] %v7309
  %7470 = vst [vmem:[#allocation3 + $0x74c] sm:$0xf] %v7312
  %7471 = vst [vmem:[#allocation3 + $0x770] sm:$0xf] %v7316
  %7472 = vst [vmem:[#allocation3 + $0x794] sm:$0xf] %v7319
  %7473 = vst [vmem:[#allocation3 + $0x7b8] sm:$0xf] %v7323
  %7474 = vst [vmem:[#allocation3 + $0x7dc] sm:$0xf] %v7326
  %7475 = vst [vmem:[#allocation3 + $0x800] sm:$0xf] %v7330
  %7476 = vst [vmem:[#allocation3 + $0x824] sm:$0xf] %v7333
  %7477 = vst [vmem:[#allocation3 + $0x848] sm:$0xf] %v7337
  %7478 = vst [vmem:[#allocation3 + $0x86c] sm:$0xf] %v7340
  %7479 = vst [vmem:[#allocation3 + $0x890] sm:$0xf] %v7344
  %7480 = vst [vmem:[#allocation3 + $0x8b4] sm:$0xf] %v7347
  %7481 = vst [vmem:[#allocation3 + $0x8d8] sm:$0xf] %v7351
  %7482 = vst [vmem:[#allocation3 + $0x8fc] sm:$0xf] %v7354
  %v7483 = vld [vmem:[#allocation3] sm:$0xff]
  %v7484 = vld [vmem:[#allocation3 + $0x8] sm:$0xff]
  %v7485 = vld [vmem:[#allocation3 + $0x10] sm:$0xff]
  %v7486 = vld [vmem:[#allocation3 + $0x18] sm:$0xff]
  %v7487 = vld [vmem:[#allocation3 + $0x20] sm:$0xf]
  %v7488 = vld [vmem:[#allocation3 + $0x24] sm:$0xff]
  %v7489 = vld [vmem:[#allocation3 + $0x2c] sm:$0xff]
  %v7490 = vld [vmem:[#allocation3 + $0x34] sm:$0xff]
  %v7491 = vld [vmem:[#allocation3 + $0x3c] sm:$0xff]
  %v7492 = vld [vmem:[#allocation3 + $0x44] sm:$0xf]
  %v7493 = vld [vmem:[#allocation3 + $0x48] sm:$0xff]
  %v7494 = vld [vmem:[#allocation3 + $0x50] sm:$0xff]
  %v7495 = vld [vmem:[#allocation3 + $0x58] sm:$0xff]
  %v7496 = vld [vmem:[#allocation3 + $0x60] sm:$0xff]
  %v7497 = vld [vmem:[#allocation3 + $0x68] sm:$0xf]
  %v7498 = vld [vmem:[#allocation3 + $0x6c] sm:$0xff]
  %v7499 = vld [vmem:[#allocation3 + $0x74] sm:$0xff]
  %v7500 = vld [vmem:[#allocation3 + $0x7c] sm:$0xff]
  %v7501 = vld [vmem:[#allocation3 + $0x84] sm:$0xff]
  %v7502 = vld [vmem:[#allocation3 + $0x8c] sm:$0xf]
  %v7503 = vld [vmem:[#allocation3 + $0x90] sm:$0xff]
  %v7504 = vld [vmem:[#allocation3 + $0x98] sm:$0xff]
  %v7505 = vld [vmem:[#allocation3 + $0xa0] sm:$0xff]
  %v7506 = vld [vmem:[#allocation3 + $0xa8] sm:$0xff]
  %v7507 = vld [vmem:[#allocation3 + $0xb0] sm:$0xf]
  %v7508 = vld [vmem:[#allocation3 + $0xb4] sm:$0xff]
  %v7509 = vld [vmem:[#allocation3 + $0xbc] sm:$0xff]
  %v7510 = vld [vmem:[#allocation3 + $0xc4] sm:$0xff]
  %v7511 = vld [vmem:[#allocation3 + $0xcc] sm:$0xff]
  %v7512 = vld [vmem:[#allocation3 + $0xd4] sm:$0xf]
  %v7513 = vld [vmem:[#allocation3 + $0xd8] sm:$0xff]
  %v7514 = vld [vmem:[#allocation3 + $0xe0] sm:$0xff]
  %v7515 = vld [vmem:[#allocation3 + $0xe8] sm:$0xff]
  %v7516 = vld [vmem:[#allocation3 + $0xf0] sm:$0xff]
  %v7517 = vld [vmem:[#allocation3 + $0xf8] sm:$0xf]
  %v7518 = vld [vmem:[#allocation3 + $0xfc] sm:$0xff]
  %v7519 = vld [vmem:[#allocation3 + $0x104] sm:$0xff]
  %v7520 = vld [vmem:[#allocation3 + $0x10c] sm:$0xff]
  %v7521 = vld [vmem:[#allocation3 + $0x114] sm:$0xff]
  %v7522 = vld [vmem:[#allocation3 + $0x11c] sm:$0xf]
  %v7523 = vld [vmem:[#allocation3 + $0x120] sm:$0xff]
  %v7524 = vld [vmem:[#allocation3 + $0x128] sm:$0xff]
  %v7525 = vld [vmem:[#allocation3 + $0x130] sm:$0xff]
  %v7526 = vld [vmem:[#allocation3 + $0x138] sm:$0xff]
  %v7527 = vld [vmem:[#allocation3 + $0x140] sm:$0xf]
  %v7528 = vld [vmem:[#allocation3 + $0x144] sm:$0xff]
  %v7529 = vld [vmem:[#allocation3 + $0x14c] sm:$0xff]
  %v7530 = vld [vmem:[#allocation3 + $0x154] sm:$0xff]
  %v7531 = vld [vmem:[#allocation3 + $0x15c] sm:$0xff]
  %v7532 = vld [vmem:[#allocation3 + $0x164] sm:$0xf]
  %v7533 = vld [vmem:[#allocation3 + $0x168] sm:$0xff]
  %v7534 = vld [vmem:[#allocation3 + $0x170] sm:$0xff]
  %v7535 = vld [vmem:[#allocation3 + $0x178] sm:$0xff]
  %v7536 = vld [vmem:[#allocation3 + $0x180] sm:$0xff]
  %v7537 = vld [vmem:[#allocation3 + $0x188] sm:$0xf]
  %v7538 = vld [vmem:[#allocation3 + $0x18c] sm:$0xff]
  %v7539 = vld [vmem:[#allocation3 + $0x194] sm:$0xff]
  %v7540 = vld [vmem:[#allocation3 + $0x19c] sm:$0xff]
  %v7541 = vld [vmem:[#allocation3 + $0x1a4] sm:$0xff]
  %v7542 = vld [vmem:[#allocation3 + $0x1ac] sm:$0xf]
  %v7543 = vld [vmem:[#allocation3 + $0x1b0] sm:$0xff]
  %v7544 = vld [vmem:[#allocation3 + $0x1b8] sm:$0xff]
  %v7545 = vld [vmem:[#allocation3 + $0x1c0] sm:$0xff]
  %v7546 = vld [vmem:[#allocation3 + $0x1c8] sm:$0xff]
  %v7547 = vld [vmem:[#allocation3 + $0x1d0] sm:$0xf]
  %v7548 = vld [vmem:[#allocation3 + $0x1d4] sm:$0xff]
  %v7549 = vld [vmem:[#allocation3 + $0x1dc] sm:$0xff]
  %v7550 = vld [vmem:[#allocation3 + $0x1e4] sm:$0xff]
  %v7551 = vld [vmem:[#allocation3 + $0x1ec] sm:$0xff]
  %v7552 = vld [vmem:[#allocation3 + $0x1f4] sm:$0xf]
  %v7553 = vld [vmem:[#allocation3 + $0x1f8] sm:$0xff]
  %v7554 = vld [vmem:[#allocation3 + $0x200] sm:$0xff]
  %v7555 = vld [vmem:[#allocation3 + $0x208] sm:$0xff]
  %v7556 = vld [vmem:[#allocation3 + $0x210] sm:$0xff]
  %v7557 = vld [vmem:[#allocation3 + $0x218] sm:$0xf]
  %v7558 = vld [vmem:[#allocation3 + $0x21c] sm:$0xff]
  %v7559 = vld [vmem:[#allocation3 + $0x224] sm:$0xff]
  %v7560 = vld [vmem:[#allocation3 + $0x22c] sm:$0xff]
  %v7561 = vld [vmem:[#allocation3 + $0x234] sm:$0xff]
  %v7562 = vld [vmem:[#allocation3 + $0x23c] sm:$0xf]
  %v7563 = vld [vmem:[#allocation3 + $0x240] sm:$0xff]
  %v7564 = vld [vmem:[#allocation3 + $0x248] sm:$0xff]
  %v7565 = vld [vmem:[#allocation3 + $0x250] sm:$0xff]
  %v7566 = vld [vmem:[#allocation3 + $0x258] sm:$0xff]
  %v7567 = vld [vmem:[#allocation3 + $0x260] sm:$0xf]
  %v7568 = vld [vmem:[#allocation3 + $0x264] sm:$0xff]
  %v7569 = vld [vmem:[#allocation3 + $0x26c] sm:$0xff]
  %v7570 = vld [vmem:[#allocation3 + $0x274] sm:$0xff]
  %v7571 = vld [vmem:[#allocation3 + $0x27c] sm:$0xff]
  %v7572 = vld [vmem:[#allocation3 + $0x284] sm:$0xf]
  %v7573 = vld [vmem:[#allocation3 + $0x288] sm:$0xff]
  %v7574 = vld [vmem:[#allocation3 + $0x290] sm:$0xff]
  %v7575 = vld [vmem:[#allocation3 + $0x298] sm:$0xff]
  %v7576 = vld [vmem:[#allocation3 + $0x2a0] sm:$0xff]
  %v7577 = vld [vmem:[#allocation3 + $0x2a8] sm:$0xf]
  %v7578 = vld [vmem:[#allocation3 + $0x2ac] sm:$0xff]
  %v7579 = vld [vmem:[#allocation3 + $0x2b4] sm:$0xff]
  %v7580 = vld [vmem:[#allocation3 + $0x2bc] sm:$0xff]
  %v7581 = vld [vmem:[#allocation3 + $0x2c4] sm:$0xff]
  %v7582 = vld [vmem:[#allocation3 + $0x2cc] sm:$0xf]
  %v7583 = vld [vmem:[#allocation3 + $0x2d0] sm:$0xff]
  %v7584 = vld [vmem:[#allocation3 + $0x2d8] sm:$0xff]
  %v7585 = vld [vmem:[#allocation3 + $0x2e0] sm:$0xff]
  %v7586 = vld [vmem:[#allocation3 + $0x2e8] sm:$0xff]
  %v7587 = vld [vmem:[#allocation3 + $0x2f0] sm:$0xf]
  %v7588 = vld [vmem:[#allocation3 + $0x2f4] sm:$0xff]
  %v7589 = vld [vmem:[#allocation3 + $0x2fc] sm:$0xff]
  %v7590 = vld [vmem:[#allocation3 + $0x304] sm:$0xff]
  %v7591 = vld [vmem:[#allocation3 + $0x30c] sm:$0xff]
  %v7592 = vld [vmem:[#allocation3 + $0x314] sm:$0xf]
  %v7593 = vld [vmem:[#allocation3 + $0x318] sm:$0xff]
  %v7594 = vld [vmem:[#allocation3 + $0x320] sm:$0xff]
  %v7595 = vld [vmem:[#allocation3 + $0x328] sm:$0xff]
  %v7596 = vld [vmem:[#allocation3 + $0x330] sm:$0xff]
  %v7597 = vld [vmem:[#allocation3 + $0x338] sm:$0xf]
  %v7598 = vld [vmem:[#allocation3 + $0x33c] sm:$0xff]
  %v7599 = vld [vmem:[#allocation3 + $0x344] sm:$0xff]
  %v7600 = vld [vmem:[#allocation3 + $0x34c] sm:$0xff]
  %v7601 = vld [vmem:[#allocation3 + $0x354] sm:$0xff]
  %v7602 = vld [vmem:[#allocation3 + $0x35c] sm:$0xf]
  %v7603 = vld [vmem:[#allocation3 + $0x360] sm:$0xff]
  %v7604 = vld [vmem:[#allocation3 + $0x368] sm:$0xff]
  %v7605 = vld [vmem:[#allocation3 + $0x370] sm:$0xff]
  %v7606 = vld [vmem:[#allocation3 + $0x378] sm:$0xff]
  %v7607 = vld [vmem:[#allocation3 + $0x380] sm:$0xf]
  %v7608 = vld [vmem:[#allocation3 + $0x384] sm:$0xff]
  %v7609 = vld [vmem:[#allocation3 + $0x38c] sm:$0xff]
  %v7610 = vld [vmem:[#allocation3 + $0x394] sm:$0xff]
  %v7611 = vld [vmem:[#allocation3 + $0x39c] sm:$0xff]
  %v7612 = vld [vmem:[#allocation3 + $0x3a4] sm:$0xf]
  %v7613 = vld [vmem:[#allocation3 + $0x3a8] sm:$0xff]
  %v7614 = vld [vmem:[#allocation3 + $0x3b0] sm:$0xff]
  %v7615 = vld [vmem:[#allocation3 + $0x3b8] sm:$0xff]
  %v7616 = vld [vmem:[#allocation3 + $0x3c0] sm:$0xff]
  %v7617 = vld [vmem:[#allocation3 + $0x3c8] sm:$0xf]
  %v7618 = vld [vmem:[#allocation3 + $0x3cc] sm:$0xff]
  %v7619 = vld [vmem:[#allocation3 + $0x3d4] sm:$0xff]
  %v7620 = vld [vmem:[#allocation3 + $0x3dc] sm:$0xff]
  %v7621 = vld [vmem:[#allocation3 + $0x3e4] sm:$0xff]
  %v7622 = vld [vmem:[#allocation3 + $0x3ec] sm:$0xf]
  %v7623 = vld [vmem:[#allocation3 + $0x3f0] sm:$0xff]
  %v7624 = vld [vmem:[#allocation3 + $0x3f8] sm:$0xff]
  %v7625 = vld [vmem:[#allocation3 + $0x400] sm:$0xff]
  %v7626 = vld [vmem:[#allocation3 + $0x408] sm:$0xff]
  %v7627 = vld [vmem:[#allocation3 + $0x410] sm:$0xf]
  %v7628 = vld [vmem:[#allocation3 + $0x414] sm:$0xff]
  %v7629 = vld [vmem:[#allocation3 + $0x41c] sm:$0xff]
  %v7630 = vld [vmem:[#allocation3 + $0x424] sm:$0xff]
  %v7631 = vld [vmem:[#allocation3 + $0x42c] sm:$0xff]
  %v7632 = vld [vmem:[#allocation3 + $0x434] sm:$0xf]
  %v7633 = vld [vmem:[#allocation3 + $0x438] sm:$0xff]
  %v7634 = vld [vmem:[#allocation3 + $0x440] sm:$0xff]
  %v7635 = vld [vmem:[#allocation3 + $0x448] sm:$0xff]
  %v7636 = vld [vmem:[#allocation3 + $0x450] sm:$0xff]
  %v7637 = vld [vmem:[#allocation3 + $0x458] sm:$0xf]
  %v7638 = vld [vmem:[#allocation3 + $0x45c] sm:$0xff]
  %v7639 = vld [vmem:[#allocation3 + $0x464] sm:$0xff]
  %v7640 = vld [vmem:[#allocation3 + $0x46c] sm:$0xff]
  %v7641 = vld [vmem:[#allocation3 + $0x474] sm:$0xff]
  %v7642 = vld [vmem:[#allocation3 + $0x47c] sm:$0xf]
  %v7643 = vld [vmem:[#allocation3 + $0x480] sm:$0xff]
  %v7644 = vld [vmem:[#allocation3 + $0x488] sm:$0xff]
  %v7645 = vld [vmem:[#allocation3 + $0x490] sm:$0xff]
  %v7646 = vld [vmem:[#allocation3 + $0x498] sm:$0xff]
  %v7647 = vld [vmem:[#allocation3 + $0x4a0] sm:$0xf]
  %v7648 = vld [vmem:[#allocation3 + $0x4a4] sm:$0xff]
  %v7649 = vld [vmem:[#allocation3 + $0x4ac] sm:$0xff]
  %v7650 = vld [vmem:[#allocation3 + $0x4b4] sm:$0xff]
  %v7651 = vld [vmem:[#allocation3 + $0x4bc] sm:$0xff]
  %v7652 = vld [vmem:[#allocation3 + $0x4c4] sm:$0xf]
  %v7653 = vld [vmem:[#allocation3 + $0x4c8] sm:$0xff]
  %v7654 = vld [vmem:[#allocation3 + $0x4d0] sm:$0xff]
  %v7655 = vld [vmem:[#allocation3 + $0x4d8] sm:$0xff]
  %v7656 = vld [vmem:[#allocation3 + $0x4e0] sm:$0xff]
  %v7657 = vld [vmem:[#allocation3 + $0x4e8] sm:$0xf]
  %v7658 = vld [vmem:[#allocation3 + $0x4ec] sm:$0xff]
  %v7659 = vld [vmem:[#allocation3 + $0x4f4] sm:$0xff]
  %v7660 = vld [vmem:[#allocation3 + $0x4fc] sm:$0xff]
  %v7661 = vld [vmem:[#allocation3 + $0x504] sm:$0xff]
  %v7662 = vld [vmem:[#allocation3 + $0x50c] sm:$0xf]
  %v7663 = vld [vmem:[#allocation3 + $0x510] sm:$0xff]
  %v7664 = vld [vmem:[#allocation3 + $0x518] sm:$0xff]
  %v7665 = vld [vmem:[#allocation3 + $0x520] sm:$0xff]
  %v7666 = vld [vmem:[#allocation3 + $0x528] sm:$0xff]
  %v7667 = vld [vmem:[#allocation3 + $0x530] sm:$0xf]
  %v7668 = vld [vmem:[#allocation3 + $0x534] sm:$0xff]
  %v7669 = vld [vmem:[#allocation3 + $0x53c] sm:$0xff]
  %v7670 = vld [vmem:[#allocation3 + $0x544] sm:$0xff]
  %v7671 = vld [vmem:[#allocation3 + $0x54c] sm:$0xff]
  %v7672 = vld [vmem:[#allocation3 + $0x554] sm:$0xf]
  %v7673 = vld [vmem:[#allocation3 + $0x558] sm:$0xff]
  %v7674 = vld [vmem:[#allocation3 + $0x560] sm:$0xff]
  %v7675 = vld [vmem:[#allocation3 + $0x568] sm:$0xff]
  %v7676 = vld [vmem:[#allocation3 + $0x570] sm:$0xff]
  %v7677 = vld [vmem:[#allocation3 + $0x578] sm:$0xf]
  %v7678 = vld [vmem:[#allocation3 + $0x57c] sm:$0xff]
  %v7679 = vld [vmem:[#allocation3 + $0x584] sm:$0xff]
  %v7680 = vld [vmem:[#allocation3 + $0x58c] sm:$0xff]
  %v7681 = vld [vmem:[#allocation3 + $0x594] sm:$0xff]
  %v7682 = vld [vmem:[#allocation3 + $0x59c] sm:$0xf]
  %v7683 = vld [vmem:[#allocation3 + $0x5a0] sm:$0xff]
  %v7684 = vld [vmem:[#allocation3 + $0x5a8] sm:$0xff]
  %v7685 = vld [vmem:[#allocation3 + $0x5b0] sm:$0xff]
  %v7686 = vld [vmem:[#allocation3 + $0x5b8] sm:$0xff]
  %v7687 = vld [vmem:[#allocation3 + $0x5c0] sm:$0xf]
  %v7688 = vld [vmem:[#allocation3 + $0x5c4] sm:$0xff]
  %v7689 = vld [vmem:[#allocation3 + $0x5cc] sm:$0xff]
  %v7690 = vld [vmem:[#allocation3 + $0x5d4] sm:$0xff]
  %v7691 = vld [vmem:[#allocation3 + $0x5dc] sm:$0xff]
  %v7692 = vld [vmem:[#allocation3 + $0x5e4] sm:$0xf]
  %v7693 = vld [vmem:[#allocation3 + $0x5e8] sm:$0xff]
  %v7694 = vld [vmem:[#allocation3 + $0x5f0] sm:$0xff]
  %v7695 = vld [vmem:[#allocation3 + $0x5f8] sm:$0xff]
  %v7696 = vld [vmem:[#allocation3 + $0x600] sm:$0xff]
  %v7697 = vld [vmem:[#allocation3 + $0x608] sm:$0xf]
  %v7698 = vld [vmem:[#allocation3 + $0x60c] sm:$0xff]
  %v7699 = vld [vmem:[#allocation3 + $0x614] sm:$0xff]
  %v7700 = vld [vmem:[#allocation3 + $0x61c] sm:$0xff]
  %v7701 = vld [vmem:[#allocation3 + $0x624] sm:$0xff]
  %v7702 = vld [vmem:[#allocation3 + $0x62c] sm:$0xf]
  %v7703 = vld [vmem:[#allocation3 + $0x630] sm:$0xff]
  %v7704 = vld [vmem:[#allocation3 + $0x638] sm:$0xff]
  %v7705 = vld [vmem:[#allocation3 + $0x640] sm:$0xff]
  %v7706 = vld [vmem:[#allocation3 + $0x648] sm:$0xff]
  %v7707 = vld [vmem:[#allocation3 + $0x650] sm:$0xf]
  %v7708 = vld [vmem:[#allocation3 + $0x654] sm:$0xff]
  %v7709 = vld [vmem:[#allocation3 + $0x65c] sm:$0xff]
  %v7710 = vld [vmem:[#allocation3 + $0x664] sm:$0xff]
  %v7711 = vld [vmem:[#allocation3 + $0x66c] sm:$0xff]
  %v7712 = vld [vmem:[#allocation3 + $0x674] sm:$0xf]
  %v7713 = vld [vmem:[#allocation3 + $0x678] sm:$0xff]
  %v7714 = vld [vmem:[#allocation3 + $0x680] sm:$0xff]
  %v7715 = vld [vmem:[#allocation3 + $0x688] sm:$0xff]
  %v7716 = vld [vmem:[#allocation3 + $0x690] sm:$0xff]
  %v7717 = vld [vmem:[#allocation3 + $0x698] sm:$0xf]
  %v7718 = vld [vmem:[#allocation3 + $0x69c] sm:$0xff]
  %v7719 = vld [vmem:[#allocation3 + $0x6a4] sm:$0xff]
  %v7720 = vld [vmem:[#allocation3 + $0x6ac] sm:$0xff]
  %v7721 = vld [vmem:[#allocation3 + $0x6b4] sm:$0xff]
  %v7722 = vld [vmem:[#allocation3 + $0x6bc] sm:$0xf]
  %v7723 = vld [vmem:[#allocation3 + $0x6c0] sm:$0xff]
  %v7724 = vld [vmem:[#allocation3 + $0x6c8] sm:$0xff]
  %v7725 = vld [vmem:[#allocation3 + $0x6d0] sm:$0xff]
  %v7726 = vld [vmem:[#allocation3 + $0x6d8] sm:$0xff]
  %v7727 = vld [vmem:[#allocation3 + $0x6e0] sm:$0xf]
  %v7728 = vld [vmem:[#allocation3 + $0x6e4] sm:$0xff]
  %v7729 = vld [vmem:[#allocation3 + $0x6ec] sm:$0xff]
  %v7730 = vld [vmem:[#allocation3 + $0x6f4] sm:$0xff]
  %v7731 = vld [vmem:[#allocation3 + $0x6fc] sm:$0xff]
  %v7732 = vld [vmem:[#allocation3 + $0x704] sm:$0xf]
  %v7733 = vld [vmem:[#allocation3 + $0x708] sm:$0xff]
  %v7734 = vld [vmem:[#allocation3 + $0x710] sm:$0xff]
  %v7735 = vld [vmem:[#allocation3 + $0x718] sm:$0xff]
  %v7736 = vld [vmem:[#allocation3 + $0x720] sm:$0xff]
  %v7737 = vld [vmem:[#allocation3 + $0x728] sm:$0xf]
  %v7738 = vld [vmem:[#allocation3 + $0x72c] sm:$0xff]
  %v7739 = vld [vmem:[#allocation3 + $0x734] sm:$0xff]
  %v7740 = vld [vmem:[#allocation3 + $0x73c] sm:$0xff]
  %v7741 = vld [vmem:[#allocation3 + $0x744] sm:$0xff]
  %v7742 = vld [vmem:[#allocation3 + $0x74c] sm:$0xf]
  %v7743 = vld [vmem:[#allocation3 + $0x750] sm:$0xff]
  %v7744 = vld [vmem:[#allocation3 + $0x758] sm:$0xff]
  %v7745 = vld [vmem:[#allocation3 + $0x760] sm:$0xff]
  %v7746 = vld [vmem:[#allocation3 + $0x768] sm:$0xff]
  %v7747 = vld [vmem:[#allocation3 + $0x770] sm:$0xf]
  %v7748 = vld [vmem:[#allocation3 + $0x774] sm:$0xff]
  %v7749 = vld [vmem:[#allocation3 + $0x77c] sm:$0xff]
  %v7750 = vld [vmem:[#allocation3 + $0x784] sm:$0xff]
  %v7751 = vld [vmem:[#allocation3 + $0x78c] sm:$0xff]
  %v7752 = vld [vmem:[#allocation3 + $0x794] sm:$0xf]
  %v7753 = vld [vmem:[#allocation3 + $0x798] sm:$0xff]
  %v7754 = vld [vmem:[#allocation3 + $0x7a0] sm:$0xff]
  %v7755 = vld [vmem:[#allocation3 + $0x7a8] sm:$0xff]
  %v7756 = vld [vmem:[#allocation3 + $0x7b0] sm:$0xff]
  %v7757 = vld [vmem:[#allocation3 + $0x7b8] sm:$0xf]
  %v7758 = vld [vmem:[#allocation3 + $0x7bc] sm:$0xff]
  %v7759 = vld [vmem:[#allocation3 + $0x7c4] sm:$0xff]
  %v7760 = vld [vmem:[#allocation3 + $0x7cc] sm:$0xff]
  %v7761 = vld [vmem:[#allocation3 + $0x7d4] sm:$0xff]
  %v7762 = vld [vmem:[#allocation3 + $0x7dc] sm:$0xf]
  %v7763 = vld [vmem:[#allocation3 + $0x7e0] sm:$0xff]
  %v7764 = vld [vmem:[#allocation3 + $0x7e8] sm:$0xff]
  %v7765 = vld [vmem:[#allocation3 + $0x7f0] sm:$0xff]
  %v7766 = vld [vmem:[#allocation3 + $0x7f8] sm:$0xff]
  %v7767 = vld [vmem:[#allocation3 + $0x800] sm:$0xf]
  %v7768 = vld [vmem:[#allocation3 + $0x804] sm:$0xff]
  %v7769 = vld [vmem:[#allocation3 + $0x80c] sm:$0xff]
  %v7770 = vld [vmem:[#allocation3 + $0x814] sm:$0xff]
  %v7771 = vld [vmem:[#allocation3 + $0x81c] sm:$0xff]
  %v7772 = vld [vmem:[#allocation3 + $0x824] sm:$0xf]
  %v7773 = vld [vmem:[#allocation3 + $0x828] sm:$0xff]
  %v7774 = vld [vmem:[#allocation3 + $0x830] sm:$0xff]
  %v7775 = vld [vmem:[#allocation3 + $0x838] sm:$0xff]
  %v7776 = vld [vmem:[#allocation3 + $0x840] sm:$0xff]
  %v7777 = vld [vmem:[#allocation3 + $0x848] sm:$0xf]
  %v7778 = vld [vmem:[#allocation3 + $0x84c] sm:$0xff]
  %v7779 = vld [vmem:[#allocation3 + $0x854] sm:$0xff]
  %v7780 = vld [vmem:[#allocation3 + $0x85c] sm:$0xff]
  %v7781 = vld [vmem:[#allocation3 + $0x864] sm:$0xff]
  %v7782 = vld [vmem:[#allocation3 + $0x86c] sm:$0xf]
  %v7783 = vld [vmem:[#allocation3 + $0x870] sm:$0xff]
  %v7784 = vld [vmem:[#allocation3 + $0x878] sm:$0xff]
  %v7785 = vld [vmem:[#allocation3 + $0x880] sm:$0xff]
  %v7786 = vld [vmem:[#allocation3 + $0x888] sm:$0xff]
  %v7787 = vld [vmem:[#allocation3 + $0x890] sm:$0xf]
  %v7788 = vld [vmem:[#allocation3 + $0x894] sm:$0xff]
  %v7789 = vld [vmem:[#allocation3 + $0x89c] sm:$0xff]
  %v7790 = vld [vmem:[#allocation3 + $0x8a4] sm:$0xff]
  %v7791 = vld [vmem:[#allocation3 + $0x8ac] sm:$0xff]
  %v7792 = vld [vmem:[#allocation3 + $0x8b4] sm:$0xf]
  %v7793 = vld [vmem:[#allocation3 + $0x8b8] sm:$0xff]
  %v7794 = vld [vmem:[#allocation3 + $0x8c0] sm:$0xff]
  %v7795 = vld [vmem:[#allocation3 + $0x8c8] sm:$0xff]
  %v7796 = vld [vmem:[#allocation3 + $0x8d0] sm:$0xff]
  %v7797 = vld [vmem:[#allocation3 + $0x8d8] sm:$0xf]
  %v7798 = vld [vmem:[#allocation3 + $0x8dc] sm:$0xff]
  %v7799 = vld [vmem:[#allocation3 + $0x8e4] sm:$0xff]
  %v7800 = vld [vmem:[#allocation3 + $0x8ec] sm:$0xff]
  %v7801 = vld [vmem:[#allocation3 + $0x8f4] sm:$0xff]
  %v7802 = vld [vmem:[#allocation3 + $0x8fc] sm:$0xf]
  %v7803 = vld [vmem:[%s2] sm:$0xf]
  %v7804 = vld [vmem:[%s2 + $0x4] sm:$0xf]
  %v7805 = vld [vmem:[%s2 + $0x8] sm:$0xf]
  %v7806 = vld [vmem:[%s2 + $0xc] sm:$0xf]
  %v7807 = vld [vmem:[%s2 + $0x10] sm:$0xf]
  %v7808 = vld [vmem:[%s2 + $0x14] sm:$0xf]
  %v7809 = vld [vmem:[%s2 + $0x18] sm:$0xf]
  %v7810 = vld [vmem:[%s2 + $0x1c] sm:$0xf]
  %v7811 = vld [vmem:[%s2 + $0x20] sm:$0xf]
  %v7812 = vld [vmem:[%s2 + $0x24] sm:$0xf]
  %v7813 = vld [vmem:[%s2 + $0x28] sm:$0xf]
  %v7814 = vld [vmem:[%s2 + $0x2c] sm:$0xf]
  %v7815 = vld [vmem:[%s2 + $0x30] sm:$0xf]
  %v7816 = vld [vmem:[%s2 + $0x34] sm:$0xf]
  %v7817 = vld [vmem:[%s2 + $0x38] sm:$0xf]
  %v7818 = vld [vmem:[%s2 + $0x3c] sm:$0xf]
  %v7819 = vld [vmem:[%s2 + $0x40] sm:$0xf]
  %v7820 = vld [vmem:[%s2 + $0x44] sm:$0xf]
  %v7821 = vld [vmem:[%s2 + $0x48] sm:$0xf]
  %v7822 = vld [vmem:[%s2 + $0x4c] sm:$0xf]
  %v7823 = vld [vmem:[%s2 + $0x50] sm:$0xf]
  %v7824 = vld [vmem:[%s2 + $0x54] sm:$0xf]
  %v7825 = vld [vmem:[%s2 + $0x58] sm:$0xf]
  %v7826 = vld [vmem:[%s2 + $0x5c] sm:$0xf]
  %v7827 = vld [vmem:[%s2 + $0x60] sm:$0xf]
  %v7828 = vld [vmem:[%s2 + $0x64] sm:$0xf]
  %v7829 = vld [vmem:[%s2 + $0x68] sm:$0xf]
  %v7830 = vld [vmem:[%s2 + $0x6c] sm:$0xf]
  %v7831 = vld [vmem:[%s2 + $0x70] sm:$0xf]
  %v7832 = vld [vmem:[%s2 + $0x74] sm:$0xf]
  %v7833 = vld [vmem:[%s2 + $0x78] sm:$0xf]
  %v7834 = vld [vmem:[%s2 + $0x7c] sm:$0xf]
  %v7835 = vld [vmem:[%s2 + $0x80] sm:$0xf]
  %v7836 = vld [vmem:[%s2 + $0x84] sm:$0xf]
  %v7837 = vld [vmem:[%s2 + $0x88] sm:$0xf]
  %v7838 = vld [vmem:[%s2 + $0x8c] sm:$0xf]
  %v7839 = vld [vmem:[%s2 + $0x90] sm:$0xf]
  %v7840 = vld [vmem:[%s2 + $0x94] sm:$0xf]
  %v7841 = vld [vmem:[%s2 + $0x98] sm:$0xf]
  %v7842 = vld [vmem:[%s2 + $0x9c] sm:$0xf]
  %v7843 = vld [vmem:[%s2 + $0xa0] sm:$0xf]
  %v7844 = vld [vmem:[%s2 + $0xa4] sm:$0xf]
  %v7845 = vld [vmem:[%s2 + $0xa8] sm:$0xf]
  %v7846 = vld [vmem:[%s2 + $0xac] sm:$0xf]
  %v7847 = vld [vmem:[%s2 + $0xb0] sm:$0xf]
  %v7848 = vld [vmem:[%s2 + $0xb4] sm:$0xf]
  %v7849 = vld [vmem:[%s2 + $0xb8] sm:$0xf]
  %v7850 = vld [vmem:[%s2 + $0xbc] sm:$0xf]
  %v7851 = vld [vmem:[%s2 + $0xc0] sm:$0xf]
  %v7852 = vld [vmem:[%s2 + $0xc4] sm:$0xf]
  %v7853 = vld [vmem:[%s2 + $0xc8] sm:$0xf]
  %v7854 = vld [vmem:[%s2 + $0xcc] sm:$0xf]
  %v7855 = vld [vmem:[%s2 + $0xd0] sm:$0xf]
  %v7856 = vld [vmem:[%s2 + $0xd4] sm:$0xf]
  %v7857 = vld [vmem:[%s2 + $0xd8] sm:$0xf]
  %v7858 = vld [vmem:[%s2 + $0xdc] sm:$0xf]
  %v7859 = vld [vmem:[%s2 + $0xe0] sm:$0xf]
  %v7860 = vld [vmem:[%s2 + $0xe4] sm:$0xf]
  %v7861 = vld [vmem:[%s2 + $0xe8] sm:$0xf]
  %v7862 = vld [vmem:[%s2 + $0xec] sm:$0xf]
  %v7863 = vld [vmem:[%s2 + $0xf0] sm:$0xf]
  %v7864 = vld [vmem:[%s2 + $0xf4] sm:$0xf]
  %v7865 = vld [vmem:[%s2 + $0xf8] sm:$0xf]
  %v7866 = vld [vmem:[%s2 + $0xfc] sm:$0xf]
  %v7867 = vld [vmem:[%s2 + $0x100] sm:$0xf]
  %v7868 = vld [vmem:[%s2 + $0x104] sm:$0xf]
  %v7869 = vld [vmem:[%s2 + $0x108] sm:$0xf]
  %v7870 = vld [vmem:[%s2 + $0x10c] sm:$0xf]
  %v7871 = vld [vmem:[%s2 + $0x110] sm:$0xf]
  %v7872 = vld [vmem:[%s2 + $0x114] sm:$0xf]
  %v7873 = vld [vmem:[%s2 + $0x118] sm:$0xf]
  %v7874 = vld [vmem:[%s2 + $0x11c] sm:$0xf]
  %v7875 = vld [vmem:[%s2 + $0x120] sm:$0xf]
  %v7876 = vld [vmem:[%s2 + $0x124] sm:$0xf]
  %v7877 = vld [vmem:[%s2 + $0x128] sm:$0xf]
  %v7878 = vld [vmem:[%s2 + $0x12c] sm:$0xf]
  %v7879 = vld [vmem:[%s2 + $0x130] sm:$0xf]
  %v7880 = vld [vmem:[%s2 + $0x134] sm:$0xf]
  %v7881 = vld [vmem:[%s2 + $0x138] sm:$0xf]
  %v7882 = vld [vmem:[%s2 + $0x13c] sm:$0xf]
  %v7883 = vld [vmem:[%s2 + $0x140] sm:$0xf]
  %v7884 = vld [vmem:[%s2 + $0x144] sm:$0xf]
  %v7885 = vld [vmem:[%s2 + $0x148] sm:$0xf]
  %v7886 = vld [vmem:[%s2 + $0x14c] sm:$0xf]
  %v7887 = vld [vmem:[%s2 + $0x150] sm:$0xf]
  %v7888 = vld [vmem:[%s2 + $0x154] sm:$0xf]
  %v7889 = vld [vmem:[%s2 + $0x158] sm:$0xf]
  %v7890 = vld [vmem:[%s2 + $0x15c] sm:$0xf]
  %v7891 = vld [vmem:[%s2 + $0x160] sm:$0xf]
  %v7892 = vld [vmem:[%s2 + $0x164] sm:$0xf]
  %v7893 = vld [vmem:[%s2 + $0x168] sm:$0xf]
  %v7894 = vld [vmem:[%s2 + $0x16c] sm:$0xf]
  %v7895 = vld [vmem:[%s2 + $0x170] sm:$0xf]
  %v7896 = vld [vmem:[%s2 + $0x174] sm:$0xf]
  %v7897 = vld [vmem:[%s2 + $0x178] sm:$0xf]
  %v7898 = vld [vmem:[%s2 + $0x17c] sm:$0xf]
  %v7899 = vld [vmem:[%s2 + $0x180] sm:$0xf]
  %v7900 = vld [vmem:[%s2 + $0x184] sm:$0xf]
  %v7901 = vld [vmem:[%s2 + $0x188] sm:$0xf]
  %v7902 = vld [vmem:[%s2 + $0x18c] sm:$0xf]
  %v7903 = vld [vmem:[%s2 + $0x190] sm:$0xf]
  %v7904 = vld [vmem:[%s2 + $0x194] sm:$0xf]
  %v7905 = vld [vmem:[%s2 + $0x198] sm:$0xf]
  %v7906 = vld [vmem:[%s2 + $0x19c] sm:$0xf]
  %v7907 = vld [vmem:[%s2 + $0x1a0] sm:$0xf]
  %v7908 = vld [vmem:[%s2 + $0x1a4] sm:$0xf]
  %v7909 = vld [vmem:[%s2 + $0x1a8] sm:$0xf]
  %v7910 = vld [vmem:[%s2 + $0x1ac] sm:$0xf]
  %v7911 = vld [vmem:[%s2 + $0x1b0] sm:$0xf]
  %v7912 = vld [vmem:[%s2 + $0x1b4] sm:$0xf]
  %v7913 = vld [vmem:[%s2 + $0x1b8] sm:$0xf]
  %v7914 = vld [vmem:[%s2 + $0x1bc] sm:$0xf]
  %v7915 = vld [vmem:[%s2 + $0x1c0] sm:$0xf]
  %v7916 = vld [vmem:[%s2 + $0x1c4] sm:$0xf]
  %v7917 = vld [vmem:[%s2 + $0x1c8] sm:$0xf]
  %v7918 = vld [vmem:[%s2 + $0x1cc] sm:$0xf]
  %v7919 = vld [vmem:[%s2 + $0x1d0] sm:$0xf]
  %v7920 = vld [vmem:[%s2 + $0x1d4] sm:$0xf]
  %v7921 = vld [vmem:[%s2 + $0x1d8] sm:$0xf]
  %v7922 = vld [vmem:[%s2 + $0x1dc] sm:$0xf]
  %v7923 = vld [vmem:[%s2 + $0x1e0] sm:$0xf]
  %v7924 = vld [vmem:[%s2 + $0x1e4] sm:$0xf]
  %v7925 = vld [vmem:[%s2 + $0x1e8] sm:$0xf]
  %v7926 = vld [vmem:[%s2 + $0x1ec] sm:$0xf]
  %v7927 = vld [vmem:[%s2 + $0x1f0] sm:$0xf]
  %v7928 = vld [vmem:[%s2 + $0x1f4] sm:$0xf]
  %v7929 = vld [vmem:[%s2 + $0x1f8] sm:$0xf]
  %v7930 = vld [vmem:[%s2 + $0x1fc] sm:$0xf]
  %v7931 = vld [vmem:[%s2 + $0x200] sm:$0xf]
  %v7932 = vld [vmem:[%s2 + $0x204] sm:$0xf]
  %v7933 = vld [vmem:[%s2 + $0x208] sm:$0xf]
  %v7934 = vld [vmem:[%s2 + $0x20c] sm:$0xf]
  %v7935 = vld [vmem:[%s2 + $0x210] sm:$0xf]
  %v7936 = vld [vmem:[%s2 + $0x214] sm:$0xf]
  %v7937 = vld [vmem:[%s2 + $0x218] sm:$0xf]
  %v7938 = vld [vmem:[%s2 + $0x21c] sm:$0xf]
  %v7939 = vld [vmem:[%s2 + $0x220] sm:$0xf]
  %v7940 = vld [vmem:[%s2 + $0x224] sm:$0xf]
  %v7941 = vld [vmem:[%s2 + $0x228] sm:$0xf]
  %v7942 = vld [vmem:[%s2 + $0x22c] sm:$0xf]
  %v7943 = vld [vmem:[%s2 + $0x230] sm:$0xf]
  %v7944 = vld [vmem:[%s2 + $0x234] sm:$0xf]
  %v7945 = vld [vmem:[%s2 + $0x238] sm:$0xf]
  %v7946 = vld [vmem:[%s2 + $0x23c] sm:$0xf]
  %v8267 = vunpack.c.l.b16 %v7483
  %v8268 = vunpack.c.h.b16 %v7483
  %v8269 = vunpack.c.l.b16 %v7484
  %v8270 = vunpack.c.h.b16 %v7484
  %v8271 = vunpack.c.l.b16 %v7485
  %v8272 = vunpack.c.h.b16 %v7485
  %v8273 = vunpack.c.l.b16 %v7486
  %v8274 = vunpack.c.h.b16 %v7486
  %v8275 = vunpack.c.l.b16 %v7487
  %v8276 = vunpack.c.l.b16 %v7488
  %v8277 = vunpack.c.h.b16 %v7488
  %v8278 = vunpack.c.l.b16 %v7489
  %v8279 = vunpack.c.h.b16 %v7489
  %v8280 = vunpack.c.l.b16 %v7490
  %v8281 = vunpack.c.h.b16 %v7490
  %v8282 = vunpack.c.l.b16 %v7491
  %v8283 = vunpack.c.h.b16 %v7491
  %v8284 = vunpack.c.l.b16 %v7492
  %v8285 = vunpack.c.l.b16 %v7493
  %v8286 = vunpack.c.h.b16 %v7493
  %v8287 = vunpack.c.l.b16 %v7494
  %v8288 = vunpack.c.h.b16 %v7494
  %v8289 = vunpack.c.l.b16 %v7495
  %v8290 = vunpack.c.h.b16 %v7495
  %v8291 = vunpack.c.l.b16 %v7496
  %v8292 = vunpack.c.h.b16 %v7496
  %v8293 = vunpack.c.l.b16 %v7497
  %v8294 = vunpack.c.l.b16 %v7498
  %v8295 = vunpack.c.h.b16 %v7498
  %v8296 = vunpack.c.l.b16 %v7499
  %v8297 = vunpack.c.h.b16 %v7499
  %v8298 = vunpack.c.l.b16 %v7500
  %v8299 = vunpack.c.h.b16 %v7500
  %v8300 = vunpack.c.l.b16 %v7501
  %v8301 = vunpack.c.h.b16 %v7501
  %v8302 = vunpack.c.l.b16 %v7502
  %v8303 = vunpack.c.l.b16 %v7503
  %v8304 = vunpack.c.h.b16 %v7503
  %v8305 = vunpack.c.l.b16 %v7504
  %v8306 = vunpack.c.h.b16 %v7504
  %v8307 = vunpack.c.l.b16 %v7505
  %v8308 = vunpack.c.h.b16 %v7505
  %v8309 = vunpack.c.l.b16 %v7506
  %v8310 = vunpack.c.h.b16 %v7506
  %v8311 = vunpack.c.l.b16 %v7507
  %v8312 = vunpack.c.l.b16 %v7508
  %v8313 = vunpack.c.h.b16 %v7508
  %v8314 = vunpack.c.l.b16 %v7509
  %v8315 = vunpack.c.h.b16 %v7509
  %v8316 = vunpack.c.l.b16 %v7510
  %v8317 = vunpack.c.h.b16 %v7510
  %v8318 = vunpack.c.l.b16 %v7511
  %v8319 = vunpack.c.h.b16 %v7511
  %v8320 = vunpack.c.l.b16 %v7512
  %v8321 = vunpack.c.l.b16 %v7513
  %v8322 = vunpack.c.h.b16 %v7513
  %v8323 = vunpack.c.l.b16 %v7514
  %v8324 = vunpack.c.h.b16 %v7514
  %v8325 = vunpack.c.l.b16 %v7515
  %v8326 = vunpack.c.h.b16 %v7515
  %v8327 = vunpack.c.l.b16 %v7516
  %v8328 = vunpack.c.h.b16 %v7516
  %v8329 = vunpack.c.l.b16 %v7517
  %v8330 = vunpack.c.l.b16 %v7518
  %v8331 = vunpack.c.h.b16 %v7518
  %v8332 = vunpack.c.l.b16 %v7519
  %v8333 = vunpack.c.h.b16 %v7519
  %v8334 = vunpack.c.l.b16 %v7520
  %v8335 = vunpack.c.h.b16 %v7520
  %v8336 = vunpack.c.l.b16 %v7521
  %v8337 = vunpack.c.h.b16 %v7521
  %v8338 = vunpack.c.l.b16 %v7522
  %v8339 = vunpack.c.l.b16 %v7523
  %v8340 = vunpack.c.h.b16 %v7523
  %v8341 = vunpack.c.l.b16 %v7524
  %v8342 = vunpack.c.h.b16 %v7524
  %v8343 = vunpack.c.l.b16 %v7525
  %v8344 = vunpack.c.h.b16 %v7525
  %v8345 = vunpack.c.l.b16 %v7526
  %v8346 = vunpack.c.h.b16 %v7526
  %v8347 = vunpack.c.l.b16 %v7527
  %v8348 = vunpack.c.l.b16 %v7528
  %v8349 = vunpack.c.h.b16 %v7528
  %v8350 = vunpack.c.l.b16 %v7529
  %v8351 = vunpack.c.h.b16 %v7529
  %v8352 = vunpack.c.l.b16 %v7530
  %v8353 = vunpack.c.h.b16 %v7530
  %v8354 = vunpack.c.l.b16 %v7531
  %v8355 = vunpack.c.h.b16 %v7531
  %v8356 = vunpack.c.l.b16 %v7532
  %v8357 = vunpack.c.l.b16 %v7533
  %v8358 = vunpack.c.h.b16 %v7533
  %v8359 = vunpack.c.l.b16 %v7534
  %v8360 = vunpack.c.h.b16 %v7534
  %v8361 = vunpack.c.l.b16 %v7535
  %v8362 = vunpack.c.h.b16 %v7535
  %v8363 = vunpack.c.l.b16 %v7536
  %v8364 = vunpack.c.h.b16 %v7536
  %v8365 = vunpack.c.l.b16 %v7537
  %v8366 = vunpack.c.l.b16 %v7538
  %v8367 = vunpack.c.h.b16 %v7538
  %v8368 = vunpack.c.l.b16 %v7539
  %v8369 = vunpack.c.h.b16 %v7539
  %v8370 = vunpack.c.l.b16 %v7540
  %v8371 = vunpack.c.h.b16 %v7540
  %v8372 = vunpack.c.l.b16 %v7541
  %v8373 = vunpack.c.h.b16 %v7541
  %v8374 = vunpack.c.l.b16 %v7542
  %v8375 = vunpack.c.l.b16 %v7543
  %v8376 = vunpack.c.h.b16 %v7543
  %v8377 = vunpack.c.l.b16 %v7544
  %v8378 = vunpack.c.h.b16 %v7544
  %v8379 = vunpack.c.l.b16 %v7545
  %v8380 = vunpack.c.h.b16 %v7545
  %v8381 = vunpack.c.l.b16 %v7546
  %v8382 = vunpack.c.h.b16 %v7546
  %v8383 = vunpack.c.l.b16 %v7547
  %v8384 = vunpack.c.l.b16 %v7548
  %v8385 = vunpack.c.h.b16 %v7548
  %v8386 = vunpack.c.l.b16 %v7549
  %v8387 = vunpack.c.h.b16 %v7549
  %v8388 = vunpack.c.l.b16 %v7550
  %v8389 = vunpack.c.h.b16 %v7550
  %v8390 = vunpack.c.l.b16 %v7551
  %v8391 = vunpack.c.h.b16 %v7551
  %v8392 = vunpack.c.l.b16 %v7552
  %v8393 = vunpack.c.l.b16 %v7553
  %v8394 = vunpack.c.h.b16 %v7553
  %v8395 = vunpack.c.l.b16 %v7554
  %v8396 = vunpack.c.h.b16 %v7554
  %v8397 = vunpack.c.l.b16 %v7555
  %v8398 = vunpack.c.h.b16 %v7555
  %v8399 = vunpack.c.l.b16 %v7556
  %v8400 = vunpack.c.h.b16 %v7556
  %v8401 = vunpack.c.l.b16 %v7557
  %v8402 = vunpack.c.l.b16 %v7558
  %v8403 = vunpack.c.h.b16 %v7558
  %v8404 = vunpack.c.l.b16 %v7559
  %v8405 = vunpack.c.h.b16 %v7559
  %v8406 = vunpack.c.l.b16 %v7560
  %v8407 = vunpack.c.h.b16 %v7560
  %v8408 = vunpack.c.l.b16 %v7561
  %v8409 = vunpack.c.h.b16 %v7561
  %v8410 = vunpack.c.l.b16 %v7562
  %v8411 = vunpack.c.l.b16 %v7563
  %v8412 = vunpack.c.h.b16 %v7563
  %v8413 = vunpack.c.l.b16 %v7564
  %v8414 = vunpack.c.h.b16 %v7564
  %v8415 = vunpack.c.l.b16 %v7565
  %v8416 = vunpack.c.h.b16 %v7565
  %v8417 = vunpack.c.l.b16 %v7566
  %v8418 = vunpack.c.h.b16 %v7566
  %v8419 = vunpack.c.l.b16 %v7567
  %v8420 = vunpack.c.l.b16 %v7568
  %v8421 = vunpack.c.h.b16 %v7568
  %v8422 = vunpack.c.l.b16 %v7569
  %v8423 = vunpack.c.h.b16 %v7569
  %v8424 = vunpack.c.l.b16 %v7570
  %v8425 = vunpack.c.h.b16 %v7570
  %v8426 = vunpack.c.l.b16 %v7571
  %v8427 = vunpack.c.h.b16 %v7571
  %v8428 = vunpack.c.l.b16 %v7572
  %v8429 = vunpack.c.l.b16 %v7573
  %v8430 = vunpack.c.h.b16 %v7573
  %v8431 = vunpack.c.l.b16 %v7574
  %v8432 = vunpack.c.h.b16 %v7574
  %v8433 = vunpack.c.l.b16 %v7575
  %v8434 = vunpack.c.h.b16 %v7575
  %v8435 = vunpack.c.l.b16 %v7576
  %v8436 = vunpack.c.h.b16 %v7576
  %v8437 = vunpack.c.l.b16 %v7577
  %v8438 = vunpack.c.l.b16 %v7578
  %v8439 = vunpack.c.h.b16 %v7578
  %v8440 = vunpack.c.l.b16 %v7579
  %v8441 = vunpack.c.h.b16 %v7579
  %v8442 = vunpack.c.l.b16 %v7580
  %v8443 = vunpack.c.h.b16 %v7580
  %v8444 = vunpack.c.l.b16 %v7581
  %v8445 = vunpack.c.h.b16 %v7581
  %v8446 = vunpack.c.l.b16 %v7582
  %v8447 = vunpack.c.l.b16 %v7583
  %v8448 = vunpack.c.h.b16 %v7583
  %v8449 = vunpack.c.l.b16 %v7584
  %v8450 = vunpack.c.h.b16 %v7584
  %v8451 = vunpack.c.l.b16 %v7585
  %v8452 = vunpack.c.h.b16 %v7585
  %v8453 = vunpack.c.l.b16 %v7586
  %v8454 = vunpack.c.h.b16 %v7586
  %v8455 = vunpack.c.l.b16 %v7587
  %v8456 = vunpack.c.l.b16 %v7588
  %v8457 = vunpack.c.h.b16 %v7588
  %v8458 = vunpack.c.l.b16 %v7589
  %v8459 = vunpack.c.h.b16 %v7589
  %v8460 = vunpack.c.l.b16 %v7590
  %v8461 = vunpack.c.h.b16 %v7590
  %v8462 = vunpack.c.l.b16 %v7591
  %v8463 = vunpack.c.h.b16 %v7591
  %v8464 = vunpack.c.l.b16 %v7592
  %v8465 = vunpack.c.l.b16 %v7593
  %v8466 = vunpack.c.h.b16 %v7593
  %v8467 = vunpack.c.l.b16 %v7594
  %v8468 = vunpack.c.h.b16 %v7594
  %v8469 = vunpack.c.l.b16 %v7595
  %v8470 = vunpack.c.h.b16 %v7595
  %v8471 = vunpack.c.l.b16 %v7596
  %v8472 = vunpack.c.h.b16 %v7596
  %v8473 = vunpack.c.l.b16 %v7597
  %v8474 = vunpack.c.l.b16 %v7598
  %v8475 = vunpack.c.h.b16 %v7598
  %v8476 = vunpack.c.l.b16 %v7599
  %v8477 = vunpack.c.h.b16 %v7599
  %v8478 = vunpack.c.l.b16 %v7600
  %v8479 = vunpack.c.h.b16 %v7600
  %v8480 = vunpack.c.l.b16 %v7601
  %v8481 = vunpack.c.h.b16 %v7601
  %v8482 = vunpack.c.l.b16 %v7602
  %v8483 = vunpack.c.l.b16 %v7603
  %v8484 = vunpack.c.h.b16 %v7603
  %v8485 = vunpack.c.l.b16 %v7604
  %v8486 = vunpack.c.h.b16 %v7604
  %v8487 = vunpack.c.l.b16 %v7605
  %v8488 = vunpack.c.h.b16 %v7605
  %v8489 = vunpack.c.l.b16 %v7606
  %v8490 = vunpack.c.h.b16 %v7606
  %v8491 = vunpack.c.l.b16 %v7607
  %v8492 = vunpack.c.l.b16 %v7608
  %v8493 = vunpack.c.h.b16 %v7608
  %v8494 = vunpack.c.l.b16 %v7609
  %v8495 = vunpack.c.h.b16 %v7609
  %v8496 = vunpack.c.l.b16 %v7610
  %v8497 = vunpack.c.h.b16 %v7610
  %v8498 = vunpack.c.l.b16 %v7611
  %v8499 = vunpack.c.h.b16 %v7611
  %v8500 = vunpack.c.l.b16 %v7612
  %v8501 = vunpack.c.l.b16 %v7613
  %v8502 = vunpack.c.h.b16 %v7613
  %v8503 = vunpack.c.l.b16 %v7614
  %v8504 = vunpack.c.h.b16 %v7614
  %v8505 = vunpack.c.l.b16 %v7615
  %v8506 = vunpack.c.h.b16 %v7615
  %v8507 = vunpack.c.l.b16 %v7616
  %v8508 = vunpack.c.h.b16 %v7616
  %v8509 = vunpack.c.l.b16 %v7617
  %v8510 = vunpack.c.l.b16 %v7618
  %v8511 = vunpack.c.h.b16 %v7618
  %v8512 = vunpack.c.l.b16 %v7619
  %v8513 = vunpack.c.h.b16 %v7619
  %v8514 = vunpack.c.l.b16 %v7620
  %v8515 = vunpack.c.h.b16 %v7620
  %v8516 = vunpack.c.l.b16 %v7621
  %v8517 = vunpack.c.h.b16 %v7621
  %v8518 = vunpack.c.l.b16 %v7622
  %v8519 = vunpack.c.l.b16 %v7623
  %v8520 = vunpack.c.h.b16 %v7623
  %v8521 = vunpack.c.l.b16 %v7624
  %v8522 = vunpack.c.h.b16 %v7624
  %v8523 = vunpack.c.l.b16 %v7625
  %v8524 = vunpack.c.h.b16 %v7625
  %v8525 = vunpack.c.l.b16 %v7626
  %v8526 = vunpack.c.h.b16 %v7626
  %v8527 = vunpack.c.l.b16 %v7627
  %v8528 = vunpack.c.l.b16 %v7628
  %v8529 = vunpack.c.h.b16 %v7628
  %v8530 = vunpack.c.l.b16 %v7629
  %v8531 = vunpack.c.h.b16 %v7629
  %v8532 = vunpack.c.l.b16 %v7630
  %v8533 = vunpack.c.h.b16 %v7630
  %v8534 = vunpack.c.l.b16 %v7631
  %v8535 = vunpack.c.h.b16 %v7631
  %v8536 = vunpack.c.l.b16 %v7632
  %v8537 = vunpack.c.l.b16 %v7633
  %v8538 = vunpack.c.h.b16 %v7633
  %v8539 = vunpack.c.l.b16 %v7634
  %v8540 = vunpack.c.h.b16 %v7634
  %v8541 = vunpack.c.l.b16 %v7635
  %v8542 = vunpack.c.h.b16 %v7635
  %v8543 = vunpack.c.l.b16 %v7636
  %v8544 = vunpack.c.h.b16 %v7636
  %v8545 = vunpack.c.l.b16 %v7637
  %v8546 = vunpack.c.l.b16 %v7638
  %v8547 = vunpack.c.h.b16 %v7638
  %v8548 = vunpack.c.l.b16 %v7639
  %v8549 = vunpack.c.h.b16 %v7639
  %v8550 = vunpack.c.l.b16 %v7640
  %v8551 = vunpack.c.h.b16 %v7640
  %v8552 = vunpack.c.l.b16 %v7641
  %v8553 = vunpack.c.h.b16 %v7641
  %v8554 = vunpack.c.l.b16 %v7642
  %v8555 = vunpack.c.l.b16 %v7643
  %v8556 = vunpack.c.h.b16 %v7643
  %v8557 = vunpack.c.l.b16 %v7644
  %v8558 = vunpack.c.h.b16 %v7644
  %v8559 = vunpack.c.l.b16 %v7645
  %v8560 = vunpack.c.h.b16 %v7645
  %v8561 = vunpack.c.l.b16 %v7646
  %v8562 = vunpack.c.h.b16 %v7646
  %v8563 = vunpack.c.l.b16 %v7647
  %v8564 = vunpack.c.l.b16 %v7648
  %v8565 = vunpack.c.h.b16 %v7648
  %v8566 = vunpack.c.l.b16 %v7649
  %v8567 = vunpack.c.h.b16 %v7649
  %v8568 = vunpack.c.l.b16 %v7650
  %v8569 = vunpack.c.h.b16 %v7650
  %v8570 = vunpack.c.l.b16 %v7651
  %v8571 = vunpack.c.h.b16 %v7651
  %v8572 = vunpack.c.l.b16 %v7652
  %v8573 = vunpack.c.l.b16 %v7653
  %v8574 = vunpack.c.h.b16 %v7653
  %v8575 = vunpack.c.l.b16 %v7654
  %v8576 = vunpack.c.h.b16 %v7654
  %v8577 = vunpack.c.l.b16 %v7655
  %v8578 = vunpack.c.h.b16 %v7655
  %v8579 = vunpack.c.l.b16 %v7656
  %v8580 = vunpack.c.h.b16 %v7656
  %v8581 = vunpack.c.l.b16 %v7657
  %v8582 = vunpack.c.l.b16 %v7658
  %v8583 = vunpack.c.h.b16 %v7658
  %v8584 = vunpack.c.l.b16 %v7659
  %v8585 = vunpack.c.h.b16 %v7659
  %v8586 = vunpack.c.l.b16 %v7660
  %v8587 = vunpack.c.h.b16 %v7660
  %v8588 = vunpack.c.l.b16 %v7661
  %v8589 = vunpack.c.h.b16 %v7661
  %v8590 = vunpack.c.l.b16 %v7662
  %v8591 = vunpack.c.l.b16 %v7663
  %v8592 = vunpack.c.h.b16 %v7663
  %v8593 = vunpack.c.l.b16 %v7664
  %v8594 = vunpack.c.h.b16 %v7664
  %v8595 = vunpack.c.l.b16 %v7665
  %v8596 = vunpack.c.h.b16 %v7665
  %v8597 = vunpack.c.l.b16 %v7666
  %v8598 = vunpack.c.h.b16 %v7666
  %v8599 = vunpack.c.l.b16 %v7667
  %v8600 = vunpack.c.l.b16 %v7668
  %v8601 = vunpack.c.h.b16 %v7668
  %v8602 = vunpack.c.l.b16 %v7669
  %v8603 = vunpack.c.h.b16 %v7669
  %v8604 = vunpack.c.l.b16 %v7670
  %v8605 = vunpack.c.h.b16 %v7670
  %v8606 = vunpack.c.l.b16 %v7671
  %v8607 = vunpack.c.h.b16 %v7671
  %v8608 = vunpack.c.l.b16 %v7672
  %v8609 = vunpack.c.l.b16 %v7673
  %v8610 = vunpack.c.h.b16 %v7673
  %v8611 = vunpack.c.l.b16 %v7674
  %v8612 = vunpack.c.h.b16 %v7674
  %v8613 = vunpack.c.l.b16 %v7675
  %v8614 = vunpack.c.h.b16 %v7675
  %v8615 = vunpack.c.l.b16 %v7676
  %v8616 = vunpack.c.h.b16 %v7676
  %v8617 = vunpack.c.l.b16 %v7677
  %v8618 = vunpack.c.l.b16 %v7678
  %v8619 = vunpack.c.h.b16 %v7678
  %v8620 = vunpack.c.l.b16 %v7679
  %v8621 = vunpack.c.h.b16 %v7679
  %v8622 = vunpack.c.l.b16 %v7680
  %v8623 = vunpack.c.h.b16 %v7680
  %v8624 = vunpack.c.l.b16 %v7681
  %v8625 = vunpack.c.h.b16 %v7681
  %v8626 = vunpack.c.l.b16 %v7682
  %v8627 = vunpack.c.l.b16 %v7683
  %v8628 = vunpack.c.h.b16 %v7683
  %v8629 = vunpack.c.l.b16 %v7684
  %v8630 = vunpack.c.h.b16 %v7684
  %v8631 = vunpack.c.l.b16 %v7685
  %v8632 = vunpack.c.h.b16 %v7685
  %v8633 = vunpack.c.l.b16 %v7686
  %v8634 = vunpack.c.h.b16 %v7686
  %v8635 = vunpack.c.l.b16 %v7687
  %v8636 = vunpack.c.l.b16 %v7688
  %v8637 = vunpack.c.h.b16 %v7688
  %v8638 = vunpack.c.l.b16 %v7689
  %v8639 = vunpack.c.h.b16 %v7689
  %v8640 = vunpack.c.l.b16 %v7690
  %v8641 = vunpack.c.h.b16 %v7690
  %v8642 = vunpack.c.l.b16 %v7691
  %v8643 = vunpack.c.h.b16 %v7691
  %v8644 = vunpack.c.l.b16 %v7692
  %v8645 = vunpack.c.l.b16 %v7693
  %v8646 = vunpack.c.h.b16 %v7693
  %v8647 = vunpack.c.l.b16 %v7694
  %v8648 = vunpack.c.h.b16 %v7694
  %v8649 = vunpack.c.l.b16 %v7695
  %v8650 = vunpack.c.h.b16 %v7695
  %v8651 = vunpack.c.l.b16 %v7696
  %v8652 = vunpack.c.h.b16 %v7696
  %v8653 = vunpack.c.l.b16 %v7697
  %v8654 = vunpack.c.l.b16 %v7698
  %v8655 = vunpack.c.h.b16 %v7698
  %v8656 = vunpack.c.l.b16 %v7699
  %v8657 = vunpack.c.h.b16 %v7699
  %v8658 = vunpack.c.l.b16 %v7700
  %v8659 = vunpack.c.h.b16 %v7700
  %v8660 = vunpack.c.l.b16 %v7701
  %v8661 = vunpack.c.h.b16 %v7701
  %v8662 = vunpack.c.l.b16 %v7702
  %v8663 = vunpack.c.l.b16 %v7703
  %v8664 = vunpack.c.h.b16 %v7703
  %v8665 = vunpack.c.l.b16 %v7704
  %v8666 = vunpack.c.h.b16 %v7704
  %v8667 = vunpack.c.l.b16 %v7705
  %v8668 = vunpack.c.h.b16 %v7705
  %v8669 = vunpack.c.l.b16 %v7706
  %v8670 = vunpack.c.h.b16 %v7706
  %v8671 = vunpack.c.l.b16 %v7707
  %v8672 = vunpack.c.l.b16 %v7708
  %v8673 = vunpack.c.h.b16 %v7708
  %v8674 = vunpack.c.l.b16 %v7709
  %v8675 = vunpack.c.h.b16 %v7709
  %v8676 = vunpack.c.l.b16 %v7710
  %v8677 = vunpack.c.h.b16 %v7710
  %v8678 = vunpack.c.l.b16 %v7711
  %v8679 = vunpack.c.h.b16 %v7711
  %v8680 = vunpack.c.l.b16 %v7712
  %v8681 = vunpack.c.l.b16 %v7713
  %v8682 = vunpack.c.h.b16 %v7713
  %v8683 = vunpack.c.l.b16 %v7714
  %v8684 = vunpack.c.h.b16 %v7714
  %v8685 = vunpack.c.l.b16 %v7715
  %v8686 = vunpack.c.h.b16 %v7715
  %v8687 = vunpack.c.l.b16 %v7716
  %v8688 = vunpack.c.h.b16 %v7716
  %v8689 = vunpack.c.l.b16 %v7717
  %v8690 = vunpack.c.l.b16 %v7718
  %v8691 = vunpack.c.h.b16 %v7718
  %v8692 = vunpack.c.l.b16 %v7719
  %v8693 = vunpack.c.h.b16 %v7719
  %v8694 = vunpack.c.l.b16 %v7720
  %v8695 = vunpack.c.h.b16 %v7720
  %v8696 = vunpack.c.l.b16 %v7721
  %v8697 = vunpack.c.h.b16 %v7721
  %v8698 = vunpack.c.l.b16 %v7722
  %v8699 = vunpack.c.l.b16 %v7723
  %v8700 = vunpack.c.h.b16 %v7723
  %v8701 = vunpack.c.l.b16 %v7724
  %v8702 = vunpack.c.h.b16 %v7724
  %v8703 = vunpack.c.l.b16 %v7725
  %v8704 = vunpack.c.h.b16 %v7725
  %v8705 = vunpack.c.l.b16 %v7726
  %v8706 = vunpack.c.h.b16 %v7726
  %v8707 = vunpack.c.l.b16 %v7727
  %v8708 = vunpack.c.l.b16 %v7728
  %v8709 = vunpack.c.h.b16 %v7728
  %v8710 = vunpack.c.l.b16 %v7729
  %v8711 = vunpack.c.h.b16 %v7729
  %v8712 = vunpack.c.l.b16 %v7730
  %v8713 = vunpack.c.h.b16 %v7730
  %v8714 = vunpack.c.l.b16 %v7731
  %v8715 = vunpack.c.h.b16 %v7731
  %v8716 = vunpack.c.l.b16 %v7732
  %v8717 = vunpack.c.l.b16 %v7733
  %v8718 = vunpack.c.h.b16 %v7733
  %v8719 = vunpack.c.l.b16 %v7734
  %v8720 = vunpack.c.h.b16 %v7734
  %v8721 = vunpack.c.l.b16 %v7735
  %v8722 = vunpack.c.h.b16 %v7735
  %v8723 = vunpack.c.l.b16 %v7736
  %v8724 = vunpack.c.h.b16 %v7736
  %v8725 = vunpack.c.l.b16 %v7737
  %v8726 = vunpack.c.l.b16 %v7738
  %v8727 = vunpack.c.h.b16 %v7738
  %v8728 = vunpack.c.l.b16 %v7739
  %v8729 = vunpack.c.h.b16 %v7739
  %v8730 = vunpack.c.l.b16 %v7740
  %v8731 = vunpack.c.h.b16 %v7740
  %v8732 = vunpack.c.l.b16 %v7741
  %v8733 = vunpack.c.h.b16 %v7741
  %v8734 = vunpack.c.l.b16 %v7742
  %v8735 = vunpack.c.l.b16 %v7743
  %v8736 = vunpack.c.h.b16 %v7743
  %v8737 = vunpack.c.l.b16 %v7744
  %v8738 = vunpack.c.h.b16 %v7744
  %v8739 = vunpack.c.l.b16 %v7745
  %v8740 = vunpack.c.h.b16 %v7745
  %v8741 = vunpack.c.l.b16 %v7746
  %v8742 = vunpack.c.h.b16 %v7746
  %v8743 = vunpack.c.l.b16 %v7747
  %v8744 = vunpack.c.l.b16 %v7748
  %v8745 = vunpack.c.h.b16 %v7748
  %v8746 = vunpack.c.l.b16 %v7749
  %v8747 = vunpack.c.h.b16 %v7749
  %v8748 = vunpack.c.l.b16 %v7750
  %v8749 = vunpack.c.h.b16 %v7750
  %v8750 = vunpack.c.l.b16 %v7751
  %v8751 = vunpack.c.h.b16 %v7751
  %v8752 = vunpack.c.l.b16 %v7752
  %v8753 = vunpack.c.l.b16 %v7753
  %v8754 = vunpack.c.h.b16 %v7753
  %v8755 = vunpack.c.l.b16 %v7754
  %v8756 = vunpack.c.h.b16 %v7754
  %v8757 = vunpack.c.l.b16 %v7755
  %v8758 = vunpack.c.h.b16 %v7755
  %v8759 = vunpack.c.l.b16 %v7756
  %v8760 = vunpack.c.h.b16 %v7756
  %v8761 = vunpack.c.l.b16 %v7757
  %v8762 = vunpack.c.l.b16 %v7758
  %v8763 = vunpack.c.h.b16 %v7758
  %v8764 = vunpack.c.l.b16 %v7759
  %v8765 = vunpack.c.h.b16 %v7759
  %v8766 = vunpack.c.l.b16 %v7760
  %v8767 = vunpack.c.h.b16 %v7760
  %v8768 = vunpack.c.l.b16 %v7761
  %v8769 = vunpack.c.h.b16 %v7761
  %v8770 = vunpack.c.l.b16 %v7762
  %v8771 = vunpack.c.l.b16 %v7763
  %v8772 = vunpack.c.h.b16 %v7763
  %v8773 = vunpack.c.l.b16 %v7764
  %v8774 = vunpack.c.h.b16 %v7764
  %v8775 = vunpack.c.l.b16 %v7765
  %v8776 = vunpack.c.h.b16 %v7765
  %v8777 = vunpack.c.l.b16 %v7766
  %v8778 = vunpack.c.h.b16 %v7766
  %v8779 = vunpack.c.l.b16 %v7767
  %v8780 = vunpack.c.l.b16 %v7768
  %v8781 = vunpack.c.h.b16 %v7768
  %v8782 = vunpack.c.l.b16 %v7769
  %v8783 = vunpack.c.h.b16 %v7769
  %v8784 = vunpack.c.l.b16 %v7770
  %v8785 = vunpack.c.h.b16 %v7770
  %v8786 = vunpack.c.l.b16 %v7771
  %v8787 = vunpack.c.h.b16 %v7771
  %v8788 = vunpack.c.l.b16 %v7772
  %v8789 = vunpack.c.l.b16 %v7773
  %v8790 = vunpack.c.h.b16 %v7773
  %v8791 = vunpack.c.l.b16 %v7774
  %v8792 = vunpack.c.h.b16 %v7774
  %v8793 = vunpack.c.l.b16 %v7775
  %v8794 = vunpack.c.h.b16 %v7775
  %v8795 = vunpack.c.l.b16 %v7776
  %v8796 = vunpack.c.h.b16 %v7776
  %v8797 = vunpack.c.l.b16 %v7777
  %v8798 = vunpack.c.l.b16 %v7778
  %v8799 = vunpack.c.h.b16 %v7778
  %v8800 = vunpack.c.l.b16 %v7779
  %v8801 = vunpack.c.h.b16 %v7779
  %v8802 = vunpack.c.l.b16 %v7780
  %v8803 = vunpack.c.h.b16 %v7780
  %v8804 = vunpack.c.l.b16 %v7781
  %v8805 = vunpack.c.h.b16 %v7781
  %v8806 = vunpack.c.l.b16 %v7782
  %v8807 = vunpack.c.l.b16 %v7783
  %v8808 = vunpack.c.h.b16 %v7783
  %v8809 = vunpack.c.l.b16 %v7784
  %v8810 = vunpack.c.h.b16 %v7784
  %v8811 = vunpack.c.l.b16 %v7785
  %v8812 = vunpack.c.h.b16 %v7785
  %v8813 = vunpack.c.l.b16 %v7786
  %v8814 = vunpack.c.h.b16 %v7786
  %v8815 = vunpack.c.l.b16 %v7787
  %v8816 = vunpack.c.l.b16 %v7788
  %v8817 = vunpack.c.h.b16 %v7788
  %v8818 = vunpack.c.l.b16 %v7789
  %v8819 = vunpack.c.h.b16 %v7789
  %v8820 = vunpack.c.l.b16 %v7790
  %v8821 = vunpack.c.h.b16 %v7790
  %v8822 = vunpack.c.l.b16 %v7791
  %v8823 = vunpack.c.h.b16 %v7791
  %v8824 = vunpack.c.l.b16 %v7792
  %v8825 = vunpack.c.l.b16 %v7793
  %v8826 = vunpack.c.h.b16 %v7793
  %v8827 = vunpack.c.l.b16 %v7794
  %v8828 = vunpack.c.h.b16 %v7794
  %v8829 = vunpack.c.l.b16 %v7795
  %v8830 = vunpack.c.h.b16 %v7795
  %v8831 = vunpack.c.l.b16 %v7796
  %v8832 = vunpack.c.h.b16 %v7796
  %v8833 = vunpack.c.l.b16 %v7797
  %v8834 = vunpack.c.l.b16 %v7798
  %v8835 = vunpack.c.h.b16 %v7798
  %v8836 = vunpack.c.l.b16 %v7799
  %v8837 = vunpack.c.h.b16 %v7799
  %v8838 = vunpack.c.l.b16 %v7800
  %v8839 = vunpack.c.h.b16 %v7800
  %v8840 = vunpack.c.l.b16 %v7801
  %v8841 = vunpack.c.h.b16 %v7801
  %v8842 = vunpack.c.l.b16 %v7802
  %v8843 = vpack.c.b16 %v8276, %v8267
  %v8844 = vpack.c.b16 %v8277, %v8268
  %v8845 = vpack.c.b16 %v8278, %v8269
  %v8846 = vpack.c.b16 %v8279, %v8270
  %v8847 = vpack.c.b16 %v8280, %v8271
  %v8848 = vpack.c.b16 %v8281, %v8272
  %v8849 = vpack.c.b16 %v8282, %v8273
  %v8850 = vpack.c.b16 %v8283, %v8274
  %v8851 = vpack.c.b16 %v8284, %v8275
  %v8852 = vpack.c.b16 %v8294, %v8285
  %v8853 = vpack.c.b16 %v8295, %v8286
  %v8854 = vpack.c.b16 %v8296, %v8287
  %v8855 = vpack.c.b16 %v8297, %v8288
  %v8856 = vpack.c.b16 %v8298, %v8289
  %v8857 = vpack.c.b16 %v8299, %v8290
  %v8858 = vpack.c.b16 %v8300, %v8291
  %v8859 = vpack.c.b16 %v8301, %v8292
  %v8860 = vpack.c.b16 %v8302, %v8293
  %v8861 = vpack.c.b16 %v8312, %v8303
  %v8862 = vpack.c.b16 %v8313, %v8304
  %v8863 = vpack.c.b16 %v8314, %v8305
  %v8864 = vpack.c.b16 %v8315, %v8306
  %v8865 = vpack.c.b16 %v8316, %v8307
  %v8866 = vpack.c.b16 %v8317, %v8308
  %v8867 = vpack.c.b16 %v8318, %v8309
  %v8868 = vpack.c.b16 %v8319, %v8310
  %v8869 = vpack.c.b16 %v8320, %v8311
  %v8870 = vpack.c.b16 %v8330, %v8321
  %v8871 = vpack.c.b16 %v8331, %v8322
  %v8872 = vpack.c.b16 %v8332, %v8323
  %v8873 = vpack.c.b16 %v8333, %v8324
  %v8874 = vpack.c.b16 %v8334, %v8325
  %v8875 = vpack.c.b16 %v8335, %v8326
  %v8876 = vpack.c.b16 %v8336, %v8327
  %v8877 = vpack.c.b16 %v8337, %v8328
  %v8878 = vpack.c.b16 %v8338, %v8329
  %v8879 = vpack.c.b16 %v8348, %v8339
  %v8880 = vpack.c.b16 %v8349, %v8340
  %v8881 = vpack.c.b16 %v8350, %v8341
  %v8882 = vpack.c.b16 %v8351, %v8342
  %v8883 = vpack.c.b16 %v8352, %v8343
  %v8884 = vpack.c.b16 %v8353, %v8344
  %v8885 = vpack.c.b16 %v8354, %v8345
  %v8886 = vpack.c.b16 %v8355, %v8346
  %v8887 = vpack.c.b16 %v8356, %v8347
  %v8888 = vpack.c.b16 %v8366, %v8357
  %v8889 = vpack.c.b16 %v8367, %v8358
  %v8890 = vpack.c.b16 %v8368, %v8359
  %v8891 = vpack.c.b16 %v8369, %v8360
  %v8892 = vpack.c.b16 %v8370, %v8361
  %v8893 = vpack.c.b16 %v8371, %v8362
  %v8894 = vpack.c.b16 %v8372, %v8363
  %v8895 = vpack.c.b16 %v8373, %v8364
  %v8896 = vpack.c.b16 %v8374, %v8365
  %v8897 = vpack.c.b16 %v8384, %v8375
  %v8898 = vpack.c.b16 %v8385, %v8376
  %v8899 = vpack.c.b16 %v8386, %v8377
  %v8900 = vpack.c.b16 %v8387, %v8378
  %v8901 = vpack.c.b16 %v8388, %v8379
  %v8902 = vpack.c.b16 %v8389, %v8380
  %v8903 = vpack.c.b16 %v8390, %v8381
  %v8904 = vpack.c.b16 %v8391, %v8382
  %v8905 = vpack.c.b16 %v8392, %v8383
  %v8906 = vpack.c.b16 %v8402, %v8393
  %v8907 = vpack.c.b16 %v8403, %v8394
  %v8908 = vpack.c.b16 %v8404, %v8395
  %v8909 = vpack.c.b16 %v8405, %v8396
  %v8910 = vpack.c.b16 %v8406, %v8397
  %v8911 = vpack.c.b16 %v8407, %v8398
  %v8912 = vpack.c.b16 %v8408, %v8399
  %v8913 = vpack.c.b16 %v8409, %v8400
  %v8914 = vpack.c.b16 %v8410, %v8401
  %v8915 = vpack.c.b16 %v8420, %v8411
  %v8916 = vpack.c.b16 %v8421, %v8412
  %v8917 = vpack.c.b16 %v8422, %v8413
  %v8918 = vpack.c.b16 %v8423, %v8414
  %v8919 = vpack.c.b16 %v8424, %v8415
  %v8920 = vpack.c.b16 %v8425, %v8416
  %v8921 = vpack.c.b16 %v8426, %v8417
  %v8922 = vpack.c.b16 %v8427, %v8418
  %v8923 = vpack.c.b16 %v8428, %v8419
  %v8924 = vpack.c.b16 %v8438, %v8429
  %v8925 = vpack.c.b16 %v8439, %v8430
  %v8926 = vpack.c.b16 %v8440, %v8431
  %v8927 = vpack.c.b16 %v8441, %v8432
  %v8928 = vpack.c.b16 %v8442, %v8433
  %v8929 = vpack.c.b16 %v8443, %v8434
  %v8930 = vpack.c.b16 %v8444, %v8435
  %v8931 = vpack.c.b16 %v8445, %v8436
  %v8932 = vpack.c.b16 %v8446, %v8437
  %v8933 = vpack.c.b16 %v8456, %v8447
  %v8934 = vpack.c.b16 %v8457, %v8448
  %v8935 = vpack.c.b16 %v8458, %v8449
  %v8936 = vpack.c.b16 %v8459, %v8450
  %v8937 = vpack.c.b16 %v8460, %v8451
  %v8938 = vpack.c.b16 %v8461, %v8452
  %v8939 = vpack.c.b16 %v8462, %v8453
  %v8940 = vpack.c.b16 %v8463, %v8454
  %v8941 = vpack.c.b16 %v8464, %v8455
  %v8942 = vpack.c.b16 %v8474, %v8465
  %v8943 = vpack.c.b16 %v8475, %v8466
  %v8944 = vpack.c.b16 %v8476, %v8467
  %v8945 = vpack.c.b16 %v8477, %v8468
  %v8946 = vpack.c.b16 %v8478, %v8469
  %v8947 = vpack.c.b16 %v8479, %v8470
  %v8948 = vpack.c.b16 %v8480, %v8471
  %v8949 = vpack.c.b16 %v8481, %v8472
  %v8950 = vpack.c.b16 %v8482, %v8473
  %v8951 = vpack.c.b16 %v8492, %v8483
  %v8952 = vpack.c.b16 %v8493, %v8484
  %v8953 = vpack.c.b16 %v8494, %v8485
  %v8954 = vpack.c.b16 %v8495, %v8486
  %v8955 = vpack.c.b16 %v8496, %v8487
  %v8956 = vpack.c.b16 %v8497, %v8488
  %v8957 = vpack.c.b16 %v8498, %v8489
  %v8958 = vpack.c.b16 %v8499, %v8490
  %v8959 = vpack.c.b16 %v8500, %v8491
  %v8960 = vpack.c.b16 %v8510, %v8501
  %v8961 = vpack.c.b16 %v8511, %v8502
  %v8962 = vpack.c.b16 %v8512, %v8503
  %v8963 = vpack.c.b16 %v8513, %v8504
  %v8964 = vpack.c.b16 %v8514, %v8505
  %v8965 = vpack.c.b16 %v8515, %v8506
  %v8966 = vpack.c.b16 %v8516, %v8507
  %v8967 = vpack.c.b16 %v8517, %v8508
  %v8968 = vpack.c.b16 %v8518, %v8509
  %v8969 = vpack.c.b16 %v8528, %v8519
  %v8970 = vpack.c.b16 %v8529, %v8520
  %v8971 = vpack.c.b16 %v8530, %v8521
  %v8972 = vpack.c.b16 %v8531, %v8522
  %v8973 = vpack.c.b16 %v8532, %v8523
  %v8974 = vpack.c.b16 %v8533, %v8524
  %v8975 = vpack.c.b16 %v8534, %v8525
  %v8976 = vpack.c.b16 %v8535, %v8526
  %v8977 = vpack.c.b16 %v8536, %v8527
  %v8978 = vpack.c.b16 %v8546, %v8537
  %v8979 = vpack.c.b16 %v8547, %v8538
  %v8980 = vpack.c.b16 %v8548, %v8539
  %v8981 = vpack.c.b16 %v8549, %v8540
  %v8982 = vpack.c.b16 %v8550, %v8541
  %v8983 = vpack.c.b16 %v8551, %v8542
  %v8984 = vpack.c.b16 %v8552, %v8543
  %v8985 = vpack.c.b16 %v8553, %v8544
  %v8986 = vpack.c.b16 %v8554, %v8545
  %v8987 = vpack.c.b16 %v8564, %v8555
  %v8988 = vpack.c.b16 %v8565, %v8556
  %v8989 = vpack.c.b16 %v8566, %v8557
  %v8990 = vpack.c.b16 %v8567, %v8558
  %v8991 = vpack.c.b16 %v8568, %v8559
  %v8992 = vpack.c.b16 %v8569, %v8560
  %v8993 = vpack.c.b16 %v8570, %v8561
  %v8994 = vpack.c.b16 %v8571, %v8562
  %v8995 = vpack.c.b16 %v8572, %v8563
  %v8996 = vpack.c.b16 %v8582, %v8573
  %v8997 = vpack.c.b16 %v8583, %v8574
  %v8998 = vpack.c.b16 %v8584, %v8575
  %v8999 = vpack.c.b16 %v8585, %v8576
  %v9000 = vpack.c.b16 %v8586, %v8577
  %v9001 = vpack.c.b16 %v8587, %v8578
  %v9002 = vpack.c.b16 %v8588, %v8579
  %v9003 = vpack.c.b16 %v8589, %v8580
  %v9004 = vpack.c.b16 %v8590, %v8581
  %v9005 = vpack.c.b16 %v8600, %v8591
  %v9006 = vpack.c.b16 %v8601, %v8592
  %v9007 = vpack.c.b16 %v8602, %v8593
  %v9008 = vpack.c.b16 %v8603, %v8594
  %v9009 = vpack.c.b16 %v8604, %v8595
  %v9010 = vpack.c.b16 %v8605, %v8596
  %v9011 = vpack.c.b16 %v8606, %v8597
  %v9012 = vpack.c.b16 %v8607, %v8598
  %v9013 = vpack.c.b16 %v8608, %v8599
  %v9014 = vpack.c.b16 %v8618, %v8609
  %v9015 = vpack.c.b16 %v8619, %v8610
  %v9016 = vpack.c.b16 %v8620, %v8611
  %v9017 = vpack.c.b16 %v8621, %v8612
  %v9018 = vpack.c.b16 %v8622, %v8613
  %v9019 = vpack.c.b16 %v8623, %v8614
  %v9020 = vpack.c.b16 %v8624, %v8615
  %v9021 = vpack.c.b16 %v8625, %v8616
  %v9022 = vpack.c.b16 %v8626, %v8617
  %v9023 = vpack.c.b16 %v8636, %v8627
  %v9024 = vpack.c.b16 %v8637, %v8628
  %v9025 = vpack.c.b16 %v8638, %v8629
  %v9026 = vpack.c.b16 %v8639, %v8630
  %v9027 = vpack.c.b16 %v8640, %v8631
  %v9028 = vpack.c.b16 %v8641, %v8632
  %v9029 = vpack.c.b16 %v8642, %v8633
  %v9030 = vpack.c.b16 %v8643, %v8634
  %v9031 = vpack.c.b16 %v8644, %v8635
  %v9032 = vpack.c.b16 %v8654, %v8645
  %v9033 = vpack.c.b16 %v8655, %v8646
  %v9034 = vpack.c.b16 %v8656, %v8647
  %v9035 = vpack.c.b16 %v8657, %v8648
  %v9036 = vpack.c.b16 %v8658, %v8649
  %v9037 = vpack.c.b16 %v8659, %v8650
  %v9038 = vpack.c.b16 %v8660, %v8651
  %v9039 = vpack.c.b16 %v8661, %v8652
  %v9040 = vpack.c.b16 %v8662, %v8653
  %v9041 = vpack.c.b16 %v8672, %v8663
  %v9042 = vpack.c.b16 %v8673, %v8664
  %v9043 = vpack.c.b16 %v8674, %v8665
  %v9044 = vpack.c.b16 %v8675, %v8666
  %v9045 = vpack.c.b16 %v8676, %v8667
  %v9046 = vpack.c.b16 %v8677, %v8668
  %v9047 = vpack.c.b16 %v8678, %v8669
  %v9048 = vpack.c.b16 %v8679, %v8670
  %v9049 = vpack.c.b16 %v8680, %v8671
  %v9050 = vpack.c.b16 %v8690, %v8681
  %v9051 = vpack.c.b16 %v8691, %v8682
  %v9052 = vpack.c.b16 %v8692, %v8683
  %v9053 = vpack.c.b16 %v8693, %v8684
  %v9054 = vpack.c.b16 %v8694, %v8685
  %v9055 = vpack.c.b16 %v8695, %v8686
  %v9056 = vpack.c.b16 %v8696, %v8687
  %v9057 = vpack.c.b16 %v8697, %v8688
  %v9058 = vpack.c.b16 %v8698, %v8689
  %v9059 = vpack.c.b16 %v8708, %v8699
  %v9060 = vpack.c.b16 %v8709, %v8700
  %v9061 = vpack.c.b16 %v8710, %v8701
  %v9062 = vpack.c.b16 %v8711, %v8702
  %v9063 = vpack.c.b16 %v8712, %v8703
  %v9064 = vpack.c.b16 %v8713, %v8704
  %v9065 = vpack.c.b16 %v8714, %v8705
  %v9066 = vpack.c.b16 %v8715, %v8706
  %v9067 = vpack.c.b16 %v8716, %v8707
  %v9068 = vpack.c.b16 %v8726, %v8717
  %v9069 = vpack.c.b16 %v8727, %v8718
  %v9070 = vpack.c.b16 %v8728, %v8719
  %v9071 = vpack.c.b16 %v8729, %v8720
  %v9072 = vpack.c.b16 %v8730, %v8721
  %v9073 = vpack.c.b16 %v8731, %v8722
  %v9074 = vpack.c.b16 %v8732, %v8723
  %v9075 = vpack.c.b16 %v8733, %v8724
  %v9076 = vpack.c.b16 %v8734, %v8725
  %v9077 = vpack.c.b16 %v8744, %v8735
  %v9078 = vpack.c.b16 %v8745, %v8736
  %v9079 = vpack.c.b16 %v8746, %v8737
  %v9080 = vpack.c.b16 %v8747, %v8738
  %v9081 = vpack.c.b16 %v8748, %v8739
  %v9082 = vpack.c.b16 %v8749, %v8740
  %v9083 = vpack.c.b16 %v8750, %v8741
  %v9084 = vpack.c.b16 %v8751, %v8742
  %v9085 = vpack.c.b16 %v8752, %v8743
  %v9086 = vpack.c.b16 %v8762, %v8753
  %v9087 = vpack.c.b16 %v8763, %v8754
  %v9088 = vpack.c.b16 %v8764, %v8755
  %v9089 = vpack.c.b16 %v8765, %v8756
  %v9090 = vpack.c.b16 %v8766, %v8757
  %v9091 = vpack.c.b16 %v8767, %v8758
  %v9092 = vpack.c.b16 %v8768, %v8759
  %v9093 = vpack.c.b16 %v8769, %v8760
  %v9094 = vpack.c.b16 %v8770, %v8761
  %v9095 = vpack.c.b16 %v8780, %v8771
  %v9096 = vpack.c.b16 %v8781, %v8772
  %v9097 = vpack.c.b16 %v8782, %v8773
  %v9098 = vpack.c.b16 %v8783, %v8774
  %v9099 = vpack.c.b16 %v8784, %v8775
  %v9100 = vpack.c.b16 %v8785, %v8776
  %v9101 = vpack.c.b16 %v8786, %v8777
  %v9102 = vpack.c.b16 %v8787, %v8778
  %v9103 = vpack.c.b16 %v8788, %v8779
  %v9104 = vpack.c.b16 %v8798, %v8789
  %v9105 = vpack.c.b16 %v8799, %v8790
  %v9106 = vpack.c.b16 %v8800, %v8791
  %v9107 = vpack.c.b16 %v8801, %v8792
  %v9108 = vpack.c.b16 %v8802, %v8793
  %v9109 = vpack.c.b16 %v8803, %v8794
  %v9110 = vpack.c.b16 %v8804, %v8795
  %v9111 = vpack.c.b16 %v8805, %v8796
  %v9112 = vpack.c.b16 %v8806, %v8797
  %v9113 = vpack.c.b16 %v8816, %v8807
  %v9114 = vpack.c.b16 %v8817, %v8808
  %v9115 = vpack.c.b16 %v8818, %v8809
  %v9116 = vpack.c.b16 %v8819, %v8810
  %v9117 = vpack.c.b16 %v8820, %v8811
  %v9118 = vpack.c.b16 %v8821, %v8812
  %v9119 = vpack.c.b16 %v8822, %v8813
  %v9120 = vpack.c.b16 %v8823, %v8814
  %v9121 = vpack.c.b16 %v8824, %v8815
  %v9122 = vpack.c.b16 %v8834, %v8825
  %v9123 = vpack.c.b16 %v8835, %v8826
  %v9124 = vpack.c.b16 %v8836, %v8827
  %v9125 = vpack.c.b16 %v8837, %v8828
  %v9126 = vpack.c.b16 %v8838, %v8829
  %v9127 = vpack.c.b16 %v8839, %v8830
  %v9128 = vpack.c.b16 %v8840, %v8831
  %v9129 = vpack.c.b16 %v8841, %v8832
  %v9130 = vpack.c.b16 %v8842, %v8833
  %v9563 = vunpack.c.l.b16 %v7803
  %v9564 = vunpack.c.l.b16 %v7804
  %v9565 = vunpack.c.l.b16 %v7805
  %v9566 = vunpack.c.l.b16 %v7806
  %v9567 = vunpack.c.l.b16 %v7807
  %v9568 = vunpack.c.l.b16 %v7808
  %v9569 = vunpack.c.l.b16 %v7809
  %v9570 = vunpack.c.l.b16 %v7810
  %v9571 = vunpack.c.l.b16 %v7811
  %v9572 = vunpack.c.l.b16 %v7812
  %v9573 = vunpack.c.l.b16 %v7813
  %v9574 = vunpack.c.l.b16 %v7814
  %v9575 = vunpack.c.l.b16 %v7815
  %v9576 = vunpack.c.l.b16 %v7816
  %v9577 = vunpack.c.l.b16 %v7817
  %v9578 = vunpack.c.l.b16 %v7818
  %v9579 = vunpack.c.l.b16 %v7819
  %v9580 = vunpack.c.l.b16 %v7820
  %v9581 = vunpack.c.l.b16 %v7821
  %v9582 = vunpack.c.l.b16 %v7822
  %v9583 = vunpack.c.l.b16 %v7823
  %v9584 = vunpack.c.l.b16 %v7824
  %v9585 = vunpack.c.l.b16 %v7825
  %v9586 = vunpack.c.l.b16 %v7826
  %v9587 = vunpack.c.l.b16 %v7827
  %v9588 = vunpack.c.l.b16 %v7828
  %v9589 = vunpack.c.l.b16 %v7829
  %v9590 = vunpack.c.l.b16 %v7830
  %v9591 = vunpack.c.l.b16 %v7831
  %v9592 = vunpack.c.l.b16 %v7832
  %v9593 = vunpack.c.l.b16 %v7833
  %v9594 = vunpack.c.l.b16 %v7834
  %v9595 = vunpack.c.l.b16 %v7835
  %v9596 = vunpack.c.l.b16 %v7836
  %v9597 = vunpack.c.l.b16 %v7837
  %v9598 = vunpack.c.l.b16 %v7838
  %v9599 = vunpack.c.l.b16 %v7839
  %v9600 = vunpack.c.l.b16 %v7840
  %v9601 = vunpack.c.l.b16 %v7841
  %v9602 = vunpack.c.l.b16 %v7842
  %v9603 = vunpack.c.l.b16 %v7843
  %v9604 = vunpack.c.l.b16 %v7844
  %v9605 = vunpack.c.l.b16 %v7845
  %v9606 = vunpack.c.l.b16 %v7846
  %v9607 = vunpack.c.l.b16 %v7847
  %v9608 = vunpack.c.l.b16 %v7848
  %v9609 = vunpack.c.l.b16 %v7849
  %v9610 = vunpack.c.l.b16 %v7850
  %v9611 = vunpack.c.l.b16 %v7851
  %v9612 = vunpack.c.l.b16 %v7852
  %v9613 = vunpack.c.l.b16 %v7853
  %v9614 = vunpack.c.l.b16 %v7854
  %v9615 = vunpack.c.l.b16 %v7855
  %v9616 = vunpack.c.l.b16 %v7856
  %v9617 = vunpack.c.l.b16 %v7857
  %v9618 = vunpack.c.l.b16 %v7858
  %v9619 = vunpack.c.l.b16 %v7859
  %v9620 = vunpack.c.l.b16 %v7860
  %v9621 = vunpack.c.l.b16 %v7861
  %v9622 = vunpack.c.l.b16 %v7862
  %v9623 = vunpack.c.l.b16 %v7863
  %v9624 = vunpack.c.l.b16 %v7864
  %v9625 = vunpack.c.l.b16 %v7865
  %v9626 = vunpack.c.l.b16 %v7866
  %v9627 = vunpack.c.l.b16 %v7867
  %v9628 = vunpack.c.l.b16 %v7868
  %v9629 = vunpack.c.l.b16 %v7869
  %v9630 = vunpack.c.l.b16 %v7870
  %v9631 = vunpack.c.l.b16 %v7871
  %v9632 = vunpack.c.l.b16 %v7872
  %v9633 = vunpack.c.l.b16 %v7873
  %v9634 = vunpack.c.l.b16 %v7874
  %v9635 = vunpack.c.l.b16 %v7875
  %v9636 = vunpack.c.l.b16 %v7876
  %v9637 = vunpack.c.l.b16 %v7877
  %v9638 = vunpack.c.l.b16 %v7878
  %v9639 = vunpack.c.l.b16 %v7879
  %v9640 = vunpack.c.l.b16 %v7880
  %v9641 = vunpack.c.l.b16 %v7881
  %v9642 = vunpack.c.l.b16 %v7882
  %v9643 = vunpack.c.l.b16 %v7883
  %v9644 = vunpack.c.l.b16 %v7884
  %v9645 = vunpack.c.l.b16 %v7885
  %v9646 = vunpack.c.l.b16 %v7886
  %v9647 = vunpack.c.l.b16 %v7887
  %v9648 = vunpack.c.l.b16 %v7888
  %v9649 = vunpack.c.l.b16 %v7889
  %v9650 = vunpack.c.l.b16 %v7890
  %v9651 = vunpack.c.l.b16 %v7891
  %v9652 = vunpack.c.l.b16 %v7892
  %v9653 = vunpack.c.l.b16 %v7893
  %v9654 = vunpack.c.l.b16 %v7894
  %v9655 = vunpack.c.l.b16 %v7895
  %v9656 = vunpack.c.l.b16 %v7896
  %v9657 = vunpack.c.l.b16 %v7897
  %v9658 = vunpack.c.l.b16 %v7898
  %v9659 = vunpack.c.l.b16 %v7899
  %v9660 = vunpack.c.l.b16 %v7900
  %v9661 = vunpack.c.l.b16 %v7901
  %v9662 = vunpack.c.l.b16 %v7902
  %v9663 = vunpack.c.l.b16 %v7903
  %v9664 = vunpack.c.l.b16 %v7904
  %v9665 = vunpack.c.l.b16 %v7905
  %v9666 = vunpack.c.l.b16 %v7906
  %v9667 = vunpack.c.l.b16 %v7907
  %v9668 = vunpack.c.l.b16 %v7908
  %v9669 = vunpack.c.l.b16 %v7909
  %v9670 = vunpack.c.l.b16 %v7910
  %v9671 = vunpack.c.l.b16 %v7911
  %v9672 = vunpack.c.l.b16 %v7912
  %v9673 = vunpack.c.l.b16 %v7913
  %v9674 = vunpack.c.l.b16 %v7914
  %v9675 = vunpack.c.l.b16 %v7915
  %v9676 = vunpack.c.l.b16 %v7916
  %v9677 = vunpack.c.l.b16 %v7917
  %v9678 = vunpack.c.l.b16 %v7918
  %v9679 = vunpack.c.l.b16 %v7919
  %v9680 = vunpack.c.l.b16 %v7920
  %v9681 = vunpack.c.l.b16 %v7921
  %v9682 = vunpack.c.l.b16 %v7922
  %v9683 = vunpack.c.l.b16 %v7923
  %v9684 = vunpack.c.l.b16 %v7924
  %v9685 = vunpack.c.l.b16 %v7925
  %v9686 = vunpack.c.l.b16 %v7926
  %v9687 = vunpack.c.l.b16 %v7927
  %v9688 = vunpack.c.l.b16 %v7928
  %v9689 = vunpack.c.l.b16 %v7929
  %v9690 = vunpack.c.l.b16 %v7930
  %v9691 = vunpack.c.l.b16 %v7931
  %v9692 = vunpack.c.l.b16 %v7932
  %v9693 = vunpack.c.l.b16 %v7933
  %v9694 = vunpack.c.l.b16 %v7934
  %v9695 = vunpack.c.l.b16 %v7935
  %v9696 = vunpack.c.l.b16 %v7936
  %v9697 = vunpack.c.l.b16 %v7937
  %v9698 = vunpack.c.l.b16 %v7938
  %v9699 = vunpack.c.l.b16 %v7939
  %v9700 = vunpack.c.l.b16 %v7940
  %v9701 = vunpack.c.l.b16 %v7941
  %v9702 = vunpack.c.l.b16 %v7942
  %v9703 = vunpack.c.l.b16 %v7943
  %v9704 = vunpack.c.l.b16 %v7944
  %v9705 = vunpack.c.l.b16 %v7945
  %v9706 = vunpack.c.l.b16 %v7946
  %v9707 = vpack.c.b16 %v9564, %v9563
  %v9708 = vpack.c.b16 %v9566, %v9565
  %v9709 = vpack.c.b16 %v9568, %v9567
  %v9710 = vpack.c.b16 %v9570, %v9569
  %v9711 = vpack.c.b16 %v9572, %v9571
  %v9712 = vpack.c.b16 %v9574, %v9573
  %v9713 = vpack.c.b16 %v9576, %v9575
  %v9714 = vpack.c.b16 %v9578, %v9577
  %v9715 = vpack.c.b16 %v9580, %v9579
  %v9716 = vpack.c.b16 %v9582, %v9581
  %v9717 = vpack.c.b16 %v9584, %v9583
  %v9718 = vpack.c.b16 %v9586, %v9585
  %v9719 = vpack.c.b16 %v9588, %v9587
  %v9720 = vpack.c.b16 %v9590, %v9589
  %v9721 = vpack.c.b16 %v9592, %v9591
  %v9722 = vpack.c.b16 %v9594, %v9593
  %v9723 = vpack.c.b16 %v9596, %v9595
  %v9724 = vpack.c.b16 %v9598, %v9597
  %v9725 = vpack.c.b16 %v9600, %v9599
  %v9726 = vpack.c.b16 %v9602, %v9601
  %v9727 = vpack.c.b16 %v9604, %v9603
  %v9728 = vpack.c.b16 %v9606, %v9605
  %v9729 = vpack.c.b16 %v9608, %v9607
  %v9730 = vpack.c.b16 %v9610, %v9609
  %v9731 = vpack.c.b16 %v9612, %v9611
  %v9732 = vpack.c.b16 %v9614, %v9613
  %v9733 = vpack.c.b16 %v9616, %v9615
  %v9734 = vpack.c.b16 %v9618, %v9617
  %v9735 = vpack.c.b16 %v9620, %v9619
  %v9736 = vpack.c.b16 %v9622, %v9621
  %v9737 = vpack.c.b16 %v9624, %v9623
  %v9738 = vpack.c.b16 %v9626, %v9625
  %v9739 = vpack.c.b16 %v9628, %v9627
  %v9740 = vpack.c.b16 %v9630, %v9629
  %v9741 = vpack.c.b16 %v9632, %v9631
  %v9742 = vpack.c.b16 %v9634, %v9633
  %v9743 = vpack.c.b16 %v9636, %v9635
  %v9744 = vpack.c.b16 %v9638, %v9637
  %v9745 = vpack.c.b16 %v9640, %v9639
  %v9746 = vpack.c.b16 %v9642, %v9641
  %v9747 = vpack.c.b16 %v9644, %v9643
  %v9748 = vpack.c.b16 %v9646, %v9645
  %v9749 = vpack.c.b16 %v9648, %v9647
  %v9750 = vpack.c.b16 %v9650, %v9649
  %v9751 = vpack.c.b16 %v9652, %v9651
  %v9752 = vpack.c.b16 %v9654, %v9653
  %v9753 = vpack.c.b16 %v9656, %v9655
  %v9754 = vpack.c.b16 %v9658, %v9657
  %v9755 = vpack.c.b16 %v9660, %v9659
  %v9756 = vpack.c.b16 %v9662, %v9661
  %v9757 = vpack.c.b16 %v9664, %v9663
  %v9758 = vpack.c.b16 %v9666, %v9665
  %v9759 = vpack.c.b16 %v9668, %v9667
  %v9760 = vpack.c.b16 %v9670, %v9669
  %v9761 = vpack.c.b16 %v9672, %v9671
  %v9762 = vpack.c.b16 %v9674, %v9673
  %v9763 = vpack.c.b16 %v9676, %v9675
  %v9764 = vpack.c.b16 %v9678, %v9677
  %v9765 = vpack.c.b16 %v9680, %v9679
  %v9766 = vpack.c.b16 %v9682, %v9681
  %v9767 = vpack.c.b16 %v9684, %v9683
  %v9768 = vpack.c.b16 %v9686, %v9685
  %v9769 = vpack.c.b16 %v9688, %v9687
  %v9770 = vpack.c.b16 %v9690, %v9689
  %v9771 = vpack.c.b16 %v9692, %v9691
  %v9772 = vpack.c.b16 %v9694, %v9693
  %v9773 = vpack.c.b16 %v9696, %v9695
  %v9774 = vpack.c.b16 %v9698, %v9697
  %v9775 = vpack.c.b16 %v9700, %v9699
  %v9776 = vpack.c.b16 %v9702, %v9701
  %v9777 = vpack.c.b16 %v9704, %v9703
  %v9778 = vpack.c.b16 %v9706, %v9705
  %9851 = vmatprep.subr.bf16.mxu0 0
  %9852 = vmatpush1.bf16.msra.mxu0 %v9714
  %9853 = vmatprep.subr.bf16.mxu0 0
  %9854 = vmatpush1.bf16.msra.mxu0 %v9713
  %9855 = vmatprep.subr.bf16.mxu0 0
  %9856 = vmatpush1.bf16.msra.mxu0 %v9712
  %9857 = vmatprep.subr.bf16.mxu0 0
  %9858 = vmatpush1.bf16.msra.mxu0 %v9711
  %9859 = vmatprep.subr.bf16.mxu0 0
  %9860 = vmatpush1.bf16.msra.mxu0 %v9710
  %9861 = vmatprep.subr.bf16.mxu0 0
  %9862 = vmatpush1.bf16.msra.mxu0 %v9709
  %9863 = vmatprep.subr.bf16.mxu0 0
  %9864 = vmatpush1.bf16.msra.mxu0 %v9708
  %9865 = vmatprep.subr.bf16.mxu0 0
  %9866 = vmatpush1.bf16.msra.mxu0 %v9707
  %9867 = vmatprep.subr.bf16.mxu0 0
  %9868 = vmatpush2.bf16.msra.mxu0 %v9722
  %9869 = vmatprep.subr.bf16.mxu0 0
  %9870 = vmatpush2.bf16.msra.mxu0 %v9721
  %9871 = vmatprep.subr.bf16.mxu0 0
  %9872 = vmatpush2.bf16.msra.mxu0 %v9720
  %9873 = vmatprep.subr.bf16.mxu0 0
  %9874 = vmatpush2.bf16.msra.mxu0 %v9719
  %9875 = vmatprep.subr.bf16.mxu0 0
  %9876 = vmatpush2.bf16.msra.mxu0 %v9718
  %9877 = vmatprep.subr.bf16.mxu0 0
  %9878 = vmatpush2.bf16.msra.mxu0 %v9717
  %9879 = vmatprep.subr.bf16.mxu0 0
  %9880 = vmatpush2.bf16.msra.mxu0 %v9716
  %9881 = vmatprep.subr.bf16.mxu0 0
  %9882 = vmatpush2.bf16.msra.mxu0 %v9715
  %9883 = vmatprep.mubr.bf16.mxu0 %v8844
  %9884 = vmatmul.mubr.bf16.gmra.mxu0 %v8843
  %v9885 = vpop.f32.mrf.mxu0
  %v9886 = vadd.f32 0.0, %v9885
  %v9887 = vpop.f32.mrf.mxu0
  %v9888 = vpop.f32.mrf.mxu0
  %v9889 = vadd.f32 0.0, %v9888
  %v9890 = vpop.f32.mrf.mxu0
  %9891 = vmatprep.mubr.bf16.mxu0 %v8853
  %9892 = vmatmul.mubr.bf16.gmra.mxu0 %v8852
  %v9893 = vpop.f32.mrf.mxu0
  %v9894 = vadd.f32 0.0, %v9893
  %v9895 = vpop.f32.mrf.mxu0
  %v9896 = vpop.f32.mrf.mxu0
  %v9897 = vadd.f32 0.0, %v9896
  %v9898 = vpop.f32.mrf.mxu0
  %9899 = vmatprep.mubr.bf16.mxu0 %v8862
  %9900 = vmatmul.mubr.bf16.gmra.mxu0 %v8861
  %v9901 = vpop.f32.mrf.mxu0
  %v9902 = vadd.f32 0.0, %v9901
  %v9903 = vpop.f32.mrf.mxu0
  %v9904 = vpop.f32.mrf.mxu0
  %v9905 = vadd.f32 0.0, %v9904
  %v9906 = vpop.f32.mrf.mxu0
  %9907 = vmatprep.mubr.bf16.mxu0 %v8871
  %9908 = vmatmul.mubr.bf16.gmra.mxu0 %v8870
  %v9909 = vpop.f32.mrf.mxu0
  %v9910 = vadd.f32 0.0, %v9909
  %v9911 = vpop.f32.mrf.mxu0
  %v9912 = vpop.f32.mrf.mxu0
  %v9913 = vadd.f32 0.0, %v9912
  %v9914 = vpop.f32.mrf.mxu0
  %9915 = vmatprep.mubr.bf16.mxu0 %v8880
  %9916 = vmatmul.mubr.bf16.gmra.mxu0 %v8879
  %v9917 = vpop.f32.mrf.mxu0
  %v9918 = vadd.f32 0.0, %v9917
  %v9919 = vpop.f32.mrf.mxu0
  %v9920 = vpop.f32.mrf.mxu0
  %v9921 = vadd.f32 0.0, %v9920
  %v9922 = vpop.f32.mrf.mxu0
  %9923 = vmatprep.mubr.bf16.mxu0 %v8889
  %9924 = vmatmul.mubr.bf16.gmra.mxu0 %v8888
  %v9925 = vpop.f32.mrf.mxu0
  %v9926 = vadd.f32 0.0, %v9925
  %v9927 = vpop.f32.mrf.mxu0
  %v9928 = vpop.f32.mrf.mxu0
  %v9929 = vadd.f32 0.0, %v9928
  %v9930 = vpop.f32.mrf.mxu0
  %9931 = vmatprep.mubr.bf16.mxu0 %v8898
  %9932 = vmatmul.mubr.bf16.gmra.mxu0 %v8897
  %v9933 = vpop.f32.mrf.mxu0
  %v9934 = vadd.f32 0.0, %v9933
  %v9935 = vpop.f32.mrf.mxu0
  %v9936 = vpop.f32.mrf.mxu0
  %v9937 = vadd.f32 0.0, %v9936
  %v9938 = vpop.f32.mrf.mxu0
  %9939 = vmatprep.mubr.bf16.mxu0 %v8907
  %9940 = vmatmul.mubr.bf16.gmra.mxu0 %v8906
  %v9941 = vpop.f32.mrf.mxu0
  %v9942 = vadd.f32 0.0, %v9941
  %v9943 = vpop.f32.mrf.mxu0
  %v9944 = vpop.f32.mrf.mxu0
  %v9945 = vadd.f32 0.0, %v9944
  %v9946 = vpop.f32.mrf.mxu0
  %9947 = vmatprep.mubr.bf16.mxu0 %v8916
  %9948 = vmatmul.mubr.bf16.gmra.mxu0 %v8915
  %v9949 = vpop.f32.mrf.mxu0
  %v9950 = vadd.f32 0.0, %v9949
  %v9951 = vpop.f32.mrf.mxu0
  %v9952 = vpop.f32.mrf.mxu0
  %v9953 = vadd.f32 0.0, %v9952
  %v9954 = vpop.f32.mrf.mxu0
  %9955 = vmatprep.mubr.bf16.mxu0 %v8925
  %9956 = vmatmul.mubr.bf16.gmra.mxu0 %v8924
  %v9957 = vpop.f32.mrf.mxu0
  %v9958 = vadd.f32 0.0, %v9957
  %v9959 = vpop.f32.mrf.mxu0
  %v9960 = vpop.f32.mrf.mxu0
  %v9961 = vadd.f32 0.0, %v9960
  %v9962 = vpop.f32.mrf.mxu0
  %9963 = vmatprep.mubr.bf16.mxu0 %v8934
  %9964 = vmatmul.mubr.bf16.gmra.mxu0 %v8933
  %v9965 = vpop.f32.mrf.mxu0
  %v9966 = vadd.f32 0.0, %v9965
  %v9967 = vpop.f32.mrf.mxu0
  %v9968 = vpop.f32.mrf.mxu0
  %v9969 = vadd.f32 0.0, %v9968
  %v9970 = vpop.f32.mrf.mxu0
  %9971 = vmatprep.mubr.bf16.mxu0 %v8943
  %9972 = vmatmul.mubr.bf16.gmra.mxu0 %v8942
  %v9973 = vpop.f32.mrf.mxu0
  %v9974 = vadd.f32 0.0, %v9973
  %v9975 = vpop.f32.mrf.mxu0
  %v9976 = vpop.f32.mrf.mxu0
  %v9977 = vadd.f32 0.0, %v9976
  %v9978 = vpop.f32.mrf.mxu0
  %9979 = vmatprep.mubr.bf16.mxu0 %v8952
  %9980 = vmatmul.mubr.bf16.gmra.mxu0 %v8951
  %v9981 = vpop.f32.mrf.mxu0
  %v9982 = vadd.f32 0.0, %v9981
  %v9983 = vpop.f32.mrf.mxu0
  %v9984 = vpop.f32.mrf.mxu0
  %v9985 = vadd.f32 0.0, %v9984
  %v9986 = vpop.f32.mrf.mxu0
  %9987 = vmatprep.mubr.bf16.mxu0 %v8961
  %9988 = vmatmul.mubr.bf16.gmra.mxu0 %v8960
  %v9989 = vpop.f32.mrf.mxu0
  %v9990 = vadd.f32 0.0, %v9989
  %v9991 = vpop.f32.mrf.mxu0
  %v9992 = vpop.f32.mrf.mxu0
  %v9993 = vadd.f32 0.0, %v9992
  %v9994 = vpop.f32.mrf.mxu0
  %9995 = vmatprep.mubr.bf16.mxu0 %v8970
  %9996 = vmatmul.mubr.bf16.gmra.mxu0 %v8969
  %v9997 = vpop.f32.mrf.mxu0
  %v9998 = vadd.f32 0.0, %v9997
  %v9999 = vpop.f32.mrf.mxu0
  %v10000 = vpop.f32.mrf.mxu0
  %v10001 = vadd.f32 0.0, %v10000
  %v10002 = vpop.f32.mrf.mxu0
  %10003 = vmatprep.mubr.bf16.mxu0 %v8979
  %10004 = vmatmul.mubr.bf16.gmra.mxu0 %v8978
  %v10005 = vpop.f32.mrf.mxu0
  %v10006 = vadd.f32 0.0, %v10005
  %v10007 = vpop.f32.mrf.mxu0
  %v10008 = vpop.f32.mrf.mxu0
  %v10009 = vadd.f32 0.0, %v10008
  %v10010 = vpop.f32.mrf.mxu0
  %10011 = vmatprep.mubr.bf16.mxu0 %v8988
  %10012 = vmatmul.mubr.bf16.gmra.mxu0 %v8987
  %v10013 = vpop.f32.mrf.mxu0
  %v10014 = vadd.f32 0.0, %v10013
  %v10015 = vpop.f32.mrf.mxu0
  %v10016 = vpop.f32.mrf.mxu0
  %v10017 = vadd.f32 0.0, %v10016
  %v10018 = vpop.f32.mrf.mxu0
  %10019 = vmatprep.mubr.bf16.mxu0 %v8997
  %10020 = vmatmul.mubr.bf16.gmra.mxu0 %v8996
  %v10021 = vpop.f32.mrf.mxu0
  %v10022 = vadd.f32 0.0, %v10021
  %v10023 = vpop.f32.mrf.mxu0
  %v10024 = vpop.f32.mrf.mxu0
  %v10025 = vadd.f32 0.0, %v10024
  %v10026 = vpop.f32.mrf.mxu0
  %10027 = vmatprep.mubr.bf16.mxu0 %v9006
  %10028 = vmatmul.mubr.bf16.gmra.mxu0 %v9005
  %v10029 = vpop.f32.mrf.mxu0
  %v10030 = vadd.f32 0.0, %v10029
  %v10031 = vpop.f32.mrf.mxu0
  %v10032 = vpop.f32.mrf.mxu0
  %v10033 = vadd.f32 0.0, %v10032
  %v10034 = vpop.f32.mrf.mxu0
  %10035 = vmatprep.mubr.bf16.mxu0 %v9015
  %10036 = vmatmul.mubr.bf16.gmra.mxu0 %v9014
  %v10037 = vpop.f32.mrf.mxu0
  %v10038 = vadd.f32 0.0, %v10037
  %v10039 = vpop.f32.mrf.mxu0
  %v10040 = vpop.f32.mrf.mxu0
  %v10041 = vadd.f32 0.0, %v10040
  %v10042 = vpop.f32.mrf.mxu0
  %10043 = vmatprep.mubr.bf16.mxu0 %v9024
  %10044 = vmatmul.mubr.bf16.gmra.mxu0 %v9023
  %v10045 = vpop.f32.mrf.mxu0
  %v10046 = vadd.f32 0.0, %v10045
  %v10047 = vpop.f32.mrf.mxu0
  %v10048 = vpop.f32.mrf.mxu0
  %v10049 = vadd.f32 0.0, %v10048
  %v10050 = vpop.f32.mrf.mxu0
  %10051 = vmatprep.mubr.bf16.mxu0 %v9033
  %10052 = vmatmul.mubr.bf16.gmra.mxu0 %v9032
  %v10053 = vpop.f32.mrf.mxu0
  %v10054 = vadd.f32 0.0, %v10053
  %v10055 = vpop.f32.mrf.mxu0
  %v10056 = vpop.f32.mrf.mxu0
  %v10057 = vadd.f32 0.0, %v10056
  %v10058 = vpop.f32.mrf.mxu0
  %10059 = vmatprep.mubr.bf16.mxu0 %v9042
  %10060 = vmatmul.mubr.bf16.gmra.mxu0 %v9041
  %v10061 = vpop.f32.mrf.mxu0
  %v10062 = vadd.f32 0.0, %v10061
  %v10063 = vpop.f32.mrf.mxu0
  %v10064 = vpop.f32.mrf.mxu0
  %v10065 = vadd.f32 0.0, %v10064
  %v10066 = vpop.f32.mrf.mxu0
  %10067 = vmatprep.mubr.bf16.mxu0 %v9051
  %10068 = vmatmul.mubr.bf16.gmra.mxu0 %v9050
  %v10069 = vpop.f32.mrf.mxu0
  %v10070 = vadd.f32 0.0, %v10069
  %v10071 = vpop.f32.mrf.mxu0
  %v10072 = vpop.f32.mrf.mxu0
  %v10073 = vadd.f32 0.0, %v10072
  %v10074 = vpop.f32.mrf.mxu0
  %10075 = vmatprep.mubr.bf16.mxu0 %v9060
  %10076 = vmatmul.mubr.bf16.gmra.mxu0 %v9059
  %v10077 = vpop.f32.mrf.mxu0
  %v10078 = vadd.f32 0.0, %v10077
  %v10079 = vpop.f32.mrf.mxu0
  %v10080 = vpop.f32.mrf.mxu0
  %v10081 = vadd.f32 0.0, %v10080
  %v10082 = vpop.f32.mrf.mxu0
  %10083 = vmatprep.mubr.bf16.mxu0 %v9069
  %10084 = vmatmul.mubr.bf16.gmra.mxu0 %v9068
  %v10085 = vpop.f32.mrf.mxu0
  %v10086 = vadd.f32 0.0, %v10085
  %v10087 = vpop.f32.mrf.mxu0
  %v10088 = vpop.f32.mrf.mxu0
  %v10089 = vadd.f32 0.0, %v10088
  %v10090 = vpop.f32.mrf.mxu0
  %10091 = vmatprep.mubr.bf16.mxu0 %v9078
  %10092 = vmatmul.mubr.bf16.gmra.mxu0 %v9077
  %v10093 = vpop.f32.mrf.mxu0
  %v10094 = vadd.f32 0.0, %v10093
  %v10095 = vpop.f32.mrf.mxu0
  %v10096 = vpop.f32.mrf.mxu0
  %v10097 = vadd.f32 0.0, %v10096
  %v10098 = vpop.f32.mrf.mxu0
  %10099 = vmatprep.mubr.bf16.mxu0 %v9087
  %10100 = vmatmul.mubr.bf16.gmra.mxu0 %v9086
  %v10101 = vpop.f32.mrf.mxu0
  %v10102 = vadd.f32 0.0, %v10101
  %v10103 = vpop.f32.mrf.mxu0
  %v10104 = vpop.f32.mrf.mxu0
  %v10105 = vadd.f32 0.0, %v10104
  %v10106 = vpop.f32.mrf.mxu0
  %10107 = vmatprep.mubr.bf16.mxu0 %v9096
  %10108 = vmatmul.mubr.bf16.gmra.mxu0 %v9095
  %v10109 = vpop.f32.mrf.mxu0
  %v10110 = vadd.f32 0.0, %v10109
  %v10111 = vpop.f32.mrf.mxu0
  %v10112 = vpop.f32.mrf.mxu0
  %v10113 = vadd.f32 0.0, %v10112
  %v10114 = vpop.f32.mrf.mxu0
  %10115 = vmatprep.mubr.bf16.mxu0 %v9105
  %10116 = vmatmul.mubr.bf16.gmra.mxu0 %v9104
  %v10117 = vpop.f32.mrf.mxu0
  %v10118 = vadd.f32 0.0, %v10117
  %v10119 = vpop.f32.mrf.mxu0
  %v10120 = vpop.f32.mrf.mxu0
  %v10121 = vadd.f32 0.0, %v10120
  %v10122 = vpop.f32.mrf.mxu0
  %10123 = vmatprep.mubr.bf16.mxu0 %v9114
  %10124 = vmatmul.mubr.bf16.gmra.mxu0 %v9113
  %v10125 = vpop.f32.mrf.mxu0
  %v10126 = vadd.f32 0.0, %v10125
  %v10127 = vpop.f32.mrf.mxu0
  %v10128 = vpop.f32.mrf.mxu0
  %v10129 = vadd.f32 0.0, %v10128
  %v10130 = vpop.f32.mrf.mxu0
  %10131 = vmatprep.mubr.bf16.mxu0 %v9123
  %10132 = vmatmul.mubr.bf16.gmra.mxu0 %v9122
  %v10133 = vpop.f32.mrf.mxu0
  %v10134 = vadd.f32 0.0, %v10133
  %v10135 = vpop.f32.mrf.mxu0
  %v10136 = vpop.f32.mrf.mxu0
  %v10137 = vadd.f32 0.0, %v10136
  %v10138 = vpop.f32.mrf.mxu0
  %10139 = vdwg.mxu0
  %10140 = vmatprep.subr.bf16.mxu0 0
  %10141 = vmatpush1.bf16.msra.mxu0 %v9730
  %10142 = vmatprep.subr.bf16.mxu0 0
  %10143 = vmatpush1.bf16.msra.mxu0 %v9729
  %10144 = vmatprep.subr.bf16.mxu0 0
  %10145 = vmatpush1.bf16.msra.mxu0 %v9728
  %10146 = vmatprep.subr.bf16.mxu0 0
  %10147 = vmatpush1.bf16.msra.mxu0 %v9727
  %10148 = vmatprep.subr.bf16.mxu0 0
  %10149 = vmatpush1.bf16.msra.mxu0 %v9726
  %10150 = vmatprep.subr.bf16.mxu0 0
  %10151 = vmatpush1.bf16.msra.mxu0 %v9725
  %10152 = vmatprep.subr.bf16.mxu0 0
  %10153 = vmatpush1.bf16.msra.mxu0 %v9724
  %10154 = vmatprep.subr.bf16.mxu0 0
  %10155 = vmatpush1.bf16.msra.mxu0 %v9723
  %10156 = vmatprep.subr.bf16.mxu0 0
  %10157 = vmatpush2.bf16.msra.mxu0 %v9738
  %10158 = vmatprep.subr.bf16.mxu0 0
  %10159 = vmatpush2.bf16.msra.mxu0 %v9737
  %10160 = vmatprep.subr.bf16.mxu0 0
  %10161 = vmatpush2.bf16.msra.mxu0 %v9736
  %10162 = vmatprep.subr.bf16.mxu0 0
  %10163 = vmatpush2.bf16.msra.mxu0 %v9735
  %10164 = vmatprep.subr.bf16.mxu0 0
  %10165 = vmatpush2.bf16.msra.mxu0 %v9734
  %10166 = vmatprep.subr.bf16.mxu0 0
  %10167 = vmatpush2.bf16.msra.mxu0 %v9733
  %10168 = vmatprep.subr.bf16.mxu0 0
  %10169 = vmatpush2.bf16.msra.mxu0 %v9732
  %10170 = vmatprep.subr.bf16.mxu0 0
  %10171 = vmatpush2.bf16.msra.mxu0 %v9731
  %10172 = vmatprep.mubr.bf16.mxu0 %v8846
  %10173 = vmatmul.mubr.bf16.gmra.mxu0 %v8845
  %v10174 = vpop.f32.mrf.mxu0
  %v10175 = vadd.f32 %v9886, %v10174
  %v10176 = vpop.f32.mrf.mxu0
  %v10177 = vpop.f32.mrf.mxu0
  %v10178 = vadd.f32 %v9889, %v10177
  %v10179 = vpop.f32.mrf.mxu0
  %10180 = vmatprep.mubr.bf16.mxu0 %v8855
  %10181 = vmatmul.mubr.bf16.gmra.mxu0 %v8854
  %v10182 = vpop.f32.mrf.mxu0
  %v10183 = vadd.f32 %v9894, %v10182
  %v10184 = vpop.f32.mrf.mxu0
  %v10185 = vpop.f32.mrf.mxu0
  %v10186 = vadd.f32 %v9897, %v10185
  %v10187 = vpop.f32.mrf.mxu0
  %10188 = vmatprep.mubr.bf16.mxu0 %v8864
  %10189 = vmatmul.mubr.bf16.gmra.mxu0 %v8863
  %v10190 = vpop.f32.mrf.mxu0
  %v10191 = vadd.f32 %v9902, %v10190
  %v10192 = vpop.f32.mrf.mxu0
  %v10193 = vpop.f32.mrf.mxu0
  %v10194 = vadd.f32 %v9905, %v10193
  %v10195 = vpop.f32.mrf.mxu0
  %10196 = vmatprep.mubr.bf16.mxu0 %v8873
  %10197 = vmatmul.mubr.bf16.gmra.mxu0 %v8872
  %v10198 = vpop.f32.mrf.mxu0
  %v10199 = vadd.f32 %v9910, %v10198
  %v10200 = vpop.f32.mrf.mxu0
  %v10201 = vpop.f32.mrf.mxu0
  %v10202 = vadd.f32 %v9913, %v10201
  %v10203 = vpop.f32.mrf.mxu0
  %10204 = vmatprep.mubr.bf16.mxu0 %v8882
  %10205 = vmatmul.mubr.bf16.gmra.mxu0 %v8881
  %v10206 = vpop.f32.mrf.mxu0
  %v10207 = vadd.f32 %v9918, %v10206
  %v10208 = vpop.f32.mrf.mxu0
  %v10209 = vpop.f32.mrf.mxu0
  %v10210 = vadd.f32 %v9921, %v10209
  %v10211 = vpop.f32.mrf.mxu0
  %10212 = vmatprep.mubr.bf16.mxu0 %v8891
  %10213 = vmatmul.mubr.bf16.gmra.mxu0 %v8890
  %v10214 = vpop.f32.mrf.mxu0
  %v10215 = vadd.f32 %v9926, %v10214
  %v10216 = vpop.f32.mrf.mxu0
  %v10217 = vpop.f32.mrf.mxu0
  %v10218 = vadd.f32 %v9929, %v10217
  %v10219 = vpop.f32.mrf.mxu0
  %10220 = vmatprep.mubr.bf16.mxu0 %v8900
  %10221 = vmatmul.mubr.bf16.gmra.mxu0 %v8899
  %v10222 = vpop.f32.mrf.mxu0
  %v10223 = vadd.f32 %v9934, %v10222
  %v10224 = vpop.f32.mrf.mxu0
  %v10225 = vpop.f32.mrf.mxu0
  %v10226 = vadd.f32 %v9937, %v10225
  %v10227 = vpop.f32.mrf.mxu0
  %10228 = vmatprep.mubr.bf16.mxu0 %v8909
  %10229 = vmatmul.mubr.bf16.gmra.mxu0 %v8908
  %v10230 = vpop.f32.mrf.mxu0
  %v10231 = vadd.f32 %v9942, %v10230
  %v10232 = vpop.f32.mrf.mxu0
  %v10233 = vpop.f32.mrf.mxu0
  %v10234 = vadd.f32 %v9945, %v10233
  %v10235 = vpop.f32.mrf.mxu0
  %10236 = vmatprep.mubr.bf16.mxu0 %v8918
  %10237 = vmatmul.mubr.bf16.gmra.mxu0 %v8917
  %v10238 = vpop.f32.mrf.mxu0
  %v10239 = vadd.f32 %v9950, %v10238
  %v10240 = vpop.f32.mrf.mxu0
  %v10241 = vpop.f32.mrf.mxu0
  %v10242 = vadd.f32 %v9953, %v10241
  %v10243 = vpop.f32.mrf.mxu0
  %10244 = vmatprep.mubr.bf16.mxu0 %v8927
  %10245 = vmatmul.mubr.bf16.gmra.mxu0 %v8926
  %v10246 = vpop.f32.mrf.mxu0
  %v10247 = vadd.f32 %v9958, %v10246
  %v10248 = vpop.f32.mrf.mxu0
  %v10249 = vpop.f32.mrf.mxu0
  %v10250 = vadd.f32 %v9961, %v10249
  %v10251 = vpop.f32.mrf.mxu0
  %10252 = vmatprep.mubr.bf16.mxu0 %v8936
  %10253 = vmatmul.mubr.bf16.gmra.mxu0 %v8935
  %v10254 = vpop.f32.mrf.mxu0
  %v10255 = vadd.f32 %v9966, %v10254
  %v10256 = vpop.f32.mrf.mxu0
  %v10257 = vpop.f32.mrf.mxu0
  %v10258 = vadd.f32 %v9969, %v10257
  %v10259 = vpop.f32.mrf.mxu0
  %10260 = vmatprep.mubr.bf16.mxu0 %v8945
  %10261 = vmatmul.mubr.bf16.gmra.mxu0 %v8944
  %v10262 = vpop.f32.mrf.mxu0
  %v10263 = vadd.f32 %v9974, %v10262
  %v10264 = vpop.f32.mrf.mxu0
  %v10265 = vpop.f32.mrf.mxu0
  %v10266 = vadd.f32 %v9977, %v10265
  %v10267 = vpop.f32.mrf.mxu0
  %10268 = vmatprep.mubr.bf16.mxu0 %v8954
  %10269 = vmatmul.mubr.bf16.gmra.mxu0 %v8953
  %v10270 = vpop.f32.mrf.mxu0
  %v10271 = vadd.f32 %v9982, %v10270
  %v10272 = vpop.f32.mrf.mxu0
  %v10273 = vpop.f32.mrf.mxu0
  %v10274 = vadd.f32 %v9985, %v10273
  %v10275 = vpop.f32.mrf.mxu0
  %10276 = vmatprep.mubr.bf16.mxu0 %v8963
  %10277 = vmatmul.mubr.bf16.gmra.mxu0 %v8962
  %v10278 = vpop.f32.mrf.mxu0
  %v10279 = vadd.f32 %v9990, %v10278
  %v10280 = vpop.f32.mrf.mxu0
  %v10281 = vpop.f32.mrf.mxu0
  %v10282 = vadd.f32 %v9993, %v10281
  %v10283 = vpop.f32.mrf.mxu0
  %10284 = vmatprep.mubr.bf16.mxu0 %v8972
  %10285 = vmatmul.mubr.bf16.gmra.mxu0 %v8971
  %v10286 = vpop.f32.mrf.mxu0
  %v10287 = vadd.f32 %v9998, %v10286
  %v10288 = vpop.f32.mrf.mxu0
  %v10289 = vpop.f32.mrf.mxu0
  %v10290 = vadd.f32 %v10001, %v10289
  %v10291 = vpop.f32.mrf.mxu0
  %10292 = vmatprep.mubr.bf16.mxu0 %v8981
  %10293 = vmatmul.mubr.bf16.gmra.mxu0 %v8980
  %v10294 = vpop.f32.mrf.mxu0
  %v10295 = vadd.f32 %v10006, %v10294
  %v10296 = vpop.f32.mrf.mxu0
  %v10297 = vpop.f32.mrf.mxu0
  %v10298 = vadd.f32 %v10009, %v10297
  %v10299 = vpop.f32.mrf.mxu0
  %10300 = vmatprep.mubr.bf16.mxu0 %v8990
  %10301 = vmatmul.mubr.bf16.gmra.mxu0 %v8989
  %v10302 = vpop.f32.mrf.mxu0
  %v10303 = vadd.f32 %v10014, %v10302
  %v10304 = vpop.f32.mrf.mxu0
  %v10305 = vpop.f32.mrf.mxu0
  %v10306 = vadd.f32 %v10017, %v10305
  %v10307 = vpop.f32.mrf.mxu0
  %10308 = vmatprep.mubr.bf16.mxu0 %v8999
  %10309 = vmatmul.mubr.bf16.gmra.mxu0 %v8998
  %v10310 = vpop.f32.mrf.mxu0
  %v10311 = vadd.f32 %v10022, %v10310
  %v10312 = vpop.f32.mrf.mxu0
  %v10313 = vpop.f32.mrf.mxu0
  %v10314 = vadd.f32 %v10025, %v10313
  %v10315 = vpop.f32.mrf.mxu0
  %10316 = vmatprep.mubr.bf16.mxu0 %v9008
  %10317 = vmatmul.mubr.bf16.gmra.mxu0 %v9007
  %v10318 = vpop.f32.mrf.mxu0
  %v10319 = vadd.f32 %v10030, %v10318
  %v10320 = vpop.f32.mrf.mxu0
  %v10321 = vpop.f32.mrf.mxu0
  %v10322 = vadd.f32 %v10033, %v10321
  %v10323 = vpop.f32.mrf.mxu0
  %10324 = vmatprep.mubr.bf16.mxu0 %v9017
  %10325 = vmatmul.mubr.bf16.gmra.mxu0 %v9016
  %v10326 = vpop.f32.mrf.mxu0
  %v10327 = vadd.f32 %v10038, %v10326
  %v10328 = vpop.f32.mrf.mxu0
  %v10329 = vpop.f32.mrf.mxu0
  %v10330 = vadd.f32 %v10041, %v10329
  %v10331 = vpop.f32.mrf.mxu0
  %10332 = vmatprep.mubr.bf16.mxu0 %v9026
  %10333 = vmatmul.mubr.bf16.gmra.mxu0 %v9025
  %v10334 = vpop.f32.mrf.mxu0
  %v10335 = vadd.f32 %v10046, %v10334
  %v10336 = vpop.f32.mrf.mxu0
  %v10337 = vpop.f32.mrf.mxu0
  %v10338 = vadd.f32 %v10049, %v10337
  %v10339 = vpop.f32.mrf.mxu0
  %10340 = vmatprep.mubr.bf16.mxu0 %v9035
  %10341 = vmatmul.mubr.bf16.gmra.mxu0 %v9034
  %v10342 = vpop.f32.mrf.mxu0
  %v10343 = vadd.f32 %v10054, %v10342
  %v10344 = vpop.f32.mrf.mxu0
  %v10345 = vpop.f32.mrf.mxu0
  %v10346 = vadd.f32 %v10057, %v10345
  %v10347 = vpop.f32.mrf.mxu0
  %10348 = vmatprep.mubr.bf16.mxu0 %v9044
  %10349 = vmatmul.mubr.bf16.gmra.mxu0 %v9043
  %v10350 = vpop.f32.mrf.mxu0
  %v10351 = vadd.f32 %v10062, %v10350
  %v10352 = vpop.f32.mrf.mxu0
  %v10353 = vpop.f32.mrf.mxu0
  %v10354 = vadd.f32 %v10065, %v10353
  %v10355 = vpop.f32.mrf.mxu0
  %10356 = vmatprep.mubr.bf16.mxu0 %v9053
  %10357 = vmatmul.mubr.bf16.gmra.mxu0 %v9052
  %v10358 = vpop.f32.mrf.mxu0
  %v10359 = vadd.f32 %v10070, %v10358
  %v10360 = vpop.f32.mrf.mxu0
  %v10361 = vpop.f32.mrf.mxu0
  %v10362 = vadd.f32 %v10073, %v10361
  %v10363 = vpop.f32.mrf.mxu0
  %10364 = vmatprep.mubr.bf16.mxu0 %v9062
  %10365 = vmatmul.mubr.bf16.gmra.mxu0 %v9061
  %v10366 = vpop.f32.mrf.mxu0
  %v10367 = vadd.f32 %v10078, %v10366
  %v10368 = vpop.f32.mrf.mxu0
  %v10369 = vpop.f32.mrf.mxu0
  %v10370 = vadd.f32 %v10081, %v10369
  %v10371 = vpop.f32.mrf.mxu0
  %10372 = vmatprep.mubr.bf16.mxu0 %v9071
  %10373 = vmatmul.mubr.bf16.gmra.mxu0 %v9070
  %v10374 = vpop.f32.mrf.mxu0
  %v10375 = vadd.f32 %v10086, %v10374
  %v10376 = vpop.f32.mrf.mxu0
  %v10377 = vpop.f32.mrf.mxu0
  %v10378 = vadd.f32 %v10089, %v10377
  %v10379 = vpop.f32.mrf.mxu0
  %10380 = vmatprep.mubr.bf16.mxu0 %v9080
  %10381 = vmatmul.mubr.bf16.gmra.mxu0 %v9079
  %v10382 = vpop.f32.mrf.mxu0
  %v10383 = vadd.f32 %v10094, %v10382
  %v10384 = vpop.f32.mrf.mxu0
  %v10385 = vpop.f32.mrf.mxu0
  %v10386 = vadd.f32 %v10097, %v10385
  %v10387 = vpop.f32.mrf.mxu0
  %10388 = vmatprep.mubr.bf16.mxu0 %v9089
  %10389 = vmatmul.mubr.bf16.gmra.mxu0 %v9088
  %v10390 = vpop.f32.mrf.mxu0
  %v10391 = vadd.f32 %v10102, %v10390
  %v10392 = vpop.f32.mrf.mxu0
  %v10393 = vpop.f32.mrf.mxu0
  %v10394 = vadd.f32 %v10105, %v10393
  %v10395 = vpop.f32.mrf.mxu0
  %10396 = vmatprep.mubr.bf16.mxu0 %v9098
  %10397 = vmatmul.mubr.bf16.gmra.mxu0 %v9097
  %v10398 = vpop.f32.mrf.mxu0
  %v10399 = vadd.f32 %v10110, %v10398
  %v10400 = vpop.f32.mrf.mxu0
  %v10401 = vpop.f32.mrf.mxu0
  %v10402 = vadd.f32 %v10113, %v10401
  %v10403 = vpop.f32.mrf.mxu0
  %10404 = vmatprep.mubr.bf16.mxu0 %v9107
  %10405 = vmatmul.mubr.bf16.gmra.mxu0 %v9106
  %v10406 = vpop.f32.mrf.mxu0
  %v10407 = vadd.f32 %v10118, %v10406
  %v10408 = vpop.f32.mrf.mxu0
  %v10409 = vpop.f32.mrf.mxu0
  %v10410 = vadd.f32 %v10121, %v10409
  %v10411 = vpop.f32.mrf.mxu0
  %10412 = vmatprep.mubr.bf16.mxu0 %v9116
  %10413 = vmatmul.mubr.bf16.gmra.mxu0 %v9115
  %v10414 = vpop.f32.mrf.mxu0
  %v10415 = vadd.f32 %v10126, %v10414
  %v10416 = vpop.f32.mrf.mxu0
  %v10417 = vpop.f32.mrf.mxu0
  %v10418 = vadd.f32 %v10129, %v10417
  %v10419 = vpop.f32.mrf.mxu0
  %10420 = vmatprep.mubr.bf16.mxu0 %v9125
  %10421 = vmatmul.mubr.bf16.gmra.mxu0 %v9124
  %v10422 = vpop.f32.mrf.mxu0
  %v10423 = vadd.f32 %v10134, %v10422
  %v10424 = vpop.f32.mrf.mxu0
  %v10425 = vpop.f32.mrf.mxu0
  %v10426 = vadd.f32 %v10137, %v10425
  %v10427 = vpop.f32.mrf.mxu0
  %10428 = vdwg.mxu0
  %10429 = vmatprep.subr.bf16.mxu0 0
  %10430 = vmatpush1.bf16.msra.mxu0 %v9746
  %10431 = vmatprep.subr.bf16.mxu0 0
  %10432 = vmatpush1.bf16.msra.mxu0 %v9745
  %10433 = vmatprep.subr.bf16.mxu0 0
  %10434 = vmatpush1.bf16.msra.mxu0 %v9744
  %10435 = vmatprep.subr.bf16.mxu0 0
  %10436 = vmatpush1.bf16.msra.mxu0 %v9743
  %10437 = vmatprep.subr.bf16.mxu0 0
  %10438 = vmatpush1.bf16.msra.mxu0 %v9742
  %10439 = vmatprep.subr.bf16.mxu0 0
  %10440 = vmatpush1.bf16.msra.mxu0 %v9741
  %10441 = vmatprep.subr.bf16.mxu0 0
  %10442 = vmatpush1.bf16.msra.mxu0 %v9740
  %10443 = vmatprep.subr.bf16.mxu0 0
  %10444 = vmatpush1.bf16.msra.mxu0 %v9739
  %10445 = vmatprep.subr.bf16.mxu0 0
  %10446 = vmatpush2.bf16.msra.mxu0 %v9754
  %10447 = vmatprep.subr.bf16.mxu0 0
  %10448 = vmatpush2.bf16.msra.mxu0 %v9753
  %10449 = vmatprep.subr.bf16.mxu0 0
  %10450 = vmatpush2.bf16.msra.mxu0 %v9752
  %10451 = vmatprep.subr.bf16.mxu0 0
  %10452 = vmatpush2.bf16.msra.mxu0 %v9751
  %10453 = vmatprep.subr.bf16.mxu0 0
  %10454 = vmatpush2.bf16.msra.mxu0 %v9750
  %10455 = vmatprep.subr.bf16.mxu0 0
  %10456 = vmatpush2.bf16.msra.mxu0 %v9749
  %10457 = vmatprep.subr.bf16.mxu0 0
  %10458 = vmatpush2.bf16.msra.mxu0 %v9748
  %10459 = vmatprep.subr.bf16.mxu0 0
  %10460 = vmatpush2.bf16.msra.mxu0 %v9747
  %10461 = vmatprep.mubr.bf16.mxu0 %v8848
  %10462 = vmatmul.mubr.bf16.gmra.mxu0 %v8847
  %v10463 = vpop.f32.mrf.mxu0
  %v10464 = vadd.f32 %v10175, %v10463
  %v10465 = vpop.f32.mrf.mxu0
  %v10466 = vpop.f32.mrf.mxu0
  %v10467 = vadd.f32 %v10178, %v10466
  %v10468 = vpop.f32.mrf.mxu0
  %10469 = vmatprep.mubr.bf16.mxu0 %v8857
  %10470 = vmatmul.mubr.bf16.gmra.mxu0 %v8856
  %v10471 = vpop.f32.mrf.mxu0
  %v10472 = vadd.f32 %v10183, %v10471
  %v10473 = vpop.f32.mrf.mxu0
  %v10474 = vpop.f32.mrf.mxu0
  %v10475 = vadd.f32 %v10186, %v10474
  %v10476 = vpop.f32.mrf.mxu0
  %10477 = vmatprep.mubr.bf16.mxu0 %v8866
  %10478 = vmatmul.mubr.bf16.gmra.mxu0 %v8865
  %v10479 = vpop.f32.mrf.mxu0
  %v10480 = vadd.f32 %v10191, %v10479
  %v10481 = vpop.f32.mrf.mxu0
  %v10482 = vpop.f32.mrf.mxu0
  %v10483 = vadd.f32 %v10194, %v10482
  %v10484 = vpop.f32.mrf.mxu0
  %10485 = vmatprep.mubr.bf16.mxu0 %v8875
  %10486 = vmatmul.mubr.bf16.gmra.mxu0 %v8874
  %v10487 = vpop.f32.mrf.mxu0
  %v10488 = vadd.f32 %v10199, %v10487
  %v10489 = vpop.f32.mrf.mxu0
  %v10490 = vpop.f32.mrf.mxu0
  %v10491 = vadd.f32 %v10202, %v10490
  %v10492 = vpop.f32.mrf.mxu0
  %10493 = vmatprep.mubr.bf16.mxu0 %v8884
  %10494 = vmatmul.mubr.bf16.gmra.mxu0 %v8883
  %v10495 = vpop.f32.mrf.mxu0
  %v10496 = vadd.f32 %v10207, %v10495
  %v10497 = vpop.f32.mrf.mxu0
  %v10498 = vpop.f32.mrf.mxu0
  %v10499 = vadd.f32 %v10210, %v10498
  %v10500 = vpop.f32.mrf.mxu0
  %10501 = vmatprep.mubr.bf16.mxu0 %v8893
  %10502 = vmatmul.mubr.bf16.gmra.mxu0 %v8892
  %v10503 = vpop.f32.mrf.mxu0
  %v10504 = vadd.f32 %v10215, %v10503
  %v10505 = vpop.f32.mrf.mxu0
  %v10506 = vpop.f32.mrf.mxu0
  %v10507 = vadd.f32 %v10218, %v10506
  %v10508 = vpop.f32.mrf.mxu0
  %10509 = vmatprep.mubr.bf16.mxu0 %v8902
  %10510 = vmatmul.mubr.bf16.gmra.mxu0 %v8901
  %v10511 = vpop.f32.mrf.mxu0
  %v10512 = vadd.f32 %v10223, %v10511
  %v10513 = vpop.f32.mrf.mxu0
  %v10514 = vpop.f32.mrf.mxu0
  %v10515 = vadd.f32 %v10226, %v10514
  %v10516 = vpop.f32.mrf.mxu0
  %10517 = vmatprep.mubr.bf16.mxu0 %v8911
  %10518 = vmatmul.mubr.bf16.gmra.mxu0 %v8910
  %v10519 = vpop.f32.mrf.mxu0
  %v10520 = vadd.f32 %v10231, %v10519
  %v10521 = vpop.f32.mrf.mxu0
  %v10522 = vpop.f32.mrf.mxu0
  %v10523 = vadd.f32 %v10234, %v10522
  %v10524 = vpop.f32.mrf.mxu0
  %10525 = vmatprep.mubr.bf16.mxu0 %v8920
  %10526 = vmatmul.mubr.bf16.gmra.mxu0 %v8919
  %v10527 = vpop.f32.mrf.mxu0
  %v10528 = vadd.f32 %v10239, %v10527
  %v10529 = vpop.f32.mrf.mxu0
  %v10530 = vpop.f32.mrf.mxu0
  %v10531 = vadd.f32 %v10242, %v10530
  %v10532 = vpop.f32.mrf.mxu0
  %10533 = vmatprep.mubr.bf16.mxu0 %v8929
  %10534 = vmatmul.mubr.bf16.gmra.mxu0 %v8928
  %v10535 = vpop.f32.mrf.mxu0
  %v10536 = vadd.f32 %v10247, %v10535
  %v10537 = vpop.f32.mrf.mxu0
  %v10538 = vpop.f32.mrf.mxu0
  %v10539 = vadd.f32 %v10250, %v10538
  %v10540 = vpop.f32.mrf.mxu0
  %10541 = vmatprep.mubr.bf16.mxu0 %v8938
  %10542 = vmatmul.mubr.bf16.gmra.mxu0 %v8937
  %v10543 = vpop.f32.mrf.mxu0
  %v10544 = vadd.f32 %v10255, %v10543
  %v10545 = vpop.f32.mrf.mxu0
  %v10546 = vpop.f32.mrf.mxu0
  %v10547 = vadd.f32 %v10258, %v10546
  %v10548 = vpop.f32.mrf.mxu0
  %10549 = vmatprep.mubr.bf16.mxu0 %v8947
  %10550 = vmatmul.mubr.bf16.gmra.mxu0 %v8946
  %v10551 = vpop.f32.mrf.mxu0
  %v10552 = vadd.f32 %v10263, %v10551
  %v10553 = vpop.f32.mrf.mxu0
  %v10554 = vpop.f32.mrf.mxu0
  %v10555 = vadd.f32 %v10266, %v10554
  %v10556 = vpop.f32.mrf.mxu0
  %10557 = vmatprep.mubr.bf16.mxu0 %v8956
  %10558 = vmatmul.mubr.bf16.gmra.mxu0 %v8955
  %v10559 = vpop.f32.mrf.mxu0
  %v10560 = vadd.f32 %v10271, %v10559
  %v10561 = vpop.f32.mrf.mxu0
  %v10562 = vpop.f32.mrf.mxu0
  %v10563 = vadd.f32 %v10274, %v10562
  %v10564 = vpop.f32.mrf.mxu0
  %10565 = vmatprep.mubr.bf16.mxu0 %v8965
  %10566 = vmatmul.mubr.bf16.gmra.mxu0 %v8964
  %v10567 = vpop.f32.mrf.mxu0
  %v10568 = vadd.f32 %v10279, %v10567
  %v10569 = vpop.f32.mrf.mxu0
  %v10570 = vpop.f32.mrf.mxu0
  %v10571 = vadd.f32 %v10282, %v10570
  %v10572 = vpop.f32.mrf.mxu0
  %10573 = vmatprep.mubr.bf16.mxu0 %v8974
  %10574 = vmatmul.mubr.bf16.gmra.mxu0 %v8973
  %v10575 = vpop.f32.mrf.mxu0
  %v10576 = vadd.f32 %v10287, %v10575
  %v10577 = vpop.f32.mrf.mxu0
  %v10578 = vpop.f32.mrf.mxu0
  %v10579 = vadd.f32 %v10290, %v10578
  %v10580 = vpop.f32.mrf.mxu0
  %10581 = vmatprep.mubr.bf16.mxu0 %v8983
  %10582 = vmatmul.mubr.bf16.gmra.mxu0 %v8982
  %v10583 = vpop.f32.mrf.mxu0
  %v10584 = vadd.f32 %v10295, %v10583
  %v10585 = vpop.f32.mrf.mxu0
  %v10586 = vpop.f32.mrf.mxu0
  %v10587 = vadd.f32 %v10298, %v10586
  %v10588 = vpop.f32.mrf.mxu0
  %10589 = vmatprep.mubr.bf16.mxu0 %v8992
  %10590 = vmatmul.mubr.bf16.gmra.mxu0 %v8991
  %v10591 = vpop.f32.mrf.mxu0
  %v10592 = vadd.f32 %v10303, %v10591
  %v10593 = vpop.f32.mrf.mxu0
  %v10594 = vpop.f32.mrf.mxu0
  %v10595 = vadd.f32 %v10306, %v10594
  %v10596 = vpop.f32.mrf.mxu0
  %10597 = vmatprep.mubr.bf16.mxu0 %v9001
  %10598 = vmatmul.mubr.bf16.gmra.mxu0 %v9000
  %v10599 = vpop.f32.mrf.mxu0
  %v10600 = vadd.f32 %v10311, %v10599
  %v10601 = vpop.f32.mrf.mxu0
  %v10602 = vpop.f32.mrf.mxu0
  %v10603 = vadd.f32 %v10314, %v10602
  %v10604 = vpop.f32.mrf.mxu0
  %10605 = vmatprep.mubr.bf16.mxu0 %v9010
  %10606 = vmatmul.mubr.bf16.gmra.mxu0 %v9009
  %v10607 = vpop.f32.mrf.mxu0
  %v10608 = vadd.f32 %v10319, %v10607
  %v10609 = vpop.f32.mrf.mxu0
  %v10610 = vpop.f32.mrf.mxu0
  %v10611 = vadd.f32 %v10322, %v10610
  %v10612 = vpop.f32.mrf.mxu0
  %10613 = vmatprep.mubr.bf16.mxu0 %v9019
  %10614 = vmatmul.mubr.bf16.gmra.mxu0 %v9018
  %v10615 = vpop.f32.mrf.mxu0
  %v10616 = vadd.f32 %v10327, %v10615
  %v10617 = vpop.f32.mrf.mxu0
  %v10618 = vpop.f32.mrf.mxu0
  %v10619 = vadd.f32 %v10330, %v10618
  %v10620 = vpop.f32.mrf.mxu0
  %10621 = vmatprep.mubr.bf16.mxu0 %v9028
  %10622 = vmatmul.mubr.bf16.gmra.mxu0 %v9027
  %v10623 = vpop.f32.mrf.mxu0
  %v10624 = vadd.f32 %v10335, %v10623
  %v10625 = vpop.f32.mrf.mxu0
  %v10626 = vpop.f32.mrf.mxu0
  %v10627 = vadd.f32 %v10338, %v10626
  %v10628 = vpop.f32.mrf.mxu0
  %10629 = vmatprep.mubr.bf16.mxu0 %v9037
  %10630 = vmatmul.mubr.bf16.gmra.mxu0 %v9036
  %v10631 = vpop.f32.mrf.mxu0
  %v10632 = vadd.f32 %v10343, %v10631
  %v10633 = vpop.f32.mrf.mxu0
  %v10634 = vpop.f32.mrf.mxu0
  %v10635 = vadd.f32 %v10346, %v10634
  %v10636 = vpop.f32.mrf.mxu0
  %10637 = vmatprep.mubr.bf16.mxu0 %v9046
  %10638 = vmatmul.mubr.bf16.gmra.mxu0 %v9045
  %v10639 = vpop.f32.mrf.mxu0
  %v10640 = vadd.f32 %v10351, %v10639
  %v10641 = vpop.f32.mrf.mxu0
  %v10642 = vpop.f32.mrf.mxu0
  %v10643 = vadd.f32 %v10354, %v10642
  %v10644 = vpop.f32.mrf.mxu0
  %10645 = vmatprep.mubr.bf16.mxu0 %v9055
  %10646 = vmatmul.mubr.bf16.gmra.mxu0 %v9054
  %v10647 = vpop.f32.mrf.mxu0
  %v10648 = vadd.f32 %v10359, %v10647
  %v10649 = vpop.f32.mrf.mxu0
  %v10650 = vpop.f32.mrf.mxu0
  %v10651 = vadd.f32 %v10362, %v10650
  %v10652 = vpop.f32.mrf.mxu0
  %10653 = vmatprep.mubr.bf16.mxu0 %v9064
  %10654 = vmatmul.mubr.bf16.gmra.mxu0 %v9063
  %v10655 = vpop.f32.mrf.mxu0
  %v10656 = vadd.f32 %v10367, %v10655
  %v10657 = vpop.f32.mrf.mxu0
  %v10658 = vpop.f32.mrf.mxu0
  %v10659 = vadd.f32 %v10370, %v10658
  %v10660 = vpop.f32.mrf.mxu0
  %10661 = vmatprep.mubr.bf16.mxu0 %v9073
  %10662 = vmatmul.mubr.bf16.gmra.mxu0 %v9072
  %v10663 = vpop.f32.mrf.mxu0
  %v10664 = vadd.f32 %v10375, %v10663
  %v10665 = vpop.f32.mrf.mxu0
  %v10666 = vpop.f32.mrf.mxu0
  %v10667 = vadd.f32 %v10378, %v10666
  %v10668 = vpop.f32.mrf.mxu0
  %10669 = vmatprep.mubr.bf16.mxu0 %v9082
  %10670 = vmatmul.mubr.bf16.gmra.mxu0 %v9081
  %v10671 = vpop.f32.mrf.mxu0
  %v10672 = vadd.f32 %v10383, %v10671
  %v10673 = vpop.f32.mrf.mxu0
  %v10674 = vpop.f32.mrf.mxu0
  %v10675 = vadd.f32 %v10386, %v10674
  %v10676 = vpop.f32.mrf.mxu0
  %10677 = vmatprep.mubr.bf16.mxu0 %v9091
  %10678 = vmatmul.mubr.bf16.gmra.mxu0 %v9090
  %v10679 = vpop.f32.mrf.mxu0
  %v10680 = vadd.f32 %v10391, %v10679
  %v10681 = vpop.f32.mrf.mxu0
  %v10682 = vpop.f32.mrf.mxu0
  %v10683 = vadd.f32 %v10394, %v10682
  %v10684 = vpop.f32.mrf.mxu0
  %10685 = vmatprep.mubr.bf16.mxu0 %v9100
  %10686 = vmatmul.mubr.bf16.gmra.mxu0 %v9099
  %v10687 = vpop.f32.mrf.mxu0
  %v10688 = vadd.f32 %v10399, %v10687
  %v10689 = vpop.f32.mrf.mxu0
  %v10690 = vpop.f32.mrf.mxu0
  %v10691 = vadd.f32 %v10402, %v10690
  %v10692 = vpop.f32.mrf.mxu0
  %10693 = vmatprep.mubr.bf16.mxu0 %v9109
  %10694 = vmatmul.mubr.bf16.gmra.mxu0 %v9108
  %v10695 = vpop.f32.mrf.mxu0
  %v10696 = vadd.f32 %v10407, %v10695
  %v10697 = vpop.f32.mrf.mxu0
  %v10698 = vpop.f32.mrf.mxu0
  %v10699 = vadd.f32 %v10410, %v10698
  %v10700 = vpop.f32.mrf.mxu0
  %10701 = vmatprep.mubr.bf16.mxu0 %v9118
  %10702 = vmatmul.mubr.bf16.gmra.mxu0 %v9117
  %v10703 = vpop.f32.mrf.mxu0
  %v10704 = vadd.f32 %v10415, %v10703
  %v10705 = vpop.f32.mrf.mxu0
  %v10706 = vpop.f32.mrf.mxu0
  %v10707 = vadd.f32 %v10418, %v10706
  %v10708 = vpop.f32.mrf.mxu0
  %10709 = vmatprep.mubr.bf16.mxu0 %v9127
  %10710 = vmatmul.mubr.bf16.gmra.mxu0 %v9126
  %v10711 = vpop.f32.mrf.mxu0
  %v10712 = vadd.f32 %v10423, %v10711
  %v10713 = vpop.f32.mrf.mxu0
  %v10714 = vpop.f32.mrf.mxu0
  %v10715 = vadd.f32 %v10426, %v10714
  %v10716 = vpop.f32.mrf.mxu0
  %10717 = vdwg.mxu0
  %10718 = vmatprep.subr.bf16.mxu0 0
  %10719 = vmatpush1.bf16.msra.mxu0 %v9762
  %10720 = vmatprep.subr.bf16.mxu0 0
  %10721 = vmatpush1.bf16.msra.mxu0 %v9761
  %10722 = vmatprep.subr.bf16.mxu0 0
  %10723 = vmatpush1.bf16.msra.mxu0 %v9760
  %10724 = vmatprep.subr.bf16.mxu0 0
  %10725 = vmatpush1.bf16.msra.mxu0 %v9759
  %10726 = vmatprep.subr.bf16.mxu0 0
  %10727 = vmatpush1.bf16.msra.mxu0 %v9758
  %10728 = vmatprep.subr.bf16.mxu0 0
  %10729 = vmatpush1.bf16.msra.mxu0 %v9757
  %10730 = vmatprep.subr.bf16.mxu0 0
  %10731 = vmatpush1.bf16.msra.mxu0 %v9756
  %10732 = vmatprep.subr.bf16.mxu0 0
  %10733 = vmatpush1.bf16.msra.mxu0 %v9755
  %10734 = vmatprep.subr.bf16.mxu0 0
  %10735 = vmatpush2.bf16.msra.mxu0 %v9770
  %10736 = vmatprep.subr.bf16.mxu0 0
  %10737 = vmatpush2.bf16.msra.mxu0 %v9769
  %10738 = vmatprep.subr.bf16.mxu0 0
  %10739 = vmatpush2.bf16.msra.mxu0 %v9768
  %10740 = vmatprep.subr.bf16.mxu0 0
  %10741 = vmatpush2.bf16.msra.mxu0 %v9767
  %10742 = vmatprep.subr.bf16.mxu0 0
  %10743 = vmatpush2.bf16.msra.mxu0 %v9766
  %10744 = vmatprep.subr.bf16.mxu0 0
  %10745 = vmatpush2.bf16.msra.mxu0 %v9765
  %10746 = vmatprep.subr.bf16.mxu0 0
  %10747 = vmatpush2.bf16.msra.mxu0 %v9764
  %10748 = vmatprep.subr.bf16.mxu0 0
  %10749 = vmatpush2.bf16.msra.mxu0 %v9763
  %10750 = vmatprep.mubr.bf16.mxu0 %v8850
  %10751 = vmatmul.mubr.bf16.gmra.mxu0 %v8849
  %v10752 = vpop.f32.mrf.mxu0
  %v10753 = vadd.f32 %v10464, %v10752
  %v10754 = vpop.f32.mrf.mxu0
  %v10755 = vpop.f32.mrf.mxu0
  %v10756 = vadd.f32 %v10467, %v10755
  %v10757 = vpop.f32.mrf.mxu0
  %10758 = vmatprep.mubr.bf16.mxu0 %v8859
  %10759 = vmatmul.mubr.bf16.gmra.mxu0 %v8858
  %v10760 = vpop.f32.mrf.mxu0
  %v10761 = vadd.f32 %v10472, %v10760
  %v10762 = vpop.f32.mrf.mxu0
  %v10763 = vpop.f32.mrf.mxu0
  %v10764 = vadd.f32 %v10475, %v10763
  %v10765 = vpop.f32.mrf.mxu0
  %10766 = vmatprep.mubr.bf16.mxu0 %v8868
  %10767 = vmatmul.mubr.bf16.gmra.mxu0 %v8867
  %v10768 = vpop.f32.mrf.mxu0
  %v10769 = vadd.f32 %v10480, %v10768
  %v10770 = vpop.f32.mrf.mxu0
  %v10771 = vpop.f32.mrf.mxu0
  %v10772 = vadd.f32 %v10483, %v10771
  %v10773 = vpop.f32.mrf.mxu0
  %10774 = vmatprep.mubr.bf16.mxu0 %v8877
  %10775 = vmatmul.mubr.bf16.gmra.mxu0 %v8876
  %v10776 = vpop.f32.mrf.mxu0
  %v10777 = vadd.f32 %v10488, %v10776
  %v10778 = vpop.f32.mrf.mxu0
  %v10779 = vpop.f32.mrf.mxu0
  %v10780 = vadd.f32 %v10491, %v10779
  %v10781 = vpop.f32.mrf.mxu0
  %10782 = vmatprep.mubr.bf16.mxu0 %v8886
  %10783 = vmatmul.mubr.bf16.gmra.mxu0 %v8885
  %v10784 = vpop.f32.mrf.mxu0
  %v10785 = vadd.f32 %v10496, %v10784
  %v10786 = vpop.f32.mrf.mxu0
  %v10787 = vpop.f32.mrf.mxu0
  %v10788 = vadd.f32 %v10499, %v10787
  %v10789 = vpop.f32.mrf.mxu0
  %10790 = vmatprep.mubr.bf16.mxu0 %v8895
  %10791 = vmatmul.mubr.bf16.gmra.mxu0 %v8894
  %v10792 = vpop.f32.mrf.mxu0
  %v10793 = vadd.f32 %v10504, %v10792
  %v10794 = vpop.f32.mrf.mxu0
  %v10795 = vpop.f32.mrf.mxu0
  %v10796 = vadd.f32 %v10507, %v10795
  %v10797 = vpop.f32.mrf.mxu0
  %10798 = vmatprep.mubr.bf16.mxu0 %v8904
  %10799 = vmatmul.mubr.bf16.gmra.mxu0 %v8903
  %v10800 = vpop.f32.mrf.mxu0
  %v10801 = vadd.f32 %v10512, %v10800
  %v10802 = vpop.f32.mrf.mxu0
  %v10803 = vpop.f32.mrf.mxu0
  %v10804 = vadd.f32 %v10515, %v10803
  %v10805 = vpop.f32.mrf.mxu0
  %10806 = vmatprep.mubr.bf16.mxu0 %v8913
  %10807 = vmatmul.mubr.bf16.gmra.mxu0 %v8912
  %v10808 = vpop.f32.mrf.mxu0
  %v10809 = vadd.f32 %v10520, %v10808
  %v10810 = vpop.f32.mrf.mxu0
  %v10811 = vpop.f32.mrf.mxu0
  %v10812 = vadd.f32 %v10523, %v10811
  %v10813 = vpop.f32.mrf.mxu0
  %10814 = vmatprep.mubr.bf16.mxu0 %v8922
  %10815 = vmatmul.mubr.bf16.gmra.mxu0 %v8921
  %v10816 = vpop.f32.mrf.mxu0
  %v10817 = vadd.f32 %v10528, %v10816
  %v10818 = vpop.f32.mrf.mxu0
  %v10819 = vpop.f32.mrf.mxu0
  %v10820 = vadd.f32 %v10531, %v10819
  %v10821 = vpop.f32.mrf.mxu0
  %10822 = vmatprep.mubr.bf16.mxu0 %v8931
  %10823 = vmatmul.mubr.bf16.gmra.mxu0 %v8930
  %v10824 = vpop.f32.mrf.mxu0
  %v10825 = vadd.f32 %v10536, %v10824
  %v10826 = vpop.f32.mrf.mxu0
  %v10827 = vpop.f32.mrf.mxu0
  %v10828 = vadd.f32 %v10539, %v10827
  %v10829 = vpop.f32.mrf.mxu0
  %10830 = vmatprep.mubr.bf16.mxu0 %v8940
  %10831 = vmatmul.mubr.bf16.gmra.mxu0 %v8939
  %v10832 = vpop.f32.mrf.mxu0
  %v10833 = vadd.f32 %v10544, %v10832
  %v10834 = vpop.f32.mrf.mxu0
  %v10835 = vpop.f32.mrf.mxu0
  %v10836 = vadd.f32 %v10547, %v10835
  %v10837 = vpop.f32.mrf.mxu0
  %10838 = vmatprep.mubr.bf16.mxu0 %v8949
  %10839 = vmatmul.mubr.bf16.gmra.mxu0 %v8948
  %v10840 = vpop.f32.mrf.mxu0
  %v10841 = vadd.f32 %v10552, %v10840
  %v10842 = vpop.f32.mrf.mxu0
  %v10843 = vpop.f32.mrf.mxu0
  %v10844 = vadd.f32 %v10555, %v10843
  %v10845 = vpop.f32.mrf.mxu0
  %10846 = vmatprep.mubr.bf16.mxu0 %v8958
  %10847 = vmatmul.mubr.bf16.gmra.mxu0 %v8957
  %v10848 = vpop.f32.mrf.mxu0
  %v10849 = vadd.f32 %v10560, %v10848
  %v10850 = vpop.f32.mrf.mxu0
  %v10851 = vpop.f32.mrf.mxu0
  %v10852 = vadd.f32 %v10563, %v10851
  %v10853 = vpop.f32.mrf.mxu0
  %10854 = vmatprep.mubr.bf16.mxu0 %v8967
  %10855 = vmatmul.mubr.bf16.gmra.mxu0 %v8966
  %v10856 = vpop.f32.mrf.mxu0
  %v10857 = vadd.f32 %v10568, %v10856
  %v10858 = vpop.f32.mrf.mxu0
  %v10859 = vpop.f32.mrf.mxu0
  %v10860 = vadd.f32 %v10571, %v10859
  %v10861 = vpop.f32.mrf.mxu0
  %10862 = vmatprep.mubr.bf16.mxu0 %v8976
  %10863 = vmatmul.mubr.bf16.gmra.mxu0 %v8975
  %v10864 = vpop.f32.mrf.mxu0
  %v10865 = vadd.f32 %v10576, %v10864
  %v10866 = vpop.f32.mrf.mxu0
  %v10867 = vpop.f32.mrf.mxu0
  %v10868 = vadd.f32 %v10579, %v10867
  %v10869 = vpop.f32.mrf.mxu0
  %10870 = vmatprep.mubr.bf16.mxu0 %v8985
  %10871 = vmatmul.mubr.bf16.gmra.mxu0 %v8984
  %v10872 = vpop.f32.mrf.mxu0
  %v10873 = vadd.f32 %v10584, %v10872
  %v10874 = vpop.f32.mrf.mxu0
  %v10875 = vpop.f32.mrf.mxu0
  %v10876 = vadd.f32 %v10587, %v10875
  %v10877 = vpop.f32.mrf.mxu0
  %10878 = vmatprep.mubr.bf16.mxu0 %v8994
  %10879 = vmatmul.mubr.bf16.gmra.mxu0 %v8993
  %v10880 = vpop.f32.mrf.mxu0
  %v10881 = vadd.f32 %v10592, %v10880
  %v10882 = vpop.f32.mrf.mxu0
  %v10883 = vpop.f32.mrf.mxu0
  %v10884 = vadd.f32 %v10595, %v10883
  %v10885 = vpop.f32.mrf.mxu0
  %10886 = vmatprep.mubr.bf16.mxu0 %v9003
  %10887 = vmatmul.mubr.bf16.gmra.mxu0 %v9002
  %v10888 = vpop.f32.mrf.mxu0
  %v10889 = vadd.f32 %v10600, %v10888
  %v10890 = vpop.f32.mrf.mxu0
  %v10891 = vpop.f32.mrf.mxu0
  %v10892 = vadd.f32 %v10603, %v10891
  %v10893 = vpop.f32.mrf.mxu0
  %10894 = vmatprep.mubr.bf16.mxu0 %v9012
  %10895 = vmatmul.mubr.bf16.gmra.mxu0 %v9011
  %v10896 = vpop.f32.mrf.mxu0
  %v10897 = vadd.f32 %v10608, %v10896
  %v10898 = vpop.f32.mrf.mxu0
  %v10899 = vpop.f32.mrf.mxu0
  %v10900 = vadd.f32 %v10611, %v10899
  %v10901 = vpop.f32.mrf.mxu0
  %10902 = vmatprep.mubr.bf16.mxu0 %v9021
  %10903 = vmatmul.mubr.bf16.gmra.mxu0 %v9020
  %v10904 = vpop.f32.mrf.mxu0
  %v10905 = vadd.f32 %v10616, %v10904
  %v10906 = vpop.f32.mrf.mxu0
  %v10907 = vpop.f32.mrf.mxu0
  %v10908 = vadd.f32 %v10619, %v10907
  %v10909 = vpop.f32.mrf.mxu0
  %10910 = vmatprep.mubr.bf16.mxu0 %v9030
  %10911 = vmatmul.mubr.bf16.gmra.mxu0 %v9029
  %v10912 = vpop.f32.mrf.mxu0
  %v10913 = vadd.f32 %v10624, %v10912
  %v10914 = vpop.f32.mrf.mxu0
  %v10915 = vpop.f32.mrf.mxu0
  %v10916 = vadd.f32 %v10627, %v10915
  %v10917 = vpop.f32.mrf.mxu0
  %10918 = vmatprep.mubr.bf16.mxu0 %v9039
  %10919 = vmatmul.mubr.bf16.gmra.mxu0 %v9038
  %v10920 = vpop.f32.mrf.mxu0
  %v10921 = vadd.f32 %v10632, %v10920
  %v10922 = vpop.f32.mrf.mxu0
  %v10923 = vpop.f32.mrf.mxu0
  %v10924 = vadd.f32 %v10635, %v10923
  %v10925 = vpop.f32.mrf.mxu0
  %10926 = vmatprep.mubr.bf16.mxu0 %v9048
  %10927 = vmatmul.mubr.bf16.gmra.mxu0 %v9047
  %v10928 = vpop.f32.mrf.mxu0
  %v10929 = vadd.f32 %v10640, %v10928
  %v10930 = vpop.f32.mrf.mxu0
  %v10931 = vpop.f32.mrf.mxu0
  %v10932 = vadd.f32 %v10643, %v10931
  %v10933 = vpop.f32.mrf.mxu0
  %10934 = vmatprep.mubr.bf16.mxu0 %v9057
  %10935 = vmatmul.mubr.bf16.gmra.mxu0 %v9056
  %v10936 = vpop.f32.mrf.mxu0
  %v10937 = vadd.f32 %v10648, %v10936
  %v10938 = vpop.f32.mrf.mxu0
  %v10939 = vpop.f32.mrf.mxu0
  %v10940 = vadd.f32 %v10651, %v10939
  %v10941 = vpop.f32.mrf.mxu0
  %10942 = vmatprep.mubr.bf16.mxu0 %v9066
  %10943 = vmatmul.mubr.bf16.gmra.mxu0 %v9065
  %v10944 = vpop.f32.mrf.mxu0
  %v10945 = vadd.f32 %v10656, %v10944
  %v10946 = vpop.f32.mrf.mxu0
  %v10947 = vpop.f32.mrf.mxu0
  %v10948 = vadd.f32 %v10659, %v10947
  %v10949 = vpop.f32.mrf.mxu0
  %10950 = vmatprep.mubr.bf16.mxu0 %v9075
  %10951 = vmatmul.mubr.bf16.gmra.mxu0 %v9074
  %v10952 = vpop.f32.mrf.mxu0
  %v10953 = vadd.f32 %v10664, %v10952
  %v10954 = vpop.f32.mrf.mxu0
  %v10955 = vpop.f32.mrf.mxu0
  %v10956 = vadd.f32 %v10667, %v10955
  %v10957 = vpop.f32.mrf.mxu0
  %10958 = vmatprep.mubr.bf16.mxu0 %v9084
  %10959 = vmatmul.mubr.bf16.gmra.mxu0 %v9083
  %v10960 = vpop.f32.mrf.mxu0
  %v10961 = vadd.f32 %v10672, %v10960
  %v10962 = vpop.f32.mrf.mxu0
  %v10963 = vpop.f32.mrf.mxu0
  %v10964 = vadd.f32 %v10675, %v10963
  %v10965 = vpop.f32.mrf.mxu0
  %10966 = vmatprep.mubr.bf16.mxu0 %v9093
  %10967 = vmatmul.mubr.bf16.gmra.mxu0 %v9092
  %v10968 = vpop.f32.mrf.mxu0
  %v10969 = vadd.f32 %v10680, %v10968
  %v10970 = vpop.f32.mrf.mxu0
  %v10971 = vpop.f32.mrf.mxu0
  %v10972 = vadd.f32 %v10683, %v10971
  %v10973 = vpop.f32.mrf.mxu0
  %10974 = vmatprep.mubr.bf16.mxu0 %v9102
  %10975 = vmatmul.mubr.bf16.gmra.mxu0 %v9101
  %v10976 = vpop.f32.mrf.mxu0
  %v10977 = vadd.f32 %v10688, %v10976
  %v10978 = vpop.f32.mrf.mxu0
  %v10979 = vpop.f32.mrf.mxu0
  %v10980 = vadd.f32 %v10691, %v10979
  %v10981 = vpop.f32.mrf.mxu0
  %10982 = vmatprep.mubr.bf16.mxu0 %v9111
  %10983 = vmatmul.mubr.bf16.gmra.mxu0 %v9110
  %v10984 = vpop.f32.mrf.mxu0
  %v10985 = vadd.f32 %v10696, %v10984
  %v10986 = vpop.f32.mrf.mxu0
  %v10987 = vpop.f32.mrf.mxu0
  %v10988 = vadd.f32 %v10699, %v10987
  %v10989 = vpop.f32.mrf.mxu0
  %10990 = vmatprep.mubr.bf16.mxu0 %v9120
  %10991 = vmatmul.mubr.bf16.gmra.mxu0 %v9119
  %v10992 = vpop.f32.mrf.mxu0
  %v10993 = vadd.f32 %v10704, %v10992
  %v10994 = vpop.f32.mrf.mxu0
  %v10995 = vpop.f32.mrf.mxu0
  %v10996 = vadd.f32 %v10707, %v10995
  %v10997 = vpop.f32.mrf.mxu0
  %10998 = vmatprep.mubr.bf16.mxu0 %v9129
  %10999 = vmatmul.mubr.bf16.gmra.mxu0 %v9128
  %v11000 = vpop.f32.mrf.mxu0
  %v11001 = vadd.f32 %v10712, %v11000
  %v11002 = vpop.f32.mrf.mxu0
  %v11003 = vpop.f32.mrf.mxu0
  %v11004 = vadd.f32 %v10715, %v11003
  %v11005 = vpop.f32.mrf.mxu0
  %11006 = vdwg.mxu0
  %11007 = vmatprep.subr.bf16.mxu0 0
  %11008 = vmatpush1.bf16.msra.mxu0 %v9778
  %11009 = vmatprep.subr.bf16.mxu0 0
  %11010 = vmatpush1.bf16.msra.mxu0 %v9777
  %11011 = vmatprep.subr.bf16.mxu0 0
  %11012 = vmatpush1.bf16.msra.mxu0 %v9776
  %11013 = vmatprep.subr.bf16.mxu0 0
  %11014 = vmatpush1.bf16.msra.mxu0 %v9775
  %11015 = vmatprep.subr.bf16.mxu0 0
  %11016 = vmatpush1.bf16.msra.mxu0 %v9774
  %11017 = vmatprep.subr.bf16.mxu0 0
  %11018 = vmatpush1.bf16.msra.mxu0 %v9773
  %11019 = vmatprep.subr.bf16.mxu0 0
  %11020 = vmatpush1.bf16.msra.mxu0 %v9772
  %11021 = vmatprep.subr.bf16.mxu0 0
  %11022 = vmatpush1.bf16.msra.mxu0 %v9771
  %11023 = vmatprep.subr.bf16.mxu0 0
  %11024 = vmatpush2.bf16.msra.mxu0 0
  %11025 = vmatprep.subr.bf16.mxu0 0
  %11026 = vmatpush2.bf16.msra.mxu0 0
  %11027 = vmatprep.subr.bf16.mxu0 0
  %11028 = vmatpush2.bf16.msra.mxu0 0
  %11029 = vmatprep.subr.bf16.mxu0 0
  %11030 = vmatpush2.bf16.msra.mxu0 0
  %11031 = vmatprep.subr.bf16.mxu0 0
  %11032 = vmatpush2.bf16.msra.mxu0 0
  %11033 = vmatprep.subr.bf16.mxu0 0
  %11034 = vmatpush2.bf16.msra.mxu0 0
  %11035 = vmatprep.subr.bf16.mxu0 0
  %11036 = vmatpush2.bf16.msra.mxu0 0
  %11037 = vmatprep.subr.bf16.mxu0 0
  %11038 = vmatpush2.bf16.msra.mxu0 0
  %11039 = vmatprep.mubr.bf16.mxu0 0
  %11040 = vmatmul.mubr.bf16.gmra.mxu0 %v8851
  %v11041 = vpop.f32.mrf.mxu0
  %v11042 = vadd.f32 %v10753, %v11041
  %v11043 = vpop.f32.mrf.mxu0
  %v11044 = vpop.f32.mrf.mxu0
  %v11045 = vadd.f32 %v10756, %v11044
  %v11046 = vpop.f32.mrf.mxu0
  %11047 = vmatprep.mubr.bf16.mxu0 0
  %11048 = vmatmul.mubr.bf16.gmra.mxu0 %v8860
  %v11049 = vpop.f32.mrf.mxu0
  %v11050 = vadd.f32 %v10761, %v11049
  %v11051 = vpop.f32.mrf.mxu0
  %v11052 = vpop.f32.mrf.mxu0
  %v11053 = vadd.f32 %v10764, %v11052
  %v11054 = vpop.f32.mrf.mxu0
  %11055 = vmatprep.mubr.bf16.mxu0 0
  %11056 = vmatmul.mubr.bf16.gmra.mxu0 %v8869
  %v11057 = vpop.f32.mrf.mxu0
  %v11058 = vadd.f32 %v10769, %v11057
  %v11059 = vpop.f32.mrf.mxu0
  %v11060 = vpop.f32.mrf.mxu0
  %v11061 = vadd.f32 %v10772, %v11060
  %v11062 = vpop.f32.mrf.mxu0
  %11063 = vmatprep.mubr.bf16.mxu0 0
  %11064 = vmatmul.mubr.bf16.gmra.mxu0 %v8878
  %v11065 = vpop.f32.mrf.mxu0
  %v11066 = vadd.f32 %v10777, %v11065
  %v11067 = vpop.f32.mrf.mxu0
  %v11068 = vpop.f32.mrf.mxu0
  %v11069 = vadd.f32 %v10780, %v11068
  %v11070 = vpop.f32.mrf.mxu0
  %11071 = vmatprep.mubr.bf16.mxu0 0
  %11072 = vmatmul.mubr.bf16.gmra.mxu0 %v8887
  %v11073 = vpop.f32.mrf.mxu0
  %v11074 = vadd.f32 %v10785, %v11073
  %v11075 = vpop.f32.mrf.mxu0
  %v11076 = vpop.f32.mrf.mxu0
  %v11077 = vadd.f32 %v10788, %v11076
  %v11078 = vpop.f32.mrf.mxu0
  %11079 = vmatprep.mubr.bf16.mxu0 0
  %11080 = vmatmul.mubr.bf16.gmra.mxu0 %v8896
  %v11081 = vpop.f32.mrf.mxu0
  %v11082 = vadd.f32 %v10793, %v11081
  %v11083 = vpop.f32.mrf.mxu0
  %v11084 = vpop.f32.mrf.mxu0
  %v11085 = vadd.f32 %v10796, %v11084
  %v11086 = vpop.f32.mrf.mxu0
  %11087 = vmatprep.mubr.bf16.mxu0 0
  %11088 = vmatmul.mubr.bf16.gmra.mxu0 %v8905
  %v11089 = vpop.f32.mrf.mxu0
  %v11090 = vadd.f32 %v10801, %v11089
  %v11091 = vpop.f32.mrf.mxu0
  %v11092 = vpop.f32.mrf.mxu0
  %v11093 = vadd.f32 %v10804, %v11092
  %v11094 = vpop.f32.mrf.mxu0
  %11095 = vmatprep.mubr.bf16.mxu0 0
  %11096 = vmatmul.mubr.bf16.gmra.mxu0 %v8914
  %v11097 = vpop.f32.mrf.mxu0
  %v11098 = vadd.f32 %v10809, %v11097
  %v11099 = vpop.f32.mrf.mxu0
  %v11100 = vpop.f32.mrf.mxu0
  %v11101 = vadd.f32 %v10812, %v11100
  %v11102 = vpop.f32.mrf.mxu0
  %11103 = vmatprep.mubr.bf16.mxu0 0
  %11104 = vmatmul.mubr.bf16.gmra.mxu0 %v8923
  %v11105 = vpop.f32.mrf.mxu0
  %v11106 = vadd.f32 %v10817, %v11105
  %v11107 = vpop.f32.mrf.mxu0
  %v11108 = vpop.f32.mrf.mxu0
  %v11109 = vadd.f32 %v10820, %v11108
  %v11110 = vpop.f32.mrf.mxu0
  %11111 = vmatprep.mubr.bf16.mxu0 0
  %11112 = vmatmul.mubr.bf16.gmra.mxu0 %v8932
  %v11113 = vpop.f32.mrf.mxu0
  %v11114 = vadd.f32 %v10825, %v11113
  %v11115 = vpop.f32.mrf.mxu0
  %v11116 = vpop.f32.mrf.mxu0
  %v11117 = vadd.f32 %v10828, %v11116
  %v11118 = vpop.f32.mrf.mxu0
  %11119 = vmatprep.mubr.bf16.mxu0 0
  %11120 = vmatmul.mubr.bf16.gmra.mxu0 %v8941
  %v11121 = vpop.f32.mrf.mxu0
  %v11122 = vadd.f32 %v10833, %v11121
  %v11123 = vpop.f32.mrf.mxu0
  %v11124 = vpop.f32.mrf.mxu0
  %v11125 = vadd.f32 %v10836, %v11124
  %v11126 = vpop.f32.mrf.mxu0
  %11127 = vmatprep.mubr.bf16.mxu0 0
  %11128 = vmatmul.mubr.bf16.gmra.mxu0 %v8950
  %v11129 = vpop.f32.mrf.mxu0
  %v11130 = vadd.f32 %v10841, %v11129
  %v11131 = vpop.f32.mrf.mxu0
  %v11132 = vpop.f32.mrf.mxu0
  %v11133 = vadd.f32 %v10844, %v11132
  %v11134 = vpop.f32.mrf.mxu0
  %11135 = vmatprep.mubr.bf16.mxu0 0
  %11136 = vmatmul.mubr.bf16.gmra.mxu0 %v8959
  %v11137 = vpop.f32.mrf.mxu0
  %v11138 = vadd.f32 %v10849, %v11137
  %v11139 = vpop.f32.mrf.mxu0
  %v11140 = vpop.f32.mrf.mxu0
  %v11141 = vadd.f32 %v10852, %v11140
  %v11142 = vpop.f32.mrf.mxu0
  %11143 = vmatprep.mubr.bf16.mxu0 0
  %11144 = vmatmul.mubr.bf16.gmra.mxu0 %v8968
  %v11145 = vpop.f32.mrf.mxu0
  %v11146 = vadd.f32 %v10857, %v11145
  %v11147 = vpop.f32.mrf.mxu0
  %v11148 = vpop.f32.mrf.mxu0
  %v11149 = vadd.f32 %v10860, %v11148
  %v11150 = vpop.f32.mrf.mxu0
  %11151 = vmatprep.mubr.bf16.mxu0 0
  %11152 = vmatmul.mubr.bf16.gmra.mxu0 %v8977
  %v11153 = vpop.f32.mrf.mxu0
  %v11154 = vadd.f32 %v10865, %v11153
  %v11155 = vpop.f32.mrf.mxu0
  %v11156 = vpop.f32.mrf.mxu0
  %v11157 = vadd.f32 %v10868, %v11156
  %v11158 = vpop.f32.mrf.mxu0
  %11159 = vmatprep.mubr.bf16.mxu0 0
  %11160 = vmatmul.mubr.bf16.gmra.mxu0 %v8986
  %v11161 = vpop.f32.mrf.mxu0
  %v11162 = vadd.f32 %v10873, %v11161
  %v11163 = vpop.f32.mrf.mxu0
  %v11164 = vpop.f32.mrf.mxu0
  %v11165 = vadd.f32 %v10876, %v11164
  %v11166 = vpop.f32.mrf.mxu0
  %11167 = vmatprep.mubr.bf16.mxu0 0
  %11168 = vmatmul.mubr.bf16.gmra.mxu0 %v8995
  %v11169 = vpop.f32.mrf.mxu0
  %v11170 = vadd.f32 %v10881, %v11169
  %v11171 = vpop.f32.mrf.mxu0
  %v11172 = vpop.f32.mrf.mxu0
  %v11173 = vadd.f32 %v10884, %v11172
  %v11174 = vpop.f32.mrf.mxu0
  %11175 = vmatprep.mubr.bf16.mxu0 0
  %11176 = vmatmul.mubr.bf16.gmra.mxu0 %v9004
  %v11177 = vpop.f32.mrf.mxu0
  %v11178 = vadd.f32 %v10889, %v11177
  %v11179 = vpop.f32.mrf.mxu0
  %v11180 = vpop.f32.mrf.mxu0
  %v11181 = vadd.f32 %v10892, %v11180
  %v11182 = vpop.f32.mrf.mxu0
  %11183 = vmatprep.mubr.bf16.mxu0 0
  %11184 = vmatmul.mubr.bf16.gmra.mxu0 %v9013
  %v11185 = vpop.f32.mrf.mxu0
  %v11186 = vadd.f32 %v10897, %v11185
  %v11187 = vpop.f32.mrf.mxu0
  %v11188 = vpop.f32.mrf.mxu0
  %v11189 = vadd.f32 %v10900, %v11188
  %v11190 = vpop.f32.mrf.mxu0
  %11191 = vmatprep.mubr.bf16.mxu0 0
  %11192 = vmatmul.mubr.bf16.gmra.mxu0 %v9022
  %v11193 = vpop.f32.mrf.mxu0
  %v11194 = vadd.f32 %v10905, %v11193
  %v11195 = vpop.f32.mrf.mxu0
  %v11196 = vpop.f32.mrf.mxu0
  %v11197 = vadd.f32 %v10908, %v11196
  %v11198 = vpop.f32.mrf.mxu0
  %11199 = vmatprep.mubr.bf16.mxu0 0
  %11200 = vmatmul.mubr.bf16.gmra.mxu0 %v9031
  %v11201 = vpop.f32.mrf.mxu0
  %v11202 = vadd.f32 %v10913, %v11201
  %v11203 = vpop.f32.mrf.mxu0
  %v11204 = vpop.f32.mrf.mxu0
  %v11205 = vadd.f32 %v10916, %v11204
  %v11206 = vpop.f32.mrf.mxu0
  %11207 = vmatprep.mubr.bf16.mxu0 0
  %11208 = vmatmul.mubr.bf16.gmra.mxu0 %v9040
  %v11209 = vpop.f32.mrf.mxu0
  %v11210 = vadd.f32 %v10921, %v11209
  %v11211 = vpop.f32.mrf.mxu0
  %v11212 = vpop.f32.mrf.mxu0
  %v11213 = vadd.f32 %v10924, %v11212
  %v11214 = vpop.f32.mrf.mxu0
  %11215 = vmatprep.mubr.bf16.mxu0 0
  %11216 = vmatmul.mubr.bf16.gmra.mxu0 %v9049
  %v11217 = vpop.f32.mrf.mxu0
  %v11218 = vadd.f32 %v10929, %v11217
  %v11219 = vpop.f32.mrf.mxu0
  %v11220 = vpop.f32.mrf.mxu0
  %v11221 = vadd.f32 %v10932, %v11220
  %v11222 = vpop.f32.mrf.mxu0
  %11223 = vmatprep.mubr.bf16.mxu0 0
  %11224 = vmatmul.mubr.bf16.gmra.mxu0 %v9058
  %v11225 = vpop.f32.mrf.mxu0
  %v11226 = vadd.f32 %v10937, %v11225
  %v11227 = vpop.f32.mrf.mxu0
  %v11228 = vpop.f32.mrf.mxu0
  %v11229 = vadd.f32 %v10940, %v11228
  %v11230 = vpop.f32.mrf.mxu0
  %11231 = vmatprep.mubr.bf16.mxu0 0
  %11232 = vmatmul.mubr.bf16.gmra.mxu0 %v9067
  %v11233 = vpop.f32.mrf.mxu0
  %v11234 = vadd.f32 %v10945, %v11233
  %v11235 = vpop.f32.mrf.mxu0
  %v11236 = vpop.f32.mrf.mxu0
  %v11237 = vadd.f32 %v10948, %v11236
  %v11238 = vpop.f32.mrf.mxu0
  %11239 = vmatprep.mubr.bf16.mxu0 0
  %11240 = vmatmul.mubr.bf16.gmra.mxu0 %v9076
  %v11241 = vpop.f32.mrf.mxu0
  %v11242 = vadd.f32 %v10953, %v11241
  %v11243 = vpop.f32.mrf.mxu0
  %v11244 = vpop.f32.mrf.mxu0
  %v11245 = vadd.f32 %v10956, %v11244
  %v11246 = vpop.f32.mrf.mxu0
  %11247 = vmatprep.mubr.bf16.mxu0 0
  %11248 = vmatmul.mubr.bf16.gmra.mxu0 %v9085
  %v11249 = vpop.f32.mrf.mxu0
  %v11250 = vadd.f32 %v10961, %v11249
  %v11251 = vpop.f32.mrf.mxu0
  %v11252 = vpop.f32.mrf.mxu0
  %v11253 = vadd.f32 %v10964, %v11252
  %v11254 = vpop.f32.mrf.mxu0
  %11255 = vmatprep.mubr.bf16.mxu0 0
  %11256 = vmatmul.mubr.bf16.gmra.mxu0 %v9094
  %v11257 = vpop.f32.mrf.mxu0
  %v11258 = vadd.f32 %v10969, %v11257
  %v11259 = vpop.f32.mrf.mxu0
  %v11260 = vpop.f32.mrf.mxu0
  %v11261 = vadd.f32 %v10972, %v11260
  %v11262 = vpop.f32.mrf.mxu0
  %11263 = vmatprep.mubr.bf16.mxu0 0
  %11264 = vmatmul.mubr.bf16.gmra.mxu0 %v9103
  %v11265 = vpop.f32.mrf.mxu0
  %v11266 = vadd.f32 %v10977, %v11265
  %v11267 = vpop.f32.mrf.mxu0
  %v11268 = vpop.f32.mrf.mxu0
  %v11269 = vadd.f32 %v10980, %v11268
  %v11270 = vpop.f32.mrf.mxu0
  %11271 = vmatprep.mubr.bf16.mxu0 0
  %11272 = vmatmul.mubr.bf16.gmra.mxu0 %v9112
  %v11273 = vpop.f32.mrf.mxu0
  %v11274 = vadd.f32 %v10985, %v11273
  %v11275 = vpop.f32.mrf.mxu0
  %v11276 = vpop.f32.mrf.mxu0
  %v11277 = vadd.f32 %v10988, %v11276
  %v11278 = vpop.f32.mrf.mxu0
  %11279 = vmatprep.mubr.bf16.mxu0 0
  %11280 = vmatmul.mubr.bf16.gmra.mxu0 %v9121
  %v11281 = vpop.f32.mrf.mxu0
  %v11282 = vadd.f32 %v10993, %v11281
  %v11283 = vpop.f32.mrf.mxu0
  %v11284 = vpop.f32.mrf.mxu0
  %v11285 = vadd.f32 %v10996, %v11284
  %v11286 = vpop.f32.mrf.mxu0
  %11287 = vmatprep.mubr.bf16.mxu0 0
  %11288 = vmatmul.mubr.bf16.gmra.mxu0 %v9130
  %v11289 = vpop.f32.mrf.mxu0
  %v11290 = vadd.f32 %v11001, %v11289
  %v11291 = vpop.f32.mrf.mxu0
  %v11292 = vpop.f32.mrf.mxu0
  %v11293 = vadd.f32 %v11004, %v11292
  %v11294 = vpop.f32.mrf.mxu0
  %11295 = vdwg.mxu0
  %v11296 = vld [vmem:[%s6] sm:$0x1]
  %v11297 = vld [vmem:[%s7] sm:$0x1]
  %v11298 = vadd.f32 %v11042, %v11045
  %v11299 = vadd.f32 %v11298, %v11050
  %v11300 = vadd.f32 %v11299, %v11053
  %v11301 = vadd.f32 %v11300, %v11058
  %v11302 = vadd.f32 %v11301, %v11061
  %v11303 = vadd.f32 %v11302, %v11066
  %v11304 = vadd.f32 %v11303, %v11069
  %v11305 = vadd.f32 %v11304, %v11074
  %v11306 = vadd.f32 %v11305, %v11077
  %v11307 = vadd.f32 %v11306, %v11082
  %v11308 = vadd.f32 %v11307, %v11085
  %v11309 = vadd.f32 %v11308, %v11090
  %v11310 = vadd.f32 %v11309, %v11093
  %v11311 = vadd.f32 %v11310, %v11098
  %v11312 = vadd.f32 %v11311, %v11101
  %v11313 = vadd.f32 %v11312, %v11106
  %v11314 = vadd.f32 %v11313, %v11109
  %v11315 = vadd.f32 %v11314, %v11114
  %v11316 = vadd.f32 %v11315, %v11117
  %v11317 = vadd.f32 %v11316, %v11122
  %v11318 = vadd.f32 %v11317, %v11125
  %v11319 = vadd.f32 %v11318, %v11130
  %v11320 = vadd.f32 %v11319, %v11133
  %v11321 = vadd.f32 %v11320, %v11138
  %v11322 = vadd.f32 %v11321, %v11141
  %v11323 = vadd.f32 %v11322, %v11146
  %v11324 = vadd.f32 %v11323, %v11149
  %v11325 = vadd.f32 %v11324, %v11154
  %v11326 = vadd.f32 %v11325, %v11157
  %v11327 = vadd.f32 %v11326, %v11162
  %v11328 = vadd.f32 %v11327, %v11165
  %v11329 = vadd.f32 %v11328, %v11170
  %v11330 = vadd.f32 %v11329, %v11173
  %v11331 = vadd.f32 %v11330, %v11178
  %v11332 = vadd.f32 %v11331, %v11181
  %v11333 = vadd.f32 %v11332, %v11186
  %v11334 = vadd.f32 %v11333, %v11189
  %v11335 = vadd.f32 %v11334, %v11194
  %v11336 = vadd.f32 %v11335, %v11197
  %v11337 = vadd.f32 %v11336, %v11202
  %v11338 = vadd.f32 %v11337, %v11205
  %v11339 = vadd.f32 %v11338, %v11210
  %v11340 = vadd.f32 %v11339, %v11213
  %v11341 = vadd.f32 %v11340, %v11218
  %v11342 = vadd.f32 %v11341, %v11221
  %v11343 = vadd.f32 %v11342, %v11226
  %v11344 = vadd.f32 %v11343, %v11229
  %v11345 = vadd.f32 %v11344, %v11234
  %v11346 = vadd.f32 %v11345, %v11237
  %v11347 = vadd.f32 %v11346, %v11242
  %v11348 = vadd.f32 %v11347, %v11245
  %v11349 = vadd.f32 %v11348, %v11250
  %v11350 = vadd.f32 %v11349, %v11253
  %v11351 = vadd.f32 %v11350, %v11258
  %v11352 = vadd.f32 %v11351, %v11261
  %v11353 = vadd.f32 %v11352, %v11266
  %v11354 = vadd.f32 %v11353, %v11269
  %v11355 = vadd.f32 %v11354, %v11274
  %v11356 = vadd.f32 %v11355, %v11277
  %v11357 = vadd.f32 %v11356, %v11282
  %v11358 = vadd.f32 %v11357, %v11285
  %v11359 = vadd.f32 %v11358, %v11290
  %v11360 = vadd.f32 %v11359, %v11293
  %v11361 = vrot.slane %v11360, 4
  %v11362 = vadd.f32 %v11360, %v11361
  %v11363 = vrot.slane %v11362, 2
  %v11364 = vadd.f32 %v11362, %v11363
  %v11365 = vrot.slane %v11364, 1
  %v11366 = vadd.f32 %v11364, %v11365
  %v11367 = vmul.f32 %v11366, %v716
  %v11368 = vmul.f32 %v11042, %v11042
  %v11369 = vmul.f32 %v11045, %v11045
  %v11370 = vmul.f32 %v11050, %v11050
  %v11371 = vmul.f32 %v11053, %v11053
  %v11372 = vmul.f32 %v11058, %v11058
  %v11373 = vmul.f32 %v11061, %v11061
  %v11374 = vmul.f32 %v11066, %v11066
  %v11375 = vmul.f32 %v11069, %v11069
  %v11376 = vmul.f32 %v11074, %v11074
  %v11377 = vmul.f32 %v11077, %v11077
  %v11378 = vmul.f32 %v11082, %v11082
  %v11379 = vmul.f32 %v11085, %v11085
  %v11380 = vmul.f32 %v11090, %v11090
  %v11381 = vmul.f32 %v11093, %v11093
  %v11382 = vmul.f32 %v11098, %v11098
  %v11383 = vmul.f32 %v11101, %v11101
  %v11384 = vmul.f32 %v11106, %v11106
  %v11385 = vmul.f32 %v11109, %v11109
  %v11386 = vmul.f32 %v11114, %v11114
  %v11387 = vmul.f32 %v11117, %v11117
  %v11388 = vmul.f32 %v11122, %v11122
  %v11389 = vmul.f32 %v11125, %v11125
  %v11390 = vmul.f32 %v11130, %v11130
  %v11391 = vmul.f32 %v11133, %v11133
  %v11392 = vmul.f32 %v11138, %v11138
  %v11393 = vmul.f32 %v11141, %v11141
  %v11394 = vmul.f32 %v11146, %v11146
  %v11395 = vmul.f32 %v11149, %v11149
  %v11396 = vmul.f32 %v11154, %v11154
  %v11397 = vmul.f32 %v11157, %v11157
  %v11398 = vmul.f32 %v11162, %v11162
  %v11399 = vmul.f32 %v11165, %v11165
  %v11400 = vmul.f32 %v11170, %v11170
  %v11401 = vmul.f32 %v11173, %v11173
  %v11402 = vmul.f32 %v11178, %v11178
  %v11403 = vmul.f32 %v11181, %v11181
  %v11404 = vmul.f32 %v11186, %v11186
  %v11405 = vmul.f32 %v11189, %v11189
  %v11406 = vmul.f32 %v11194, %v11194
  %v11407 = vmul.f32 %v11197, %v11197
  %v11408 = vmul.f32 %v11202, %v11202
  %v11409 = vmul.f32 %v11205, %v11205
  %v11410 = vmul.f32 %v11210, %v11210
  %v11411 = vmul.f32 %v11213, %v11213
  %v11412 = vmul.f32 %v11218, %v11218
  %v11413 = vmul.f32 %v11221, %v11221
  %v11414 = vmul.f32 %v11226, %v11226
  %v11415 = vmul.f32 %v11229, %v11229
  %v11416 = vmul.f32 %v11234, %v11234
  %v11417 = vmul.f32 %v11237, %v11237
  %v11418 = vmul.f32 %v11242, %v11242
  %v11419 = vmul.f32 %v11245, %v11245
  %v11420 = vmul.f32 %v11250, %v11250
  %v11421 = vmul.f32 %v11253, %v11253
  %v11422 = vmul.f32 %v11258, %v11258
  %v11423 = vmul.f32 %v11261, %v11261
  %v11424 = vmul.f32 %v11266, %v11266
  %v11425 = vmul.f32 %v11269, %v11269
  %v11426 = vmul.f32 %v11274, %v11274
  %v11427 = vmul.f32 %v11277, %v11277
  %v11428 = vmul.f32 %v11282, %v11282
  %v11429 = vmul.f32 %v11285, %v11285
  %v11430 = vmul.f32 %v11290, %v11290
  %v11431 = vmul.f32 %v11293, %v11293
  %v11432 = vadd.f32 %v11368, %v11369
  %v11433 = vadd.f32 %v11432, %v11370
  %v11434 = vadd.f32 %v11433, %v11371
  %v11435 = vadd.f32 %v11434, %v11372
  %v11436 = vadd.f32 %v11435, %v11373
  %v11437 = vadd.f32 %v11436, %v11374
  %v11438 = vadd.f32 %v11437, %v11375
  %v11439 = vadd.f32 %v11438, %v11376
  %v11440 = vadd.f32 %v11439, %v11377
  %v11441 = vadd.f32 %v11440, %v11378
  %v11442 = vadd.f32 %v11441, %v11379
  %v11443 = vadd.f32 %v11442, %v11380
  %v11444 = vadd.f32 %v11443, %v11381
  %v11445 = vadd.f32 %v11444, %v11382
  %v11446 = vadd.f32 %v11445, %v11383
  %v11447 = vadd.f32 %v11446, %v11384
  %v11448 = vadd.f32 %v11447, %v11385
  %v11449 = vadd.f32 %v11448, %v11386
  %v11450 = vadd.f32 %v11449, %v11387
  %v11451 = vadd.f32 %v11450, %v11388
  %v11452 = vadd.f32 %v11451, %v11389
  %v11453 = vadd.f32 %v11452, %v11390
  %v11454 = vadd.f32 %v11453, %v11391
  %v11455 = vadd.f32 %v11454, %v11392
  %v11456 = vadd.f32 %v11455, %v11393
  %v11457 = vadd.f32 %v11456, %v11394
  %v11458 = vadd.f32 %v11457, %v11395
  %v11459 = vadd.f32 %v11458, %v11396
  %v11460 = vadd.f32 %v11459, %v11397
  %v11461 = vadd.f32 %v11460, %v11398
  %v11462 = vadd.f32 %v11461, %v11399
  %v11463 = vadd.f32 %v11462, %v11400
  %v11464 = vadd.f32 %v11463, %v11401
  %v11465 = vadd.f32 %v11464, %v11402
  %v11466 = vadd.f32 %v11465, %v11403
  %v11467 = vadd.f32 %v11466, %v11404
  %v11468 = vadd.f32 %v11467, %v11405
  %v11469 = vadd.f32 %v11468, %v11406
  %v11470 = vadd.f32 %v11469, %v11407
  %v11471 = vadd.f32 %v11470, %v11408
  %v11472 = vadd.f32 %v11471, %v11409
  %v11473 = vadd.f32 %v11472, %v11410
  %v11474 = vadd.f32 %v11473, %v11411
  %v11475 = vadd.f32 %v11474, %v11412
  %v11476 = vadd.f32 %v11475, %v11413
  %v11477 = vadd.f32 %v11476, %v11414
  %v11478 = vadd.f32 %v11477, %v11415
  %v11479 = vadd.f32 %v11478, %v11416
  %v11480 = vadd.f32 %v11479, %v11417
  %v11481 = vadd.f32 %v11480, %v11418
  %v11482 = vadd.f32 %v11481, %v11419
  %v11483 = vadd.f32 %v11482, %v11420
  %v11484 = vadd.f32 %v11483, %v11421
  %v11485 = vadd.f32 %v11484, %v11422
  %v11486 = vadd.f32 %v11485, %v11423
  %v11487 = vadd.f32 %v11486, %v11424
  %v11488 = vadd.f32 %v11487, %v11425
  %v11489 = vadd.f32 %v11488, %v11426
  %v11490 = vadd.f32 %v11489, %v11427
  %v11491 = vadd.f32 %v11490, %v11428
  %v11492 = vadd.f32 %v11491, %v11429
  %v11493 = vadd.f32 %v11492, %v11430
  %v11494 = vadd.f32 %v11493, %v11431
  %v11495 = vrot.slane %v11494, 4
  %v11496 = vadd.f32 %v11494, %v11495
  %v11497 = vrot.slane %v11496, 2
  %v11498 = vadd.f32 %v11496, %v11497
  %v11499 = vrot.slane %v11498, 1
  %v11500 = vadd.f32 %v11498, %v11499
  %v11501 = vmul.f32 %v11500, %v716
  %v11502 = vmul.f32 %v11367, %v11367
  %v11503 = vsub.f32 %v11501, %v11502
  %v11504 = vmax.f32 %v11503, 0.0
  %v11505 = vsub.f32 %v11042, %v11367
  %v11506 = vsub.f32 %v11045, %v11367
  %v11507 = vsub.f32 %v11050, %v11367
  %v11508 = vsub.f32 %v11053, %v11367
  %v11509 = vsub.f32 %v11058, %v11367
  %v11510 = vsub.f32 %v11061, %v11367
  %v11511 = vsub.f32 %v11066, %v11367
  %v11512 = vsub.f32 %v11069, %v11367
  %v11513 = vsub.f32 %v11074, %v11367
  %v11514 = vsub.f32 %v11077, %v11367
  %v11515 = vsub.f32 %v11082, %v11367
  %v11516 = vsub.f32 %v11085, %v11367
  %v11517 = vsub.f32 %v11090, %v11367
  %v11518 = vsub.f32 %v11093, %v11367
  %v11519 = vsub.f32 %v11098, %v11367
  %v11520 = vsub.f32 %v11101, %v11367
  %v11521 = vsub.f32 %v11106, %v11367
  %v11522 = vsub.f32 %v11109, %v11367
  %v11523 = vsub.f32 %v11114, %v11367
  %v11524 = vsub.f32 %v11117, %v11367
  %v11525 = vsub.f32 %v11122, %v11367
  %v11526 = vsub.f32 %v11125, %v11367
  %v11527 = vsub.f32 %v11130, %v11367
  %v11528 = vsub.f32 %v11133, %v11367
  %v11529 = vsub.f32 %v11138, %v11367
  %v11530 = vsub.f32 %v11141, %v11367
  %v11531 = vsub.f32 %v11146, %v11367
  %v11532 = vsub.f32 %v11149, %v11367
  %v11533 = vsub.f32 %v11154, %v11367
  %v11534 = vsub.f32 %v11157, %v11367
  %v11535 = vsub.f32 %v11162, %v11367
  %v11536 = vsub.f32 %v11165, %v11367
  %v11537 = vsub.f32 %v11170, %v11367
  %v11538 = vsub.f32 %v11173, %v11367
  %v11539 = vsub.f32 %v11178, %v11367
  %v11540 = vsub.f32 %v11181, %v11367
  %v11541 = vsub.f32 %v11186, %v11367
  %v11542 = vsub.f32 %v11189, %v11367
  %v11543 = vsub.f32 %v11194, %v11367
  %v11544 = vsub.f32 %v11197, %v11367
  %v11545 = vsub.f32 %v11202, %v11367
  %v11546 = vsub.f32 %v11205, %v11367
  %v11547 = vsub.f32 %v11210, %v11367
  %v11548 = vsub.f32 %v11213, %v11367
  %v11549 = vsub.f32 %v11218, %v11367
  %v11550 = vsub.f32 %v11221, %v11367
  %v11551 = vsub.f32 %v11226, %v11367
  %v11552 = vsub.f32 %v11229, %v11367
  %v11553 = vsub.f32 %v11234, %v11367
  %v11554 = vsub.f32 %v11237, %v11367
  %v11555 = vsub.f32 %v11242, %v11367
  %v11556 = vsub.f32 %v11245, %v11367
  %v11557 = vsub.f32 %v11250, %v11367
  %v11558 = vsub.f32 %v11253, %v11367
  %v11559 = vsub.f32 %v11258, %v11367
  %v11560 = vsub.f32 %v11261, %v11367
  %v11561 = vsub.f32 %v11266, %v11367
  %v11562 = vsub.f32 %v11269, %v11367
  %v11563 = vsub.f32 %v11274, %v11367
  %v11564 = vsub.f32 %v11277, %v11367
  %v11565 = vsub.f32 %v11282, %v11367
  %v11566 = vsub.f32 %v11285, %v11367
  %v11567 = vsub.f32 %v11290, %v11367
  %v11568 = vsub.f32 %v11293, %v11367
  %v11569 = vadd.f32 %v11504, 1e-05
  %v11570 = vrsqrt.pop %v11569
  %v11571 = vmul.f32 %v11505, %v11570
  %v11572 = vmul.f32 %v11506, %v11570
  %v11573 = vmul.f32 %v11507, %v11570
  %v11574 = vmul.f32 %v11508, %v11570
  %v11575 = vmul.f32 %v11509, %v11570
  %v11576 = vmul.f32 %v11510, %v11570
  %v11577 = vmul.f32 %v11511, %v11570
  %v11578 = vmul.f32 %v11512, %v11570
  %v11579 = vmul.f32 %v11513, %v11570
  %v11580 = vmul.f32 %v11514, %v11570
  %v11581 = vmul.f32 %v11515, %v11570
  %v11582 = vmul.f32 %v11516, %v11570
  %v11583 = vmul.f32 %v11517, %v11570
  %v11584 = vmul.f32 %v11518, %v11570
  %v11585 = vmul.f32 %v11519, %v11570
  %v11586 = vmul.f32 %v11520, %v11570
  %v11587 = vmul.f32 %v11521, %v11570
  %v11588 = vmul.f32 %v11522, %v11570
  %v11589 = vmul.f32 %v11523, %v11570
  %v11590 = vmul.f32 %v11524, %v11570
  %v11591 = vmul.f32 %v11525, %v11570
  %v11592 = vmul.f32 %v11526, %v11570
  %v11593 = vmul.f32 %v11527, %v11570
  %v11594 = vmul.f32 %v11528, %v11570
  %v11595 = vmul.f32 %v11529, %v11570
  %v11596 = vmul.f32 %v11530, %v11570
  %v11597 = vmul.f32 %v11531, %v11570
  %v11598 = vmul.f32 %v11532, %v11570
  %v11599 = vmul.f32 %v11533, %v11570
  %v11600 = vmul.f32 %v11534, %v11570
  %v11601 = vmul.f32 %v11535, %v11570
  %v11602 = vmul.f32 %v11536, %v11570
  %v11603 = vmul.f32 %v11537, %v11570
  %v11604 = vmul.f32 %v11538, %v11570
  %v11605 = vmul.f32 %v11539, %v11570
  %v11606 = vmul.f32 %v11540, %v11570
  %v11607 = vmul.f32 %v11541, %v11570
  %v11608 = vmul.f32 %v11542, %v11570
  %v11609 = vmul.f32 %v11543, %v11570
  %v11610 = vmul.f32 %v11544, %v11570
  %v11611 = vmul.f32 %v11545, %v11570
  %v11612 = vmul.f32 %v11546, %v11570
  %v11613 = vmul.f32 %v11547, %v11570
  %v11614 = vmul.f32 %v11548, %v11570
  %v11615 = vmul.f32 %v11549, %v11570
  %v11616 = vmul.f32 %v11550, %v11570
  %v11617 = vmul.f32 %v11551, %v11570
  %v11618 = vmul.f32 %v11552, %v11570
  %v11619 = vmul.f32 %v11553, %v11570
  %v11620 = vmul.f32 %v11554, %v11570
  %v11621 = vmul.f32 %v11555, %v11570
  %v11622 = vmul.f32 %v11556, %v11570
  %v11623 = vmul.f32 %v11557, %v11570
  %v11624 = vmul.f32 %v11558, %v11570
  %v11625 = vmul.f32 %v11559, %v11570
  %v11626 = vmul.f32 %v11560, %v11570
  %v11627 = vmul.f32 %v11561, %v11570
  %v11628 = vmul.f32 %v11562, %v11570
  %v11629 = vmul.f32 %v11563, %v11570
  %v11630 = vmul.f32 %v11564, %v11570
  %v11631 = vmul.f32 %v11565, %v11570
  %v11632 = vmul.f32 %v11566, %v11570
  %v11633 = vmul.f32 %v11567, %v11570
  %v11634 = vmul.f32 %v11568, %v11570
  %v11636 = vlaneseq
  %v11637 = vshrl.u32 %v11636, 7
  %v11638 = vsub.s32 0, %v11637
  %v11639 = vrot.slane %v11296, %v11638
  %v11641 = vmul.f32 %v11571, %v11639
  %v11642 = vmul.f32 %v11572, %v11639
  %v11643 = vmul.f32 %v11573, %v11639
  %v11644 = vmul.f32 %v11574, %v11639
  %v11645 = vmul.f32 %v11575, %v11639
  %v11646 = vmul.f32 %v11576, %v11639
  %v11647 = vmul.f32 %v11577, %v11639
  %v11648 = vmul.f32 %v11578, %v11639
  %v11649 = vmul.f32 %v11579, %v11639
  %v11650 = vmul.f32 %v11580, %v11639
  %v11651 = vmul.f32 %v11581, %v11639
  %v11652 = vmul.f32 %v11582, %v11639
  %v11653 = vmul.f32 %v11583, %v11639
  %v11654 = vmul.f32 %v11584, %v11639
  %v11655 = vmul.f32 %v11585, %v11639
  %v11656 = vmul.f32 %v11586, %v11639
  %v11657 = vmul.f32 %v11587, %v11639
  %v11658 = vmul.f32 %v11588, %v11639
  %v11659 = vmul.f32 %v11589, %v11639
  %v11660 = vmul.f32 %v11590, %v11639
  %v11661 = vmul.f32 %v11591, %v11639
  %v11662 = vmul.f32 %v11592, %v11639
  %v11663 = vmul.f32 %v11593, %v11639
  %v11664 = vmul.f32 %v11594, %v11639
  %v11665 = vmul.f32 %v11595, %v11639
  %v11666 = vmul.f32 %v11596, %v11639
  %v11667 = vmul.f32 %v11597, %v11639
  %v11668 = vmul.f32 %v11598, %v11639
  %v11669 = vmul.f32 %v11599, %v11639
  %v11670 = vmul.f32 %v11600, %v11639
  %v11671 = vmul.f32 %v11601, %v11639
  %v11672 = vmul.f32 %v11602, %v11639
  %v11673 = vmul.f32 %v11603, %v11639
  %v11674 = vmul.f32 %v11604, %v11639
  %v11675 = vmul.f32 %v11605, %v11639
  %v11676 = vmul.f32 %v11606, %v11639
  %v11677 = vmul.f32 %v11607, %v11639
  %v11678 = vmul.f32 %v11608, %v11639
  %v11679 = vmul.f32 %v11609, %v11639
  %v11680 = vmul.f32 %v11610, %v11639
  %v11681 = vmul.f32 %v11611, %v11639
  %v11682 = vmul.f32 %v11612, %v11639
  %v11683 = vmul.f32 %v11613, %v11639
  %v11684 = vmul.f32 %v11614, %v11639
  %v11685 = vmul.f32 %v11615, %v11639
  %v11686 = vmul.f32 %v11616, %v11639
  %v11687 = vmul.f32 %v11617, %v11639
  %v11688 = vmul.f32 %v11618, %v11639
  %v11689 = vmul.f32 %v11619, %v11639
  %v11690 = vmul.f32 %v11620, %v11639
  %v11691 = vmul.f32 %v11621, %v11639
  %v11692 = vmul.f32 %v11622, %v11639
  %v11693 = vmul.f32 %v11623, %v11639
  %v11694 = vmul.f32 %v11624, %v11639
  %v11695 = vmul.f32 %v11625, %v11639
  %v11696 = vmul.f32 %v11626, %v11639
  %v11697 = vmul.f32 %v11627, %v11639
  %v11698 = vmul.f32 %v11628, %v11639
  %v11699 = vmul.f32 %v11629, %v11639
  %v11700 = vmul.f32 %v11630, %v11639
  %v11701 = vmul.f32 %v11631, %v11639
  %v11702 = vmul.f32 %v11632, %v11639
  %v11703 = vmul.f32 %v11633, %v11639
  %v11704 = vmul.f32 %v11634, %v11639
  %v11706 = vlaneseq
  %v11707 = vshrl.u32 %v11706, 7
  %v11708 = vsub.s32 0, %v11707
  %v11709 = vrot.slane %v11297, %v11708
  %v11711 = vadd.f32 %v11641, %v11709
  %v11712 = vadd.f32 %v11642, %v11709
  %v11713 = vadd.f32 %v11643, %v11709
  %v11714 = vadd.f32 %v11644, %v11709
  %v11715 = vadd.f32 %v11645, %v11709
  %v11716 = vadd.f32 %v11646, %v11709
  %v11717 = vadd.f32 %v11647, %v11709
  %v11718 = vadd.f32 %v11648, %v11709
  %v11719 = vadd.f32 %v11649, %v11709
  %v11720 = vadd.f32 %v11650, %v11709
  %v11721 = vadd.f32 %v11651, %v11709
  %v11722 = vadd.f32 %v11652, %v11709
  %v11723 = vadd.f32 %v11653, %v11709
  %v11724 = vadd.f32 %v11654, %v11709
  %v11725 = vadd.f32 %v11655, %v11709
  %v11726 = vadd.f32 %v11656, %v11709
  %v11727 = vadd.f32 %v11657, %v11709
  %v11728 = vadd.f32 %v11658, %v11709
  %v11729 = vadd.f32 %v11659, %v11709
  %v11730 = vadd.f32 %v11660, %v11709
  %v11731 = vadd.f32 %v11661, %v11709
  %v11732 = vadd.f32 %v11662, %v11709
  %v11733 = vadd.f32 %v11663, %v11709
  %v11734 = vadd.f32 %v11664, %v11709
  %v11735 = vadd.f32 %v11665, %v11709
  %v11736 = vadd.f32 %v11666, %v11709
  %v11737 = vadd.f32 %v11667, %v11709
  %v11738 = vadd.f32 %v11668, %v11709
  %v11739 = vadd.f32 %v11669, %v11709
  %v11740 = vadd.f32 %v11670, %v11709
  %v11741 = vadd.f32 %v11671, %v11709
  %v11742 = vadd.f32 %v11672, %v11709
  %v11743 = vadd.f32 %v11673, %v11709
  %v11744 = vadd.f32 %v11674, %v11709
  %v11745 = vadd.f32 %v11675, %v11709
  %v11746 = vadd.f32 %v11676, %v11709
  %v11747 = vadd.f32 %v11677, %v11709
  %v11748 = vadd.f32 %v11678, %v11709
  %v11749 = vadd.f32 %v11679, %v11709
  %v11750 = vadd.f32 %v11680, %v11709
  %v11751 = vadd.f32 %v11681, %v11709
  %v11752 = vadd.f32 %v11682, %v11709
  %v11753 = vadd.f32 %v11683, %v11709
  %v11754 = vadd.f32 %v11684, %v11709
  %v11755 = vadd.f32 %v11685, %v11709
  %v11756 = vadd.f32 %v11686, %v11709
  %v11757 = vadd.f32 %v11687, %v11709
  %v11758 = vadd.f32 %v11688, %v11709
  %v11759 = vadd.f32 %v11689, %v11709
  %v11760 = vadd.f32 %v11690, %v11709
  %v11761 = vadd.f32 %v11691, %v11709
  %v11762 = vadd.f32 %v11692, %v11709
  %v11763 = vadd.f32 %v11693, %v11709
  %v11764 = vadd.f32 %v11694, %v11709
  %v11765 = vadd.f32 %v11695, %v11709
  %v11766 = vadd.f32 %v11696, %v11709
  %v11767 = vadd.f32 %v11697, %v11709
  %v11768 = vadd.f32 %v11698, %v11709
  %v11769 = vadd.f32 %v11699, %v11709
  %v11770 = vadd.f32 %v11700, %v11709
  %v11771 = vadd.f32 %v11701, %v11709
  %v11772 = vadd.f32 %v11702, %v11709
  %v11773 = vadd.f32 %v11703, %v11709
  %v11774 = vadd.f32 %v11704, %v11709
  %v11775 = vmax.f32 %v11711, 0.0
  %v11776 = vmax.f32 %v11712, 0.0
  %v11777 = vmax.f32 %v11713, 0.0
  %v11778 = vmax.f32 %v11714, 0.0
  %v11779 = vmax.f32 %v11715, 0.0
  %v11780 = vmax.f32 %v11716, 0.0
  %v11781 = vmax.f32 %v11717, 0.0
  %v11782 = vmax.f32 %v11718, 0.0
  %v11783 = vmax.f32 %v11719, 0.0
  %v11784 = vmax.f32 %v11720, 0.0
  %v11785 = vmax.f32 %v11721, 0.0
  %v11786 = vmax.f32 %v11722, 0.0
  %v11787 = vmax.f32 %v11723, 0.0
  %v11788 = vmax.f32 %v11724, 0.0
  %v11789 = vmax.f32 %v11725, 0.0
  %v11790 = vmax.f32 %v11726, 0.0
  %v11791 = vmax.f32 %v11727, 0.0
  %v11792 = vmax.f32 %v11728, 0.0
  %v11793 = vmax.f32 %v11729, 0.0
  %v11794 = vmax.f32 %v11730, 0.0
  %v11795 = vmax.f32 %v11731, 0.0
  %v11796 = vmax.f32 %v11732, 0.0
  %v11797 = vmax.f32 %v11733, 0.0
  %v11798 = vmax.f32 %v11734, 0.0
  %v11799 = vmax.f32 %v11735, 0.0
  %v11800 = vmax.f32 %v11736, 0.0
  %v11801 = vmax.f32 %v11737, 0.0
  %v11802 = vmax.f32 %v11738, 0.0
  %v11803 = vmax.f32 %v11739, 0.0
  %v11804 = vmax.f32 %v11740, 0.0
  %v11805 = vmax.f32 %v11741, 0.0
  %v11806 = vmax.f32 %v11742, 0.0
  %v11807 = vmax.f32 %v11743, 0.0
  %v11808 = vmax.f32 %v11744, 0.0
  %v11809 = vmax.f32 %v11745, 0.0
  %v11810 = vmax.f32 %v11746, 0.0
  %v11811 = vmax.f32 %v11747, 0.0
  %v11812 = vmax.f32 %v11748, 0.0
  %v11813 = vmax.f32 %v11749, 0.0
  %v11814 = vmax.f32 %v11750, 0.0
  %v11815 = vmax.f32 %v11751, 0.0
  %v11816 = vmax.f32 %v11752, 0.0
  %v11817 = vmax.f32 %v11753, 0.0
  %v11818 = vmax.f32 %v11754, 0.0
  %v11819 = vmax.f32 %v11755, 0.0
  %v11820 = vmax.f32 %v11756, 0.0
  %v11821 = vmax.f32 %v11757, 0.0
  %v11822 = vmax.f32 %v11758, 0.0
  %v11823 = vmax.f32 %v11759, 0.0
  %v11824 = vmax.f32 %v11760, 0.0
  %v11825 = vmax.f32 %v11761, 0.0
  %v11826 = vmax.f32 %v11762, 0.0
  %v11827 = vmax.f32 %v11763, 0.0
  %v11828 = vmax.f32 %v11764, 0.0
  %v11829 = vmax.f32 %v11765, 0.0
  %v11830 = vmax.f32 %v11766, 0.0
  %v11831 = vmax.f32 %v11767, 0.0
  %v11832 = vmax.f32 %v11768, 0.0
  %v11833 = vmax.f32 %v11769, 0.0
  %v11834 = vmax.f32 %v11770, 0.0
  %v11835 = vmax.f32 %v11771, 0.0
  %v11836 = vmax.f32 %v11772, 0.0
  %v11837 = vmax.f32 %v11773, 0.0
  %v11838 = vmax.f32 %v11774, 0.0
  %v11839 = vpack.c.bf16 %v11776, %v11775
  %v11840 = vpack.c.bf16 %v11778, %v11777
  %v11841 = vpack.c.bf16 %v11780, %v11779
  %v11842 = vpack.c.bf16 %v11782, %v11781
  %v11843 = vpack.c.bf16 %v11784, %v11783
  %v11844 = vpack.c.bf16 %v11786, %v11785
  %v11845 = vpack.c.bf16 %v11788, %v11787
  %v11846 = vpack.c.bf16 %v11790, %v11789
  %v11847 = vpack.c.bf16 %v11792, %v11791
  %v11848 = vpack.c.bf16 %v11794, %v11793
  %v11849 = vpack.c.bf16 %v11796, %v11795
  %v11850 = vpack.c.bf16 %v11798, %v11797
  %v11851 = vpack.c.bf16 %v11800, %v11799
  %v11852 = vpack.c.bf16 %v11802, %v11801
  %v11853 = vpack.c.bf16 %v11804, %v11803
  %v11854 = vpack.c.bf16 %v11806, %v11805
  %v11855 = vpack.c.bf16 %v11808, %v11807
  %v11856 = vpack.c.bf16 %v11810, %v11809
  %v11857 = vpack.c.bf16 %v11812, %v11811
  %v11858 = vpack.c.bf16 %v11814, %v11813
  %v11859 = vpack.c.bf16 %v11816, %v11815
  %v11860 = vpack.c.bf16 %v11818, %v11817
  %v11861 = vpack.c.bf16 %v11820, %v11819
  %v11862 = vpack.c.bf16 %v11822, %v11821
  %v11863 = vpack.c.bf16 %v11824, %v11823
  %v11864 = vpack.c.bf16 %v11826, %v11825
  %v11865 = vpack.c.bf16 %v11828, %v11827
  %v11866 = vpack.c.bf16 %v11830, %v11829
  %v11867 = vpack.c.bf16 %v11832, %v11831
  %v11868 = vpack.c.bf16 %v11834, %v11833
  %v11869 = vpack.c.bf16 %v11836, %v11835
  %v11870 = vpack.c.bf16 %v11838, %v11837
  %v11871 = vld [vmem:[%s3] sm:$0xf]
  %v11872 = vld [vmem:[%s3 + $0x4] sm:$0xf]
  %v11873 = vld [vmem:[%s3 + $0x8] sm:$0xf]
  %v11874 = vld [vmem:[%s3 + $0xc] sm:$0xf]
  %v11875 = vld [vmem:[%s3 + $0x10] sm:$0xf]
  %v11876 = vld [vmem:[%s3 + $0x14] sm:$0xf]
  %v11877 = vld [vmem:[%s3 + $0x18] sm:$0xf]
  %v11878 = vld [vmem:[%s3 + $0x1c] sm:$0xf]
  %v11879 = vld [vmem:[%s3 + $0x20] sm:$0xf]
  %v11880 = vld [vmem:[%s3 + $0x24] sm:$0xf]
  %v11881 = vld [vmem:[%s3 + $0x28] sm:$0xf]
  %v11882 = vld [vmem:[%s3 + $0x2c] sm:$0xf]
  %v11883 = vld [vmem:[%s3 + $0x30] sm:$0xf]
  %v11884 = vld [vmem:[%s3 + $0x34] sm:$0xf]
  %v11885 = vld [vmem:[%s3 + $0x38] sm:$0xf]
  %v11886 = vld [vmem:[%s3 + $0x3c] sm:$0xf]
  %v11903 = vunpack.c.l.b16 %v11871
  %v11904 = vunpack.c.l.b16 %v11872
  %v11905 = vunpack.c.l.b16 %v11873
  %v11906 = vunpack.c.l.b16 %v11874
  %v11907 = vunpack.c.l.b16 %v11875
  %v11908 = vunpack.c.l.b16 %v11876
  %v11909 = vunpack.c.l.b16 %v11877
  %v11910 = vunpack.c.l.b16 %v11878
  %v11911 = vunpack.c.l.b16 %v11879
  %v11912 = vunpack.c.l.b16 %v11880
  %v11913 = vunpack.c.l.b16 %v11881
  %v11914 = vunpack.c.l.b16 %v11882
  %v11915 = vunpack.c.l.b16 %v11883
  %v11916 = vunpack.c.l.b16 %v11884
  %v11917 = vunpack.c.l.b16 %v11885
  %v11918 = vunpack.c.l.b16 %v11886
  %v11919 = vpack.c.b16 %v11904, %v11903
  %v11920 = vpack.c.b16 %v11906, %v11905
  %v11921 = vpack.c.b16 %v11908, %v11907
  %v11922 = vpack.c.b16 %v11910, %v11909
  %v11923 = vpack.c.b16 %v11912, %v11911
  %v11924 = vpack.c.b16 %v11914, %v11913
  %v11925 = vpack.c.b16 %v11916, %v11915
  %v11926 = vpack.c.b16 %v11918, %v11917
  %11935 = vmatprep.subr.bf16.mxu0 0
  %11936 = vmatpush1.bf16.msra.mxu0 %v11926
  %11937 = vmatprep.subr.bf16.mxu0 0
  %11938 = vmatpush1.bf16.msra.mxu0 %v11925
  %11939 = vmatprep.subr.bf16.mxu0 0
  %11940 = vmatpush1.bf16.msra.mxu0 %v11924
  %11941 = vmatprep.subr.bf16.mxu0 0
  %11942 = vmatpush1.bf16.msra.mxu0 %v11923
  %11943 = vmatprep.subr.bf16.mxu0 0
  %11944 = vmatpush1.bf16.msra.mxu0 %v11922
  %11945 = vmatprep.subr.bf16.mxu0 0
  %11946 = vmatpush1.bf16.msra.mxu0 %v11921
  %11947 = vmatprep.subr.bf16.mxu0 0
  %11948 = vmatpush1.bf16.msra.mxu0 %v11920
  %11949 = vmatprep.subr.bf16.mxu0 0
  %11950 = vmatpush1.bf16.msra.mxu0 %v11919
  %11951 = vmatprep.subr.bf16.mxu0 0
  %11952 = vmatpush2.bf16.msra.mxu0 0
  %11953 = vmatprep.subr.bf16.mxu0 0
  %11954 = vmatpush2.bf16.msra.mxu0 0
  %11955 = vmatprep.subr.bf16.mxu0 0
  %11956 = vmatpush2.bf16.msra.mxu0 0
  %11957 = vmatprep.subr.bf16.mxu0 0
  %11958 = vmatpush2.bf16.msra.mxu0 0
  %11959 = vmatprep.subr.bf16.mxu0 0
  %11960 = vmatpush2.bf16.msra.mxu0 0
  %11961 = vmatprep.subr.bf16.mxu0 0
  %11962 = vmatpush2.bf16.msra.mxu0 0
  %11963 = vmatprep.subr.bf16.mxu0 0
  %11964 = vmatpush2.bf16.msra.mxu0 0
  %11965 = vmatprep.subr.bf16.mxu0 0
  %11966 = vmatpush2.bf16.msra.mxu0 0
  %11967 = vmatprep.mubr.bf16.mxu0 0
  %11968 = vmatmul.mubr.bf16.gmra.mxu0 %v11839
  %v11969 = vpop.f32.mrf.mxu0
  %v11970 = vadd.f32 0.0, %v11969
  %v11971 = vpop.f32.mrf.mxu0
  %v11972 = vpop.f32.mrf.mxu0
  %v11973 = vadd.f32 0.0, %v11972
  %v11974 = vpop.f32.mrf.mxu0
  %11975 = vmatprep.mubr.bf16.mxu0 0
  %11976 = vmatmul.mubr.bf16.gmra.mxu0 %v11840
  %v11977 = vpop.f32.mrf.mxu0
  %v11978 = vadd.f32 0.0, %v11977
  %v11979 = vpop.f32.mrf.mxu0
  %v11980 = vpop.f32.mrf.mxu0
  %v11981 = vadd.f32 0.0, %v11980
  %v11982 = vpop.f32.mrf.mxu0
  %11983 = vmatprep.mubr.bf16.mxu0 0
  %11984 = vmatmul.mubr.bf16.gmra.mxu0 %v11841
  %v11985 = vpop.f32.mrf.mxu0
  %v11986 = vadd.f32 0.0, %v11985
  %v11987 = vpop.f32.mrf.mxu0
  %v11988 = vpop.f32.mrf.mxu0
  %v11989 = vadd.f32 0.0, %v11988
  %v11990 = vpop.f32.mrf.mxu0
  %11991 = vmatprep.mubr.bf16.mxu0 0
  %11992 = vmatmul.mubr.bf16.gmra.mxu0 %v11842
  %v11993 = vpop.f32.mrf.mxu0
  %v11994 = vadd.f32 0.0, %v11993
  %v11995 = vpop.f32.mrf.mxu0
  %v11996 = vpop.f32.mrf.mxu0
  %v11997 = vadd.f32 0.0, %v11996
  %v11998 = vpop.f32.mrf.mxu0
  %11999 = vmatprep.mubr.bf16.mxu0 0
  %12000 = vmatmul.mubr.bf16.gmra.mxu0 %v11843
  %v12001 = vpop.f32.mrf.mxu0
  %v12002 = vadd.f32 0.0, %v12001
  %v12003 = vpop.f32.mrf.mxu0
  %v12004 = vpop.f32.mrf.mxu0
  %v12005 = vadd.f32 0.0, %v12004
  %v12006 = vpop.f32.mrf.mxu0
  %12007 = vmatprep.mubr.bf16.mxu0 0
  %12008 = vmatmul.mubr.bf16.gmra.mxu0 %v11844
  %v12009 = vpop.f32.mrf.mxu0
  %v12010 = vadd.f32 0.0, %v12009
  %v12011 = vpop.f32.mrf.mxu0
  %v12012 = vpop.f32.mrf.mxu0
  %v12013 = vadd.f32 0.0, %v12012
  %v12014 = vpop.f32.mrf.mxu0
  %12015 = vmatprep.mubr.bf16.mxu0 0
  %12016 = vmatmul.mubr.bf16.gmra.mxu0 %v11845
  %v12017 = vpop.f32.mrf.mxu0
  %v12018 = vadd.f32 0.0, %v12017
  %v12019 = vpop.f32.mrf.mxu0
  %v12020 = vpop.f32.mrf.mxu0
  %v12021 = vadd.f32 0.0, %v12020
  %v12022 = vpop.f32.mrf.mxu0
  %12023 = vmatprep.mubr.bf16.mxu0 0
  %12024 = vmatmul.mubr.bf16.gmra.mxu0 %v11846
  %v12025 = vpop.f32.mrf.mxu0
  %v12026 = vadd.f32 0.0, %v12025
  %v12027 = vpop.f32.mrf.mxu0
  %v12028 = vpop.f32.mrf.mxu0
  %v12029 = vadd.f32 0.0, %v12028
  %v12030 = vpop.f32.mrf.mxu0
  %12031 = vmatprep.mubr.bf16.mxu0 0
  %12032 = vmatmul.mubr.bf16.gmra.mxu0 %v11847
  %v12033 = vpop.f32.mrf.mxu0
  %v12034 = vadd.f32 0.0, %v12033
  %v12035 = vpop.f32.mrf.mxu0
  %v12036 = vpop.f32.mrf.mxu0
  %v12037 = vadd.f32 0.0, %v12036
  %v12038 = vpop.f32.mrf.mxu0
  %12039 = vmatprep.mubr.bf16.mxu0 0
  %12040 = vmatmul.mubr.bf16.gmra.mxu0 %v11848
  %v12041 = vpop.f32.mrf.mxu0
  %v12042 = vadd.f32 0.0, %v12041
  %v12043 = vpop.f32.mrf.mxu0
  %v12044 = vpop.f32.mrf.mxu0
  %v12045 = vadd.f32 0.0, %v12044
  %v12046 = vpop.f32.mrf.mxu0
  %12047 = vmatprep.mubr.bf16.mxu0 0
  %12048 = vmatmul.mubr.bf16.gmra.mxu0 %v11849
  %v12049 = vpop.f32.mrf.mxu0
  %v12050 = vadd.f32 0.0, %v12049
  %v12051 = vpop.f32.mrf.mxu0
  %v12052 = vpop.f32.mrf.mxu0
  %v12053 = vadd.f32 0.0, %v12052
  %v12054 = vpop.f32.mrf.mxu0
  %12055 = vmatprep.mubr.bf16.mxu0 0
  %12056 = vmatmul.mubr.bf16.gmra.mxu0 %v11850
  %v12057 = vpop.f32.mrf.mxu0
  %v12058 = vadd.f32 0.0, %v12057
  %v12059 = vpop.f32.mrf.mxu0
  %v12060 = vpop.f32.mrf.mxu0
  %v12061 = vadd.f32 0.0, %v12060
  %v12062 = vpop.f32.mrf.mxu0
  %12063 = vmatprep.mubr.bf16.mxu0 0
  %12064 = vmatmul.mubr.bf16.gmra.mxu0 %v11851
  %v12065 = vpop.f32.mrf.mxu0
  %v12066 = vadd.f32 0.0, %v12065
  %v12067 = vpop.f32.mrf.mxu0
  %v12068 = vpop.f32.mrf.mxu0
  %v12069 = vadd.f32 0.0, %v12068
  %v12070 = vpop.f32.mrf.mxu0
  %12071 = vmatprep.mubr.bf16.mxu0 0
  %12072 = vmatmul.mubr.bf16.gmra.mxu0 %v11852
  %v12073 = vpop.f32.mrf.mxu0
  %v12074 = vadd.f32 0.0, %v12073
  %v12075 = vpop.f32.mrf.mxu0
  %v12076 = vpop.f32.mrf.mxu0
  %v12077 = vadd.f32 0.0, %v12076
  %v12078 = vpop.f32.mrf.mxu0
  %12079 = vmatprep.mubr.bf16.mxu0 0
  %12080 = vmatmul.mubr.bf16.gmra.mxu0 %v11853
  %v12081 = vpop.f32.mrf.mxu0
  %v12082 = vadd.f32 0.0, %v12081
  %v12083 = vpop.f32.mrf.mxu0
  %v12084 = vpop.f32.mrf.mxu0
  %v12085 = vadd.f32 0.0, %v12084
  %v12086 = vpop.f32.mrf.mxu0
  %12087 = vmatprep.mubr.bf16.mxu0 0
  %12088 = vmatmul.mubr.bf16.gmra.mxu0 %v11854
  %v12089 = vpop.f32.mrf.mxu0
  %v12090 = vadd.f32 0.0, %v12089
  %v12091 = vpop.f32.mrf.mxu0
  %v12092 = vpop.f32.mrf.mxu0
  %v12093 = vadd.f32 0.0, %v12092
  %v12094 = vpop.f32.mrf.mxu0
  %12095 = vmatprep.mubr.bf16.mxu0 0
  %12096 = vmatmul.mubr.bf16.gmra.mxu0 %v11855
  %v12097 = vpop.f32.mrf.mxu0
  %v12098 = vadd.f32 0.0, %v12097
  %v12099 = vpop.f32.mrf.mxu0
  %v12100 = vpop.f32.mrf.mxu0
  %v12101 = vadd.f32 0.0, %v12100
  %v12102 = vpop.f32.mrf.mxu0
  %12103 = vmatprep.mubr.bf16.mxu0 0
  %12104 = vmatmul.mubr.bf16.gmra.mxu0 %v11856
  %v12105 = vpop.f32.mrf.mxu0
  %v12106 = vadd.f32 0.0, %v12105
  %v12107 = vpop.f32.mrf.mxu0
  %v12108 = vpop.f32.mrf.mxu0
  %v12109 = vadd.f32 0.0, %v12108
  %v12110 = vpop.f32.mrf.mxu0
  %12111 = vmatprep.mubr.bf16.mxu0 0
  %12112 = vmatmul.mubr.bf16.gmra.mxu0 %v11857
  %v12113 = vpop.f32.mrf.mxu0
  %v12114 = vadd.f32 0.0, %v12113
  %v12115 = vpop.f32.mrf.mxu0
  %v12116 = vpop.f32.mrf.mxu0
  %v12117 = vadd.f32 0.0, %v12116
  %v12118 = vpop.f32.mrf.mxu0
  %12119 = vmatprep.mubr.bf16.mxu0 0
  %12120 = vmatmul.mubr.bf16.gmra.mxu0 %v11858
  %v12121 = vpop.f32.mrf.mxu0
  %v12122 = vadd.f32 0.0, %v12121
  %v12123 = vpop.f32.mrf.mxu0
  %v12124 = vpop.f32.mrf.mxu0
  %v12125 = vadd.f32 0.0, %v12124
  %v12126 = vpop.f32.mrf.mxu0
  %12127 = vmatprep.mubr.bf16.mxu0 0
  %12128 = vmatmul.mubr.bf16.gmra.mxu0 %v11859
  %v12129 = vpop.f32.mrf.mxu0
  %v12130 = vadd.f32 0.0, %v12129
  %v12131 = vpop.f32.mrf.mxu0
  %v12132 = vpop.f32.mrf.mxu0
  %v12133 = vadd.f32 0.0, %v12132
  %v12134 = vpop.f32.mrf.mxu0
  %12135 = vmatprep.mubr.bf16.mxu0 0
  %12136 = vmatmul.mubr.bf16.gmra.mxu0 %v11860
  %v12137 = vpop.f32.mrf.mxu0
  %v12138 = vadd.f32 0.0, %v12137
  %v12139 = vpop.f32.mrf.mxu0
  %v12140 = vpop.f32.mrf.mxu0
  %v12141 = vadd.f32 0.0, %v12140
  %v12142 = vpop.f32.mrf.mxu0
  %12143 = vmatprep.mubr.bf16.mxu0 0
  %12144 = vmatmul.mubr.bf16.gmra.mxu0 %v11861
  %v12145 = vpop.f32.mrf.mxu0
  %v12146 = vadd.f32 0.0, %v12145
  %v12147 = vpop.f32.mrf.mxu0
  %v12148 = vpop.f32.mrf.mxu0
  %v12149 = vadd.f32 0.0, %v12148
  %v12150 = vpop.f32.mrf.mxu0
  %12151 = vmatprep.mubr.bf16.mxu0 0
  %12152 = vmatmul.mubr.bf16.gmra.mxu0 %v11862
  %v12153 = vpop.f32.mrf.mxu0
  %v12154 = vadd.f32 0.0, %v12153
  %v12155 = vpop.f32.mrf.mxu0
  %v12156 = vpop.f32.mrf.mxu0
  %v12157 = vadd.f32 0.0, %v12156
  %v12158 = vpop.f32.mrf.mxu0
  %12159 = vmatprep.mubr.bf16.mxu0 0
  %12160 = vmatmul.mubr.bf16.gmra.mxu0 %v11863
  %v12161 = vpop.f32.mrf.mxu0
  %v12162 = vadd.f32 0.0, %v12161
  %v12163 = vpop.f32.mrf.mxu0
  %v12164 = vpop.f32.mrf.mxu0
  %v12165 = vadd.f32 0.0, %v12164
  %v12166 = vpop.f32.mrf.mxu0
  %12167 = vmatprep.mubr.bf16.mxu0 0
  %12168 = vmatmul.mubr.bf16.gmra.mxu0 %v11864
  %v12169 = vpop.f32.mrf.mxu0
  %v12170 = vadd.f32 0.0, %v12169
  %v12171 = vpop.f32.mrf.mxu0
  %v12172 = vpop.f32.mrf.mxu0
  %v12173 = vadd.f32 0.0, %v12172
  %v12174 = vpop.f32.mrf.mxu0
  %12175 = vmatprep.mubr.bf16.mxu0 0
  %12176 = vmatmul.mubr.bf16.gmra.mxu0 %v11865
  %v12177 = vpop.f32.mrf.mxu0
  %v12178 = vadd.f32 0.0, %v12177
  %v12179 = vpop.f32.mrf.mxu0
  %v12180 = vpop.f32.mrf.mxu0
  %v12181 = vadd.f32 0.0, %v12180
  %v12182 = vpop.f32.mrf.mxu0
  %12183 = vmatprep.mubr.bf16.mxu0 0
  %12184 = vmatmul.mubr.bf16.gmra.mxu0 %v11866
  %v12185 = vpop.f32.mrf.mxu0
  %v12186 = vadd.f32 0.0, %v12185
  %v12187 = vpop.f32.mrf.mxu0
  %v12188 = vpop.f32.mrf.mxu0
  %v12189 = vadd.f32 0.0, %v12188
  %v12190 = vpop.f32.mrf.mxu0
  %12191 = vmatprep.mubr.bf16.mxu0 0
  %12192 = vmatmul.mubr.bf16.gmra.mxu0 %v11867
  %v12193 = vpop.f32.mrf.mxu0
  %v12194 = vadd.f32 0.0, %v12193
  %v12195 = vpop.f32.mrf.mxu0
  %v12196 = vpop.f32.mrf.mxu0
  %v12197 = vadd.f32 0.0, %v12196
  %v12198 = vpop.f32.mrf.mxu0
  %12199 = vmatprep.mubr.bf16.mxu0 0
  %12200 = vmatmul.mubr.bf16.gmra.mxu0 %v11868
  %v12201 = vpop.f32.mrf.mxu0
  %v12202 = vadd.f32 0.0, %v12201
  %v12203 = vpop.f32.mrf.mxu0
  %v12204 = vpop.f32.mrf.mxu0
  %v12205 = vadd.f32 0.0, %v12204
  %v12206 = vpop.f32.mrf.mxu0
  %12207 = vmatprep.mubr.bf16.mxu0 0
  %12208 = vmatmul.mubr.bf16.gmra.mxu0 %v11869
  %v12209 = vpop.f32.mrf.mxu0
  %v12210 = vadd.f32 0.0, %v12209
  %v12211 = vpop.f32.mrf.mxu0
  %v12212 = vpop.f32.mrf.mxu0
  %v12213 = vadd.f32 0.0, %v12212
  %v12214 = vpop.f32.mrf.mxu0
  %12215 = vmatprep.mubr.bf16.mxu0 0
  %12216 = vmatmul.mubr.bf16.gmra.mxu0 %v11870
  %v12217 = vpop.f32.mrf.mxu0
  %v12218 = vadd.f32 0.0, %v12217
  %v12219 = vpop.f32.mrf.mxu0
  %v12220 = vpop.f32.mrf.mxu0
  %v12221 = vadd.f32 0.0, %v12220
  %v12222 = vpop.f32.mrf.mxu0
  %12223 = vdwg.mxu0
  %v12224 = vld [vmem:[%s8] sm:$0x1]
  %v12225 = vld [vmem:[%s9] sm:$0x1]
  %v12226 = vadd.f32 %v11970, %v11973
  %v12227 = vadd.f32 %v12226, %v11978
  %v12228 = vadd.f32 %v12227, %v11981
  %v12229 = vadd.f32 %v12228, %v11986
  %v12230 = vadd.f32 %v12229, %v11989
  %v12231 = vadd.f32 %v12230, %v11994
  %v12232 = vadd.f32 %v12231, %v11997
  %v12233 = vadd.f32 %v12232, %v12002
  %v12234 = vadd.f32 %v12233, %v12005
  %v12235 = vadd.f32 %v12234, %v12010
  %v12236 = vadd.f32 %v12235, %v12013
  %v12237 = vadd.f32 %v12236, %v12018
  %v12238 = vadd.f32 %v12237, %v12021
  %v12239 = vadd.f32 %v12238, %v12026
  %v12240 = vadd.f32 %v12239, %v12029
  %v12241 = vadd.f32 %v12240, %v12034
  %v12242 = vadd.f32 %v12241, %v12037
  %v12243 = vadd.f32 %v12242, %v12042
  %v12244 = vadd.f32 %v12243, %v12045
  %v12245 = vadd.f32 %v12244, %v12050
  %v12246 = vadd.f32 %v12245, %v12053
  %v12247 = vadd.f32 %v12246, %v12058
  %v12248 = vadd.f32 %v12247, %v12061
  %v12249 = vadd.f32 %v12248, %v12066
  %v12250 = vadd.f32 %v12249, %v12069
  %v12251 = vadd.f32 %v12250, %v12074
  %v12252 = vadd.f32 %v12251, %v12077
  %v12253 = vadd.f32 %v12252, %v12082
  %v12254 = vadd.f32 %v12253, %v12085
  %v12255 = vadd.f32 %v12254, %v12090
  %v12256 = vadd.f32 %v12255, %v12093
  %v12257 = vadd.f32 %v12256, %v12098
  %v12258 = vadd.f32 %v12257, %v12101
  %v12259 = vadd.f32 %v12258, %v12106
  %v12260 = vadd.f32 %v12259, %v12109
  %v12261 = vadd.f32 %v12260, %v12114
  %v12262 = vadd.f32 %v12261, %v12117
  %v12263 = vadd.f32 %v12262, %v12122
  %v12264 = vadd.f32 %v12263, %v12125
  %v12265 = vadd.f32 %v12264, %v12130
  %v12266 = vadd.f32 %v12265, %v12133
  %v12267 = vadd.f32 %v12266, %v12138
  %v12268 = vadd.f32 %v12267, %v12141
  %v12269 = vadd.f32 %v12268, %v12146
  %v12270 = vadd.f32 %v12269, %v12149
  %v12271 = vadd.f32 %v12270, %v12154
  %v12272 = vadd.f32 %v12271, %v12157
  %v12273 = vadd.f32 %v12272, %v12162
  %v12274 = vadd.f32 %v12273, %v12165
  %v12275 = vadd.f32 %v12274, %v12170
  %v12276 = vadd.f32 %v12275, %v12173
  %v12277 = vadd.f32 %v12276, %v12178
  %v12278 = vadd.f32 %v12277, %v12181
  %v12279 = vadd.f32 %v12278, %v12186
  %v12280 = vadd.f32 %v12279, %v12189
  %v12281 = vadd.f32 %v12280, %v12194
  %v12282 = vadd.f32 %v12281, %v12197
  %v12283 = vadd.f32 %v12282, %v12202
  %v12284 = vadd.f32 %v12283, %v12205
  %v12285 = vadd.f32 %v12284, %v12210
  %v12286 = vadd.f32 %v12285, %v12213
  %v12287 = vadd.f32 %v12286, %v12218
  %v12288 = vadd.f32 %v12287, %v12221
  %v12289 = vrot.slane %v12288, 4
  %v12290 = vadd.f32 %v12288, %v12289
  %v12291 = vrot.slane %v12290, 2
  %v12292 = vadd.f32 %v12290, %v12291
  %v12293 = vrot.slane %v12292, 1
  %v12294 = vadd.f32 %v12292, %v12293
  %v12295 = vmul.f32 %v12294, %v716
  %v12296 = vmul.f32 %v11970, %v11970
  %v12297 = vmul.f32 %v11973, %v11973
  %v12298 = vmul.f32 %v11978, %v11978
  %v12299 = vmul.f32 %v11981, %v11981
  %v12300 = vmul.f32 %v11986, %v11986
  %v12301 = vmul.f32 %v11989, %v11989
  %v12302 = vmul.f32 %v11994, %v11994
  %v12303 = vmul.f32 %v11997, %v11997
  %v12304 = vmul.f32 %v12002, %v12002
  %v12305 = vmul.f32 %v12005, %v12005
  %v12306 = vmul.f32 %v12010, %v12010
  %v12307 = vmul.f32 %v12013, %v12013
  %v12308 = vmul.f32 %v12018, %v12018
  %v12309 = vmul.f32 %v12021, %v12021
  %v12310 = vmul.f32 %v12026, %v12026
  %v12311 = vmul.f32 %v12029, %v12029
  %v12312 = vmul.f32 %v12034, %v12034
  %v12313 = vmul.f32 %v12037, %v12037
  %v12314 = vmul.f32 %v12042, %v12042
  %v12315 = vmul.f32 %v12045, %v12045
  %v12316 = vmul.f32 %v12050, %v12050
  %v12317 = vmul.f32 %v12053, %v12053
  %v12318 = vmul.f32 %v12058, %v12058
  %v12319 = vmul.f32 %v12061, %v12061
  %v12320 = vmul.f32 %v12066, %v12066
  %v12321 = vmul.f32 %v12069, %v12069
  %v12322 = vmul.f32 %v12074, %v12074
  %v12323 = vmul.f32 %v12077, %v12077
  %v12324 = vmul.f32 %v12082, %v12082
  %v12325 = vmul.f32 %v12085, %v12085
  %v12326 = vmul.f32 %v12090, %v12090
  %v12327 = vmul.f32 %v12093, %v12093
  %v12328 = vmul.f32 %v12098, %v12098
  %v12329 = vmul.f32 %v12101, %v12101
  %v12330 = vmul.f32 %v12106, %v12106
  %v12331 = vmul.f32 %v12109, %v12109
  %v12332 = vmul.f32 %v12114, %v12114
  %v12333 = vmul.f32 %v12117, %v12117
  %v12334 = vmul.f32 %v12122, %v12122
  %v12335 = vmul.f32 %v12125, %v12125
  %v12336 = vmul.f32 %v12130, %v12130
  %v12337 = vmul.f32 %v12133, %v12133
  %v12338 = vmul.f32 %v12138, %v12138
  %v12339 = vmul.f32 %v12141, %v12141
  %v12340 = vmul.f32 %v12146, %v12146
  %v12341 = vmul.f32 %v12149, %v12149
  %v12342 = vmul.f32 %v12154, %v12154
  %v12343 = vmul.f32 %v12157, %v12157
  %v12344 = vmul.f32 %v12162, %v12162
  %v12345 = vmul.f32 %v12165, %v12165
  %v12346 = vmul.f32 %v12170, %v12170
  %v12347 = vmul.f32 %v12173, %v12173
  %v12348 = vmul.f32 %v12178, %v12178
  %v12349 = vmul.f32 %v12181, %v12181
  %v12350 = vmul.f32 %v12186, %v12186
  %v12351 = vmul.f32 %v12189, %v12189
  %v12352 = vmul.f32 %v12194, %v12194
  %v12353 = vmul.f32 %v12197, %v12197
  %v12354 = vmul.f32 %v12202, %v12202
  %v12355 = vmul.f32 %v12205, %v12205
  %v12356 = vmul.f32 %v12210, %v12210
  %v12357 = vmul.f32 %v12213, %v12213
  %v12358 = vmul.f32 %v12218, %v12218
  %v12359 = vmul.f32 %v12221, %v12221
  %v12360 = vadd.f32 %v12296, %v12297
  %v12361 = vadd.f32 %v12360, %v12298
  %v12362 = vadd.f32 %v12361, %v12299
  %v12363 = vadd.f32 %v12362, %v12300
  %v12364 = vadd.f32 %v12363, %v12301
  %v12365 = vadd.f32 %v12364, %v12302
  %v12366 = vadd.f32 %v12365, %v12303
  %v12367 = vadd.f32 %v12366, %v12304
  %v12368 = vadd.f32 %v12367, %v12305
  %v12369 = vadd.f32 %v12368, %v12306
  %v12370 = vadd.f32 %v12369, %v12307
  %v12371 = vadd.f32 %v12370, %v12308
  %v12372 = vadd.f32 %v12371, %v12309
  %v12373 = vadd.f32 %v12372, %v12310
  %v12374 = vadd.f32 %v12373, %v12311
  %v12375 = vadd.f32 %v12374, %v12312
  %v12376 = vadd.f32 %v12375, %v12313
  %v12377 = vadd.f32 %v12376, %v12314
  %v12378 = vadd.f32 %v12377, %v12315
  %v12379 = vadd.f32 %v12378, %v12316
  %v12380 = vadd.f32 %v12379, %v12317
  %v12381 = vadd.f32 %v12380, %v12318
  %v12382 = vadd.f32 %v12381, %v12319
  %v12383 = vadd.f32 %v12382, %v12320
  %v12384 = vadd.f32 %v12383, %v12321
  %v12385 = vadd.f32 %v12384, %v12322
  %v12386 = vadd.f32 %v12385, %v12323
  %v12387 = vadd.f32 %v12386, %v12324
  %v12388 = vadd.f32 %v12387, %v12325
  %v12389 = vadd.f32 %v12388, %v12326
  %v12390 = vadd.f32 %v12389, %v12327
  %v12391 = vadd.f32 %v12390, %v12328
  %v12392 = vadd.f32 %v12391, %v12329
  %v12393 = vadd.f32 %v12392, %v12330
  %v12394 = vadd.f32 %v12393, %v12331
  %v12395 = vadd.f32 %v12394, %v12332
  %v12396 = vadd.f32 %v12395, %v12333
  %v12397 = vadd.f32 %v12396, %v12334
  %v12398 = vadd.f32 %v12397, %v12335
  %v12399 = vadd.f32 %v12398, %v12336
  %v12400 = vadd.f32 %v12399, %v12337
  %v12401 = vadd.f32 %v12400, %v12338
  %v12402 = vadd.f32 %v12401, %v12339
  %v12403 = vadd.f32 %v12402, %v12340
  %v12404 = vadd.f32 %v12403, %v12341
  %v12405 = vadd.f32 %v12404, %v12342
  %v12406 = vadd.f32 %v12405, %v12343
  %v12407 = vadd.f32 %v12406, %v12344
  %v12408 = vadd.f32 %v12407, %v12345
  %v12409 = vadd.f32 %v12408, %v12346
  %v12410 = vadd.f32 %v12409, %v12347
  %v12411 = vadd.f32 %v12410, %v12348
  %v12412 = vadd.f32 %v12411, %v12349
  %v12413 = vadd.f32 %v12412, %v12350
  %v12414 = vadd.f32 %v12413, %v12351
  %v12415 = vadd.f32 %v12414, %v12352
  %v12416 = vadd.f32 %v12415, %v12353
  %v12417 = vadd.f32 %v12416, %v12354
  %v12418 = vadd.f32 %v12417, %v12355
  %v12419 = vadd.f32 %v12418, %v12356
  %v12420 = vadd.f32 %v12419, %v12357
  %v12421 = vadd.f32 %v12420, %v12358
  %v12422 = vadd.f32 %v12421, %v12359
  %v12423 = vrot.slane %v12422, 4
  %v12424 = vadd.f32 %v12422, %v12423
  %v12425 = vrot.slane %v12424, 2
  %v12426 = vadd.f32 %v12424, %v12425
  %v12427 = vrot.slane %v12426, 1
  %v12428 = vadd.f32 %v12426, %v12427
  %v12429 = vmul.f32 %v12428, %v716
  %v12430 = vmul.f32 %v12295, %v12295
  %v12431 = vsub.f32 %v12429, %v12430
  %v12432 = vmax.f32 %v12431, 0.0
  %v12433 = vsub.f32 %v11970, %v12295
  %v12434 = vsub.f32 %v11973, %v12295
  %v12435 = vsub.f32 %v11978, %v12295
  %v12436 = vsub.f32 %v11981, %v12295
  %v12437 = vsub.f32 %v11986, %v12295
  %v12438 = vsub.f32 %v11989, %v12295
  %v12439 = vsub.f32 %v11994, %v12295
  %v12440 = vsub.f32 %v11997, %v12295
  %v12441 = vsub.f32 %v12002, %v12295
  %v12442 = vsub.f32 %v12005, %v12295
  %v12443 = vsub.f32 %v12010, %v12295
  %v12444 = vsub.f32 %v12013, %v12295
  %v12445 = vsub.f32 %v12018, %v12295
  %v12446 = vsub.f32 %v12021, %v12295
  %v12447 = vsub.f32 %v12026, %v12295
  %v12448 = vsub.f32 %v12029, %v12295
  %v12449 = vsub.f32 %v12034, %v12295
  %v12450 = vsub.f32 %v12037, %v12295
  %v12451 = vsub.f32 %v12042, %v12295
  %v12452 = vsub.f32 %v12045, %v12295
  %v12453 = vsub.f32 %v12050, %v12295
  %v12454 = vsub.f32 %v12053, %v12295
  %v12455 = vsub.f32 %v12058, %v12295
  %v12456 = vsub.f32 %v12061, %v12295
  %v12457 = vsub.f32 %v12066, %v12295
  %v12458 = vsub.f32 %v12069, %v12295
  %v12459 = vsub.f32 %v12074, %v12295
  %v12460 = vsub.f32 %v12077, %v12295
  %v12461 = vsub.f32 %v12082, %v12295
  %v12462 = vsub.f32 %v12085, %v12295
  %v12463 = vsub.f32 %v12090, %v12295
  %v12464 = vsub.f32 %v12093, %v12295
  %v12465 = vsub.f32 %v12098, %v12295
  %v12466 = vsub.f32 %v12101, %v12295
  %v12467 = vsub.f32 %v12106, %v12295
  %v12468 = vsub.f32 %v12109, %v12295
  %v12469 = vsub.f32 %v12114, %v12295
  %v12470 = vsub.f32 %v12117, %v12295
  %v12471 = vsub.f32 %v12122, %v12295
  %v12472 = vsub.f32 %v12125, %v12295
  %v12473 = vsub.f32 %v12130, %v12295
  %v12474 = vsub.f32 %v12133, %v12295
  %v12475 = vsub.f32 %v12138, %v12295
  %v12476 = vsub.f32 %v12141, %v12295
  %v12477 = vsub.f32 %v12146, %v12295
  %v12478 = vsub.f32 %v12149, %v12295
  %v12479 = vsub.f32 %v12154, %v12295
  %v12480 = vsub.f32 %v12157, %v12295
  %v12481 = vsub.f32 %v12162, %v12295
  %v12482 = vsub.f32 %v12165, %v12295
  %v12483 = vsub.f32 %v12170, %v12295
  %v12484 = vsub.f32 %v12173, %v12295
  %v12485 = vsub.f32 %v12178, %v12295
  %v12486 = vsub.f32 %v12181, %v12295
  %v12487 = vsub.f32 %v12186, %v12295
  %v12488 = vsub.f32 %v12189, %v12295
  %v12489 = vsub.f32 %v12194, %v12295
  %v12490 = vsub.f32 %v12197, %v12295
  %v12491 = vsub.f32 %v12202, %v12295
  %v12492 = vsub.f32 %v12205, %v12295
  %v12493 = vsub.f32 %v12210, %v12295
  %v12494 = vsub.f32 %v12213, %v12295
  %v12495 = vsub.f32 %v12218, %v12295
  %v12496 = vsub.f32 %v12221, %v12295
  %v12497 = vadd.f32 %v12432, 1e-05
  %v12498 = vrsqrt.pop %v12497
  %v12499 = vmul.f32 %v12433, %v12498
  %v12500 = vmul.f32 %v12434, %v12498
  %v12501 = vmul.f32 %v12435, %v12498
  %v12502 = vmul.f32 %v12436, %v12498
  %v12503 = vmul.f32 %v12437, %v12498
  %v12504 = vmul.f32 %v12438, %v12498
  %v12505 = vmul.f32 %v12439, %v12498
  %v12506 = vmul.f32 %v12440, %v12498
  %v12507 = vmul.f32 %v12441, %v12498
  %v12508 = vmul.f32 %v12442, %v12498
  %v12509 = vmul.f32 %v12443, %v12498
  %v12510 = vmul.f32 %v12444, %v12498
  %v12511 = vmul.f32 %v12445, %v12498
  %v12512 = vmul.f32 %v12446, %v12498
  %v12513 = vmul.f32 %v12447, %v12498
  %v12514 = vmul.f32 %v12448, %v12498
  %v12515 = vmul.f32 %v12449, %v12498
  %v12516 = vmul.f32 %v12450, %v12498
  %v12517 = vmul.f32 %v12451, %v12498
  %v12518 = vmul.f32 %v12452, %v12498
  %v12519 = vmul.f32 %v12453, %v12498
  %v12520 = vmul.f32 %v12454, %v12498
  %v12521 = vmul.f32 %v12455, %v12498
  %v12522 = vmul.f32 %v12456, %v12498
  %v12523 = vmul.f32 %v12457, %v12498
  %v12524 = vmul.f32 %v12458, %v12498
  %v12525 = vmul.f32 %v12459, %v12498
  %v12526 = vmul.f32 %v12460, %v12498
  %v12527 = vmul.f32 %v12461, %v12498
  %v12528 = vmul.f32 %v12462, %v12498
  %v12529 = vmul.f32 %v12463, %v12498
  %v12530 = vmul.f32 %v12464, %v12498
  %v12531 = vmul.f32 %v12465, %v12498
  %v12532 = vmul.f32 %v12466, %v12498
  %v12533 = vmul.f32 %v12467, %v12498
  %v12534 = vmul.f32 %v12468, %v12498
  %v12535 = vmul.f32 %v12469, %v12498
  %v12536 = vmul.f32 %v12470, %v12498
  %v12537 = vmul.f32 %v12471, %v12498
  %v12538 = vmul.f32 %v12472, %v12498
  %v12539 = vmul.f32 %v12473, %v12498
  %v12540 = vmul.f32 %v12474, %v12498
  %v12541 = vmul.f32 %v12475, %v12498
  %v12542 = vmul.f32 %v12476, %v12498
  %v12543 = vmul.f32 %v12477, %v12498
  %v12544 = vmul.f32 %v12478, %v12498
  %v12545 = vmul.f32 %v12479, %v12498
  %v12546 = vmul.f32 %v12480, %v12498
  %v12547 = vmul.f32 %v12481, %v12498
  %v12548 = vmul.f32 %v12482, %v12498
  %v12549 = vmul.f32 %v12483, %v12498
  %v12550 = vmul.f32 %v12484, %v12498
  %v12551 = vmul.f32 %v12485, %v12498
  %v12552 = vmul.f32 %v12486, %v12498
  %v12553 = vmul.f32 %v12487, %v12498
  %v12554 = vmul.f32 %v12488, %v12498
  %v12555 = vmul.f32 %v12489, %v12498
  %v12556 = vmul.f32 %v12490, %v12498
  %v12557 = vmul.f32 %v12491, %v12498
  %v12558 = vmul.f32 %v12492, %v12498
  %v12559 = vmul.f32 %v12493, %v12498
  %v12560 = vmul.f32 %v12494, %v12498
  %v12561 = vmul.f32 %v12495, %v12498
  %v12562 = vmul.f32 %v12496, %v12498
  %v12564 = vlaneseq
  %v12565 = vshrl.u32 %v12564, 7
  %v12566 = vsub.s32 0, %v12565
  %v12567 = vrot.slane %v12224, %v12566
  %v12569 = vmul.f32 %v12499, %v12567
  %v12570 = vmul.f32 %v12500, %v12567
  %v12571 = vmul.f32 %v12501, %v12567
  %v12572 = vmul.f32 %v12502, %v12567
  %v12573 = vmul.f32 %v12503, %v12567
  %v12574 = vmul.f32 %v12504, %v12567
  %v12575 = vmul.f32 %v12505, %v12567
  %v12576 = vmul.f32 %v12506, %v12567
  %v12577 = vmul.f32 %v12507, %v12567
  %v12578 = vmul.f32 %v12508, %v12567
  %v12579 = vmul.f32 %v12509, %v12567
  %v12580 = vmul.f32 %v12510, %v12567
  %v12581 = vmul.f32 %v12511, %v12567
  %v12582 = vmul.f32 %v12512, %v12567
  %v12583 = vmul.f32 %v12513, %v12567
  %v12584 = vmul.f32 %v12514, %v12567
  %v12585 = vmul.f32 %v12515, %v12567
  %v12586 = vmul.f32 %v12516, %v12567
  %v12587 = vmul.f32 %v12517, %v12567
  %v12588 = vmul.f32 %v12518, %v12567
  %v12589 = vmul.f32 %v12519, %v12567
  %v12590 = vmul.f32 %v12520, %v12567
  %v12591 = vmul.f32 %v12521, %v12567
  %v12592 = vmul.f32 %v12522, %v12567
  %v12593 = vmul.f32 %v12523, %v12567
  %v12594 = vmul.f32 %v12524, %v12567
  %v12595 = vmul.f32 %v12525, %v12567
  %v12596 = vmul.f32 %v12526, %v12567
  %v12597 = vmul.f32 %v12527, %v12567
  %v12598 = vmul.f32 %v12528, %v12567
  %v12599 = vmul.f32 %v12529, %v12567
  %v12600 = vmul.f32 %v12530, %v12567
  %v12601 = vmul.f32 %v12531, %v12567
  %v12602 = vmul.f32 %v12532, %v12567
  %v12603 = vmul.f32 %v12533, %v12567
  %v12604 = vmul.f32 %v12534, %v12567
  %v12605 = vmul.f32 %v12535, %v12567
  %v12606 = vmul.f32 %v12536, %v12567
  %v12607 = vmul.f32 %v12537, %v12567
  %v12608 = vmul.f32 %v12538, %v12567
  %v12609 = vmul.f32 %v12539, %v12567
  %v12610 = vmul.f32 %v12540, %v12567
  %v12611 = vmul.f32 %v12541, %v12567
  %v12612 = vmul.f32 %v12542, %v12567
  %v12613 = vmul.f32 %v12543, %v12567
  %v12614 = vmul.f32 %v12544, %v12567
  %v12615 = vmul.f32 %v12545, %v12567
  %v12616 = vmul.f32 %v12546, %v12567
  %v12617 = vmul.f32 %v12547, %v12567
  %v12618 = vmul.f32 %v12548, %v12567
  %v12619 = vmul.f32 %v12549, %v12567
  %v12620 = vmul.f32 %v12550, %v12567
  %v12621 = vmul.f32 %v12551, %v12567
  %v12622 = vmul.f32 %v12552, %v12567
  %v12623 = vmul.f32 %v12553, %v12567
  %v12624 = vmul.f32 %v12554, %v12567
  %v12625 = vmul.f32 %v12555, %v12567
  %v12626 = vmul.f32 %v12556, %v12567
  %v12627 = vmul.f32 %v12557, %v12567
  %v12628 = vmul.f32 %v12558, %v12567
  %v12629 = vmul.f32 %v12559, %v12567
  %v12630 = vmul.f32 %v12560, %v12567
  %v12631 = vmul.f32 %v12561, %v12567
  %v12632 = vmul.f32 %v12562, %v12567
  %v12634 = vlaneseq
  %v12635 = vshrl.u32 %v12634, 7
  %v12636 = vsub.s32 0, %v12635
  %v12637 = vrot.slane %v12225, %v12636
  %v12639 = vadd.f32 %v12569, %v12637
  %v12640 = vadd.f32 %v12570, %v12637
  %v12641 = vadd.f32 %v12571, %v12637
  %v12642 = vadd.f32 %v12572, %v12637
  %v12643 = vadd.f32 %v12573, %v12637
  %v12644 = vadd.f32 %v12574, %v12637
  %v12645 = vadd.f32 %v12575, %v12637
  %v12646 = vadd.f32 %v12576, %v12637
  %v12647 = vadd.f32 %v12577, %v12637
  %v12648 = vadd.f32 %v12578, %v12637
  %v12649 = vadd.f32 %v12579, %v12637
  %v12650 = vadd.f32 %v12580, %v12637
  %v12651 = vadd.f32 %v12581, %v12637
  %v12652 = vadd.f32 %v12582, %v12637
  %v12653 = vadd.f32 %v12583, %v12637
  %v12654 = vadd.f32 %v12584, %v12637
  %v12655 = vadd.f32 %v12585, %v12637
  %v12656 = vadd.f32 %v12586, %v12637
  %v12657 = vadd.f32 %v12587, %v12637
  %v12658 = vadd.f32 %v12588, %v12637
  %v12659 = vadd.f32 %v12589, %v12637
  %v12660 = vadd.f32 %v12590, %v12637
  %v12661 = vadd.f32 %v12591, %v12637
  %v12662 = vadd.f32 %v12592, %v12637
  %v12663 = vadd.f32 %v12593, %v12637
  %v12664 = vadd.f32 %v12594, %v12637
  %v12665 = vadd.f32 %v12595, %v12637
  %v12666 = vadd.f32 %v12596, %v12637
  %v12667 = vadd.f32 %v12597, %v12637
  %v12668 = vadd.f32 %v12598, %v12637
  %v12669 = vadd.f32 %v12599, %v12637
  %v12670 = vadd.f32 %v12600, %v12637
  %v12671 = vadd.f32 %v12601, %v12637
  %v12672 = vadd.f32 %v12602, %v12637
  %v12673 = vadd.f32 %v12603, %v12637
  %v12674 = vadd.f32 %v12604, %v12637
  %v12675 = vadd.f32 %v12605, %v12637
  %v12676 = vadd.f32 %v12606, %v12637
  %v12677 = vadd.f32 %v12607, %v12637
  %v12678 = vadd.f32 %v12608, %v12637
  %v12679 = vadd.f32 %v12609, %v12637
  %v12680 = vadd.f32 %v12610, %v12637
  %v12681 = vadd.f32 %v12611, %v12637
  %v12682 = vadd.f32 %v12612, %v12637
  %v12683 = vadd.f32 %v12613, %v12637
  %v12684 = vadd.f32 %v12614, %v12637
  %v12685 = vadd.f32 %v12615, %v12637
  %v12686 = vadd.f32 %v12616, %v12637
  %v12687 = vadd.f32 %v12617, %v12637
  %v12688 = vadd.f32 %v12618, %v12637
  %v12689 = vadd.f32 %v12619, %v12637
  %v12690 = vadd.f32 %v12620, %v12637
  %v12691 = vadd.f32 %v12621, %v12637
  %v12692 = vadd.f32 %v12622, %v12637
  %v12693 = vadd.f32 %v12623, %v12637
  %v12694 = vadd.f32 %v12624, %v12637
  %v12695 = vadd.f32 %v12625, %v12637
  %v12696 = vadd.f32 %v12626, %v12637
  %v12697 = vadd.f32 %v12627, %v12637
  %v12698 = vadd.f32 %v12628, %v12637
  %v12699 = vadd.f32 %v12629, %v12637
  %v12700 = vadd.f32 %v12630, %v12637
  %v12701 = vadd.f32 %v12631, %v12637
  %v12702 = vadd.f32 %v12632, %v12637
  %v12703 = vld [vmem:[%s0] sm:$0xf]
  %v12704 = vld [vmem:[%s0 + $0x4] sm:$0xf]
  %v12705 = vld [vmem:[%s0 + $0x8] sm:$0xf]
  %v12706 = vld [vmem:[%s0 + $0xc] sm:$0xf]
  %v12707 = vld [vmem:[%s0 + $0x10] sm:$0xf]
  %v12708 = vld [vmem:[%s0 + $0x14] sm:$0xf]
  %v12709 = vld [vmem:[%s0 + $0x18] sm:$0xf]
  %v12710 = vld [vmem:[%s0 + $0x1c] sm:$0xf]
  %v12711 = vld [vmem:[%s0 + $0x20] sm:$0xf]
  %v12712 = vld [vmem:[%s0 + $0x24] sm:$0xf]
  %v12713 = vld [vmem:[%s0 + $0x28] sm:$0xf]
  %v12714 = vld [vmem:[%s0 + $0x2c] sm:$0xf]
  %v12715 = vld [vmem:[%s0 + $0x30] sm:$0xf]
  %v12716 = vld [vmem:[%s0 + $0x34] sm:$0xf]
  %v12717 = vld [vmem:[%s0 + $0x38] sm:$0xf]
  %v12718 = vld [vmem:[%s0 + $0x3c] sm:$0xf]
  %v12719 = vld [vmem:[%s0 + $0x40] sm:$0xf]
  %v12720 = vld [vmem:[%s0 + $0x44] sm:$0xf]
  %v12721 = vld [vmem:[%s0 + $0x48] sm:$0xf]
  %v12722 = vld [vmem:[%s0 + $0x4c] sm:$0xf]
  %v12723 = vld [vmem:[%s0 + $0x50] sm:$0xf]
  %v12724 = vld [vmem:[%s0 + $0x54] sm:$0xf]
  %v12725 = vld [vmem:[%s0 + $0x58] sm:$0xf]
  %v12726 = vld [vmem:[%s0 + $0x5c] sm:$0xf]
  %v12727 = vld [vmem:[%s0 + $0x60] sm:$0xf]
  %v12728 = vld [vmem:[%s0 + $0x64] sm:$0xf]
  %v12729 = vld [vmem:[%s0 + $0x68] sm:$0xf]
  %v12730 = vld [vmem:[%s0 + $0x6c] sm:$0xf]
  %v12731 = vld [vmem:[%s0 + $0x70] sm:$0xf]
  %v12732 = vld [vmem:[%s0 + $0x74] sm:$0xf]
  %v12733 = vld [vmem:[%s0 + $0x78] sm:$0xf]
  %v12734 = vld [vmem:[%s0 + $0x7c] sm:$0xf]
  %v12735 = vld [vmem:[%s0 + $0x80] sm:$0xf]
  %v12736 = vld [vmem:[%s0 + $0x84] sm:$0xf]
  %v12737 = vld [vmem:[%s0 + $0x88] sm:$0xf]
  %v12738 = vld [vmem:[%s0 + $0x8c] sm:$0xf]
  %v12739 = vld [vmem:[%s0 + $0x90] sm:$0xf]
  %v12740 = vld [vmem:[%s0 + $0x94] sm:$0xf]
  %v12741 = vld [vmem:[%s0 + $0x98] sm:$0xf]
  %v12742 = vld [vmem:[%s0 + $0x9c] sm:$0xf]
  %v12743 = vld [vmem:[%s0 + $0xa0] sm:$0xf]
  %v12744 = vld [vmem:[%s0 + $0xa4] sm:$0xf]
  %v12745 = vld [vmem:[%s0 + $0xa8] sm:$0xf]
  %v12746 = vld [vmem:[%s0 + $0xac] sm:$0xf]
  %v12747 = vld [vmem:[%s0 + $0xb0] sm:$0xf]
  %v12748 = vld [vmem:[%s0 + $0xb4] sm:$0xf]
  %v12749 = vld [vmem:[%s0 + $0xb8] sm:$0xf]
  %v12750 = vld [vmem:[%s0 + $0xbc] sm:$0xf]
  %v12751 = vld [vmem:[%s0 + $0xc0] sm:$0xf]
  %v12752 = vld [vmem:[%s0 + $0xc4] sm:$0xf]
  %v12753 = vld [vmem:[%s0 + $0xc8] sm:$0xf]
  %v12754 = vld [vmem:[%s0 + $0xcc] sm:$0xf]
  %v12755 = vld [vmem:[%s0 + $0xd0] sm:$0xf]
  %v12756 = vld [vmem:[%s0 + $0xd4] sm:$0xf]
  %v12757 = vld [vmem:[%s0 + $0xd8] sm:$0xf]
  %v12758 = vld [vmem:[%s0 + $0xdc] sm:$0xf]
  %v12759 = vld [vmem:[%s0 + $0xe0] sm:$0xf]
  %v12760 = vld [vmem:[%s0 + $0xe4] sm:$0xf]
  %v12761 = vld [vmem:[%s0 + $0xe8] sm:$0xf]
  %v12762 = vld [vmem:[%s0 + $0xec] sm:$0xf]
  %v12763 = vld [vmem:[%s0 + $0xf0] sm:$0xf]
  %v12764 = vld [vmem:[%s0 + $0xf4] sm:$0xf]
  %v12765 = vld [vmem:[%s0 + $0xf8] sm:$0xf]
  %v12766 = vld [vmem:[%s0 + $0xfc] sm:$0xf]
  %v12767 = vunpack.c.l.bf16 %v12703
  %v12768 = vunpack.c.l.bf16 %v12704
  %v12769 = vunpack.c.l.bf16 %v12705
  %v12770 = vunpack.c.l.bf16 %v12706
  %v12771 = vunpack.c.l.bf16 %v12707
  %v12772 = vunpack.c.l.bf16 %v12708
  %v12773 = vunpack.c.l.bf16 %v12709
  %v12774 = vunpack.c.l.bf16 %v12710
  %v12775 = vunpack.c.l.bf16 %v12711
  %v12776 = vunpack.c.l.bf16 %v12712
  %v12777 = vunpack.c.l.bf16 %v12713
  %v12778 = vunpack.c.l.bf16 %v12714
  %v12779 = vunpack.c.l.bf16 %v12715
  %v12780 = vunpack.c.l.bf16 %v12716
  %v12781 = vunpack.c.l.bf16 %v12717
  %v12782 = vunpack.c.l.bf16 %v12718
  %v12783 = vunpack.c.l.bf16 %v12719
  %v12784 = vunpack.c.l.bf16 %v12720
  %v12785 = vunpack.c.l.bf16 %v12721
  %v12786 = vunpack.c.l.bf16 %v12722
  %v12787 = vunpack.c.l.bf16 %v12723
  %v12788 = vunpack.c.l.bf16 %v12724
  %v12789 = vunpack.c.l.bf16 %v12725
  %v12790 = vunpack.c.l.bf16 %v12726
  %v12791 = vunpack.c.l.bf16 %v12727
  %v12792 = vunpack.c.l.bf16 %v12728
  %v12793 = vunpack.c.l.bf16 %v12729
  %v12794 = vunpack.c.l.bf16 %v12730
  %v12795 = vunpack.c.l.bf16 %v12731
  %v12796 = vunpack.c.l.bf16 %v12732
  %v12797 = vunpack.c.l.bf16 %v12733
  %v12798 = vunpack.c.l.bf16 %v12734
  %v12799 = vunpack.c.l.bf16 %v12735
  %v12800 = vunpack.c.l.bf16 %v12736
  %v12801 = vunpack.c.l.bf16 %v12737
  %v12802 = vunpack.c.l.bf16 %v12738
  %v12803 = vunpack.c.l.bf16 %v12739
  %v12804 = vunpack.c.l.bf16 %v12740
  %v12805 = vunpack.c.l.bf16 %v12741
  %v12806 = vunpack.c.l.bf16 %v12742
  %v12807 = vunpack.c.l.bf16 %v12743
  %v12808 = vunpack.c.l.bf16 %v12744
  %v12809 = vunpack.c.l.bf16 %v12745
  %v12810 = vunpack.c.l.bf16 %v12746
  %v12811 = vunpack.c.l.bf16 %v12747
  %v12812 = vunpack.c.l.bf16 %v12748
  %v12813 = vunpack.c.l.bf16 %v12749
  %v12814 = vunpack.c.l.bf16 %v12750
  %v12815 = vunpack.c.l.bf16 %v12751
  %v12816 = vunpack.c.l.bf16 %v12752
  %v12817 = vunpack.c.l.bf16 %v12753
  %v12818 = vunpack.c.l.bf16 %v12754
  %v12819 = vunpack.c.l.bf16 %v12755
  %v12820 = vunpack.c.l.bf16 %v12756
  %v12821 = vunpack.c.l.bf16 %v12757
  %v12822 = vunpack.c.l.bf16 %v12758
  %v12823 = vunpack.c.l.bf16 %v12759
  %v12824 = vunpack.c.l.bf16 %v12760
  %v12825 = vunpack.c.l.bf16 %v12761
  %v12826 = vunpack.c.l.bf16 %v12762
  %v12827 = vunpack.c.l.bf16 %v12763
  %v12828 = vunpack.c.l.bf16 %v12764
  %v12829 = vunpack.c.l.bf16 %v12765
  %v12830 = vunpack.c.l.bf16 %v12766
  %v12831 = vadd.f32 %v12639, %v12767
  %v12832 = vadd.f32 %v12640, %v12768
  %v12833 = vadd.f32 %v12641, %v12769
  %v12834 = vadd.f32 %v12642, %v12770
  %v12835 = vadd.f32 %v12643, %v12771
  %v12836 = vadd.f32 %v12644, %v12772
  %v12837 = vadd.f32 %v12645, %v12773
  %v12838 = vadd.f32 %v12646, %v12774
  %v12839 = vadd.f32 %v12647, %v12775
  %v12840 = vadd.f32 %v12648, %v12776
  %v12841 = vadd.f32 %v12649, %v12777
  %v12842 = vadd.f32 %v12650, %v12778
  %v12843 = vadd.f32 %v12651, %v12779
  %v12844 = vadd.f32 %v12652, %v12780
  %v12845 = vadd.f32 %v12653, %v12781
  %v12846 = vadd.f32 %v12654, %v12782
  %v12847 = vadd.f32 %v12655, %v12783
  %v12848 = vadd.f32 %v12656, %v12784
  %v12849 = vadd.f32 %v12657, %v12785
  %v12850 = vadd.f32 %v12658, %v12786
  %v12851 = vadd.f32 %v12659, %v12787
  %v12852 = vadd.f32 %v12660, %v12788
  %v12853 = vadd.f32 %v12661, %v12789
  %v12854 = vadd.f32 %v12662, %v12790
  %v12855 = vadd.f32 %v12663, %v12791
  %v12856 = vadd.f32 %v12664, %v12792
  %v12857 = vadd.f32 %v12665, %v12793
  %v12858 = vadd.f32 %v12666, %v12794
  %v12859 = vadd.f32 %v12667, %v12795
  %v12860 = vadd.f32 %v12668, %v12796
  %v12861 = vadd.f32 %v12669, %v12797
  %v12862 = vadd.f32 %v12670, %v12798
  %v12863 = vadd.f32 %v12671, %v12799
  %v12864 = vadd.f32 %v12672, %v12800
  %v12865 = vadd.f32 %v12673, %v12801
  %v12866 = vadd.f32 %v12674, %v12802
  %v12867 = vadd.f32 %v12675, %v12803
  %v12868 = vadd.f32 %v12676, %v12804
  %v12869 = vadd.f32 %v12677, %v12805
  %v12870 = vadd.f32 %v12678, %v12806
  %v12871 = vadd.f32 %v12679, %v12807
  %v12872 = vadd.f32 %v12680, %v12808
  %v12873 = vadd.f32 %v12681, %v12809
  %v12874 = vadd.f32 %v12682, %v12810
  %v12875 = vadd.f32 %v12683, %v12811
  %v12876 = vadd.f32 %v12684, %v12812
  %v12877 = vadd.f32 %v12685, %v12813
  %v12878 = vadd.f32 %v12686, %v12814
  %v12879 = vadd.f32 %v12687, %v12815
  %v12880 = vadd.f32 %v12688, %v12816
  %v12881 = vadd.f32 %v12689, %v12817
  %v12882 = vadd.f32 %v12690, %v12818
  %v12883 = vadd.f32 %v12691, %v12819
  %v12884 = vadd.f32 %v12692, %v12820
  %v12885 = vadd.f32 %v12693, %v12821
  %v12886 = vadd.f32 %v12694, %v12822
  %v12887 = vadd.f32 %v12695, %v12823
  %v12888 = vadd.f32 %v12696, %v12824
  %v12889 = vadd.f32 %v12697, %v12825
  %v12890 = vadd.f32 %v12698, %v12826
  %v12891 = vadd.f32 %v12699, %v12827
  %v12892 = vadd.f32 %v12700, %v12828
  %v12893 = vadd.f32 %v12701, %v12829
  %v12894 = vadd.f32 %v12702, %v12830
  %v12895 = vmax.f32 %v12831, 0.0
  %v12896 = vmax.f32 %v12832, 0.0
  %v12897 = vmax.f32 %v12833, 0.0
  %v12898 = vmax.f32 %v12834, 0.0
  %v12899 = vmax.f32 %v12835, 0.0
  %v12900 = vmax.f32 %v12836, 0.0
  %v12901 = vmax.f32 %v12837, 0.0
  %v12902 = vmax.f32 %v12838, 0.0
  %v12903 = vmax.f32 %v12839, 0.0
  %v12904 = vmax.f32 %v12840, 0.0
  %v12905 = vmax.f32 %v12841, 0.0
  %v12906 = vmax.f32 %v12842, 0.0
  %v12907 = vmax.f32 %v12843, 0.0
  %v12908 = vmax.f32 %v12844, 0.0
  %v12909 = vmax.f32 %v12845, 0.0
  %v12910 = vmax.f32 %v12846, 0.0
  %v12911 = vmax.f32 %v12847, 0.0
  %v12912 = vmax.f32 %v12848, 0.0
  %v12913 = vmax.f32 %v12849, 0.0
  %v12914 = vmax.f32 %v12850, 0.0
  %v12915 = vmax.f32 %v12851, 0.0
  %v12916 = vmax.f32 %v12852, 0.0
  %v12917 = vmax.f32 %v12853, 0.0
  %v12918 = vmax.f32 %v12854, 0.0
  %v12919 = vmax.f32 %v12855, 0.0
  %v12920 = vmax.f32 %v12856, 0.0
  %v12921 = vmax.f32 %v12857, 0.0
  %v12922 = vmax.f32 %v12858, 0.0
  %v12923 = vmax.f32 %v12859, 0.0
  %v12924 = vmax.f32 %v12860, 0.0
  %v12925 = vmax.f32 %v12861, 0.0
  %v12926 = vmax.f32 %v12862, 0.0
  %v12927 = vmax.f32 %v12863, 0.0
  %v12928 = vmax.f32 %v12864, 0.0
  %v12929 = vmax.f32 %v12865, 0.0
  %v12930 = vmax.f32 %v12866, 0.0
  %v12931 = vmax.f32 %v12867, 0.0
  %v12932 = vmax.f32 %v12868, 0.0
  %v12933 = vmax.f32 %v12869, 0.0
  %v12934 = vmax.f32 %v12870, 0.0
  %v12935 = vmax.f32 %v12871, 0.0
  %v12936 = vmax.f32 %v12872, 0.0
  %v12937 = vmax.f32 %v12873, 0.0
  %v12938 = vmax.f32 %v12874, 0.0
  %v12939 = vmax.f32 %v12875, 0.0
  %v12940 = vmax.f32 %v12876, 0.0
  %v12941 = vmax.f32 %v12877, 0.0
  %v12942 = vmax.f32 %v12878, 0.0
  %v12943 = vmax.f32 %v12879, 0.0
  %v12944 = vmax.f32 %v12880, 0.0
  %v12945 = vmax.f32 %v12881, 0.0
  %v12946 = vmax.f32 %v12882, 0.0
  %v12947 = vmax.f32 %v12883, 0.0
  %v12948 = vmax.f32 %v12884, 0.0
  %v12949 = vmax.f32 %v12885, 0.0
  %v12950 = vmax.f32 %v12886, 0.0
  %v12951 = vmax.f32 %v12887, 0.0
  %v12952 = vmax.f32 %v12888, 0.0
  %v12953 = vmax.f32 %v12889, 0.0
  %v12954 = vmax.f32 %v12890, 0.0
  %v12955 = vmax.f32 %v12891, 0.0
  %v12956 = vmax.f32 %v12892, 0.0
  %v12957 = vmax.f32 %v12893, 0.0
  %v12958 = vmax.f32 %v12894, 0.0
  %v12959 = vpack.c.bf16 %v12896, %v12895
  %v12960 = vpack.c.bf16 %v12898, %v12897
  %v12961 = vpack.c.bf16 %v12900, %v12899
  %v12962 = vpack.c.bf16 %v12902, %v12901
  %v12963 = vpack.c.bf16 %v12904, %v12903
  %v12964 = vpack.c.bf16 %v12906, %v12905
  %v12965 = vpack.c.bf16 %v12908, %v12907
  %v12966 = vpack.c.bf16 %v12910, %v12909
  %v12967 = vpack.c.bf16 %v12912, %v12911
  %v12968 = vpack.c.bf16 %v12914, %v12913
  %v12969 = vpack.c.bf16 %v12916, %v12915
  %v12970 = vpack.c.bf16 %v12918, %v12917
  %v12971 = vpack.c.bf16 %v12920, %v12919
  %v12972 = vpack.c.bf16 %v12922, %v12921
  %v12973 = vpack.c.bf16 %v12924, %v12923
  %v12974 = vpack.c.bf16 %v12926, %v12925
  %v12975 = vpack.c.bf16 %v12928, %v12927
  %v12976 = vpack.c.bf16 %v12930, %v12929
  %v12977 = vpack.c.bf16 %v12932, %v12931
  %v12978 = vpack.c.bf16 %v12934, %v12933
  %v12979 = vpack.c.bf16 %v12936, %v12935
  %v12980 = vpack.c.bf16 %v12938, %v12937
  %v12981 = vpack.c.bf16 %v12940, %v12939
  %v12982 = vpack.c.bf16 %v12942, %v12941
  %v12983 = vpack.c.bf16 %v12944, %v12943
  %v12984 = vpack.c.bf16 %v12946, %v12945
  %v12985 = vpack.c.bf16 %v12948, %v12947
  %v12986 = vpack.c.bf16 %v12950, %v12949
  %v12987 = vpack.c.bf16 %v12952, %v12951
  %v12988 = vpack.c.bf16 %v12954, %v12953
  %v12989 = vpack.c.bf16 %v12956, %v12955
  %v12990 = vpack.c.bf16 %v12958, %v12957
  %v13023 = vunpack.c.l.b16 %v12959
  %v13024 = vunpack.c.h.b16 %v12959
  %v13025 = vunpack.c.l.b16 %v12960
  %v13026 = vunpack.c.h.b16 %v12960
  %v13027 = vunpack.c.l.b16 %v12961
  %v13028 = vunpack.c.h.b16 %v12961
  %v13029 = vunpack.c.l.b16 %v12962
  %v13030 = vunpack.c.h.b16 %v12962
  %v13031 = vunpack.c.l.b16 %v12963
  %v13032 = vunpack.c.h.b16 %v12963
  %v13033 = vunpack.c.l.b16 %v12964
  %v13034 = vunpack.c.h.b16 %v12964
  %v13035 = vunpack.c.l.b16 %v12965
  %v13036 = vunpack.c.h.b16 %v12965
  %v13037 = vunpack.c.l.b16 %v12966
  %v13038 = vunpack.c.h.b16 %v12966
  %v13039 = vunpack.c.l.b16 %v12967
  %v13040 = vunpack.c.h.b16 %v12967
  %v13041 = vunpack.c.l.b16 %v12968
  %v13042 = vunpack.c.h.b16 %v12968
  %v13043 = vunpack.c.l.b16 %v12969
  %v13044 = vunpack.c.h.b16 %v12969
  %v13045 = vunpack.c.l.b16 %v12970
  %v13046 = vunpack.c.h.b16 %v12970
  %v13047 = vunpack.c.l.b16 %v12971
  %v13048 = vunpack.c.h.b16 %v12971
  %v13049 = vunpack.c.l.b16 %v12972
  %v13050 = vunpack.c.h.b16 %v12972
  %v13051 = vunpack.c.l.b16 %v12973
  %v13052 = vunpack.c.h.b16 %v12973
  %v13053 = vunpack.c.l.b16 %v12974
  %v13054 = vunpack.c.h.b16 %v12974
  %v13055 = vunpack.c.l.b16 %v12975
  %v13056 = vunpack.c.h.b16 %v12975
  %v13057 = vunpack.c.l.b16 %v12976
  %v13058 = vunpack.c.h.b16 %v12976
  %v13059 = vunpack.c.l.b16 %v12977
  %v13060 = vunpack.c.h.b16 %v12977
  %v13061 = vunpack.c.l.b16 %v12978
  %v13062 = vunpack.c.h.b16 %v12978
  %v13063 = vunpack.c.l.b16 %v12979
  %v13064 = vunpack.c.h.b16 %v12979
  %v13065 = vunpack.c.l.b16 %v12980
  %v13066 = vunpack.c.h.b16 %v12980
  %v13067 = vunpack.c.l.b16 %v12981
  %v13068 = vunpack.c.h.b16 %v12981
  %v13069 = vunpack.c.l.b16 %v12982
  %v13070 = vunpack.c.h.b16 %v12982
  %v13071 = vunpack.c.l.b16 %v12983
  %v13072 = vunpack.c.h.b16 %v12983
  %v13073 = vunpack.c.l.b16 %v12984
  %v13074 = vunpack.c.h.b16 %v12984
  %v13075 = vunpack.c.l.b16 %v12985
  %v13076 = vunpack.c.h.b16 %v12985
  %v13077 = vunpack.c.l.b16 %v12986
  %v13078 = vunpack.c.h.b16 %v12986
  %v13079 = vunpack.c.l.b16 %v12987
  %v13080 = vunpack.c.h.b16 %v12987
  %v13081 = vunpack.c.l.b16 %v12988
  %v13082 = vunpack.c.h.b16 %v12988
  %v13083 = vunpack.c.l.b16 %v12989
  %v13084 = vunpack.c.h.b16 %v12989
  %v13085 = vunpack.c.l.b16 %v12990
  %v13086 = vunpack.c.h.b16 %v12990
  %v13087 = vpack.c.b16 %v13023, %v13023
  %v13088 = vpack.c.b16 %v13024, %v13024
  %v13089 = vpack.c.b16 %v13025, %v13025
  %v13090 = vpack.c.b16 %v13026, %v13026
  %v13091 = vpack.c.b16 %v13027, %v13027
  %v13092 = vpack.c.b16 %v13028, %v13028
  %v13093 = vpack.c.b16 %v13029, %v13029
  %v13094 = vpack.c.b16 %v13030, %v13030
  %v13095 = vpack.c.b16 %v13031, %v13031
  %v13096 = vpack.c.b16 %v13032, %v13032
  %v13097 = vpack.c.b16 %v13033, %v13033
  %v13098 = vpack.c.b16 %v13034, %v13034
  %v13099 = vpack.c.b16 %v13035, %v13035
  %v13100 = vpack.c.b16 %v13036, %v13036
  %v13101 = vpack.c.b16 %v13037, %v13037
  %v13102 = vpack.c.b16 %v13038, %v13038
  %v13103 = vpack.c.b16 %v13039, %v13039
  %v13104 = vpack.c.b16 %v13040, %v13040
  %v13105 = vpack.c.b16 %v13041, %v13041
  %v13106 = vpack.c.b16 %v13042, %v13042
  %v13107 = vpack.c.b16 %v13043, %v13043
  %v13108 = vpack.c.b16 %v13044, %v13044
  %v13109 = vpack.c.b16 %v13045, %v13045
  %v13110 = vpack.c.b16 %v13046, %v13046
  %v13111 = vpack.c.b16 %v13047, %v13047
  %v13112 = vpack.c.b16 %v13048, %v13048
  %v13113 = vpack.c.b16 %v13049, %v13049
  %v13114 = vpack.c.b16 %v13050, %v13050
  %v13115 = vpack.c.b16 %v13051, %v13051
  %v13116 = vpack.c.b16 %v13052, %v13052
  %v13117 = vpack.c.b16 %v13053, %v13053
  %v13118 = vpack.c.b16 %v13054, %v13054
  %v13119 = vpack.c.b16 %v13055, %v13055
  %v13120 = vpack.c.b16 %v13056, %v13056
  %v13121 = vpack.c.b16 %v13057, %v13057
  %v13122 = vpack.c.b16 %v13058, %v13058
  %v13123 = vpack.c.b16 %v13059, %v13059
  %v13124 = vpack.c.b16 %v13060, %v13060
  %v13125 = vpack.c.b16 %v13061, %v13061
  %v13126 = vpack.c.b16 %v13062, %v13062
  %v13127 = vpack.c.b16 %v13063, %v13063
  %v13128 = vpack.c.b16 %v13064, %v13064
  %v13129 = vpack.c.b16 %v13065, %v13065
  %v13130 = vpack.c.b16 %v13066, %v13066
  %v13131 = vpack.c.b16 %v13067, %v13067
  %v13132 = vpack.c.b16 %v13068, %v13068
  %v13133 = vpack.c.b16 %v13069, %v13069
  %v13134 = vpack.c.b16 %v13070, %v13070
  %v13135 = vpack.c.b16 %v13071, %v13071
  %v13136 = vpack.c.b16 %v13072, %v13072
  %v13137 = vpack.c.b16 %v13073, %v13073
  %v13138 = vpack.c.b16 %v13074, %v13074
  %v13139 = vpack.c.b16 %v13075, %v13075
  %v13140 = vpack.c.b16 %v13076, %v13076
  %v13141 = vpack.c.b16 %v13077, %v13077
  %v13142 = vpack.c.b16 %v13078, %v13078
  %v13143 = vpack.c.b16 %v13079, %v13079
  %v13144 = vpack.c.b16 %v13080, %v13080
  %v13145 = vpack.c.b16 %v13081, %v13081
  %v13146 = vpack.c.b16 %v13082, %v13082
  %v13147 = vpack.c.b16 %v13083, %v13083
  %v13148 = vpack.c.b16 %v13084, %v13084
  %v13149 = vpack.c.b16 %v13085, %v13085
  %v13150 = vpack.c.b16 %v13086, %v13086
  %13215 = vst [vmem:[%s10] sm:$0xf] %v13087
  %13216 = vst [vmem:[%s10 + $0x4] sm:$0xf] %v13088
  %13217 = vst [vmem:[%s10 + $0x8] sm:$0xf] %v13089
  %13218 = vst [vmem:[%s10 + $0xc] sm:$0xf] %v13090
  %13219 = vst [vmem:[%s10 + $0x10] sm:$0xf] %v13091
  %13220 = vst [vmem:[%s10 + $0x14] sm:$0xf] %v13092
  %13221 = vst [vmem:[%s10 + $0x18] sm:$0xf] %v13093
  %13222 = vst [vmem:[%s10 + $0x1c] sm:$0xf] %v13094
  %13223 = vst [vmem:[%s10 + $0x20] sm:$0xf] %v13095
  %13224 = vst [vmem:[%s10 + $0x24] sm:$0xf] %v13096
  %13225 = vst [vmem:[%s10 + $0x28] sm:$0xf] %v13097
  %13226 = vst [vmem:[%s10 + $0x2c] sm:$0xf] %v13098
  %13227 = vst [vmem:[%s10 + $0x30] sm:$0xf] %v13099
  %13228 = vst [vmem:[%s10 + $0x34] sm:$0xf] %v13100
  %13229 = vst [vmem:[%s10 + $0x38] sm:$0xf] %v13101
  %13230 = vst [vmem:[%s10 + $0x3c] sm:$0xf] %v13102
  %13231 = vst [vmem:[%s10 + $0x40] sm:$0xf] %v13103
  %13232 = vst [vmem:[%s10 + $0x44] sm:$0xf] %v13104
  %13233 = vst [vmem:[%s10 + $0x48] sm:$0xf] %v13105
  %13234 = vst [vmem:[%s10 + $0x4c] sm:$0xf] %v13106
  %13235 = vst [vmem:[%s10 + $0x50] sm:$0xf] %v13107
  %13236 = vst [vmem:[%s10 + $0x54] sm:$0xf] %v13108
  %13237 = vst [vmem:[%s10 + $0x58] sm:$0xf] %v13109
  %13238 = vst [vmem:[%s10 + $0x5c] sm:$0xf] %v13110
  %13239 = vst [vmem:[%s10 + $0x60] sm:$0xf] %v13111
  %13240 = vst [vmem:[%s10 + $0x64] sm:$0xf] %v13112
  %13241 = vst [vmem:[%s10 + $0x68] sm:$0xf] %v13113
  %13242 = vst [vmem:[%s10 + $0x6c] sm:$0xf] %v13114
  %13243 = vst [vmem:[%s10 + $0x70] sm:$0xf] %v13115
  %13244 = vst [vmem:[%s10 + $0x74] sm:$0xf] %v13116
  %13245 = vst [vmem:[%s10 + $0x78] sm:$0xf] %v13117
  %13246 = vst [vmem:[%s10 + $0x7c] sm:$0xf] %v13118
  %13247 = vst [vmem:[%s10 + $0x80] sm:$0xf] %v13119
  %13248 = vst [vmem:[%s10 + $0x84] sm:$0xf] %v13120
  %13249 = vst [vmem:[%s10 + $0x88] sm:$0xf] %v13121
  %13250 = vst [vmem:[%s10 + $0x8c] sm:$0xf] %v13122
  %13251 = vst [vmem:[%s10 + $0x90] sm:$0xf] %v13123
  %13252 = vst [vmem:[%s10 + $0x94] sm:$0xf] %v13124
  %13253 = vst [vmem:[%s10 + $0x98] sm:$0xf] %v13125
  %13254 = vst [vmem:[%s10 + $0x9c] sm:$0xf] %v13126
  %13255 = vst [vmem:[%s10 + $0xa0] sm:$0xf] %v13127
  %13256 = vst [vmem:[%s10 + $0xa4] sm:$0xf] %v13128
  %13257 = vst [vmem:[%s10 + $0xa8] sm:$0xf] %v13129
  %13258 = vst [vmem:[%s10 + $0xac] sm:$0xf] %v13130
  %13259 = vst [vmem:[%s10 + $0xb0] sm:$0xf] %v13131
  %13260 = vst [vmem:[%s10 + $0xb4] sm:$0xf] %v13132
  %13261 = vst [vmem:[%s10 + $0xb8] sm:$0xf] %v13133
  %13262 = vst [vmem:[%s10 + $0xbc] sm:$0xf] %v13134
  %13263 = vst [vmem:[%s10 + $0xc0] sm:$0xf] %v13135
  %13264 = vst [vmem:[%s10 + $0xc4] sm:$0xf] %v13136
  %13265 = vst [vmem:[%s10 + $0xc8] sm:$0xf] %v13137
  %13266 = vst [vmem:[%s10 + $0xcc] sm:$0xf] %v13138
  %13267 = vst [vmem:[%s10 + $0xd0] sm:$0xf] %v13139
  %13268 = vst [vmem:[%s10 + $0xd4] sm:$0xf] %v13140
  %13269 = vst [vmem:[%s10 + $0xd8] sm:$0xf] %v13141
  %13270 = vst [vmem:[%s10 + $0xdc] sm:$0xf] %v13142
  %13271 = vst [vmem:[%s10 + $0xe0] sm:$0xf] %v13143
  %13272 = vst [vmem:[%s10 + $0xe4] sm:$0xf] %v13144
  %13273 = vst [vmem:[%s10 + $0xe8] sm:$0xf] %v13145
  %13274 = vst [vmem:[%s10 + $0xec] sm:$0xf] %v13146
  %13275 = vst [vmem:[%s10 + $0xf0] sm:$0xf] %v13147
  %13276 = vst [vmem:[%s10 + $0xf4] sm:$0xf] %v13148
  %13277 = vst [vmem:[%s10 + $0xf8] sm:$0xf] %v13149
  %13278 = vst [vmem:[%s10 + $0xfc] sm:$0xf] %v13150
  // Predicated region
  $region42: #{bottleneck_forward.1} parent=0 // pred_check
    _
  $region43: #{bottleneck_forward.1} parent=0 // pred_check_branch
    %13280 = sbr.rel (0) target = $region45
  $region44: #{bottleneck_forward.1} parent=0 // pred_region
    _
  $region45: #{bottleneck_forward.1} parent=0 // pred_fallthru
    _
  // Predicated region
  $region46: #{bottleneck_forward.1} parent=0 // pred_check
    _
  $region47: #{bottleneck_forward.1} parent=0 // pred_check_branch
    %13282 = sbr.rel (0) target = $region49
  $region48: #{bottleneck_forward.1} parent=0 // pred_region
    _
  $region49: #{bottleneck_forward.1} parent=0 // pred_fallthru
    _

</llo_original>
